<compile_context>
chip_gen: v7x
topology: tpu7x:2x2x1
jax: 0.10.0
libtpu: 0.0.40
codegen_flags: <defaults>
</compile_context>

<pallas_src>
import jax
import jax.numpy as jnp
from jax import lax
from jax.experimental import pallas as pl
from jax.experimental.pallas import tpu as pltpu

LEAKY_SLOPE = 0.1
BN_EPS = 1e-5


def _leaky(v):
    return jnp.where(v > 0, v, LEAKY_SLOPE * v)


# --------------------------------------------------------------------------
# Kernel
# --------------------------------------------------------------------------
def conv_set_kernel(x_ref,
                    w1_ref, b1_ref, w2_ref, b2_ref, w3_ref, b3_ref,
                    w4_ref, b4_ref, w5_ref, b5_ref,
                    o_ref, cols_ref):
    # x_ref   : (1, H, W, Cp) bf16  one image, channels padded to mult. of 128
    # w1/3/5  : (Cp, Kp)       bf16 folded 1x1 weights (BN scale folded in)
    # w2/4    : (3, 3*Kp, Cp)  bf16 folded 3x3 weights, per-ky row-im2col layout
    # b*      : (1, out)       f32  folded BN bias
    # cols_ref: (H+2, W, 3*Kp) bf16 row-wise im2col scratch (shared by L2 & L4)
    _, H, W, Cp = x_ref.shape
    K3 = cols_ref.shape[-1]
    Kp = K3 // 3

    # Border-only zero init: ky-pad rows (0 and H+1) and kx-pad column chunks.
    # These locations are never overwritten by the per-layer interior writes.
    cols_ref[0:1, :, :] = jnp.zeros((1, W, K3), jnp.bfloat16)
    cols_ref[H + 1:H + 2, :, :] = jnp.zeros((1, W, K3), jnp.bfloat16)
    cols_ref[1:H + 1, 0:1, 0:Kp] = jnp.zeros((H, 1, Kp), jnp.bfloat16)
    cols_ref[1:H + 1, W - 1:W, 2 * Kp:3 * Kp] = jnp.zeros((H, 1, Kp), jnp.bfloat16)

    def conv1x1(yb, w_ref, b_ref):
        # yb: (H*W, in) bf16 -> (H*W, out) f32 ; bf16 matmul, f32 accumulate.
        z = jnp.dot(yb, w_ref[...], preferred_element_type=jnp.float32)
        return _leaky(z + b_ref[...])

    def conv3x3(yb, w_ref, b_ref):
        # yb: (H, W, Kp) bf16 -> (H*W, Cp) f32 via row-wise im2col:
        #   cols[r, w, kx*Kp + ci] = y[r-1, w + kx - 1, ci]  (zeros at borders)
        # then 3 accumulating matmuls, one per ky (operand = cheap outer slice).
        cols_ref[1:H + 1, :, Kp:2 * Kp] = yb                       # kx = 1
        cols_ref[1:H + 1, 1:W, 0:Kp] = yb[:, :W - 1, :]            # kx = 0
        cols_ref[1:H + 1, :W - 1, 2 * Kp:3 * Kp] = yb[:, 1:, :]    # kx = 2
        z = jnp.dot(cols_ref[0:H].reshape(H * W, K3), w_ref[0],
                    preferred_element_type=jnp.float32)
        z = z + jnp.dot(cols_ref[1:H + 1].reshape(H * W, K3), w_ref[1],
                        preferred_element_type=jnp.float32)
        z = z + jnp.dot(cols_ref[2:H + 2].reshape(H * W, K3), w_ref[2],
                        preferred_element_type=jnp.float32)
        return _leaky(z + b_ref[...])

    y = conv1x1(x_ref[0].reshape(H * W, Cp), w1_ref, b1_ref)              # (HW, Kp)
    y = conv3x3(y.astype(jnp.bfloat16).reshape(H, W, Kp), w2_ref, b2_ref)  # (HW, Cp)
    y = conv1x1(y.astype(jnp.bfloat16), w3_ref, b3_ref)                    # (HW, Kp)
    y = conv3x3(y.astype(jnp.bfloat16).reshape(H, W, Kp), w4_ref, b4_ref)  # (HW, Cp)
    y = conv1x1(y.astype(jnp.bfloat16), w5_ref, b5_ref)                    # (HW, Kp)
    o_ref[0] = y.reshape(H, W, Kp).astype(o_ref.dtype)


def _whole_spec(p):
    if p.ndim == 2:
        return pl.BlockSpec(p.shape, lambda n: (0, 0))
    return pl.BlockSpec(p.shape, lambda n: (0, 0, 0))


def _conv_set_pallas(x_nhwc, params):
    """x_nhwc: (N, H, W, Cp) bf16, channels already padded to a multiple of 128."""
    N, H, W, Cp = x_nhwc.shape
    Kp = params[0].shape[1]

    return pl.pallas_call(
        conv_set_kernel,
        out_shape=jax.ShapeDtypeStruct((N, H, W, Kp), jnp.float32),
        grid_spec=pltpu.PrefetchScalarGridSpec(
            num_scalar_prefetch=0,
            grid=(N,),
            in_specs=[pl.BlockSpec((1, H, W, Cp), lambda n: (n, 0, 0, 0))]
                     + [_whole_spec(p) for p in params],
            out_specs=pl.BlockSpec((1, H, W, Kp), lambda n: (n, 0, 0, 0)),
            scratch_shapes=[pltpu.VMEM((H + 2, W, 3 * Kp), jnp.bfloat16)],
        ),
        compiler_params=pltpu.CompilerParams(
            dimension_semantics=("parallel",),
            vmem_limit_bytes=64 * 1024 * 1024),
    )(x_nhwc, *params)


def conv_set_nchw(x_nchw, kernel_params, c_out):
    """PyTorch-convention NCHW in/out wrapper around the NHWC Pallas kernel."""
    N, c_in, H, W = x_nchw.shape
    cp = kernel_params[0].shape[0]
    x_nhwc = jnp.transpose(x_nchw, (0, 2, 3, 1))
    if cp != c_in:
        x_nhwc = jnp.pad(x_nhwc, ((0, 0), (0, 0), (0, 0), (0, cp - c_in)))
    x_nhwc = x_nhwc.astype(jnp.bfloat16)   # kernel matmuls are bf16 anyway
    out_nhwc = _conv_set_pallas(x_nhwc, kernel_params)
    return jnp.transpose(out_nhwc[..., :c_out], (0, 3, 1, 2))


# --------------------------------------------------------------------------
# Parameter construction (PyTorch-shaped originals + kernel-layout folded)
# --------------------------------------------------------------------------
def _round_up(n, m=128):
    return ((n + m - 1) // m) * m


def _fold_bn(g, be, m, v):
    s = g / jnp.sqrt(v + BN_EPS)
    return s, be - m * s


def _fold_1x1(w_pt, g, be, m, v, cin_p, cout_p):
    s, b = _fold_bn(g, be, m, v)
    wk = jnp.transpose(w_pt[:, :, 0, 0], (1, 0)) * s[None, :]        # (cin, cout)
    wk_p = jnp.zeros((cin_p, cout_p), jnp.float32)
    wk_p = wk_p.at[:wk.shape[0], :wk.shape[1]].set(wk)
    bk_p = jnp.zeros((1, cout_p), jnp.float32).at[0, :b.shape[0]].set(b)
    return wk_p.astype(jnp.bfloat16), bk_p


def _fold_3x3(w_pt, g, be, m, v, cin_p, cout_p):
    # kernel layout: (ky, kx*cin_p + ci, co)  -- matches cols_ref channel chunks
    s, b = _fold_bn(g, be, m, v)
    wk = jnp.transpose(w_pt, (2, 3, 1, 0)) * s[None, None, None, :]  # (ky,kx,ci,co)
    wk_p = jnp.zeros((3, 3, cin_p, cout_p), jnp.float32)
    wk_p = wk_p.at[:, :, :wk.shape[2], :wk.shape[3]].set(wk)
    bk_p = jnp.zeros((1, cout_p), jnp.float32).at[0, :b.shape[0]].set(b)
    return wk_p.reshape(3, 3 * cin_p, cout_p).astype(jnp.bfloat16), bk_p


def _gen_layer(key, cin, cout, k):
    ks = jax.random.split(key, 5)
    w = 0.1 * jax.random.normal(ks[0], (cout, cin, k, k), jnp.float32)
    g = 1.0 + 0.1 * jax.random.normal(ks[1], (cout,), jnp.float32)
    be = 0.1 * jax.random.normal(ks[2], (cout,), jnp.float32)
    m = 0.1 * jax.random.normal(ks[3], (cout,), jnp.float32)
    v = jnp.abs(1.0 + 0.1 * jax.random.normal(ks[4], (cout,), jnp.float32))
    return (w, g, be, m, v)


def make_params(key, c_in, c_out):
    keys = jax.random.split(key, 5)
    layers = [
        _gen_layer(keys[0], c_in, c_out, 1),
        _gen_layer(keys[1], c_out, c_in, 3),
        _gen_layer(keys[2], c_in, c_out, 1),
        _gen_layer(keys[3], c_out, c_in, 3),
        _gen_layer(keys[4], c_in, c_out, 1),
    ]
    cp, kp = _round_up(c_in), _round_up(c_out)
    kparams = []
    for (w, g, be, m, v) in layers:
        if w.shape[-1] == 1:
            kparams += list(_fold_1x1(w, g, be, m, v, cp, kp))
        else:
            kparams += list(_fold_3x3(w, g, be, m, v, kp, cp))
    return tuple(kparams), layers


# --------------------------------------------------------------------------
# Pure-JAX reference (mirrors PyTorch NCHW convs, eval-mode BN folded), f32
# --------------------------------------------------------------------------
def reference_nchw(x, layers):
    dn = ("NCHW", "OIHW", "NCHW")
    y = x
    for (w, g, be, m, v) in layers:
        pad = (w.shape[-1] - 1) // 2
        s, b = _fold_bn(g, be, m, v)
        y = lax.conv_general_dilated(y, w, (1, 1), ((pad, pad), (pad, pad)),
                                     dimension_numbers=dn)
        y = _leaky(y * s[None, :, None, None] + b[None, :, None, None])
    return y


if __name__ == "__main__":
    key = jax.random.PRNGKey(0)
    k_x, k_p = jax.random.split(key)

    # "in_channels > out_channels" per the module docstring.
    N, C_IN, C_OUT, H, W = 2, 4, 2, 16, 16
    x_nchw = jax.random.normal(k_x, (N, C_IN, H, W), jnp.float32)

    kernel_params, torch_layers = make_params(k_p, C_IN, C_OUT)

    out_nchw = conv_set_nchw(x_nchw, kernel_params, C_OUT)
    out_nchw = jax.block_until_ready(out_nchw)

    ref = reference_nchw(x_nchw, torch_layers)
    max_err = float(jnp.max(jnp.abs(out_nchw - ref)))
    # bf16 MXU operands (with f32 accumulation) vs a pure-f32 reference across
    # five chained layers -> allow a small absolute/relative deviation.
    assert jnp.allclose(out_nchw, ref, atol=2e-2, rtol=2e-2), max_err

    print("KERNEL_OK")
</pallas_src>

<mosaic_0001>
module attributes {stable_mosaic.version = 11 : i64} {
  func.func @conv_set_kernel(%arg0: i32, %arg1: memref<1x16x16x128xbf16, #tpu.memory_space<vmem>>, %arg2: memref<128x128xbf16, #tpu.memory_space<vmem>>, %arg3: memref<1x128xf32, #tpu.memory_space<vmem>>, %arg4: memref<3x384x128xbf16, #tpu.memory_space<vmem>>, %arg5: memref<1x128xf32, #tpu.memory_space<vmem>>, %arg6: memref<128x128xbf16, #tpu.memory_space<vmem>>, %arg7: memref<1x128xf32, #tpu.memory_space<vmem>>, %arg8: memref<3x384x128xbf16, #tpu.memory_space<vmem>>, %arg9: memref<1x128xf32, #tpu.memory_space<vmem>>, %arg10: memref<128x128xbf16, #tpu.memory_space<vmem>>, %arg11: memref<1x128xf32, #tpu.memory_space<vmem>>, %arg12: memref<1x16x16x128xf32, #tpu.memory_space<vmem>>, %arg13: memref<18x16x384xbf16, #tpu.memory_space<vmem>>) attributes {dimension_semantics = [#tpu.dimension_semantics<parallel>], iteration_bounds = array<i64: 2>, scalar_prefetch = 0 : i64, scratch_operands = 1 : i64, tpu.core_type = #tpu.core_type<tc>, window_params = [{transform_indices = @transform_0, window_bounds = array<i64: 1, 16, 16, 128>}, {pipeline_mode = #tpu.pipeline_mode<synchronous>, transform_indices = @transform_1, window_bounds = array<i64: 128, 128>}, {pipeline_mode = #tpu.pipeline_mode<synchronous>, transform_indices = @transform_2, window_bounds = array<i64: 1, 128>}, {pipeline_mode = #tpu.pipeline_mode<synchronous>, transform_indices = @transform_3, window_bounds = array<i64: 3, 384, 128>}, {pipeline_mode = #tpu.pipeline_mode<synchronous>, transform_indices = @transform_4, window_bounds = array<i64: 1, 128>}, {pipeline_mode = #tpu.pipeline_mode<synchronous>, transform_indices = @transform_5, window_bounds = array<i64: 128, 128>}, {pipeline_mode = #tpu.pipeline_mode<synchronous>, transform_indices = @transform_6, window_bounds = array<i64: 1, 128>}, {pipeline_mode = #tpu.pipeline_mode<synchronous>, transform_indices = @transform_7, window_bounds = array<i64: 3, 384, 128>}, {pipeline_mode = #tpu.pipeline_mode<synchronous>, transform_indices = @transform_8, window_bounds = array<i64: 1, 128>}, {pipeline_mode = #tpu.pipeline_mode<synchronous>, transform_indices = @transform_9, window_bounds = array<i64: 128, 128>}, {pipeline_mode = #tpu.pipeline_mode<synchronous>, transform_indices = @transform_10, window_bounds = array<i64: 1, 128>}, {transform_indices = @transform_11, window_bounds = array<i64: 1, 16, 16, 128>}]} {
    %cst = arith.constant 0.000000e+00 : bf16
    %0 = vector.broadcast %cst : bf16 to vector<1x16x384xbf16>
    %c0 = arith.constant 0 : index
    %c0_0 = arith.constant 0 : index
    %c0_1 = arith.constant 0 : index
    %1 = vector.load %arg13[%c0, %c0_0, %c0_1] : memref<18x16x384xbf16, #tpu.memory_space<vmem>>, vector<1x16x384xbf16>
    tpu.vector_store %arg13[%c0, %c0_0, %c0_1], %0 {strides = array<i32>} : memref<18x16x384xbf16, #tpu.memory_space<vmem>>, vector<1x16x384xbf16>,
    %cst_2 = arith.constant 0.000000e+00 : bf16
    %2 = vector.broadcast %cst_2 : bf16 to vector<1x16x384xbf16>
    %c17 = arith.constant 17 : index
    %c0_3 = arith.constant 0 : index
    %c0_4 = arith.constant 0 : index
    %3 = vector.load %arg13[%c17, %c0_3, %c0_4] : memref<18x16x384xbf16, #tpu.memory_space<vmem>>, vector<1x16x384xbf16>
    tpu.vector_store %arg13[%c17, %c0_3, %c0_4], %2 {strides = array<i32>} : memref<18x16x384xbf16, #tpu.memory_space<vmem>>, vector<1x16x384xbf16>,
    %cst_5 = arith.constant 0.000000e+00 : bf16
    %4 = vector.broadcast %cst_5 : bf16 to vector<16x1x128xbf16>
    %c1 = arith.constant 1 : index
    %c0_6 = arith.constant 0 : index
    %c0_7 = arith.constant 0 : index
    %5 = vector.load %arg13[%c1, %c0_6, %c0_7] : memref<18x16x384xbf16, #tpu.memory_space<vmem>>, vector<16x1x128xbf16>
    tpu.vector_store %arg13[%c1, %c0_6, %c0_7], %4 {strides = array<i32>} : memref<18x16x384xbf16, #tpu.memory_space<vmem>>, vector<16x1x128xbf16>,
    %cst_8 = arith.constant 0.000000e+00 : bf16
    %6 = vector.broadcast %cst_8 : bf16 to vector<16x1x128xbf16>
    %c1_9 = arith.constant 1 : index
    %c15 = arith.constant 15 : index
    %c256 = arith.constant 256 : index
    %7 = vector.load %arg13[%c1_9, %c15, %c256] : memref<18x16x384xbf16, #tpu.memory_space<vmem>>, vector<16x1x128xbf16>
    tpu.vector_store %arg13[%c1_9, %c15, %c256], %6 {strides = array<i32>} : memref<18x16x384xbf16, #tpu.memory_space<vmem>>, vector<16x1x128xbf16>,
    %c0_10 = arith.constant 0 : index
    %c0_11 = arith.constant 0 : index
    %c0_12 = arith.constant 0 : index
    %c0_13 = arith.constant 0 : index
    %8 = vector.load %arg1[%c0_10, %c0_11, %c0_12, %c0_13] : memref<1x16x16x128xbf16, #tpu.memory_space<vmem>>, vector<1x16x16x128xbf16>
    %9 = vector.shape_cast %8 : vector<1x16x16x128xbf16> to vector<16x16x128xbf16>
    %10 = vector.shape_cast %9 : vector<16x16x128xbf16> to vector<256x128xbf16>
    %c0_14 = arith.constant 0 : index
    %c0_15 = arith.constant 0 : index
    %11 = vector.load %arg2[%c0_14, %c0_15] : memref<128x128xbf16, #tpu.memory_space<vmem>>, vector<128x128xbf16>
    %cst_16 = arith.constant dense<0.000000e+00> : vector<256x128xf32>
    %12 = tpu.matmul %10, %11, %cst_16 {dimension_numbers = #tpu.dot_dimension_numbers<[1], [0], [0], [1], [0, 0, 1, 1], [], []>} : vector<256x128xbf16>, vector<128x128xbf16>, vector<256x128xf32> -> vector<256x128xf32>
    %c0_17 = arith.constant 0 : index
    %c0_18 = arith.constant 0 : index
    %13 = vector.load %arg3[%c0_17, %c0_18] : memref<1x128xf32, #tpu.memory_space<vmem>>, vector<1x128xf32>
    %14 = vector.broadcast %13 : vector<1x128xf32> to vector<256x128xf32>
    %15 = arith.addf %12, %14 : vector<256x128xf32>
    %cst_19 = arith.constant 0.000000e+00 : f32
    %16 = vector.broadcast %cst_19 : f32 to vector<256x128xf32>
    %17 = arith.cmpf ogt, %15, %16 : vector<256x128xf32>
    %cst_20 = arith.constant 1.000000e-01 : f32
    %18 = vector.broadcast %cst_20 : f32 to vector<256x128xf32>
    %19 = arith.mulf %18, %15 : vector<256x128xf32>
    %20 = arith.select %17, %15, %19 : vector<256x128xi1>, vector<256x128xf32>
    %21 = arith.truncf %20 : vector<256x128xf32> to vector<256x128xbf16>
    %22 = vector.shape_cast %21 : vector<256x128xbf16> to vector<16x16x128xbf16>
    %c1_21 = arith.constant 1 : index
    %c0_22 = arith.constant 0 : index
    %c128 = arith.constant 128 : index
    %23 = vector.load %arg13[%c1_21, %c0_22, %c128] : memref<18x16x384xbf16, #tpu.memory_space<vmem>>, vector<16x16x128xbf16>
    tpu.vector_store %arg13[%c1_21, %c0_22, %c128], %22 {strides = array<i32>} : memref<18x16x384xbf16, #tpu.memory_space<vmem>>, vector<16x16x128xbf16>,
    %24 = vector.extract_strided_slice %22 {offsets = [0, 0, 0], sizes = [16, 15, 128], strides = [1, 1, 1]} : vector<16x16x128xbf16> to vector<16x15x128xbf16>
    %c1_23 = arith.constant 1 : index
    %c1_24 = arith.constant 1 : index
    %c0_25 = arith.constant 0 : index
    %25 = vector.load %arg13[%c1_23, %c1_24, %c0_25] : memref<18x16x384xbf16, #tpu.memory_space<vmem>>, vector<16x15x128xbf16>
    tpu.vector_store %arg13[%c1_23, %c1_24, %c0_25], %24 {strides = array<i32>} : memref<18x16x384xbf16, #tpu.memory_space<vmem>>, vector<16x15x128xbf16>,
    %26 = vector.extract_strided_slice %22 {offsets = [0, 1, 0], sizes = [16, 15, 128], strides = [1, 1, 1]} : vector<16x16x128xbf16> to vector<16x15x128xbf16>
    %c1_26 = arith.constant 1 : index
    %c0_27 = arith.constant 0 : index
    %c256_28 = arith.constant 256 : index
    %27 = vector.load %arg13[%c1_26, %c0_27, %c256_28] : memref<18x16x384xbf16, #tpu.memory_space<vmem>>, vector<16x15x128xbf16>
    tpu.vector_store %arg13[%c1_26, %c0_27, %c256_28], %26 {strides = array<i32>} : memref<18x16x384xbf16, #tpu.memory_space<vmem>>, vector<16x15x128xbf16>,
    %c0_29 = arith.constant 0 : index
    %c0_30 = arith.constant 0 : index
    %c0_31 = arith.constant 0 : index
    %28 = vector.load %arg13[%c0_29, %c0_30, %c0_31] : memref<18x16x384xbf16, #tpu.memory_space<vmem>>, vector<16x16x384xbf16>
    %29 = vector.shape_cast %28 : vector<16x16x384xbf16> to vector<256x384xbf16>
    %c0_32 = arith.constant 0 : index
    %c0_33 = arith.constant 0 : index
    %c0_34 = arith.constant 0 : index
    %30 = vector.load %arg4[%c0_32, %c0_33, %c0_34] : memref<3x384x128xbf16, #tpu.memory_space<vmem>>, vector<1x384x128xbf16>
    %31 = vector.shape_cast %30 : vector<1x384x128xbf16> to vector<384x128xbf16>
    %cst_35 = arith.constant dense<0.000000e+00> : vector<256x128xf32>
    %32 = tpu.matmul %29, %31, %cst_35 {dimension_numbers = #tpu.dot_dimension_numbers<[1], [0], [0], [1], [0, 0, 1, 1], [], []>} : vector<256x384xbf16>, vector<384x128xbf16>, vector<256x128xf32> -> vector<256x128xf32>
    %c1_36 = arith.constant 1 : index
    %c0_37 = arith.constant 0 : index
    %c0_38 = arith.constant 0 : index
    %33 = vector.load %arg13[%c1_36, %c0_37, %c0_38] : memref<18x16x384xbf16, #tpu.memory_space<vmem>>, vector<16x16x384xbf16>
    %34 = vector.shape_cast %33 : vector<16x16x384xbf16> to vector<256x384xbf16>
    %c1_39 = arith.constant 1 : index
    %c0_40 = arith.constant 0 : index
    %c0_41 = arith.constant 0 : index
    %35 = vector.load %arg4[%c1_39, %c0_40, %c0_41] : memref<3x384x128xbf16, #tpu.memory_space<vmem>>, vector<1x384x128xbf16>
    %36 = vector.shape_cast %35 : vector<1x384x128xbf16> to vector<384x128xbf16>
    %cst_42 = arith.constant dense<0.000000e+00> : vector<256x128xf32>
    %37 = tpu.matmul %34, %36, %cst_42 {dimension_numbers = #tpu.dot_dimension_numbers<[1], [0], [0], [1], [0, 0, 1, 1], [], []>} : vector<256x384xbf16>, vector<384x128xbf16>, vector<256x128xf32> -> vector<256x128xf32>
    %38 = arith.addf %32, %37 : vector<256x128xf32>
    %c2 = arith.constant 2 : index
    %c0_43 = arith.constant 0 : index
    %c0_44 = arith.constant 0 : index
    %39 = vector.load %arg13[%c2, %c0_43, %c0_44] : memref<18x16x384xbf16, #tpu.memory_space<vmem>>, vector<16x16x384xbf16>
    %40 = vector.shape_cast %39 : vector<16x16x384xbf16> to vector<256x384xbf16>
    %c2_45 = arith.constant 2 : index
    %c0_46 = arith.constant 0 : index
    %c0_47 = arith.constant 0 : index
    %41 = vector.load %arg4[%c2_45, %c0_46, %c0_47] : memref<3x384x128xbf16, #tpu.memory_space<vmem>>, vector<1x384x128xbf16>
    %42 = vector.shape_cast %41 : vector<1x384x128xbf16> to vector<384x128xbf16>
    %cst_48 = arith.constant dense<0.000000e+00> : vector<256x128xf32>
    %43 = tpu.matmul %40, %42, %cst_48 {dimension_numbers = #tpu.dot_dimension_numbers<[1], [0], [0], [1], [0, 0, 1, 1], [], []>} : vector<256x384xbf16>, vector<384x128xbf16>, vector<256x128xf32> -> vector<256x128xf32>
    %44 = arith.addf %38, %43 : vector<256x128xf32>
    %c0_49 = arith.constant 0 : index
    %c0_50 = arith.constant 0 : index
    %45 = vector.load %arg5[%c0_49, %c0_50] : memref<1x128xf32, #tpu.memory_space<vmem>>, vector<1x128xf32>
    %46 = vector.broadcast %45 : vector<1x128xf32> to vector<256x128xf32>
    %47 = arith.addf %44, %46 : vector<256x128xf32>
    %cst_51 = arith.constant 0.000000e+00 : f32
    %48 = vector.broadcast %cst_51 : f32 to vector<256x128xf32>
    %49 = arith.cmpf ogt, %47, %48 : vector<256x128xf32>
    %cst_52 = arith.constant 1.000000e-01 : f32
    %50 = vector.broadcast %cst_52 : f32 to vector<256x128xf32>
    %51 = arith.mulf %50, %47 : vector<256x128xf32>
    %52 = arith.select %49, %47, %51 : vector<256x128xi1>, vector<256x128xf32>
    %53 = arith.truncf %52 : vector<256x128xf32> to vector<256x128xbf16>
    %c0_53 = arith.constant 0 : index
    %c0_54 = arith.constant 0 : index
    %54 = vector.load %arg6[%c0_53, %c0_54] : memref<128x128xbf16, #tpu.memory_space<vmem>>, vector<128x128xbf16>
    %cst_55 = arith.constant dense<0.000000e+00> : vector<256x128xf32>
    %55 = tpu.matmul %53, %54, %cst_55 {dimension_numbers = #tpu.dot_dimension_numbers<[1], [0], [0], [1], [0, 0, 1, 1], [], []>} : vector<256x128xbf16>, vector<128x128xbf16>, vector<256x128xf32> -> vector<256x128xf32>
    %c0_56 = arith.constant 0 : index
    %c0_57 = arith.constant 0 : index
    %56 = vector.load %arg7[%c0_56, %c0_57] : memref<1x128xf32, #tpu.memory_space<vmem>>, vector<1x128xf32>
    %57 = vector.broadcast %56 : vector<1x128xf32> to vector<256x128xf32>
    %58 = arith.addf %55, %57 : vector<256x128xf32>
    %cst_58 = arith.constant 0.000000e+00 : f32
    %59 = vector.broadcast %cst_58 : f32 to vector<256x128xf32>
    %60 = arith.cmpf ogt, %58, %59 : vector<256x128xf32>
    %cst_59 = arith.constant 1.000000e-01 : f32
    %61 = vector.broadcast %cst_59 : f32 to vector<256x128xf32>
    %62 = arith.mulf %61, %58 : vector<256x128xf32>
    %63 = arith.select %60, %58, %62 : vector<256x128xi1>, vector<256x128xf32>
    %64 = arith.truncf %63 : vector<256x128xf32> to vector<256x128xbf16>
    %65 = vector.shape_cast %64 : vector<256x128xbf16> to vector<16x16x128xbf16>
    %c1_60 = arith.constant 1 : index
    %c0_61 = arith.constant 0 : index
    %c128_62 = arith.constant 128 : index
    %66 = vector.load %arg13[%c1_60, %c0_61, %c128_62] : memref<18x16x384xbf16, #tpu.memory_space<vmem>>, vector<16x16x128xbf16>
    tpu.vector_store %arg13[%c1_60, %c0_61, %c128_62], %65 {strides = array<i32>} : memref<18x16x384xbf16, #tpu.memory_space<vmem>>, vector<16x16x128xbf16>,
    %67 = vector.extract_strided_slice %65 {offsets = [0, 0, 0], sizes = [16, 15, 128], strides = [1, 1, 1]} : vector<16x16x128xbf16> to vector<16x15x128xbf16>
    %c1_63 = arith.constant 1 : index
    %c1_64 = arith.constant 1 : index
    %c0_65 = arith.constant 0 : index
    %68 = vector.load %arg13[%c1_63, %c1_64, %c0_65] : memref<18x16x384xbf16, #tpu.memory_space<vmem>>, vector<16x15x128xbf16>
    tpu.vector_store %arg13[%c1_63, %c1_64, %c0_65], %67 {strides = array<i32>} : memref<18x16x384xbf16, #tpu.memory_space<vmem>>, vector<16x15x128xbf16>,
    %69 = vector.extract_strided_slice %65 {offsets = [0, 1, 0], sizes = [16, 15, 128], strides = [1, 1, 1]} : vector<16x16x128xbf16> to vector<16x15x128xbf16>
    %c1_66 = arith.constant 1 : index
    %c0_67 = arith.constant 0 : index
    %c256_68 = arith.constant 256 : index
    %70 = vector.load %arg13[%c1_66, %c0_67, %c256_68] : memref<18x16x384xbf16, #tpu.memory_space<vmem>>, vector<16x15x128xbf16>
    tpu.vector_store %arg13[%c1_66, %c0_67, %c256_68], %69 {strides = array<i32>} : memref<18x16x384xbf16, #tpu.memory_space<vmem>>, vector<16x15x128xbf16>,
    %c0_69 = arith.constant 0 : index
    %c0_70 = arith.constant 0 : index
    %c0_71 = arith.constant 0 : index
    %71 = vector.load %arg13[%c0_69, %c0_70, %c0_71] : memref<18x16x384xbf16, #tpu.memory_space<vmem>>, vector<16x16x384xbf16>
    %72 = vector.shape_cast %71 : vector<16x16x384xbf16> to vector<256x384xbf16>
    %c0_72 = arith.constant 0 : index
    %c0_73 = arith.constant 0 : index
    %c0_74 = arith.constant 0 : index
    %73 = vector.load %arg8[%c0_72, %c0_73, %c0_74] : memref<3x384x128xbf16, #tpu.memory_space<vmem>>, vector<1x384x128xbf16>
    %74 = vector.shape_cast %73 : vector<1x384x128xbf16> to vector<384x128xbf16>
    %cst_75 = arith.constant dense<0.000000e+00> : vector<256x128xf32>
    %75 = tpu.matmul %72, %74, %cst_75 {dimension_numbers = #tpu.dot_dimension_numbers<[1], [0], [0], [1], [0, 0, 1, 1], [], []>} : vector<256x384xbf16>, vector<384x128xbf16>, vector<256x128xf32> -> vector<256x128xf32>
    %c1_76 = arith.constant 1 : index
    %c0_77 = arith.constant 0 : index
    %c0_78 = arith.constant 0 : index
    %76 = vector.load %arg13[%c1_76, %c0_77, %c0_78] : memref<18x16x384xbf16, #tpu.memory_space<vmem>>, vector<16x16x384xbf16>
    %77 = vector.shape_cast %76 : vector<16x16x384xbf16> to vector<256x384xbf16>
    %c1_79 = arith.constant 1 : index
    %c0_80 = arith.constant 0 : index
    %c0_81 = arith.constant 0 : index
    %78 = vector.load %arg8[%c1_79, %c0_80, %c0_81] : memref<3x384x128xbf16, #tpu.memory_space<vmem>>, vector<1x384x128xbf16>
    %79 = vector.shape_cast %78 : vector<1x384x128xbf16> to vector<384x128xbf16>
    %cst_82 = arith.constant dense<0.000000e+00> : vector<256x128xf32>
    %80 = tpu.matmul %77, %79, %cst_82 {dimension_numbers = #tpu.dot_dimension_numbers<[1], [0], [0], [1], [0, 0, 1, 1], [], []>} : vector<256x384xbf16>, vector<384x128xbf16>, vector<256x128xf32> -> vector<256x128xf32>
    %81 = arith.addf %75, %80 : vector<256x128xf32>
    %c2_83 = arith.constant 2 : index
    %c0_84 = arith.constant 0 : index
    %c0_85 = arith.constant 0 : index
    %82 = vector.load %arg13[%c2_83, %c0_84, %c0_85] : memref<18x16x384xbf16, #tpu.memory_space<vmem>>, vector<16x16x384xbf16>
    %83 = vector.shape_cast %82 : vector<16x16x384xbf16> to vector<256x384xbf16>
    %c2_86 = arith.constant 2 : index
    %c0_87 = arith.constant 0 : index
    %c0_88 = arith.constant 0 : index
    %84 = vector.load %arg8[%c2_86, %c0_87, %c0_88] : memref<3x384x128xbf16, #tpu.memory_space<vmem>>, vector<1x384x128xbf16>
    %85 = vector.shape_cast %84 : vector<1x384x128xbf16> to vector<384x128xbf16>
    %cst_89 = arith.constant dense<0.000000e+00> : vector<256x128xf32>
    %86 = tpu.matmul %83, %85, %cst_89 {dimension_numbers = #tpu.dot_dimension_numbers<[1], [0], [0], [1], [0, 0, 1, 1], [], []>} : vector<256x384xbf16>, vector<384x128xbf16>, vector<256x128xf32> -> vector<256x128xf32>
    %87 = arith.addf %81, %86 : vector<256x128xf32>
    %c0_90 = arith.constant 0 : index
    %c0_91 = arith.constant 0 : index
    %88 = vector.load %arg9[%c0_90, %c0_91] : memref<1x128xf32, #tpu.memory_space<vmem>>, vector<1x128xf32>
    %89 = vector.broadcast %88 : vector<1x128xf32> to vector<256x128xf32>
    %90 = arith.addf %87, %89 : vector<256x128xf32>
    %cst_92 = arith.constant 0.000000e+00 : f32
    %91 = vector.broadcast %cst_92 : f32 to vector<256x128xf32>
    %92 = arith.cmpf ogt, %90, %91 : vector<256x128xf32>
    %cst_93 = arith.constant 1.000000e-01 : f32
    %93 = vector.broadcast %cst_93 : f32 to vector<256x128xf32>
    %94 = arith.mulf %93, %90 : vector<256x128xf32>
    %95 = arith.select %92, %90, %94 : vector<256x128xi1>, vector<256x128xf32>
    %96 = arith.truncf %95 : vector<256x128xf32> to vector<256x128xbf16>
    %c0_94 = arith.constant 0 : index
    %c0_95 = arith.constant 0 : index
    %97 = vector.load %arg10[%c0_94, %c0_95] : memref<128x128xbf16, #tpu.memory_space<vmem>>, vector<128x128xbf16>
    %cst_96 = arith.constant dense<0.000000e+00> : vector<256x128xf32>
    %98 = tpu.matmul %96, %97, %cst_96 {dimension_numbers = #tpu.dot_dimension_numbers<[1], [0], [0], [1], [0, 0, 1, 1], [], []>} : vector<256x128xbf16>, vector<128x128xbf16>, vector<256x128xf32> -> vector<256x128xf32>
    %c0_97 = arith.constant 0 : index
    %c0_98 = arith.constant 0 : index
    %99 = vector.load %arg11[%c0_97, %c0_98] : memref<1x128xf32, #tpu.memory_space<vmem>>, vector<1x128xf32>
    %100 = vector.broadcast %99 : vector<1x128xf32> to vector<256x128xf32>
    %101 = arith.addf %98, %100 : vector<256x128xf32>
    %cst_99 = arith.constant 0.000000e+00 : f32
    %102 = vector.broadcast %cst_99 : f32 to vector<256x128xf32>
    %103 = arith.cmpf ogt, %101, %102 : vector<256x128xf32>
    %cst_100 = arith.constant 1.000000e-01 : f32
    %104 = vector.broadcast %cst_100 : f32 to vector<256x128xf32>
    %105 = arith.mulf %104, %101 : vector<256x128xf32>
    %106 = arith.select %103, %101, %105 : vector<256x128xi1>, vector<256x128xf32>
    %107 = vector.shape_cast %106 : vector<256x128xf32> to vector<16x16x128xf32>
    %c0_101 = arith.constant 0 : index
    %c0_102 = arith.constant 0 : index
    %c0_103 = arith.constant 0 : index
    %c0_104 = arith.constant 0 : index
    %108 = vector.load %arg12[%c0_101, %c0_102, %c0_103, %c0_104] : memref<1x16x16x128xf32, #tpu.memory_space<vmem>>, vector<1x16x16x128xf32>
    %109 = vector.shape_cast %108 : vector<1x16x16x128xf32> to vector<16x16x128xf32>
    %110 = vector.shape_cast %107 : vector<16x16x128xf32> to vector<1x16x16x128xf32>
    tpu.vector_store %arg12[%c0_101, %c0_102, %c0_103, %c0_104], %110 {strides = array<i32>} : memref<1x16x16x128xf32, #tpu.memory_space<vmem>>, vector<1x16x16x128xf32>,
    return
  }
  func.func @transform_0(%arg0: i32) -> (i32, i32, i32, i32) {
    %c0_i32 = arith.constant 0 : i32
    %c0_i32_0 = arith.constant 0 : i32
    %c0_i32_1 = arith.constant 0 : i32
    %c0_i32_2 = arith.constant 0 : i32
    return %arg0, %c0_i32, %c0_i32_0, %c0_i32_1 : i32, i32, i32, i32
  }
  func.func @transform_1(%arg0: i32) -> (i32, i32) {
    %c0_i32 = arith.constant 0 : i32
    %c0_i32_0 = arith.constant 0 : i32
    %c0_i32_1 = arith.constant 0 : i32
    return %c0_i32, %c0_i32_0 : i32, i32
  }
  func.func @transform_2(%arg0: i32) -> (i32, i32) {
    %c0_i32 = arith.constant 0 : i32
    %c0_i32_0 = arith.constant 0 : i32
    %c0_i32_1 = arith.constant 0 : i32
    return %c0_i32, %c0_i32_0 : i32, i32
  }
  func.func @transform_3(%arg0: i32) -> (i32, i32, i32) {
    %c0_i32 = arith.constant 0 : i32
    %c0_i32_0 = arith.constant 0 : i32
    %c0_i32_1 = arith.constant 0 : i32
    %c0_i32_2 = arith.constant 0 : i32
    return %c0_i32, %c0_i32_0, %c0_i32_1 : i32, i32, i32
  }
  func.func @transform_4(%arg0: i32) -> (i32, i32) {
    %c0_i32 = arith.constant 0 : i32
    %c0_i32_0 = arith.constant 0 : i32
    %c0_i32_1 = arith.constant 0 : i32
    return %c0_i32, %c0_i32_0 : i32, i32
  }
  func.func @transform_5(%arg0: i32) -> (i32, i32) {
    %c0_i32 = arith.constant 0 : i32
    %c0_i32_0 = arith.constant 0 : i32
    %c0_i32_1 = arith.constant 0 : i32
    return %c0_i32, %c0_i32_0 : i32, i32
  }
  func.func @transform_6(%arg0: i32) -> (i32, i32) {
    %c0_i32 = arith.constant 0 : i32
    %c0_i32_0 = arith.constant 0 : i32
    %c0_i32_1 = arith.constant 0 : i32
    return %c0_i32, %c0_i32_0 : i32, i32
  }
  func.func @transform_7(%arg0: i32) -> (i32, i32, i32) {
    %c0_i32 = arith.constant 0 : i32
    %c0_i32_0 = arith.constant 0 : i32
    %c0_i32_1 = arith.constant 0 : i32
    %c0_i32_2 = arith.constant 0 : i32
    return %c0_i32, %c0_i32_0, %c0_i32_1 : i32, i32, i32
  }
  func.func @transform_8(%arg0: i32) -> (i32, i32) {
    %c0_i32 = arith.constant 0 : i32
    %c0_i32_0 = arith.constant 0 : i32
    %c0_i32_1 = arith.constant 0 : i32
    return %c0_i32, %c0_i32_0 : i32, i32
  }
  func.func @transform_9(%arg0: i32) -> (i32, i32) {
    %c0_i32 = arith.constant 0 : i32
    %c0_i32_0 = arith.constant 0 : i32
    %c0_i32_1 = arith.constant 0 : i32
    return %c0_i32, %c0_i32_0 : i32, i32
  }
  func.func @transform_10(%arg0: i32) -> (i32, i32) {
    %c0_i32 = arith.constant 0 : i32
    %c0_i32_0 = arith.constant 0 : i32
    %c0_i32_1 = arith.constant 0 : i32
    return %c0_i32, %c0_i32_0 : i32, i32
  }
  func.func @transform_11(%arg0: i32) -> (i32, i32, i32, i32) {
    %c0_i32 = arith.constant 0 : i32
    %c0_i32_0 = arith.constant 0 : i32
    %c0_i32_1 = arith.constant 0 : i32
    %c0_i32_2 = arith.constant 0 : i32
    return %arg0, %c0_i32, %c0_i32_0, %c0_i32_1 : i32, i32, i32, i32
  }
}

</mosaic_0001>

<llo_original>
// kernel: tpu_custom_call.1
$region0: #{tpu_custom_call.1}
  #allocation0 [shape = 'u32[]', space=smem, size = 0x4, offset = 0x4, fixed_abs, tag = 'smem constant byte address 0x4 - core index']
  #allocation1 [shape = 'u32[144,128]{1,0:T(1,128)}', space=vmem, size = 0x12000, scoped, tag = 'internal scratch']
  #allocation2 [shape = 'bf16[18,16,384]{2,1,0:T(16,128)(2,1)}', space=vmem, size = 0x36000, scoped, tag = 'scratch operand']
  %s0 = inlined_call_operand.hbm [shape: bf16[2,16,16,128], index: 0, kind: input, shape index: {}]
  %s1 = inlined_call_operand.hbm [shape: bf16[128,128], index: 1, kind: input, shape index: {}]
  %s2 = inlined_call_operand.hbm [shape: f32[1,128], index: 2, kind: input, shape index: {}]
  %s3 = inlined_call_operand.hbm [shape: bf16[3,384,128], index: 3, kind: input, shape index: {}]
  %s4 = inlined_call_operand.hbm [shape: f32[1,128], index: 4, kind: input, shape index: {}]
  %s5 = inlined_call_operand.hbm [shape: bf16[128,128], index: 5, kind: input, shape index: {}]
  %s6 = inlined_call_operand.hbm [shape: f32[1,128], index: 6, kind: input, shape index: {}]
  %s7 = inlined_call_operand.hbm [shape: bf16[3,384,128], index: 7, kind: input, shape index: {}]
  %s8 = inlined_call_operand.hbm [shape: f32[1,128], index: 8, kind: input, shape index: {}]
  %s9 = inlined_call_operand.hbm [shape: bf16[128,128], index: 9, kind: input, shape index: {}]
  %s10 = inlined_call_operand.hbm [shape: f32[1,128], index: 10, kind: input, shape index: {}]
  %s11 = inlined_call_operand.hbm [shape: f32[2,16,16,128], index: 11, kind: output, shape index: {}]
  %s12 = sld [smem:[#allocation0]]
  $region121: #{tpu_custom_call.1} parent=0
    _
  %s14 = ssub.s32 1, %s12
  %s15 = scalar_select 0, %s14, %s12
  $region1: #{tpu_custom_call.1} parent=0
    #allocation3 [shape = 'u8[131072]{0}', space=vmem, size = 0x20000, scoped, tag = 'input window, operand 0']
    #allocation4 [shape = 's32[2]{0}', space=sflag, size = 0x8, scoped, tag = 'scoped memory for tpu_custom_call.1']
    #allocation5 [shape = 's32[2]{0}', space=sflag, size = 0x8, scoped, tag = 'scoped memory for tpu_custom_call.1']
    #allocation6 [shape = 'u8[32768]{0}', space=vmem, size = 0x8000, scoped, tag = 'input window, operand 1, single buffered']
    #allocation7 [shape = 's32[1]{0}', space=sflag, size = 0x4, scoped, tag = 'scoped memory for tpu_custom_call.1']
    #allocation8 [shape = 'u8[512]{0}', space=vmem, size = 0x400, scoped, tag = 'input window, operand 2, single buffered']
    #allocation9 [shape = 'u8[294912]{0}', space=vmem, size = 0x48000, scoped, tag = 'input window, operand 3, single buffered']
    #allocation10 [shape = 's32[1]{0}', space=sflag, size = 0x4, scoped, tag = 'scoped memory for tpu_custom_call.1']
    #allocation11 [shape = 'u8[512]{0}', space=vmem, size = 0x400, scoped, tag = 'input window, operand 4, single buffered']
    #allocation12 [shape = 'u8[32768]{0}', space=vmem, size = 0x8000, scoped, tag = 'input window, operand 5, single buffered']
    #allocation13 [shape = 's32[1]{0}', space=sflag, size = 0x4, scoped, tag = 'scoped memory for tpu_custom_call.1']
    #allocation14 [shape = 'u8[512]{0}', space=vmem, size = 0x400, scoped, tag = 'input window, operand 6, single buffered']
    #allocation15 [shape = 'u8[294912]{0}', space=vmem, size = 0x48000, scoped, tag = 'input window, operand 7, single buffered']
    #allocation16 [shape = 's32[1]{0}', space=sflag, size = 0x4, scoped, tag = 'scoped memory for tpu_custom_call.1']
    #allocation17 [shape = 'u8[512]{0}', space=vmem, size = 0x400, scoped, tag = 'input window, operand 8, single buffered']
    #allocation18 [shape = 'u8[32768]{0}', space=vmem, size = 0x8000, scoped, tag = 'input window, operand 9, single buffered']
    #allocation19 [shape = 's32[1]{0}', space=sflag, size = 0x4, scoped, tag = 'scoped memory for tpu_custom_call.1']
    #allocation20 [shape = 'u8[512]{0}', space=vmem, size = 0x400, scoped, tag = 'input window, operand 10, single buffered']
    #allocation21 [shape = 'u8[262144]{0}', space=vmem, size = 0x40000, scoped, tag = 'output window, operand 0']
    %16 = vsyncpa [#allocation4], 0
    %s17 = scalar_lea.sflag [#allocation4], 1
    %18 = vsyncpa %s17, 0
    %19 = vsyncpa [#allocation7], 0
    %20 = vsyncpa [#allocation10], 0
    %21 = vsyncpa [#allocation13], 0
    %22 = vsyncpa [#allocation16], 0
    %23 = vsyncpa [#allocation19], 0
    %24 = vsyncpa [#allocation5], 0
    %s25 = scalar_lea.sflag [#allocation5], 1
    %26 = vsyncpa %s25, 0
    loop: start=0, step=1, limit=4
    $region2: #{tpu_custom_call.1} parent=1 // loop_pre_header
      _
    $region3: #{tpu_custom_call.1} parent=1 // loop_header
      %s28 = sphi 0, %s32
      %p29 = scmp.ge.s32.totalorder %s28, 4
      %s38 = sphi 0, %s40
      %s41 = sphi 0, %s38
      %s42 = sphi 0, %s41
      %s58 = sphi 0, %s42
      %s62 = sphi 0, %s62
      %s64 = sphi 0, %s62
      %s65 = sphi 0, %s64
      %s79 = sphi 0, %s65
      %s83 = sphi 0, %s83
      %s85 = sphi 0, %s83
      %s86 = sphi 0, %s85
      %s100 = sphi 0, %s86
      %s104 = sphi 0, %s104
      %s106 = sphi 0, %s104
      %s107 = sphi 0, %s106
      %s121 = sphi 0, %s107
      %s125 = sphi 0, %s125
      %s127 = sphi 0, %s125
      %s128 = sphi 0, %s127
      %s142 = sphi 0, %s128
      %s146 = sphi 0, %s146
      %s148 = sphi 0, %s146
      %s149 = sphi 0, %s148
      %s163 = sphi 0, %s149
      %s167 = sphi 0, %s167
      %s169 = sphi 0, %s167
      %s170 = sphi 0, %s169
      %s184 = sphi 0, %s170
      %s188 = sphi 0, %s188
      %s190 = sphi 0, %s188
      %s191 = sphi 0, %s190
      %s205 = sphi 0, %s191
      %s209 = sphi 0, %s209
      %s211 = sphi 0, %s209
      %s212 = sphi 0, %s211
      %s226 = sphi 0, %s212
      %s230 = sphi 0, %s230
      %s232 = sphi 0, %s230
      %s233 = sphi 0, %s232
      %s247 = sphi 0, %s233
      %s251 = sphi 0, %s251
      %s253 = sphi 0, %s251
      %s254 = sphi 0, %s253
      %s268 = sphi 0, %s254
      %s274 = sphi 0, %s276
      %s277 = sphi 0, %s274
      %s278 = sphi 0, %s277
      %s294 = sphi 0, %s278
    $region4: #{tpu_custom_call.1} parent=1 // loop_header_branch
      %31 = sbr.rel (%p29) target = $region8
    $region5: #{tpu_custom_call.1} parent=1 // loop_body
      %s33 = ssub.s32 %s28, 1
      %s34 = ssub.s32 %s28, 2
      %s35 = sadd.s32 %s28, 1
      %s36 = ssub.s32 %s28, %s35
      %p37 = scmp.eq.s32.totalorder %s36, 0
      %s39 = sadd.s32 %s38, 1
      %s40 = scalar_select %p37, %s38, %s39
      %p43 = pneg %p37
      %p44 = scmp.eq.s32.totalorder %s28, 1
      %p45 = por %p43, %p44
      %p46 = scmp.ne.s32.totalorder %s38, %s41
      %p47 = scmp.eq.s32.totalorder %s28, 0
      %p48 = por %p46, %p47
      %p49 = scmp.ne.s32.totalorder %s38, %s41
      %p50 = scmp.eq.s32.totalorder %s33, 1
      %p51 = por %p49, %p50
      %p52 = scmp.ne.s32.totalorder %s41, %s42
      %p53 = scmp.eq.s32.totalorder %s33, 0
      %p54 = por %p52, %p53
      %p55 = scmp.ne.s32.totalorder %s41, %s42
      %p56 = scmp.eq.s32.totalorder %s34, 1
      %p57 = por %p55, %p56
      %p59 = scmp.ne.s32.totalorder %s42, %s58
      %p60 = scmp.eq.s32.totalorder %s34, 0
      %p61 = por %p59, %p60
      %s63 = sadd.s32 %s62, 1
      %p66 = scmp.eq.s32.totalorder %s28, 1
      %p67 = scmp.ne.s32.totalorder %s62, %s64
      %p68 = scmp.eq.s32.totalorder %s28, 0
      %p69 = por %p67, %p68
      %p70 = scmp.ne.s32.totalorder %s62, %s64
      %p71 = scmp.eq.s32.totalorder %s33, 1
      %p72 = por %p70, %p71
      %p73 = scmp.ne.s32.totalorder %s64, %s65
      %p74 = scmp.eq.s32.totalorder %s33, 0
      %p75 = por %p73, %p74
      %p76 = scmp.ne.s32.totalorder %s64, %s65
      %p77 = scmp.eq.s32.totalorder %s34, 1
      %p78 = por %p76, %p77
      %p80 = scmp.ne.s32.totalorder %s65, %s79
      %p81 = scmp.eq.s32.totalorder %s34, 0
      %p82 = por %p80, %p81
      %s84 = sadd.s32 %s83, 1
      %p87 = scmp.eq.s32.totalorder %s28, 1
      %p88 = scmp.ne.s32.totalorder %s83, %s85
      %p89 = scmp.eq.s32.totalorder %s28, 0
      %p90 = por %p88, %p89
      %p91 = scmp.ne.s32.totalorder %s83, %s85
      %p92 = scmp.eq.s32.totalorder %s33, 1
      %p93 = por %p91, %p92
      %p94 = scmp.ne.s32.totalorder %s85, %s86
      %p95 = scmp.eq.s32.totalorder %s33, 0
      %p96 = por %p94, %p95
      %p97 = scmp.ne.s32.totalorder %s85, %s86
      %p98 = scmp.eq.s32.totalorder %s34, 1
      %p99 = por %p97, %p98
      %p101 = scmp.ne.s32.totalorder %s86, %s100
      %p102 = scmp.eq.s32.totalorder %s34, 0
      %p103 = por %p101, %p102
      %s105 = sadd.s32 %s104, 1
      %p108 = scmp.eq.s32.totalorder %s28, 1
      %p109 = scmp.ne.s32.totalorder %s104, %s106
      %p110 = scmp.eq.s32.totalorder %s28, 0
      %p111 = por %p109, %p110
      %p112 = scmp.ne.s32.totalorder %s104, %s106
      %p113 = scmp.eq.s32.totalorder %s33, 1
      %p114 = por %p112, %p113
      %p115 = scmp.ne.s32.totalorder %s106, %s107
      %p116 = scmp.eq.s32.totalorder %s33, 0
      %p117 = por %p115, %p116
      %p118 = scmp.ne.s32.totalorder %s106, %s107
      %p119 = scmp.eq.s32.totalorder %s34, 1
      %p120 = por %p118, %p119
      %p122 = scmp.ne.s32.totalorder %s107, %s121
      %p123 = scmp.eq.s32.totalorder %s34, 0
      %p124 = por %p122, %p123
      %s126 = sadd.s32 %s125, 1
      %p129 = scmp.eq.s32.totalorder %s28, 1
      %p130 = scmp.ne.s32.totalorder %s125, %s127
      %p131 = scmp.eq.s32.totalorder %s28, 0
      %p132 = por %p130, %p131
      %p133 = scmp.ne.s32.totalorder %s125, %s127
      %p134 = scmp.eq.s32.totalorder %s33, 1
      %p135 = por %p133, %p134
      %p136 = scmp.ne.s32.totalorder %s127, %s128
      %p137 = scmp.eq.s32.totalorder %s33, 0
      %p138 = por %p136, %p137
      %p139 = scmp.ne.s32.totalorder %s127, %s128
      %p140 = scmp.eq.s32.totalorder %s34, 1
      %p141 = por %p139, %p140
      %p143 = scmp.ne.s32.totalorder %s128, %s142
      %p144 = scmp.eq.s32.totalorder %s34, 0
      %p145 = por %p143, %p144
      %s147 = sadd.s32 %s146, 1
      %p150 = scmp.eq.s32.totalorder %s28, 1
      %p151 = scmp.ne.s32.totalorder %s146, %s148
      %p152 = scmp.eq.s32.totalorder %s28, 0
      %p153 = por %p151, %p152
      %p154 = scmp.ne.s32.totalorder %s146, %s148
      %p155 = scmp.eq.s32.totalorder %s33, 1
      %p156 = por %p154, %p155
      %p157 = scmp.ne.s32.totalorder %s148, %s149
      %p158 = scmp.eq.s32.totalorder %s33, 0
      %p159 = por %p157, %p158
      %p160 = scmp.ne.s32.totalorder %s148, %s149
      %p161 = scmp.eq.s32.totalorder %s34, 1
      %p162 = por %p160, %p161
      %p164 = scmp.ne.s32.totalorder %s149, %s163
      %p165 = scmp.eq.s32.totalorder %s34, 0
      %p166 = por %p164, %p165
      %s168 = sadd.s32 %s167, 1
      %p171 = scmp.eq.s32.totalorder %s28, 1
      %p172 = scmp.ne.s32.totalorder %s167, %s169
      %p173 = scmp.eq.s32.totalorder %s28, 0
      %p174 = por %p172, %p173
      %p175 = scmp.ne.s32.totalorder %s167, %s169
      %p176 = scmp.eq.s32.totalorder %s33, 1
      %p177 = por %p175, %p176
      %p178 = scmp.ne.s32.totalorder %s169, %s170
      %p179 = scmp.eq.s32.totalorder %s33, 0
      %p180 = por %p178, %p179
      %p181 = scmp.ne.s32.totalorder %s169, %s170
      %p182 = scmp.eq.s32.totalorder %s34, 1
      %p183 = por %p181, %p182
      %p185 = scmp.ne.s32.totalorder %s170, %s184
      %p186 = scmp.eq.s32.totalorder %s34, 0
      %p187 = por %p185, %p186
      %s189 = sadd.s32 %s188, 1
      %p192 = scmp.eq.s32.totalorder %s28, 1
      %p193 = scmp.ne.s32.totalorder %s188, %s190
      %p194 = scmp.eq.s32.totalorder %s28, 0
      %p195 = por %p193, %p194
      %p196 = scmp.ne.s32.totalorder %s188, %s190
      %p197 = scmp.eq.s32.totalorder %s33, 1
      %p198 = por %p196, %p197
      %p199 = scmp.ne.s32.totalorder %s190, %s191
      %p200 = scmp.eq.s32.totalorder %s33, 0
      %p201 = por %p199, %p200
      %p202 = scmp.ne.s32.totalorder %s190, %s191
      %p203 = scmp.eq.s32.totalorder %s34, 1
      %p204 = por %p202, %p203
      %p206 = scmp.ne.s32.totalorder %s191, %s205
      %p207 = scmp.eq.s32.totalorder %s34, 0
      %p208 = por %p206, %p207
      %s210 = sadd.s32 %s209, 1
      %p213 = scmp.eq.s32.totalorder %s28, 1
      %p214 = scmp.ne.s32.totalorder %s209, %s211
      %p215 = scmp.eq.s32.totalorder %s28, 0
      %p216 = por %p214, %p215
      %p217 = scmp.ne.s32.totalorder %s209, %s211
      %p218 = scmp.eq.s32.totalorder %s33, 1
      %p219 = por %p217, %p218
      %p220 = scmp.ne.s32.totalorder %s211, %s212
      %p221 = scmp.eq.s32.totalorder %s33, 0
      %p222 = por %p220, %p221
      %p223 = scmp.ne.s32.totalorder %s211, %s212
      %p224 = scmp.eq.s32.totalorder %s34, 1
      %p225 = por %p223, %p224
      %p227 = scmp.ne.s32.totalorder %s212, %s226
      %p228 = scmp.eq.s32.totalorder %s34, 0
      %p229 = por %p227, %p228
      %s231 = sadd.s32 %s230, 1
      %p234 = scmp.eq.s32.totalorder %s28, 1
      %p235 = scmp.ne.s32.totalorder %s230, %s232
      %p236 = scmp.eq.s32.totalorder %s28, 0
      %p237 = por %p235, %p236
      %p238 = scmp.ne.s32.totalorder %s230, %s232
      %p239 = scmp.eq.s32.totalorder %s33, 1
      %p240 = por %p238, %p239
      %p241 = scmp.ne.s32.totalorder %s232, %s233
      %p242 = scmp.eq.s32.totalorder %s33, 0
      %p243 = por %p241, %p242
      %p244 = scmp.ne.s32.totalorder %s232, %s233
      %p245 = scmp.eq.s32.totalorder %s34, 1
      %p246 = por %p244, %p245
      %p248 = scmp.ne.s32.totalorder %s233, %s247
      %p249 = scmp.eq.s32.totalorder %s34, 0
      %p250 = por %p248, %p249
      %s252 = sadd.s32 %s251, 1
      %p255 = scmp.eq.s32.totalorder %s28, 1
      %p256 = scmp.ne.s32.totalorder %s251, %s253
      %p257 = scmp.eq.s32.totalorder %s28, 0
      %p258 = por %p256, %p257
      %p259 = scmp.ne.s32.totalorder %s251, %s253
      %p260 = scmp.eq.s32.totalorder %s33, 1
      %p261 = por %p259, %p260
      %p262 = scmp.ne.s32.totalorder %s253, %s254
      %p263 = scmp.eq.s32.totalorder %s33, 0
      %p264 = por %p262, %p263
      %p265 = scmp.ne.s32.totalorder %s253, %s254
      %p266 = scmp.eq.s32.totalorder %s34, 1
      %p267 = por %p265, %p266
      %p269 = scmp.ne.s32.totalorder %s254, %s268
      %p270 = scmp.eq.s32.totalorder %s34, 0
      %p271 = por %p269, %p270
      %s272 = ssub.s32 %s28, %s35
      %p273 = scmp.eq.s32.totalorder %s272, 0
      %s275 = sadd.s32 %s274, 1
      %s276 = scalar_select %p273, %s274, %s275
      %p279 = pneg %p273
      %p280 = scmp.eq.s32.totalorder %s28, 1
      %p281 = por %p279, %p280
      %p282 = scmp.ne.s32.totalorder %s274, %s277
      %p283 = scmp.eq.s32.totalorder %s28, 0
      %p284 = por %p282, %p283
      %p285 = scmp.ne.s32.totalorder %s274, %s277
      %p286 = scmp.eq.s32.totalorder %s33, 1
      %p287 = por %p285, %p286
      %p288 = scmp.ne.s32.totalorder %s277, %s278
      %p289 = scmp.eq.s32.totalorder %s33, 0
      %p290 = por %p288, %p289
      %p291 = scmp.ne.s32.totalorder %s277, %s278
      %p292 = scmp.eq.s32.totalorder %s34, 1
      %p293 = por %p291, %p292
      %p295 = scmp.ne.s32.totalorder %s278, %s294
      %p296 = scmp.eq.s32.totalorder %s34, 0
      %p297 = por %p295, %p296
      %p298 = scmp.le.s32.totalorder 1, %s28
      %p299 = scmp.lt.s32.totalorder %s28, 3
      %p300 = pnand %p298, %p299
      %p301 = pneg %p300
      // Predicated region
      $region9: #{tpu_custom_call.1} parent=5 // pred_check
        _
      $region10: #{tpu_custom_call.1} parent=5 // pred_check_branch
        %303 = sbr.rel (%p300) target = $region12
      $region11: #{tpu_custom_call.1} parent=5 // pred_region
        %s304 = ssub.s32 %s28, 1
        // Predicated region
        $region13: #{tpu_custom_call.1} parent=11 // pred_check
          %p305 = pneg %p75
        $region14: #{tpu_custom_call.1} parent=11 // pred_check_branch
          %307 = sbr.rel (%p305) target = $region16
        $region15: #{tpu_custom_call.1} parent=11 // pred_region
          %s309 = ssub.s32 1024, 1024
          %310 = vsyncadd [#allocation7], %s309
          %s311 = sshll.u32 [#allocation6], 4
          %s312 = int_to_ptr.vmem [resolvable:$true] %s311
          %317 = dma.hbm_to_vmem [thread:$0]  %s1, 1024, %s312, [#allocation7], 64, 64, 4
        $region16: #{tpu_custom_call.1} parent=11 // pred_fallthru
          _
        // Predicated region
        $region17: #{tpu_custom_call.1} parent=11 // pred_check
          %p318 = pneg %p96
        $region18: #{tpu_custom_call.1} parent=11 // pred_check_branch
          %320 = sbr.rel (%p318) target = $region20
        $region19: #{tpu_custom_call.1} parent=11 // pred_region
          %s322 = ssub.s32 16, 16
          %323 = vsyncadd [#allocation7], %s322
          %s325 = sshll.u32 [#allocation8], 4
          %s326 = int_to_ptr.vmem [resolvable:$true] %s325
          %328 = dma.hbm_to_vmem [thread:$0]  %s2, 16, %s326, [#allocation7]
        $region20: #{tpu_custom_call.1} parent=11 // pred_fallthru
          _
        // Predicated region
        $region21: #{tpu_custom_call.1} parent=11 // pred_check
          %p329 = pneg %p117
        $region22: #{tpu_custom_call.1} parent=11 // pred_check_branch
          %331 = sbr.rel (%p329) target = $region24
        $region23: #{tpu_custom_call.1} parent=11 // pred_region
          %s333 = ssub.s32 9216, 9216
          %334 = vsyncadd [#allocation10], %s333
          %s335 = sshll.u32 [#allocation9], 4
          %s336 = int_to_ptr.vmem [resolvable:$true] %s335
          %341 = dma.hbm_to_vmem [thread:$0]  %s3, 9216, %s336, [#allocation10], 64, 64, 4
        $region24: #{tpu_custom_call.1} parent=11 // pred_fallthru
          _
        // Predicated region
        $region25: #{tpu_custom_call.1} parent=11 // pred_check
          %p342 = pneg %p138
        $region26: #{tpu_custom_call.1} parent=11 // pred_check_branch
          %344 = sbr.rel (%p342) target = $region28
        $region27: #{tpu_custom_call.1} parent=11 // pred_region
          %s346 = ssub.s32 16, 16
          %347 = vsyncadd [#allocation10], %s346
          %s349 = sshll.u32 [#allocation11], 4
          %s350 = int_to_ptr.vmem [resolvable:$true] %s349
          %352 = dma.hbm_to_vmem [thread:$0]  %s4, 16, %s350, [#allocation10]
        $region28: #{tpu_custom_call.1} parent=11 // pred_fallthru
          _
        // Predicated region
        $region29: #{tpu_custom_call.1} parent=11 // pred_check
          %p353 = pneg %p159
        $region30: #{tpu_custom_call.1} parent=11 // pred_check_branch
          %355 = sbr.rel (%p353) target = $region32
        $region31: #{tpu_custom_call.1} parent=11 // pred_region
          %s357 = ssub.s32 1024, 1024
          %358 = vsyncadd [#allocation13], %s357
          %s359 = sshll.u32 [#allocation12], 4
          %s360 = int_to_ptr.vmem [resolvable:$true] %s359
          %365 = dma.hbm_to_vmem [thread:$0]  %s5, 1024, %s360, [#allocation13], 64, 64, 4
        $region32: #{tpu_custom_call.1} parent=11 // pred_fallthru
          _
        // Predicated region
        $region33: #{tpu_custom_call.1} parent=11 // pred_check
          %p366 = pneg %p180
        $region34: #{tpu_custom_call.1} parent=11 // pred_check_branch
          %368 = sbr.rel (%p366) target = $region36
        $region35: #{tpu_custom_call.1} parent=11 // pred_region
          %s370 = ssub.s32 16, 16
          %371 = vsyncadd [#allocation13], %s370
          %s373 = sshll.u32 [#allocation14], 4
          %s374 = int_to_ptr.vmem [resolvable:$true] %s373
          %376 = dma.hbm_to_vmem [thread:$0]  %s6, 16, %s374, [#allocation13]
        $region36: #{tpu_custom_call.1} parent=11 // pred_fallthru
          _
        // Predicated region
        $region37: #{tpu_custom_call.1} parent=11 // pred_check
          %p377 = pneg %p201
        $region38: #{tpu_custom_call.1} parent=11 // pred_check_branch
          %379 = sbr.rel (%p377) target = $region40
        $region39: #{tpu_custom_call.1} parent=11 // pred_region
          %s381 = ssub.s32 9216, 9216
          %382 = vsyncadd [#allocation16], %s381
          %s383 = sshll.u32 [#allocation15], 4
          %s384 = int_to_ptr.vmem [resolvable:$true] %s383
          %389 = dma.hbm_to_vmem [thread:$0]  %s7, 9216, %s384, [#allocation16], 64, 64, 4
        $region40: #{tpu_custom_call.1} parent=11 // pred_fallthru
          _
        // Predicated region
        $region41: #{tpu_custom_call.1} parent=11 // pred_check
          %p390 = pneg %p222
        $region42: #{tpu_custom_call.1} parent=11 // pred_check_branch
          %392 = sbr.rel (%p390) target = $region44
        $region43: #{tpu_custom_call.1} parent=11 // pred_region
          %s394 = ssub.s32 16, 16
          %395 = vsyncadd [#allocation16], %s394
          %s397 = sshll.u32 [#allocation17], 4
          %s398 = int_to_ptr.vmem [resolvable:$true] %s397
          %400 = dma.hbm_to_vmem [thread:$0]  %s8, 16, %s398, [#allocation16]
        $region44: #{tpu_custom_call.1} parent=11 // pred_fallthru
          _
        // Predicated region
        $region45: #{tpu_custom_call.1} parent=11 // pred_check
          %p401 = pneg %p243
        $region46: #{tpu_custom_call.1} parent=11 // pred_check_branch
          %403 = sbr.rel (%p401) target = $region48
        $region47: #{tpu_custom_call.1} parent=11 // pred_region
          %s405 = ssub.s32 1024, 1024
          %406 = vsyncadd [#allocation19], %s405
          %s407 = sshll.u32 [#allocation18], 4
          %s408 = int_to_ptr.vmem [resolvable:$true] %s407
          %413 = dma.hbm_to_vmem [thread:$0]  %s9, 1024, %s408, [#allocation19], 64, 64, 4
        $region48: #{tpu_custom_call.1} parent=11 // pred_fallthru
          _
        // Predicated region
        $region49: #{tpu_custom_call.1} parent=11 // pred_check
          %p414 = pneg %p264
        $region50: #{tpu_custom_call.1} parent=11 // pred_check_branch
          %416 = sbr.rel (%p414) target = $region52
        $region51: #{tpu_custom_call.1} parent=11 // pred_region
          %s418 = ssub.s32 16, 16
          %419 = vsyncadd [#allocation19], %s418
          %s421 = sshll.u32 [#allocation20], 4
          %s422 = int_to_ptr.vmem [resolvable:$true] %s421
          %424 = dma.hbm_to_vmem [thread:$0]  %s10, 16, %s422, [#allocation19]
        $region52: #{tpu_custom_call.1} parent=11 // pred_fallthru
          _
      $region12: #{tpu_custom_call.1} parent=5 // pred_fallthru
        _
      %p425 = scmp.lt.s32.totalorder %s28, 2
      // Predicated region
      $region53: #{tpu_custom_call.1} parent=5 // pred_check
        %p426 = pneg %p425
      $region54: #{tpu_custom_call.1} parent=5 // pred_check_branch
        %428 = sbr.rel (%p426) target = $region56
      $region55: #{tpu_custom_call.1} parent=5 // pred_region
        // Predicated region
        $region57: #{tpu_custom_call.1} parent=55 // pred_check
          %p429 = pneg %p48
        $region58: #{tpu_custom_call.1} parent=55 // pred_check_branch
          %431 = sbr.rel (%p429) target = $region60
        $region59: #{tpu_custom_call.1} parent=55 // pred_region
          %s432 = sand.u32 %s38, 1
          %s433 = scalar_lea.sflag [#allocation4], %s432
          %s434 = sand.u32 %s38, 1
          %s435 = smul.addr %s434, 128
          %s436 = scalar_lea.vmem [#allocation3], %s435
          %s438 = ssub.s32 2048, 2048
          %439 = vsyncadd %s433, %s438
          %s440 = smul.addr %s28, 32
          %s441 = smul.addr %s440, 64
          %s442 = scalar_lea.hbm %s0, %s441
          %s443 = sshll.u32 %s436, 4
          %s444 = int_to_ptr.vmem [resolvable:$true] %s443
          %449 = dma.hbm_to_vmem [thread:$0]  %s442, 2048, %s444, %s433, 64, 64, 4
        $region60: #{tpu_custom_call.1} parent=55 // pred_fallthru
          _
      $region56: #{tpu_custom_call.1} parent=5 // pred_fallthru
        _
      %p450 = scmp.le.s32.totalorder 1, %s28
      %p451 = scmp.lt.s32.totalorder %s28, 3
      %p452 = pnand %p450, %p451
      %p453 = pneg %p452
      // Predicated region
      $region61: #{tpu_custom_call.1} parent=5 // pred_check
        _
      $region62: #{tpu_custom_call.1} parent=5 // pred_check_branch
        %455 = sbr.rel (%p452) target = $region64
      $region63: #{tpu_custom_call.1} parent=5 // pred_region
        %s456 = ssub.s32 %s28, 1
        %s457 = sand.u32 %s41, 1
        %s458 = scalar_lea.sflag [#allocation4], %s457
        %s459 = sand.u32 %s41, 1
        %s460 = smul.addr %s459, 128
        %s461 = scalar_lea.vmem [#allocation3], %s460
        // Predicated region
        $region65: #{tpu_custom_call.1} parent=63 // pred_check
          %p462 = pneg %p54
        $region66: #{tpu_custom_call.1} parent=63 // pred_check_branch
          %464 = sbr.rel (%p462) target = $region68
        $region67: #{tpu_custom_call.1} parent=63 // pred_region
          %465 = dma.done %s458, 2048
        $region68: #{tpu_custom_call.1} parent=63 // pred_fallthru
          _
        // Predicated region
        $region69: #{tpu_custom_call.1} parent=63 // pred_check
          %p466 = pneg %p75
        $region70: #{tpu_custom_call.1} parent=63 // pred_check_branch
          %468 = sbr.rel (%p466) target = $region72
        $region71: #{tpu_custom_call.1} parent=63 // pred_region
          %469 = dma.done [#allocation7], 1024
        $region72: #{tpu_custom_call.1} parent=63 // pred_fallthru
          _
        // Predicated region
        $region73: #{tpu_custom_call.1} parent=63 // pred_check
          %p470 = pneg %p96
        $region74: #{tpu_custom_call.1} parent=63 // pred_check_branch
          %472 = sbr.rel (%p470) target = $region76
        $region75: #{tpu_custom_call.1} parent=63 // pred_region
          %473 = dma.done [#allocation7], 16
        $region76: #{tpu_custom_call.1} parent=63 // pred_fallthru
          _
        // Predicated region
        $region77: #{tpu_custom_call.1} parent=63 // pred_check
          %p474 = pneg %p117
        $region78: #{tpu_custom_call.1} parent=63 // pred_check_branch
          %476 = sbr.rel (%p474) target = $region80
        $region79: #{tpu_custom_call.1} parent=63 // pred_region
          %477 = dma.done [#allocation10], 9216
        $region80: #{tpu_custom_call.1} parent=63 // pred_fallthru
          _
        // Predicated region
        $region81: #{tpu_custom_call.1} parent=63 // pred_check
          %p478 = pneg %p138
        $region82: #{tpu_custom_call.1} parent=63 // pred_check_branch
          %480 = sbr.rel (%p478) target = $region84
        $region83: #{tpu_custom_call.1} parent=63 // pred_region
          %481 = dma.done [#allocation10], 16
        $region84: #{tpu_custom_call.1} parent=63 // pred_fallthru
          _
        // Predicated region
        $region85: #{tpu_custom_call.1} parent=63 // pred_check
          %p482 = pneg %p159
        $region86: #{tpu_custom_call.1} parent=63 // pred_check_branch
          %484 = sbr.rel (%p482) target = $region88
        $region87: #{tpu_custom_call.1} parent=63 // pred_region
          %485 = dma.done [#allocation13], 1024
        $region88: #{tpu_custom_call.1} parent=63 // pred_fallthru
          _
        // Predicated region
        $region89: #{tpu_custom_call.1} parent=63 // pred_check
          %p486 = pneg %p180
        $region90: #{tpu_custom_call.1} parent=63 // pred_check_branch
          %488 = sbr.rel (%p486) target = $region92
        $region91: #{tpu_custom_call.1} parent=63 // pred_region
          %489 = dma.done [#allocation13], 16
        $region92: #{tpu_custom_call.1} parent=63 // pred_fallthru
          _
        // Predicated region
        $region93: #{tpu_custom_call.1} parent=63 // pred_check
          %p490 = pneg %p201
        $region94: #{tpu_custom_call.1} parent=63 // pred_check_branch
          %492 = sbr.rel (%p490) target = $region96
        $region95: #{tpu_custom_call.1} parent=63 // pred_region
          %493 = dma.done [#allocation16], 9216
        $region96: #{tpu_custom_call.1} parent=63 // pred_fallthru
          _
        // Predicated region
        $region97: #{tpu_custom_call.1} parent=63 // pred_check
          %p494 = pneg %p222
        $region98: #{tpu_custom_call.1} parent=63 // pred_check_branch
          %496 = sbr.rel (%p494) target = $region100
        $region99: #{tpu_custom_call.1} parent=63 // pred_region
          %497 = dma.done [#allocation16], 16
        $region100: #{tpu_custom_call.1} parent=63 // pred_fallthru
          _
        // Predicated region
        $region101: #{tpu_custom_call.1} parent=63 // pred_check
          %p498 = pneg %p243
        $region102: #{tpu_custom_call.1} parent=63 // pred_check_branch
          %500 = sbr.rel (%p498) target = $region104
        $region103: #{tpu_custom_call.1} parent=63 // pred_region
          %501 = dma.done [#allocation19], 1024
        $region104: #{tpu_custom_call.1} parent=63 // pred_fallthru
          _
        // Predicated region
        $region105: #{tpu_custom_call.1} parent=63 // pred_check
          %p502 = pneg %p264
        $region106: #{tpu_custom_call.1} parent=63 // pred_check_branch
          %504 = sbr.rel (%p502) target = $region108
        $region107: #{tpu_custom_call.1} parent=63 // pred_region
          %505 = dma.done [#allocation19], 16
        $region108: #{tpu_custom_call.1} parent=63 // pred_fallthru
          _
        %s506 = sand.u32 %s41, 1
        %s507 = scalar_lea.sflag [#allocation4], %s506
        %s508 = sand.u32 %s41, 1
        %s509 = smul.addr %s508, 128
        %s510 = scalar_lea.vmem [#allocation3], %s509
        %p511 = pneg %p54
        %p512 = pneg %p51
        %p513 = pneg %p75
        %p514 = pneg %p72
        %p515 = pneg %p96
        %p516 = pneg %p93
        %p517 = pneg %p117
        %p518 = pneg %p114
        %p519 = pneg %p138
        %p520 = pneg %p135
        %p521 = pneg %p159
        %p522 = pneg %p156
        %p523 = pneg %p180
        %p524 = pneg %p177
        %p525 = pneg %p201
        %p526 = pneg %p198
        %p527 = pneg %p222
        %p528 = pneg %p219
        %p529 = pneg %p243
        %p530 = pneg %p240
        %p531 = pneg %p264
        %p532 = pneg %p261
        %p533 = pneg %p290
        %p534 = pneg %p287
        %s535 = sand.u32 %s277, 1
        %s536 = scalar_lea.sflag [#allocation5], %s535
        %s537 = sand.u32 %s277, 1
        %s538 = smul.addr %s537, 256
        %s539 = scalar_lea.vmem [#allocation21], %s538
        %541 = vst [vmem:[#allocation2] sm:$0xff] 0
        %542 = vst [vmem:[#allocation2 + $0x8] sm:$0xff] 0
        %543 = vst [vmem:[#allocation2 + $0x10] sm:$0xff] 0
        %s544 = scalar_lea.vmem [#allocation2], 408
        %545 = vst [vmem:[%s544] sm:$0xff] 0
        %546 = vst [vmem:[%s544 + $0x8] sm:$0xff] 0
        %547 = vst [vmem:[%s544 + $0x10] sm:$0xff] 0
        %s548 = scalar_lea.vmem [#allocation2], 24
        %vm549 = vcmask 1040384
        %vm550 = vsmask.f32 256
        %vm551 = vmand %vm549, %vm550
        %v552 = vld [vmem:[%s548] sm:$0x1]
        %v553 = vsel %vm551, 0, %v552
        %554 = vst [vmem:[%s548] sm:$0x1] %v553
        %v555 = vld [vmem:[%s548 + $0x18] sm:$0x1]
        %v556 = vsel %vm551, 0, %v555
        %557 = vst [vmem:[%s548 + $0x18] sm:$0x1] %v556
        %v558 = vld [vmem:[%s548 + $0x30] sm:$0x1]
        %v559 = vsel %vm551, 0, %v558
        %560 = vst [vmem:[%s548 + $0x30] sm:$0x1] %v559
        %v561 = vld [vmem:[%s548 + $0x48] sm:$0x1]
        %v562 = vsel %vm551, 0, %v561
        %563 = vst [vmem:[%s548 + $0x48] sm:$0x1] %v562
        %v564 = vld [vmem:[%s548 + $0x60] sm:$0x1]
        %v565 = vsel %vm551, 0, %v564
        %566 = vst [vmem:[%s548 + $0x60] sm:$0x1] %v565
        %v567 = vld [vmem:[%s548 + $0x78] sm:$0x1]
        %v568 = vsel %vm551, 0, %v567
        %569 = vst [vmem:[%s548 + $0x78] sm:$0x1] %v568
        %v570 = vld [vmem:[%s548 + $0x90] sm:$0x1]
        %v571 = vsel %vm551, 0, %v570
        %572 = vst [vmem:[%s548 + $0x90] sm:$0x1] %v571
        %v573 = vld [vmem:[%s548 + $0xa8] sm:$0x1]
        %v574 = vsel %vm551, 0, %v573
        %575 = vst [vmem:[%s548 + $0xa8] sm:$0x1] %v574
        %v576 = vld [vmem:[%s548 + $0xc0] sm:$0x1]
        %v577 = vsel %vm551, 0, %v576
        %578 = vst [vmem:[%s548 + $0xc0] sm:$0x1] %v577
        %v579 = vld [vmem:[%s548 + $0xd8] sm:$0x1]
        %v580 = vsel %vm551, 0, %v579
        %581 = vst [vmem:[%s548 + $0xd8] sm:$0x1] %v580
        %v582 = vld [vmem:[%s548 + $0xf0] sm:$0x1]
        %v583 = vsel %vm551, 0, %v582
        %584 = vst [vmem:[%s548 + $0xf0] sm:$0x1] %v583
        %v585 = vld [vmem:[%s548 + $0x108] sm:$0x1]
        %v586 = vsel %vm551, 0, %v585
        %587 = vst [vmem:[%s548 + $0x108] sm:$0x1] %v586
        %v588 = vld [vmem:[%s548 + $0x120] sm:$0x1]
        %v589 = vsel %vm551, 0, %v588
        %590 = vst [vmem:[%s548 + $0x120] sm:$0x1] %v589
        %v591 = vld [vmem:[%s548 + $0x138] sm:$0x1]
        %v592 = vsel %vm551, 0, %v591
        %593 = vst [vmem:[%s548 + $0x138] sm:$0x1] %v592
        %v594 = vld [vmem:[%s548 + $0x150] sm:$0x1]
        %v595 = vsel %vm551, 0, %v594
        %596 = vst [vmem:[%s548 + $0x150] sm:$0x1] %v595
        %v597 = vld [vmem:[%s548 + $0x168] sm:$0x1]
        %v598 = vsel %vm551, 0, %v597
        %599 = vst [vmem:[%s548 + $0x168] sm:$0x1] %v598
        %vm600 = vcmask 1047559
        %vm601 = vsmask.f32 7966
        %vm602 = vmand %vm600, %vm601
        %v603 = vld [vmem:[%s548 + $0x10] sm:$0x80]
        %v604 = vsel %vm602, 0, %v603
        %605 = vst [vmem:[%s548 + $0x10] sm:$0x80] %v604
        %v606 = vld [vmem:[%s548 + $0x28] sm:$0x80]
        %v607 = vsel %vm602, 0, %v606
        %608 = vst [vmem:[%s548 + $0x28] sm:$0x80] %v607
        %v609 = vld [vmem:[%s548 + $0x40] sm:$0x80]
        %v610 = vsel %vm602, 0, %v609
        %611 = vst [vmem:[%s548 + $0x40] sm:$0x80] %v610
        %v612 = vld [vmem:[%s548 + $0x58] sm:$0x80]
        %v613 = vsel %vm602, 0, %v612
        %614 = vst [vmem:[%s548 + $0x58] sm:$0x80] %v613
        %v615 = vld [vmem:[%s548 + $0x70] sm:$0x80]
        %v616 = vsel %vm602, 0, %v615
        %617 = vst [vmem:[%s548 + $0x70] sm:$0x80] %v616
        %v618 = vld [vmem:[%s548 + $0x88] sm:$0x80]
        %v619 = vsel %vm602, 0, %v618
        %620 = vst [vmem:[%s548 + $0x88] sm:$0x80] %v619
        %v621 = vld [vmem:[%s548 + $0xa0] sm:$0x80]
        %v622 = vsel %vm602, 0, %v621
        %623 = vst [vmem:[%s548 + $0xa0] sm:$0x80] %v622
        %v624 = vld [vmem:[%s548 + $0xb8] sm:$0x80]
        %v625 = vsel %vm602, 0, %v624
        %626 = vst [vmem:[%s548 + $0xb8] sm:$0x80] %v625
        %v627 = vld [vmem:[%s548 + $0xd0] sm:$0x80]
        %v628 = vsel %vm602, 0, %v627
        %629 = vst [vmem:[%s548 + $0xd0] sm:$0x80] %v628
        %v630 = vld [vmem:[%s548 + $0xe8] sm:$0x80]
        %v631 = vsel %vm602, 0, %v630
        %632 = vst [vmem:[%s548 + $0xe8] sm:$0x80] %v631
        %v633 = vld [vmem:[%s548 + $0x100] sm:$0x80]
        %v634 = vsel %vm602, 0, %v633
        %635 = vst [vmem:[%s548 + $0x100] sm:$0x80] %v634
        %v636 = vld [vmem:[%s548 + $0x118] sm:$0x80]
        %v637 = vsel %vm602, 0, %v636
        %638 = vst [vmem:[%s548 + $0x118] sm:$0x80] %v637
        %v639 = vld [vmem:[%s548 + $0x130] sm:$0x80]
        %v640 = vsel %vm602, 0, %v639
        %641 = vst [vmem:[%s548 + $0x130] sm:$0x80] %v640
        %v642 = vld [vmem:[%s548 + $0x148] sm:$0x80]
        %v643 = vsel %vm602, 0, %v642
        %644 = vst [vmem:[%s548 + $0x148] sm:$0x80] %v643
        %v645 = vld [vmem:[%s548 + $0x160] sm:$0x80]
        %v646 = vsel %vm602, 0, %v645
        %647 = vst [vmem:[%s548 + $0x160] sm:$0x80] %v646
        %v648 = vld [vmem:[%s548 + $0x178] sm:$0x80]
        %v649 = vsel %vm602, 0, %v648
        %650 = vst [vmem:[%s548 + $0x178] sm:$0x80] %v649
        %v651 = vld [vmem:[%s461] sm:$0xf]
        %v652 = vld [vmem:[%s461 + $0x4] sm:$0xf]
        %v653 = vld [vmem:[%s461 + $0x8] sm:$0xf]
        %v654 = vld [vmem:[%s461 + $0xc] sm:$0xf]
        %v655 = vld [vmem:[%s461 + $0x10] sm:$0xf]
        %v656 = vld [vmem:[%s461 + $0x14] sm:$0xf]
        %v657 = vld [vmem:[%s461 + $0x18] sm:$0xf]
        %v658 = vld [vmem:[%s461 + $0x1c] sm:$0xf]
        %v659 = vld [vmem:[%s461 + $0x20] sm:$0xf]
        %v660 = vld [vmem:[%s461 + $0x24] sm:$0xf]
        %v661 = vld [vmem:[%s461 + $0x28] sm:$0xf]
        %v662 = vld [vmem:[%s461 + $0x2c] sm:$0xf]
        %v663 = vld [vmem:[%s461 + $0x30] sm:$0xf]
        %v664 = vld [vmem:[%s461 + $0x34] sm:$0xf]
        %v665 = vld [vmem:[%s461 + $0x38] sm:$0xf]
        %v666 = vld [vmem:[%s461 + $0x3c] sm:$0xf]
        %v667 = vld [vmem:[%s461 + $0x40] sm:$0xf]
        %v668 = vld [vmem:[%s461 + $0x44] sm:$0xf]
        %v669 = vld [vmem:[%s461 + $0x48] sm:$0xf]
        %v670 = vld [vmem:[%s461 + $0x4c] sm:$0xf]
        %v671 = vld [vmem:[%s461 + $0x50] sm:$0xf]
        %v672 = vld [vmem:[%s461 + $0x54] sm:$0xf]
        %v673 = vld [vmem:[%s461 + $0x58] sm:$0xf]
        %v674 = vld [vmem:[%s461 + $0x5c] sm:$0xf]
        %v675 = vld [vmem:[%s461 + $0x60] sm:$0xf]
        %v676 = vld [vmem:[%s461 + $0x64] sm:$0xf]
        %v677 = vld [vmem:[%s461 + $0x68] sm:$0xf]
        %v678 = vld [vmem:[%s461 + $0x6c] sm:$0xf]
        %v679 = vld [vmem:[%s461 + $0x70] sm:$0xf]
        %v680 = vld [vmem:[%s461 + $0x74] sm:$0xf]
        %v681 = vld [vmem:[%s461 + $0x78] sm:$0xf]
        %v682 = vld [vmem:[%s461 + $0x7c] sm:$0xf]
        %v683 = vld [vmem:[#allocation6] sm:$0xf]
        %v684 = vld [vmem:[#allocation6 + $0x4] sm:$0xf]
        %v685 = vld [vmem:[#allocation6 + $0x8] sm:$0xf]
        %v686 = vld [vmem:[#allocation6 + $0xc] sm:$0xf]
        %v687 = vld [vmem:[#allocation6 + $0x10] sm:$0xf]
        %v688 = vld [vmem:[#allocation6 + $0x14] sm:$0xf]
        %v689 = vld [vmem:[#allocation6 + $0x18] sm:$0xf]
        %v690 = vld [vmem:[#allocation6 + $0x1c] sm:$0xf]
        %v691 = vld [vmem:[#allocation6 + $0x20] sm:$0xf]
        %v692 = vld [vmem:[#allocation6 + $0x24] sm:$0xf]
        %v693 = vld [vmem:[#allocation6 + $0x28] sm:$0xf]
        %v694 = vld [vmem:[#allocation6 + $0x2c] sm:$0xf]
        %v695 = vld [vmem:[#allocation6 + $0x30] sm:$0xf]
        %v696 = vld [vmem:[#allocation6 + $0x34] sm:$0xf]
        %v697 = vld [vmem:[#allocation6 + $0x38] sm:$0xf]
        %v698 = vld [vmem:[#allocation6 + $0x3c] sm:$0xf]
        %v699 = vld [vmem:[#allocation8] sm:$0x1]
        %v701 = vlaneseq
        %v702 = vshrl.u32 %v701, 7
        %v703 = vsub.s32 0, %v702
        %v704 = vrot.slane %v699, %v703
        %v738 = vunpack.c.l.b16 %v651
        %v739 = vunpack.c.l.b16 %v652
        %v740 = vunpack.c.l.b16 %v653
        %v741 = vunpack.c.l.b16 %v654
        %v742 = vunpack.c.l.b16 %v655
        %v743 = vunpack.c.l.b16 %v656
        %v744 = vunpack.c.l.b16 %v657
        %v745 = vunpack.c.l.b16 %v658
        %v746 = vunpack.c.l.b16 %v659
        %v747 = vunpack.c.l.b16 %v660
        %v748 = vunpack.c.l.b16 %v661
        %v749 = vunpack.c.l.b16 %v662
        %v750 = vunpack.c.l.b16 %v663
        %v751 = vunpack.c.l.b16 %v664
        %v752 = vunpack.c.l.b16 %v665
        %v753 = vunpack.c.l.b16 %v666
        %v754 = vunpack.c.l.b16 %v667
        %v755 = vunpack.c.l.b16 %v668
        %v756 = vunpack.c.l.b16 %v669
        %v757 = vunpack.c.l.b16 %v670
        %v758 = vunpack.c.l.b16 %v671
        %v759 = vunpack.c.l.b16 %v672
        %v760 = vunpack.c.l.b16 %v673
        %v761 = vunpack.c.l.b16 %v674
        %v762 = vunpack.c.l.b16 %v675
        %v763 = vunpack.c.l.b16 %v676
        %v764 = vunpack.c.l.b16 %v677
        %v765 = vunpack.c.l.b16 %v678
        %v766 = vunpack.c.l.b16 %v679
        %v767 = vunpack.c.l.b16 %v680
        %v768 = vunpack.c.l.b16 %v681
        %v769 = vunpack.c.l.b16 %v682
        %v770 = vpack.c.b16 %v739, %v738
        %v771 = vpack.c.b16 %v741, %v740
        %v772 = vpack.c.b16 %v743, %v742
        %v773 = vpack.c.b16 %v745, %v744
        %v774 = vpack.c.b16 %v747, %v746
        %v775 = vpack.c.b16 %v749, %v748
        %v776 = vpack.c.b16 %v751, %v750
        %v777 = vpack.c.b16 %v753, %v752
        %v778 = vpack.c.b16 %v755, %v754
        %v779 = vpack.c.b16 %v757, %v756
        %v780 = vpack.c.b16 %v759, %v758
        %v781 = vpack.c.b16 %v761, %v760
        %v782 = vpack.c.b16 %v763, %v762
        %v783 = vpack.c.b16 %v765, %v764
        %v784 = vpack.c.b16 %v767, %v766
        %v785 = vpack.c.b16 %v769, %v768
        %v818 = vunpack.c.l.b16 %v683
        %v819 = vunpack.c.l.b16 %v684
        %v820 = vunpack.c.l.b16 %v685
        %v821 = vunpack.c.l.b16 %v686
        %v822 = vunpack.c.l.b16 %v687
        %v823 = vunpack.c.l.b16 %v688
        %v824 = vunpack.c.l.b16 %v689
        %v825 = vunpack.c.l.b16 %v690
        %v826 = vunpack.c.l.b16 %v691
        %v827 = vunpack.c.l.b16 %v692
        %v828 = vunpack.c.l.b16 %v693
        %v829 = vunpack.c.l.b16 %v694
        %v830 = vunpack.c.l.b16 %v695
        %v831 = vunpack.c.l.b16 %v696
        %v832 = vunpack.c.l.b16 %v697
        %v833 = vunpack.c.l.b16 %v698
        %v834 = vpack.c.b16 %v819, %v818
        %v835 = vpack.c.b16 %v821, %v820
        %v836 = vpack.c.b16 %v823, %v822
        %v837 = vpack.c.b16 %v825, %v824
        %v838 = vpack.c.b16 %v827, %v826
        %v839 = vpack.c.b16 %v829, %v828
        %v840 = vpack.c.b16 %v831, %v830
        %v841 = vpack.c.b16 %v833, %v832
        %850 = vmatprep.subr.bf16.mxu0 0
        %851 = vmatpush1.bf16.msra.mxu0 %v834
        %852 = vmatprep.subr.bf16.mxu0 0
        %853 = vmatpush1.bf16.msra.mxu0 %v835
        %854 = vmatprep.subr.bf16.mxu0 0
        %855 = vmatpush1.bf16.msra.mxu0 %v836
        %856 = vmatprep.subr.bf16.mxu0 0
        %857 = vmatpush1.bf16.msra.mxu0 %v837
        %858 = vmatprep.subr.bf16.mxu0 0
        %859 = vmatpush1.bf16.msra.mxu0 %v838
        %860 = vmatprep.subr.bf16.mxu0 0
        %861 = vmatpush1.bf16.msra.mxu0 %v839
        %862 = vmatprep.subr.bf16.mxu0 0
        %863 = vmatpush1.bf16.msra.mxu0 %v840
        %864 = vmatprep.subr.bf16.mxu0 0
        %865 = vmatpush1.bf16.msra.mxu0 %v841
        %866 = vmatprep.subr.bf16.mxu0 0
        %867 = vmatpush1.bf16.msra.mxu0 0
        %868 = vmatprep.subr.bf16.mxu0 0
        %869 = vmatpush1.bf16.msra.mxu0 0
        %870 = vmatprep.subr.bf16.mxu0 0
        %871 = vmatpush1.bf16.msra.mxu0 0
        %872 = vmatprep.subr.bf16.mxu0 0
        %873 = vmatpush1.bf16.msra.mxu0 0
        %874 = vmatprep.subr.bf16.mxu0 0
        %875 = vmatpush1.bf16.msra.mxu0 0
        %876 = vmatprep.subr.bf16.mxu0 0
        %877 = vmatpush1.bf16.msra.mxu0 0
        %878 = vmatprep.subr.bf16.mxu0 0
        %879 = vmatpush1.bf16.msra.mxu0 0
        %880 = vmatprep.subr.bf16.mxu0 0
        %881 = vmatpush1.bf16.msra.mxu0 0
        %882 = vmatprep.mubr.bf16.mxu0 0
        %883 = vmatmul.mubr.bf16.gmra.mrb[0].mxu0 %v770
        %v884 = vpop.f32.mrb[0].mxu0
        %v885 = vadd.f32 %v704, %v884
        %v886 = vpop.f32.mrb[0].mxu0
        %v887 = vpop.f32.mrb[0].mxu0
        %v888 = vadd.f32 %v704, %v887
        %v889 = vpop.f32.mrb[0].mxu0
        %890 = vmatprep.mubr.bf16.mxu0 0
        %891 = vmatmul.mubr.bf16.gmra.mrb[0].mxu0 %v771
        %v892 = vpop.f32.mrb[0].mxu0
        %v893 = vadd.f32 %v704, %v892
        %v894 = vpop.f32.mrb[0].mxu0
        %v895 = vpop.f32.mrb[0].mxu0
        %v896 = vadd.f32 %v704, %v895
        %v897 = vpop.f32.mrb[0].mxu0
        %898 = vmatprep.mubr.bf16.mxu0 0
        %899 = vmatmul.mubr.bf16.gmra.mrb[0].mxu0 %v772
        %v900 = vpop.f32.mrb[0].mxu0
        %v901 = vadd.f32 %v704, %v900
        %v902 = vpop.f32.mrb[0].mxu0
        %v903 = vpop.f32.mrb[0].mxu0
        %v904 = vadd.f32 %v704, %v903
        %v905 = vpop.f32.mrb[0].mxu0
        %906 = vmatprep.mubr.bf16.mxu0 0
        %907 = vmatmul.mubr.bf16.gmra.mrb[0].mxu0 %v773
        %v908 = vpop.f32.mrb[0].mxu0
        %v909 = vadd.f32 %v704, %v908
        %v910 = vpop.f32.mrb[0].mxu0
        %v911 = vpop.f32.mrb[0].mxu0
        %v912 = vadd.f32 %v704, %v911
        %v913 = vpop.f32.mrb[0].mxu0
        %914 = vmatprep.mubr.bf16.mxu0 0
        %915 = vmatmul.mubr.bf16.gmra.mrb[0].mxu0 %v774
        %v916 = vpop.f32.mrb[0].mxu0
        %v917 = vadd.f32 %v704, %v916
        %v918 = vpop.f32.mrb[0].mxu0
        %v919 = vpop.f32.mrb[0].mxu0
        %v920 = vadd.f32 %v704, %v919
        %v921 = vpop.f32.mrb[0].mxu0
        %922 = vmatprep.mubr.bf16.mxu0 0
        %923 = vmatmul.mubr.bf16.gmra.mrb[0].mxu0 %v775
        %v924 = vpop.f32.mrb[0].mxu0
        %v925 = vadd.f32 %v704, %v924
        %v926 = vpop.f32.mrb[0].mxu0
        %v927 = vpop.f32.mrb[0].mxu0
        %v928 = vadd.f32 %v704, %v927
        %v929 = vpop.f32.mrb[0].mxu0
        %930 = vmatprep.mubr.bf16.mxu0 0
        %931 = vmatmul.mubr.bf16.gmra.mrb[0].mxu0 %v776
        %v932 = vpop.f32.mrb[0].mxu0
        %v933 = vadd.f32 %v704, %v932
        %v934 = vpop.f32.mrb[0].mxu0
        %v935 = vpop.f32.mrb[0].mxu0
        %v936 = vadd.f32 %v704, %v935
        %v937 = vpop.f32.mrb[0].mxu0
        %938 = vmatprep.mubr.bf16.mxu0 0
        %939 = vmatmul.mubr.bf16.gmra.mrb[0].mxu0 %v777
        %v940 = vpop.f32.mrb[0].mxu0
        %v941 = vadd.f32 %v704, %v940
        %v942 = vpop.f32.mrb[0].mxu0
        %v943 = vpop.f32.mrb[0].mxu0
        %v944 = vadd.f32 %v704, %v943
        %v945 = vpop.f32.mrb[0].mxu0
        %946 = vmatprep.mubr.bf16.mxu0 0
        %947 = vmatmul.mubr.bf16.gmra.mrb[0].mxu0 %v778
        %v948 = vpop.f32.mrb[0].mxu0
        %v949 = vadd.f32 %v704, %v948
        %v950 = vpop.f32.mrb[0].mxu0
        %v951 = vpop.f32.mrb[0].mxu0
        %v952 = vadd.f32 %v704, %v951
        %v953 = vpop.f32.mrb[0].mxu0
        %954 = vmatprep.mubr.bf16.mxu0 0
        %955 = vmatmul.mubr.bf16.gmra.mrb[0].mxu0 %v779
        %v956 = vpop.f32.mrb[0].mxu0
        %v957 = vadd.f32 %v704, %v956
        %v958 = vpop.f32.mrb[0].mxu0
        %v959 = vpop.f32.mrb[0].mxu0
        %v960 = vadd.f32 %v704, %v959
        %v961 = vpop.f32.mrb[0].mxu0
        %962 = vmatprep.mubr.bf16.mxu0 0
        %963 = vmatmul.mubr.bf16.gmra.mrb[0].mxu0 %v780
        %v964 = vpop.f32.mrb[0].mxu0
        %v965 = vadd.f32 %v704, %v964
        %v966 = vpop.f32.mrb[0].mxu0
        %v967 = vpop.f32.mrb[0].mxu0
        %v968 = vadd.f32 %v704, %v967
        %v969 = vpop.f32.mrb[0].mxu0
        %970 = vmatprep.mubr.bf16.mxu0 0
        %971 = vmatmul.mubr.bf16.gmra.mrb[0].mxu0 %v781
        %v972 = vpop.f32.mrb[0].mxu0
        %v973 = vadd.f32 %v704, %v972
        %v974 = vpop.f32.mrb[0].mxu0
        %v975 = vpop.f32.mrb[0].mxu0
        %v976 = vadd.f32 %v704, %v975
        %v977 = vpop.f32.mrb[0].mxu0
        %978 = vmatprep.mubr.bf16.mxu0 0
        %979 = vmatmul.mubr.bf16.gmra.mrb[0].mxu0 %v782
        %v980 = vpop.f32.mrb[0].mxu0
        %v981 = vadd.f32 %v704, %v980
        %v982 = vpop.f32.mrb[0].mxu0
        %v983 = vpop.f32.mrb[0].mxu0
        %v984 = vadd.f32 %v704, %v983
        %v985 = vpop.f32.mrb[0].mxu0
        %986 = vmatprep.mubr.bf16.mxu0 0
        %987 = vmatmul.mubr.bf16.gmra.mrb[0].mxu0 %v783
        %v988 = vpop.f32.mrb[0].mxu0
        %v989 = vadd.f32 %v704, %v988
        %v990 = vpop.f32.mrb[0].mxu0
        %v991 = vpop.f32.mrb[0].mxu0
        %v992 = vadd.f32 %v704, %v991
        %v993 = vpop.f32.mrb[0].mxu0
        %994 = vmatprep.mubr.bf16.mxu0 0
        %995 = vmatmul.mubr.bf16.gmra.mrb[0].mxu0 %v784
        %v996 = vpop.f32.mrb[0].mxu0
        %v997 = vadd.f32 %v704, %v996
        %v998 = vpop.f32.mrb[0].mxu0
        %v999 = vpop.f32.mrb[0].mxu0
        %v1000 = vadd.f32 %v704, %v999
        %v1001 = vpop.f32.mrb[0].mxu0
        %1002 = vmatprep.mubr.bf16.mxu0 0
        %1003 = vmatmul.mubr.bf16.gmra.mrb[0].mxu0 %v785
        %v1004 = vpop.f32.mrb[0].mxu0
        %v1005 = vadd.f32 %v704, %v1004
        %v1006 = vpop.f32.mrb[0].mxu0
        %v1007 = vpop.f32.mrb[0].mxu0
        %v1008 = vadd.f32 %v704, %v1007
        %v1009 = vpop.f32.mrb[0].mxu0
        %1010 = vdwg.mxu0
        %vm1011 = vcmp.gt.f32.partialorder %v885, 0.0
        %vm1012 = vcmp.gt.f32.partialorder %v888, 0.0
        %vm1013 = vcmp.gt.f32.partialorder %v893, 0.0
        %vm1014 = vcmp.gt.f32.partialorder %v896, 0.0
        %vm1015 = vcmp.gt.f32.partialorder %v901, 0.0
        %vm1016 = vcmp.gt.f32.partialorder %v904, 0.0
        %vm1017 = vcmp.gt.f32.partialorder %v909, 0.0
        %vm1018 = vcmp.gt.f32.partialorder %v912, 0.0
        %vm1019 = vcmp.gt.f32.partialorder %v917, 0.0
        %vm1020 = vcmp.gt.f32.partialorder %v920, 0.0
        %vm1021 = vcmp.gt.f32.partialorder %v925, 0.0
        %vm1022 = vcmp.gt.f32.partialorder %v928, 0.0
        %vm1023 = vcmp.gt.f32.partialorder %v933, 0.0
        %vm1024 = vcmp.gt.f32.partialorder %v936, 0.0
        %vm1025 = vcmp.gt.f32.partialorder %v941, 0.0
        %vm1026 = vcmp.gt.f32.partialorder %v944, 0.0
        %vm1027 = vcmp.gt.f32.partialorder %v949, 0.0
        %vm1028 = vcmp.gt.f32.partialorder %v952, 0.0
        %vm1029 = vcmp.gt.f32.partialorder %v957, 0.0
        %vm1030 = vcmp.gt.f32.partialorder %v960, 0.0
        %vm1031 = vcmp.gt.f32.partialorder %v965, 0.0
        %vm1032 = vcmp.gt.f32.partialorder %v968, 0.0
        %vm1033 = vcmp.gt.f32.partialorder %v973, 0.0
        %vm1034 = vcmp.gt.f32.partialorder %v976, 0.0
        %vm1035 = vcmp.gt.f32.partialorder %v981, 0.0
        %vm1036 = vcmp.gt.f32.partialorder %v984, 0.0
        %vm1037 = vcmp.gt.f32.partialorder %v989, 0.0
        %vm1038 = vcmp.gt.f32.partialorder %v992, 0.0
        %vm1039 = vcmp.gt.f32.partialorder %v997, 0.0
        %vm1040 = vcmp.gt.f32.partialorder %v1000, 0.0
        %vm1041 = vcmp.gt.f32.partialorder %v1005, 0.0
        %vm1042 = vcmp.gt.f32.partialorder %v1008, 0.0
        %v1043 = vmul.f32 %v885, 0.1
        %v1044 = vmul.f32 %v888, 0.1
        %v1045 = vmul.f32 %v893, 0.1
        %v1046 = vmul.f32 %v896, 0.1
        %v1047 = vmul.f32 %v901, 0.1
        %v1048 = vmul.f32 %v904, 0.1
        %v1049 = vmul.f32 %v909, 0.1
        %v1050 = vmul.f32 %v912, 0.1
        %v1051 = vmul.f32 %v917, 0.1
        %v1052 = vmul.f32 %v920, 0.1
        %v1053 = vmul.f32 %v925, 0.1
        %v1054 = vmul.f32 %v928, 0.1
        %v1055 = vmul.f32 %v933, 0.1
        %v1056 = vmul.f32 %v936, 0.1
        %v1057 = vmul.f32 %v941, 0.1
        %v1058 = vmul.f32 %v944, 0.1
        %v1059 = vmul.f32 %v949, 0.1
        %v1060 = vmul.f32 %v952, 0.1
        %v1061 = vmul.f32 %v957, 0.1
        %v1062 = vmul.f32 %v960, 0.1
        %v1063 = vmul.f32 %v965, 0.1
        %v1064 = vmul.f32 %v968, 0.1
        %v1065 = vmul.f32 %v973, 0.1
        %v1066 = vmul.f32 %v976, 0.1
        %v1067 = vmul.f32 %v981, 0.1
        %v1068 = vmul.f32 %v984, 0.1
        %v1069 = vmul.f32 %v989, 0.1
        %v1070 = vmul.f32 %v992, 0.1
        %v1071 = vmul.f32 %v997, 0.1
        %v1072 = vmul.f32 %v1000, 0.1
        %v1073 = vmul.f32 %v1005, 0.1
        %v1074 = vmul.f32 %v1008, 0.1
        %v1075 = vsel %vm1011, %v885, %v1043
        %v1076 = vsel %vm1012, %v888, %v1044
        %v1077 = vsel %vm1013, %v893, %v1045
        %v1078 = vsel %vm1014, %v896, %v1046
        %v1079 = vsel %vm1015, %v901, %v1047
        %v1080 = vsel %vm1016, %v904, %v1048
        %v1081 = vsel %vm1017, %v909, %v1049
        %v1082 = vsel %vm1018, %v912, %v1050
        %v1083 = vsel %vm1019, %v917, %v1051
        %v1084 = vsel %vm1020, %v920, %v1052
        %v1085 = vsel %vm1021, %v925, %v1053
        %v1086 = vsel %vm1022, %v928, %v1054
        %v1087 = vsel %vm1023, %v933, %v1055
        %v1088 = vsel %vm1024, %v936, %v1056
        %v1089 = vsel %vm1025, %v941, %v1057
        %v1090 = vsel %vm1026, %v944, %v1058
        %v1091 = vsel %vm1027, %v949, %v1059
        %v1092 = vsel %vm1028, %v952, %v1060
        %v1093 = vsel %vm1029, %v957, %v1061
        %v1094 = vsel %vm1030, %v960, %v1062
        %v1095 = vsel %vm1031, %v965, %v1063
        %v1096 = vsel %vm1032, %v968, %v1064
        %v1097 = vsel %vm1033, %v973, %v1065
        %v1098 = vsel %vm1034, %v976, %v1066
        %v1099 = vsel %vm1035, %v981, %v1067
        %v1100 = vsel %vm1036, %v984, %v1068
        %v1101 = vsel %vm1037, %v989, %v1069
        %v1102 = vsel %vm1038, %v992, %v1070
        %v1103 = vsel %vm1039, %v997, %v1071
        %v1104 = vsel %vm1040, %v1000, %v1072
        %v1105 = vsel %vm1041, %v1005, %v1073
        %v1106 = vsel %vm1042, %v1008, %v1074
        %v1107 = vpack.c.bf16 %v1076, %v1075
        %v1108 = vpack.c.bf16 %v1078, %v1077
        %v1109 = vpack.c.bf16 %v1080, %v1079
        %v1110 = vpack.c.bf16 %v1082, %v1081
        %v1111 = vpack.c.bf16 %v1084, %v1083
        %v1112 = vpack.c.bf16 %v1086, %v1085
        %v1113 = vpack.c.bf16 %v1088, %v1087
        %v1114 = vpack.c.bf16 %v1090, %v1089
        %v1115 = vpack.c.bf16 %v1092, %v1091
        %v1116 = vpack.c.bf16 %v1094, %v1093
        %v1117 = vpack.c.bf16 %v1096, %v1095
        %v1118 = vpack.c.bf16 %v1098, %v1097
        %v1119 = vpack.c.bf16 %v1100, %v1099
        %v1120 = vpack.c.bf16 %v1102, %v1101
        %v1121 = vpack.c.bf16 %v1104, %v1103
        %v1122 = vpack.c.bf16 %v1106, %v1105
        %1123 = vst [vmem:[%s548 + $0x8] sm:$0xff] %v1107
        %1124 = vst [vmem:[%s548 + $0x20] sm:$0xff] %v1108
        %1125 = vst [vmem:[%s548 + $0x38] sm:$0xff] %v1109
        %1126 = vst [vmem:[%s548 + $0x50] sm:$0xff] %v1110
        %1127 = vst [vmem:[%s548 + $0x68] sm:$0xff] %v1111
        %1128 = vst [vmem:[%s548 + $0x80] sm:$0xff] %v1112
        %1129 = vst [vmem:[%s548 + $0x98] sm:$0xff] %v1113
        %1130 = vst [vmem:[%s548 + $0xb0] sm:$0xff] %v1114
        %1131 = vst [vmem:[%s548 + $0xc8] sm:$0xff] %v1115
        %1132 = vst [vmem:[%s548 + $0xe0] sm:$0xff] %v1116
        %1133 = vst [vmem:[%s548 + $0xf8] sm:$0xff] %v1117
        %1134 = vst [vmem:[%s548 + $0x110] sm:$0xff] %v1118
        %1135 = vst [vmem:[%s548 + $0x128] sm:$0xff] %v1119
        %1136 = vst [vmem:[%s548 + $0x140] sm:$0xff] %v1120
        %1137 = vst [vmem:[%s548 + $0x158] sm:$0xff] %v1121
        %1138 = vst [vmem:[%s548 + $0x170] sm:$0xff] %v1122
        %v1140 = vshrl.u32 %v1107, 16
        %v1142 = vrot.slane %v1140, 7
        %v1143 = vshll.u32 %v1107, 16
        %v1145 = vor.u32 %v1142, %v1143
        %v1147 = vshrl.u32 %v1108, 16
        %v1149 = vrot.slane %v1147, 7
        %v1150 = vshll.u32 %v1108, 16
        %v1152 = vor.u32 %v1149, %v1150
        %v1154 = vshrl.u32 %v1109, 16
        %v1156 = vrot.slane %v1154, 7
        %v1157 = vshll.u32 %v1109, 16
        %v1159 = vor.u32 %v1156, %v1157
        %v1161 = vshrl.u32 %v1110, 16
        %v1163 = vrot.slane %v1161, 7
        %v1164 = vshll.u32 %v1110, 16
        %v1166 = vor.u32 %v1163, %v1164
        %v1168 = vshrl.u32 %v1111, 16
        %v1170 = vrot.slane %v1168, 7
        %v1171 = vshll.u32 %v1111, 16
        %v1173 = vor.u32 %v1170, %v1171
        %v1175 = vshrl.u32 %v1112, 16
        %v1177 = vrot.slane %v1175, 7
        %v1178 = vshll.u32 %v1112, 16
        %v1180 = vor.u32 %v1177, %v1178
        %v1182 = vshrl.u32 %v1113, 16
        %v1184 = vrot.slane %v1182, 7
        %v1185 = vshll.u32 %v1113, 16
        %v1187 = vor.u32 %v1184, %v1185
        %v1189 = vshrl.u32 %v1114, 16
        %v1191 = vrot.slane %v1189, 7
        %v1192 = vshll.u32 %v1114, 16
        %v1194 = vor.u32 %v1191, %v1192
        %v1196 = vshrl.u32 %v1115, 16
        %v1198 = vrot.slane %v1196, 7
        %v1199 = vshll.u32 %v1115, 16
        %v1201 = vor.u32 %v1198, %v1199
        %v1203 = vshrl.u32 %v1116, 16
        %v1205 = vrot.slane %v1203, 7
        %v1206 = vshll.u32 %v1116, 16
        %v1208 = vor.u32 %v1205, %v1206
        %v1210 = vshrl.u32 %v1117, 16
        %v1212 = vrot.slane %v1210, 7
        %v1213 = vshll.u32 %v1117, 16
        %v1215 = vor.u32 %v1212, %v1213
        %v1217 = vshrl.u32 %v1118, 16
        %v1219 = vrot.slane %v1217, 7
        %v1220 = vshll.u32 %v1118, 16
        %v1222 = vor.u32 %v1219, %v1220
        %v1224 = vshrl.u32 %v1119, 16
        %v1226 = vrot.slane %v1224, 7
        %v1227 = vshll.u32 %v1119, 16
        %v1229 = vor.u32 %v1226, %v1227
        %v1231 = vshrl.u32 %v1120, 16
        %v1233 = vrot.slane %v1231, 7
        %v1234 = vshll.u32 %v1120, 16
        %v1236 = vor.u32 %v1233, %v1234
        %v1238 = vshrl.u32 %v1121, 16
        %v1240 = vrot.slane %v1238, 7
        %v1241 = vshll.u32 %v1121, 16
        %v1243 = vor.u32 %v1240, %v1241
        %v1245 = vshrl.u32 %v1122, 16
        %v1247 = vrot.slane %v1245, 7
        %v1248 = vshll.u32 %v1122, 16
        %v1250 = vor.u32 %v1247, %v1248
        %vm1267 = vcmask 1047552
        %vm1268 = vsmask.f32 7938
        %vm1269 = vmand %vm1267, %vm1268
        %v1270 = vld [vmem:[%s548] sm:$0xff]
        %v1271 = vsel %vm1269, %v1145, %v1270
        %1272 = vst [vmem:[%s548] sm:$0xff] %v1271
        %v1273 = vld [vmem:[%s548 + $0x18] sm:$0xff]
        %v1274 = vsel %vm1269, %v1152, %v1273
        %1275 = vst [vmem:[%s548 + $0x18] sm:$0xff] %v1274
        %v1276 = vld [vmem:[%s548 + $0x30] sm:$0xff]
        %v1277 = vsel %vm1269, %v1159, %v1276
        %1278 = vst [vmem:[%s548 + $0x30] sm:$0xff] %v1277
        %v1279 = vld [vmem:[%s548 + $0x48] sm:$0xff]
        %v1280 = vsel %vm1269, %v1166, %v1279
        %1281 = vst [vmem:[%s548 + $0x48] sm:$0xff] %v1280
        %v1282 = vld [vmem:[%s548 + $0x60] sm:$0xff]
        %v1283 = vsel %vm1269, %v1173, %v1282
        %1284 = vst [vmem:[%s548 + $0x60] sm:$0xff] %v1283
        %v1285 = vld [vmem:[%s548 + $0x78] sm:$0xff]
        %v1286 = vsel %vm1269, %v1180, %v1285
        %1287 = vst [vmem:[%s548 + $0x78] sm:$0xff] %v1286
        %v1288 = vld [vmem:[%s548 + $0x90] sm:$0xff]
        %v1289 = vsel %vm1269, %v1187, %v1288
        %1290 = vst [vmem:[%s548 + $0x90] sm:$0xff] %v1289
        %v1291 = vld [vmem:[%s548 + $0xa8] sm:$0xff]
        %v1292 = vsel %vm1269, %v1194, %v1291
        %1293 = vst [vmem:[%s548 + $0xa8] sm:$0xff] %v1292
        %v1294 = vld [vmem:[%s548 + $0xc0] sm:$0xff]
        %v1295 = vsel %vm1269, %v1201, %v1294
        %1296 = vst [vmem:[%s548 + $0xc0] sm:$0xff] %v1295
        %v1297 = vld [vmem:[%s548 + $0xd8] sm:$0xff]
        %v1298 = vsel %vm1269, %v1208, %v1297
        %1299 = vst [vmem:[%s548 + $0xd8] sm:$0xff] %v1298
        %v1300 = vld [vmem:[%s548 + $0xf0] sm:$0xff]
        %v1301 = vsel %vm1269, %v1215, %v1300
        %1302 = vst [vmem:[%s548 + $0xf0] sm:$0xff] %v1301
        %v1303 = vld [vmem:[%s548 + $0x108] sm:$0xff]
        %v1304 = vsel %vm1269, %v1222, %v1303
        %1305 = vst [vmem:[%s548 + $0x108] sm:$0xff] %v1304
        %v1306 = vld [vmem:[%s548 + $0x120] sm:$0xff]
        %v1307 = vsel %vm1269, %v1229, %v1306
        %1308 = vst [vmem:[%s548 + $0x120] sm:$0xff] %v1307
        %v1309 = vld [vmem:[%s548 + $0x138] sm:$0xff]
        %v1310 = vsel %vm1269, %v1236, %v1309
        %1311 = vst [vmem:[%s548 + $0x138] sm:$0xff] %v1310
        %v1312 = vld [vmem:[%s548 + $0x150] sm:$0xff]
        %v1313 = vsel %vm1269, %v1243, %v1312
        %1314 = vst [vmem:[%s548 + $0x150] sm:$0xff] %v1313
        %v1315 = vld [vmem:[%s548 + $0x168] sm:$0xff]
        %v1316 = vsel %vm1269, %v1250, %v1315
        %1317 = vst [vmem:[%s548 + $0x168] sm:$0xff] %v1316
        %v1318 = vrot.slane %v1143, 1
        %v1319 = vor.u32 %v1140, %v1318
        %v1320 = vrot.slane %v1150, 1
        %v1321 = vor.u32 %v1147, %v1320
        %v1322 = vrot.slane %v1157, 1
        %v1323 = vor.u32 %v1154, %v1322
        %v1324 = vrot.slane %v1164, 1
        %v1325 = vor.u32 %v1161, %v1324
        %v1326 = vrot.slane %v1171, 1
        %v1327 = vor.u32 %v1168, %v1326
        %v1328 = vrot.slane %v1178, 1
        %v1329 = vor.u32 %v1175, %v1328
        %v1330 = vrot.slane %v1185, 1
        %v1331 = vor.u32 %v1182, %v1330
        %v1332 = vrot.slane %v1192, 1
        %v1333 = vor.u32 %v1189, %v1332
        %v1334 = vrot.slane %v1199, 1
        %v1335 = vor.u32 %v1196, %v1334
        %v1336 = vrot.slane %v1206, 1
        %v1337 = vor.u32 %v1203, %v1336
        %v1338 = vrot.slane %v1213, 1
        %v1339 = vor.u32 %v1210, %v1338
        %v1340 = vrot.slane %v1220, 1
        %v1341 = vor.u32 %v1217, %v1340
        %v1342 = vrot.slane %v1227, 1
        %v1343 = vor.u32 %v1224, %v1342
        %v1344 = vrot.slane %v1234, 1
        %v1345 = vor.u32 %v1231, %v1344
        %v1346 = vrot.slane %v1241, 1
        %v1347 = vor.u32 %v1238, %v1346
        %v1348 = vrot.slane %v1248, 1
        %v1349 = vor.u32 %v1245, %v1348
        %vm1366 = vsmask.f32 7424
        %vm1367 = vmand %vm1267, %vm1366
        %v1368 = vld [vmem:[%s548 + $0x10] sm:$0xff]
        %v1369 = vsel %vm1367, %v1319, %v1368
        %1370 = vst [vmem:[%s548 + $0x10] sm:$0xff] %v1369
        %v1371 = vld [vmem:[%s548 + $0x28] sm:$0xff]
        %v1372 = vsel %vm1367, %v1321, %v1371
        %1373 = vst [vmem:[%s548 + $0x28] sm:$0xff] %v1372
        %v1374 = vld [vmem:[%s548 + $0x40] sm:$0xff]
        %v1375 = vsel %vm1367, %v1323, %v1374
        %1376 = vst [vmem:[%s548 + $0x40] sm:$0xff] %v1375
        %v1377 = vld [vmem:[%s548 + $0x58] sm:$0xff]
        %v1378 = vsel %vm1367, %v1325, %v1377
        %1379 = vst [vmem:[%s548 + $0x58] sm:$0xff] %v1378
        %v1380 = vld [vmem:[%s548 + $0x70] sm:$0xff]
        %v1381 = vsel %vm1367, %v1327, %v1380
        %1382 = vst [vmem:[%s548 + $0x70] sm:$0xff] %v1381
        %v1383 = vld [vmem:[%s548 + $0x88] sm:$0xff]
        %v1384 = vsel %vm1367, %v1329, %v1383
        %1385 = vst [vmem:[%s548 + $0x88] sm:$0xff] %v1384
        %v1386 = vld [vmem:[%s548 + $0xa0] sm:$0xff]
        %v1387 = vsel %vm1367, %v1331, %v1386
        %1388 = vst [vmem:[%s548 + $0xa0] sm:$0xff] %v1387
        %v1389 = vld [vmem:[%s548 + $0xb8] sm:$0xff]
        %v1390 = vsel %vm1367, %v1333, %v1389
        %1391 = vst [vmem:[%s548 + $0xb8] sm:$0xff] %v1390
        %v1392 = vld [vmem:[%s548 + $0xd0] sm:$0xff]
        %v1393 = vsel %vm1367, %v1335, %v1392
        %1394 = vst [vmem:[%s548 + $0xd0] sm:$0xff] %v1393
        %v1395 = vld [vmem:[%s548 + $0xe8] sm:$0xff]
        %v1396 = vsel %vm1367, %v1337, %v1395
        %1397 = vst [vmem:[%s548 + $0xe8] sm:$0xff] %v1396
        %v1398 = vld [vmem:[%s548 + $0x100] sm:$0xff]
        %v1399 = vsel %vm1367, %v1339, %v1398
        %1400 = vst [vmem:[%s548 + $0x100] sm:$0xff] %v1399
        %v1401 = vld [vmem:[%s548 + $0x118] sm:$0xff]
        %v1402 = vsel %vm1367, %v1341, %v1401
        %1403 = vst [vmem:[%s548 + $0x118] sm:$0xff] %v1402
        %v1404 = vld [vmem:[%s548 + $0x130] sm:$0xff]
        %v1405 = vsel %vm1367, %v1343, %v1404
        %1406 = vst [vmem:[%s548 + $0x130] sm:$0xff] %v1405
        %v1407 = vld [vmem:[%s548 + $0x148] sm:$0xff]
        %v1408 = vsel %vm1367, %v1345, %v1407
        %1409 = vst [vmem:[%s548 + $0x148] sm:$0xff] %v1408
        %v1410 = vld [vmem:[%s548 + $0x160] sm:$0xff]
        %v1411 = vsel %vm1367, %v1347, %v1410
        %1412 = vst [vmem:[%s548 + $0x160] sm:$0xff] %v1411
        %v1413 = vld [vmem:[%s548 + $0x178] sm:$0xff]
        %v1414 = vsel %vm1367, %v1349, %v1413
        %1415 = vst [vmem:[%s548 + $0x178] sm:$0xff] %v1414
        %v1416 = vld [vmem:[#allocation2] sm:$0xff]
        %v1417 = vld [vmem:[#allocation2 + $0x8] sm:$0xff]
        %v1418 = vld [vmem:[#allocation2 + $0x10] sm:$0xff]
        %v1419 = vld [vmem:[#allocation2 + $0x18] sm:$0xff]
        %v1420 = vld [vmem:[#allocation2 + $0x20] sm:$0xff]
        %v1421 = vld [vmem:[#allocation2 + $0x28] sm:$0xff]
        %v1422 = vld [vmem:[#allocation2 + $0x30] sm:$0xff]
        %v1423 = vld [vmem:[#allocation2 + $0x38] sm:$0xff]
        %v1424 = vld [vmem:[#allocation2 + $0x40] sm:$0xff]
        %v1425 = vld [vmem:[#allocation2 + $0x48] sm:$0xff]
        %v1426 = vld [vmem:[#allocation2 + $0x50] sm:$0xff]
        %v1427 = vld [vmem:[#allocation2 + $0x58] sm:$0xff]
        %v1428 = vld [vmem:[#allocation2 + $0x60] sm:$0xff]
        %v1429 = vld [vmem:[#allocation2 + $0x68] sm:$0xff]
        %v1430 = vld [vmem:[#allocation2 + $0x70] sm:$0xff]
        %v1431 = vld [vmem:[#allocation2 + $0x78] sm:$0xff]
        %v1432 = vld [vmem:[#allocation2 + $0x80] sm:$0xff]
        %v1433 = vld [vmem:[#allocation2 + $0x88] sm:$0xff]
        %v1434 = vld [vmem:[#allocation2 + $0x90] sm:$0xff]
        %v1435 = vld [vmem:[#allocation2 + $0x98] sm:$0xff]
        %v1436 = vld [vmem:[#allocation2 + $0xa0] sm:$0xff]
        %v1437 = vld [vmem:[#allocation2 + $0xa8] sm:$0xff]
        %v1438 = vld [vmem:[#allocation2 + $0xb0] sm:$0xff]
        %v1439 = vld [vmem:[#allocation2 + $0xb8] sm:$0xff]
        %v1440 = vld [vmem:[#allocation2 + $0xc0] sm:$0xff]
        %v1441 = vld [vmem:[#allocation2 + $0xc8] sm:$0xff]
        %v1442 = vld [vmem:[#allocation2 + $0xd0] sm:$0xff]
        %v1443 = vld [vmem:[#allocation2 + $0xd8] sm:$0xff]
        %v1444 = vld [vmem:[#allocation2 + $0xe0] sm:$0xff]
        %v1445 = vld [vmem:[#allocation2 + $0xe8] sm:$0xff]
        %v1446 = vld [vmem:[#allocation2 + $0xf0] sm:$0xff]
        %v1447 = vld [vmem:[#allocation2 + $0xf8] sm:$0xff]
        %v1448 = vld [vmem:[#allocation2 + $0x100] sm:$0xff]
        %v1449 = vld [vmem:[#allocation2 + $0x108] sm:$0xff]
        %v1450 = vld [vmem:[#allocation2 + $0x110] sm:$0xff]
        %v1451 = vld [vmem:[#allocation2 + $0x118] sm:$0xff]
        %v1452 = vld [vmem:[#allocation2 + $0x120] sm:$0xff]
        %v1453 = vld [vmem:[#allocation2 + $0x128] sm:$0xff]
        %v1454 = vld [vmem:[#allocation2 + $0x130] sm:$0xff]
        %v1455 = vld [vmem:[#allocation2 + $0x138] sm:$0xff]
        %v1456 = vld [vmem:[#allocation2 + $0x140] sm:$0xff]
        %v1457 = vld [vmem:[#allocation2 + $0x148] sm:$0xff]
        %v1458 = vld [vmem:[#allocation2 + $0x150] sm:$0xff]
        %v1459 = vld [vmem:[#allocation2 + $0x158] sm:$0xff]
        %v1460 = vld [vmem:[#allocation2 + $0x160] sm:$0xff]
        %v1461 = vld [vmem:[#allocation2 + $0x168] sm:$0xff]
        %v1462 = vld [vmem:[#allocation2 + $0x170] sm:$0xff]
        %v1463 = vld [vmem:[#allocation2 + $0x178] sm:$0xff]
        %v1464 = vld [vmem:[#allocation9] sm:$0xf]
        %v1465 = vld [vmem:[#allocation9 + $0x4] sm:$0xf]
        %v1466 = vld [vmem:[#allocation9 + $0x8] sm:$0xf]
        %v1467 = vld [vmem:[#allocation9 + $0xc] sm:$0xf]
        %v1468 = vld [vmem:[#allocation9 + $0x10] sm:$0xf]
        %v1469 = vld [vmem:[#allocation9 + $0x14] sm:$0xf]
        %v1470 = vld [vmem:[#allocation9 + $0x18] sm:$0xf]
        %v1471 = vld [vmem:[#allocation9 + $0x1c] sm:$0xf]
        %v1472 = vld [vmem:[#allocation9 + $0x20] sm:$0xf]
        %v1473 = vld [vmem:[#allocation9 + $0x24] sm:$0xf]
        %v1474 = vld [vmem:[#allocation9 + $0x28] sm:$0xf]
        %v1475 = vld [vmem:[#allocation9 + $0x2c] sm:$0xf]
        %v1476 = vld [vmem:[#allocation9 + $0x30] sm:$0xf]
        %v1477 = vld [vmem:[#allocation9 + $0x34] sm:$0xf]
        %v1478 = vld [vmem:[#allocation9 + $0x38] sm:$0xf]
        %v1479 = vld [vmem:[#allocation9 + $0x3c] sm:$0xf]
        %v1480 = vld [vmem:[#allocation9 + $0x40] sm:$0xf]
        %v1481 = vld [vmem:[#allocation9 + $0x44] sm:$0xf]
        %v1482 = vld [vmem:[#allocation9 + $0x48] sm:$0xf]
        %v1483 = vld [vmem:[#allocation9 + $0x4c] sm:$0xf]
        %v1484 = vld [vmem:[#allocation9 + $0x50] sm:$0xf]
        %v1485 = vld [vmem:[#allocation9 + $0x54] sm:$0xf]
        %v1486 = vld [vmem:[#allocation9 + $0x58] sm:$0xf]
        %v1487 = vld [vmem:[#allocation9 + $0x5c] sm:$0xf]
        %v1488 = vld [vmem:[#allocation9 + $0x60] sm:$0xf]
        %v1489 = vld [vmem:[#allocation9 + $0x64] sm:$0xf]
        %v1490 = vld [vmem:[#allocation9 + $0x68] sm:$0xf]
        %v1491 = vld [vmem:[#allocation9 + $0x6c] sm:$0xf]
        %v1492 = vld [vmem:[#allocation9 + $0x70] sm:$0xf]
        %v1493 = vld [vmem:[#allocation9 + $0x74] sm:$0xf]
        %v1494 = vld [vmem:[#allocation9 + $0x78] sm:$0xf]
        %v1495 = vld [vmem:[#allocation9 + $0x7c] sm:$0xf]
        %v1496 = vld [vmem:[#allocation9 + $0x80] sm:$0xf]
        %v1497 = vld [vmem:[#allocation9 + $0x84] sm:$0xf]
        %v1498 = vld [vmem:[#allocation9 + $0x88] sm:$0xf]
        %v1499 = vld [vmem:[#allocation9 + $0x8c] sm:$0xf]
        %v1500 = vld [vmem:[#allocation9 + $0x90] sm:$0xf]
        %v1501 = vld [vmem:[#allocation9 + $0x94] sm:$0xf]
        %v1502 = vld [vmem:[#allocation9 + $0x98] sm:$0xf]
        %v1503 = vld [vmem:[#allocation9 + $0x9c] sm:$0xf]
        %v1504 = vld [vmem:[#allocation9 + $0xa0] sm:$0xf]
        %v1505 = vld [vmem:[#allocation9 + $0xa4] sm:$0xf]
        %v1506 = vld [vmem:[#allocation9 + $0xa8] sm:$0xf]
        %v1507 = vld [vmem:[#allocation9 + $0xac] sm:$0xf]
        %v1508 = vld [vmem:[#allocation9 + $0xb0] sm:$0xf]
        %v1509 = vld [vmem:[#allocation9 + $0xb4] sm:$0xf]
        %v1510 = vld [vmem:[#allocation9 + $0xb8] sm:$0xf]
        %v1511 = vld [vmem:[#allocation9 + $0xbc] sm:$0xf]
        %v1512 = vld [vmem:[%s548] sm:$0xff]
        %v1513 = vld [vmem:[%s548 + $0x8] sm:$0xff]
        %v1514 = vld [vmem:[%s548 + $0x10] sm:$0xff]
        %v1515 = vld [vmem:[%s548 + $0x18] sm:$0xff]
        %v1516 = vld [vmem:[%s548 + $0x20] sm:$0xff]
        %v1517 = vld [vmem:[%s548 + $0x28] sm:$0xff]
        %v1518 = vld [vmem:[%s548 + $0x30] sm:$0xff]
        %v1519 = vld [vmem:[%s548 + $0x38] sm:$0xff]
        %v1520 = vld [vmem:[%s548 + $0x40] sm:$0xff]
        %v1521 = vld [vmem:[%s548 + $0x48] sm:$0xff]
        %v1522 = vld [vmem:[%s548 + $0x50] sm:$0xff]
        %v1523 = vld [vmem:[%s548 + $0x58] sm:$0xff]
        %v1524 = vld [vmem:[%s548 + $0x60] sm:$0xff]
        %v1525 = vld [vmem:[%s548 + $0x68] sm:$0xff]
        %v1526 = vld [vmem:[%s548 + $0x70] sm:$0xff]
        %v1527 = vld [vmem:[%s548 + $0x78] sm:$0xff]
        %v1528 = vld [vmem:[%s548 + $0x80] sm:$0xff]
        %v1529 = vld [vmem:[%s548 + $0x88] sm:$0xff]
        %v1530 = vld [vmem:[%s548 + $0x90] sm:$0xff]
        %v1531 = vld [vmem:[%s548 + $0x98] sm:$0xff]
        %v1532 = vld [vmem:[%s548 + $0xa0] sm:$0xff]
        %v1533 = vld [vmem:[%s548 + $0xa8] sm:$0xff]
        %v1534 = vld [vmem:[%s548 + $0xb0] sm:$0xff]
        %v1535 = vld [vmem:[%s548 + $0xb8] sm:$0xff]
        %v1536 = vld [vmem:[%s548 + $0xc0] sm:$0xff]
        %v1537 = vld [vmem:[%s548 + $0xc8] sm:$0xff]
        %v1538 = vld [vmem:[%s548 + $0xd0] sm:$0xff]
        %v1539 = vld [vmem:[%s548 + $0xd8] sm:$0xff]
        %v1540 = vld [vmem:[%s548 + $0xe0] sm:$0xff]
        %v1541 = vld [vmem:[%s548 + $0xe8] sm:$0xff]
        %v1542 = vld [vmem:[%s548 + $0xf0] sm:$0xff]
        %v1543 = vld [vmem:[%s548 + $0xf8] sm:$0xff]
        %v1544 = vld [vmem:[%s548 + $0x100] sm:$0xff]
        %v1545 = vld [vmem:[%s548 + $0x108] sm:$0xff]
        %v1546 = vld [vmem:[%s548 + $0x110] sm:$0xff]
        %v1547 = vld [vmem:[%s548 + $0x118] sm:$0xff]
        %v1548 = vld [vmem:[%s548 + $0x120] sm:$0xff]
        %v1549 = vld [vmem:[%s548 + $0x128] sm:$0xff]
        %v1550 = vld [vmem:[%s548 + $0x130] sm:$0xff]
        %v1551 = vld [vmem:[%s548 + $0x138] sm:$0xff]
        %v1552 = vld [vmem:[%s548 + $0x140] sm:$0xff]
        %v1553 = vld [vmem:[%s548 + $0x148] sm:$0xff]
        %v1554 = vld [vmem:[%s548 + $0x150] sm:$0xff]
        %v1555 = vld [vmem:[%s548 + $0x158] sm:$0xff]
        %v1556 = vld [vmem:[%s548 + $0x160] sm:$0xff]
        %v1557 = vld [vmem:[%s548 + $0x168] sm:$0xff]
        %v1558 = vld [vmem:[%s548 + $0x170] sm:$0xff]
        %v1559 = vld [vmem:[%s548 + $0x178] sm:$0xff]
        %s1560 = scalar_lea.vmem [#allocation9], 192
        %v1561 = vld [vmem:[%s1560] sm:$0xf]
        %v1562 = vld [vmem:[%s1560 + $0x4] sm:$0xf]
        %v1563 = vld [vmem:[%s1560 + $0x8] sm:$0xf]
        %v1564 = vld [vmem:[%s1560 + $0xc] sm:$0xf]
        %v1565 = vld [vmem:[%s1560 + $0x10] sm:$0xf]
        %v1566 = vld [vmem:[%s1560 + $0x14] sm:$0xf]
        %v1567 = vld [vmem:[%s1560 + $0x18] sm:$0xf]
        %v1568 = vld [vmem:[%s1560 + $0x1c] sm:$0xf]
        %v1569 = vld [vmem:[%s1560 + $0x20] sm:$0xf]
        %v1570 = vld [vmem:[%s1560 + $0x24] sm:$0xf]
        %v1571 = vld [vmem:[%s1560 + $0x28] sm:$0xf]
        %v1572 = vld [vmem:[%s1560 + $0x2c] sm:$0xf]
        %v1573 = vld [vmem:[%s1560 + $0x30] sm:$0xf]
        %v1574 = vld [vmem:[%s1560 + $0x34] sm:$0xf]
        %v1575 = vld [vmem:[%s1560 + $0x38] sm:$0xf]
        %v1576 = vld [vmem:[%s1560 + $0x3c] sm:$0xf]
        %v1577 = vld [vmem:[%s1560 + $0x40] sm:$0xf]
        %v1578 = vld [vmem:[%s1560 + $0x44] sm:$0xf]
        %v1579 = vld [vmem:[%s1560 + $0x48] sm:$0xf]
        %v1580 = vld [vmem:[%s1560 + $0x4c] sm:$0xf]
        %v1581 = vld [vmem:[%s1560 + $0x50] sm:$0xf]
        %v1582 = vld [vmem:[%s1560 + $0x54] sm:$0xf]
        %v1583 = vld [vmem:[%s1560 + $0x58] sm:$0xf]
        %v1584 = vld [vmem:[%s1560 + $0x5c] sm:$0xf]
        %v1585 = vld [vmem:[%s1560 + $0x60] sm:$0xf]
        %v1586 = vld [vmem:[%s1560 + $0x64] sm:$0xf]
        %v1587 = vld [vmem:[%s1560 + $0x68] sm:$0xf]
        %v1588 = vld [vmem:[%s1560 + $0x6c] sm:$0xf]
        %v1589 = vld [vmem:[%s1560 + $0x70] sm:$0xf]
        %v1590 = vld [vmem:[%s1560 + $0x74] sm:$0xf]
        %v1591 = vld [vmem:[%s1560 + $0x78] sm:$0xf]
        %v1592 = vld [vmem:[%s1560 + $0x7c] sm:$0xf]
        %v1593 = vld [vmem:[%s1560 + $0x80] sm:$0xf]
        %v1594 = vld [vmem:[%s1560 + $0x84] sm:$0xf]
        %v1595 = vld [vmem:[%s1560 + $0x88] sm:$0xf]
        %v1596 = vld [vmem:[%s1560 + $0x8c] sm:$0xf]
        %v1597 = vld [vmem:[%s1560 + $0x90] sm:$0xf]
        %v1598 = vld [vmem:[%s1560 + $0x94] sm:$0xf]
        %v1599 = vld [vmem:[%s1560 + $0x98] sm:$0xf]
        %v1600 = vld [vmem:[%s1560 + $0x9c] sm:$0xf]
        %v1601 = vld [vmem:[%s1560 + $0xa0] sm:$0xf]
        %v1602 = vld [vmem:[%s1560 + $0xa4] sm:$0xf]
        %v1603 = vld [vmem:[%s1560 + $0xa8] sm:$0xf]
        %v1604 = vld [vmem:[%s1560 + $0xac] sm:$0xf]
        %v1605 = vld [vmem:[%s1560 + $0xb0] sm:$0xf]
        %v1606 = vld [vmem:[%s1560 + $0xb4] sm:$0xf]
        %v1607 = vld [vmem:[%s1560 + $0xb8] sm:$0xf]
        %v1608 = vld [vmem:[%s1560 + $0xbc] sm:$0xf]
        %v1657 = vunpack.c.l.b16 %v1561
        %v1658 = vunpack.c.l.b16 %v1562
        %v1659 = vunpack.c.l.b16 %v1563
        %v1660 = vunpack.c.l.b16 %v1564
        %v1661 = vunpack.c.l.b16 %v1565
        %v1662 = vunpack.c.l.b16 %v1566
        %v1663 = vunpack.c.l.b16 %v1567
        %v1664 = vunpack.c.l.b16 %v1568
        %v1665 = vunpack.c.l.b16 %v1569
        %v1666 = vunpack.c.l.b16 %v1570
        %v1667 = vunpack.c.l.b16 %v1571
        %v1668 = vunpack.c.l.b16 %v1572
        %v1669 = vunpack.c.l.b16 %v1573
        %v1670 = vunpack.c.l.b16 %v1574
        %v1671 = vunpack.c.l.b16 %v1575
        %v1672 = vunpack.c.l.b16 %v1576
        %v1673 = vunpack.c.l.b16 %v1577
        %v1674 = vunpack.c.l.b16 %v1578
        %v1675 = vunpack.c.l.b16 %v1579
        %v1676 = vunpack.c.l.b16 %v1580
        %v1677 = vunpack.c.l.b16 %v1581
        %v1678 = vunpack.c.l.b16 %v1582
        %v1679 = vunpack.c.l.b16 %v1583
        %v1680 = vunpack.c.l.b16 %v1584
        %v1681 = vunpack.c.l.b16 %v1585
        %v1682 = vunpack.c.l.b16 %v1586
        %v1683 = vunpack.c.l.b16 %v1587
        %v1684 = vunpack.c.l.b16 %v1588
        %v1685 = vunpack.c.l.b16 %v1589
        %v1686 = vunpack.c.l.b16 %v1590
        %v1687 = vunpack.c.l.b16 %v1591
        %v1688 = vunpack.c.l.b16 %v1592
        %v1689 = vunpack.c.l.b16 %v1593
        %v1690 = vunpack.c.l.b16 %v1594
        %v1691 = vunpack.c.l.b16 %v1595
        %v1692 = vunpack.c.l.b16 %v1596
        %v1693 = vunpack.c.l.b16 %v1597
        %v1694 = vunpack.c.l.b16 %v1598
        %v1695 = vunpack.c.l.b16 %v1599
        %v1696 = vunpack.c.l.b16 %v1600
        %v1697 = vunpack.c.l.b16 %v1601
        %v1698 = vunpack.c.l.b16 %v1602
        %v1699 = vunpack.c.l.b16 %v1603
        %v1700 = vunpack.c.l.b16 %v1604
        %v1701 = vunpack.c.l.b16 %v1605
        %v1702 = vunpack.c.l.b16 %v1606
        %v1703 = vunpack.c.l.b16 %v1607
        %v1704 = vunpack.c.l.b16 %v1608
        %v1705 = vpack.c.b16 %v1658, %v1657
        %v1706 = vpack.c.b16 %v1660, %v1659
        %v1707 = vpack.c.b16 %v1662, %v1661
        %v1708 = vpack.c.b16 %v1664, %v1663
        %v1709 = vpack.c.b16 %v1666, %v1665
        %v1710 = vpack.c.b16 %v1668, %v1667
        %v1711 = vpack.c.b16 %v1670, %v1669
        %v1712 = vpack.c.b16 %v1672, %v1671
        %v1713 = vpack.c.b16 %v1674, %v1673
        %v1714 = vpack.c.b16 %v1676, %v1675
        %v1715 = vpack.c.b16 %v1678, %v1677
        %v1716 = vpack.c.b16 %v1680, %v1679
        %v1717 = vpack.c.b16 %v1682, %v1681
        %v1718 = vpack.c.b16 %v1684, %v1683
        %v1719 = vpack.c.b16 %v1686, %v1685
        %v1720 = vpack.c.b16 %v1688, %v1687
        %v1721 = vpack.c.b16 %v1690, %v1689
        %v1722 = vpack.c.b16 %v1692, %v1691
        %v1723 = vpack.c.b16 %v1694, %v1693
        %v1724 = vpack.c.b16 %v1696, %v1695
        %v1725 = vpack.c.b16 %v1698, %v1697
        %v1726 = vpack.c.b16 %v1700, %v1699
        %v1727 = vpack.c.b16 %v1702, %v1701
        %v1728 = vpack.c.b16 %v1704, %v1703
        %1753 = vmatprep.subr.bf16.mxu0 0
        %1754 = vmatpush1.bf16.msra.mxu0 %v1705
        %1755 = vmatprep.subr.bf16.mxu0 0
        %1756 = vmatpush1.bf16.msra.mxu0 %v1706
        %1757 = vmatprep.subr.bf16.mxu0 0
        %1758 = vmatpush1.bf16.msra.mxu0 %v1707
        %1759 = vmatprep.subr.bf16.mxu0 0
        %1760 = vmatpush1.bf16.msra.mxu0 %v1708
        %1761 = vmatprep.subr.bf16.mxu0 0
        %1762 = vmatpush1.bf16.msra.mxu0 %v1709
        %1763 = vmatprep.subr.bf16.mxu0 0
        %1764 = vmatpush1.bf16.msra.mxu0 %v1710
        %1765 = vmatprep.subr.bf16.mxu0 0
        %1766 = vmatpush1.bf16.msra.mxu0 %v1711
        %1767 = vmatprep.subr.bf16.mxu0 0
        %1768 = vmatpush1.bf16.msra.mxu0 %v1712
        %1769 = vmatprep.subr.bf16.mxu0 0
        %1770 = vmatpush1.bf16.msra.mxu0 %v1713
        %1771 = vmatprep.subr.bf16.mxu0 0
        %1772 = vmatpush1.bf16.msra.mxu0 %v1714
        %1773 = vmatprep.subr.bf16.mxu0 0
        %1774 = vmatpush1.bf16.msra.mxu0 %v1715
        %1775 = vmatprep.subr.bf16.mxu0 0
        %1776 = vmatpush1.bf16.msra.mxu0 %v1716
        %1777 = vmatprep.subr.bf16.mxu0 0
        %1778 = vmatpush1.bf16.msra.mxu0 %v1717
        %1779 = vmatprep.subr.bf16.mxu0 0
        %1780 = vmatpush1.bf16.msra.mxu0 %v1718
        %1781 = vmatprep.subr.bf16.mxu0 0
        %1782 = vmatpush1.bf16.msra.mxu0 %v1719
        %1783 = vmatprep.subr.bf16.mxu0 0
        %1784 = vmatpush1.bf16.msra.mxu0 %v1720
        %1785 = vmatprep.mubr.bf16.mxu0 %v1513
        %1786 = vmatmul.mubr.bf16.gmra.mrb[0].mxu0 %v1512
        %v1787 = vpop.f32.mrb[0].mxu0
        %v1788 = vadd.f32 0.0, %v1787
        %v1789 = vpop.f32.mrb[0].mxu0
        %v1790 = vpop.f32.mrb[0].mxu0
        %v1791 = vadd.f32 0.0, %v1790
        %v1792 = vpop.f32.mrb[0].mxu0
        %1793 = vmatprep.mubr.bf16.mxu0 %v1516
        %1794 = vmatmul.mubr.bf16.gmra.mrb[0].mxu0 %v1515
        %v1795 = vpop.f32.mrb[0].mxu0
        %v1796 = vadd.f32 0.0, %v1795
        %v1797 = vpop.f32.mrb[0].mxu0
        %v1798 = vpop.f32.mrb[0].mxu0
        %v1799 = vadd.f32 0.0, %v1798
        %v1800 = vpop.f32.mrb[0].mxu0
        %1801 = vmatprep.mubr.bf16.mxu0 %v1519
        %1802 = vmatmul.mubr.bf16.gmra.mrb[0].mxu0 %v1518
        %v1803 = vpop.f32.mrb[0].mxu0
        %v1804 = vadd.f32 0.0, %v1803
        %v1805 = vpop.f32.mrb[0].mxu0
        %v1806 = vpop.f32.mrb[0].mxu0
        %v1807 = vadd.f32 0.0, %v1806
        %v1808 = vpop.f32.mrb[0].mxu0
        %1809 = vmatprep.mubr.bf16.mxu0 %v1522
        %1810 = vmatmul.mubr.bf16.gmra.mrb[0].mxu0 %v1521
        %v1811 = vpop.f32.mrb[0].mxu0
        %v1812 = vadd.f32 0.0, %v1811
        %v1813 = vpop.f32.mrb[0].mxu0
        %v1814 = vpop.f32.mrb[0].mxu0
        %v1815 = vadd.f32 0.0, %v1814
        %v1816 = vpop.f32.mrb[0].mxu0
        %1817 = vmatprep.mubr.bf16.mxu0 %v1525
        %1818 = vmatmul.mubr.bf16.gmra.mrb[0].mxu0 %v1524
        %v1819 = vpop.f32.mrb[0].mxu0
        %v1820 = vadd.f32 0.0, %v1819
        %v1821 = vpop.f32.mrb[0].mxu0
        %v1822 = vpop.f32.mrb[0].mxu0
        %v1823 = vadd.f32 0.0, %v1822
        %v1824 = vpop.f32.mrb[0].mxu0
        %1825 = vmatprep.mubr.bf16.mxu0 %v1528
        %1826 = vmatmul.mubr.bf16.gmra.mrb[0].mxu0 %v1527
        %v1827 = vpop.f32.mrb[0].mxu0
        %v1828 = vadd.f32 0.0, %v1827
        %v1829 = vpop.f32.mrb[0].mxu0
        %v1830 = vpop.f32.mrb[0].mxu0
        %v1831 = vadd.f32 0.0, %v1830
        %v1832 = vpop.f32.mrb[0].mxu0
        %1833 = vmatprep.mubr.bf16.mxu0 %v1531
        %1834 = vmatmul.mubr.bf16.gmra.mrb[0].mxu0 %v1530
        %v1835 = vpop.f32.mrb[0].mxu0
        %v1836 = vadd.f32 0.0, %v1835
        %v1837 = vpop.f32.mrb[0].mxu0
        %v1838 = vpop.f32.mrb[0].mxu0
        %v1839 = vadd.f32 0.0, %v1838
        %v1840 = vpop.f32.mrb[0].mxu0
        %1841 = vmatprep.mubr.bf16.mxu0 %v1534
        %1842 = vmatmul.mubr.bf16.gmra.mrb[0].mxu0 %v1533
        %v1843 = vpop.f32.mrb[0].mxu0
        %v1844 = vadd.f32 0.0, %v1843
        %v1845 = vpop.f32.mrb[0].mxu0
        %v1846 = vpop.f32.mrb[0].mxu0
        %v1847 = vadd.f32 0.0, %v1846
        %v1848 = vpop.f32.mrb[0].mxu0
        %1849 = vmatprep.mubr.bf16.mxu0 %v1537
        %1850 = vmatmul.mubr.bf16.gmra.mrb[0].mxu0 %v1536
        %v1851 = vpop.f32.mrb[0].mxu0
        %v1852 = vadd.f32 0.0, %v1851
        %v1853 = vpop.f32.mrb[0].mxu0
        %v1854 = vpop.f32.mrb[0].mxu0
        %v1855 = vadd.f32 0.0, %v1854
        %v1856 = vpop.f32.mrb[0].mxu0
        %1857 = vmatprep.mubr.bf16.mxu0 %v1540
        %1858 = vmatmul.mubr.bf16.gmra.mrb[0].mxu0 %v1539
        %v1859 = vpop.f32.mrb[0].mxu0
        %v1860 = vadd.f32 0.0, %v1859
        %v1861 = vpop.f32.mrb[0].mxu0
        %v1862 = vpop.f32.mrb[0].mxu0
        %v1863 = vadd.f32 0.0, %v1862
        %v1864 = vpop.f32.mrb[0].mxu0
        %1865 = vmatprep.mubr.bf16.mxu0 %v1543
        %1866 = vmatmul.mubr.bf16.gmra.mrb[0].mxu0 %v1542
        %v1867 = vpop.f32.mrb[0].mxu0
        %v1868 = vadd.f32 0.0, %v1867
        %v1869 = vpop.f32.mrb[0].mxu0
        %v1870 = vpop.f32.mrb[0].mxu0
        %v1871 = vadd.f32 0.0, %v1870
        %v1872 = vpop.f32.mrb[0].mxu0
        %1873 = vmatprep.mubr.bf16.mxu0 %v1546
        %1874 = vmatmul.mubr.bf16.gmra.mrb[0].mxu0 %v1545
        %v1875 = vpop.f32.mrb[0].mxu0
        %v1876 = vadd.f32 0.0, %v1875
        %v1877 = vpop.f32.mrb[0].mxu0
        %v1878 = vpop.f32.mrb[0].mxu0
        %v1879 = vadd.f32 0.0, %v1878
        %v1880 = vpop.f32.mrb[0].mxu0
        %1881 = vmatprep.mubr.bf16.mxu0 %v1549
        %1882 = vmatmul.mubr.bf16.gmra.mrb[0].mxu0 %v1548
        %v1883 = vpop.f32.mrb[0].mxu0
        %v1884 = vadd.f32 0.0, %v1883
        %v1885 = vpop.f32.mrb[0].mxu0
        %v1886 = vpop.f32.mrb[0].mxu0
        %v1887 = vadd.f32 0.0, %v1886
        %v1888 = vpop.f32.mrb[0].mxu0
        %1889 = vmatprep.mubr.bf16.mxu0 %v1552
        %1890 = vmatmul.mubr.bf16.gmra.mrb[0].mxu0 %v1551
        %v1891 = vpop.f32.mrb[0].mxu0
        %v1892 = vadd.f32 0.0, %v1891
        %v1893 = vpop.f32.mrb[0].mxu0
        %v1894 = vpop.f32.mrb[0].mxu0
        %v1895 = vadd.f32 0.0, %v1894
        %v1896 = vpop.f32.mrb[0].mxu0
        %1897 = vmatprep.mubr.bf16.mxu0 %v1555
        %1898 = vmatmul.mubr.bf16.gmra.mrb[0].mxu0 %v1554
        %v1899 = vpop.f32.mrb[0].mxu0
        %v1900 = vadd.f32 0.0, %v1899
        %v1901 = vpop.f32.mrb[0].mxu0
        %v1902 = vpop.f32.mrb[0].mxu0
        %v1903 = vadd.f32 0.0, %v1902
        %v1904 = vpop.f32.mrb[0].mxu0
        %1905 = vmatprep.mubr.bf16.mxu0 %v1558
        %1906 = vmatmul.mubr.bf16.gmra.mrb[0].mxu0 %v1557
        %v1907 = vpop.f32.mrb[0].mxu0
        %v1908 = vadd.f32 0.0, %v1907
        %v1909 = vpop.f32.mrb[0].mxu0
        %v1910 = vpop.f32.mrb[0].mxu0
        %v1911 = vadd.f32 0.0, %v1910
        %v1912 = vpop.f32.mrb[0].mxu0
        %1913 = vdwg.mxu0
        %1914 = vmatprep.subr.bf16.mxu0 0
        %1915 = vmatpush1.bf16.msra.mxu0 %v1721
        %1916 = vmatprep.subr.bf16.mxu0 0
        %1917 = vmatpush1.bf16.msra.mxu0 %v1722
        %1918 = vmatprep.subr.bf16.mxu0 0
        %1919 = vmatpush1.bf16.msra.mxu0 %v1723
        %1920 = vmatprep.subr.bf16.mxu0 0
        %1921 = vmatpush1.bf16.msra.mxu0 %v1724
        %1922 = vmatprep.subr.bf16.mxu0 0
        %1923 = vmatpush1.bf16.msra.mxu0 %v1725
        %1924 = vmatprep.subr.bf16.mxu0 0
        %1925 = vmatpush1.bf16.msra.mxu0 %v1726
        %1926 = vmatprep.subr.bf16.mxu0 0
        %1927 = vmatpush1.bf16.msra.mxu0 %v1727
        %1928 = vmatprep.subr.bf16.mxu0 0
        %1929 = vmatpush1.bf16.msra.mxu0 %v1728
        %1930 = vmatprep.subr.bf16.mxu0 0
        %1931 = vmatpush1.bf16.msra.mxu0 0
        %1932 = vmatprep.subr.bf16.mxu0 0
        %1933 = vmatpush1.bf16.msra.mxu0 0
        %1934 = vmatprep.subr.bf16.mxu0 0
        %1935 = vmatpush1.bf16.msra.mxu0 0
        %1936 = vmatprep.subr.bf16.mxu0 0
        %1937 = vmatpush1.bf16.msra.mxu0 0
        %1938 = vmatprep.subr.bf16.mxu0 0
        %1939 = vmatpush1.bf16.msra.mxu0 0
        %1940 = vmatprep.subr.bf16.mxu0 0
        %1941 = vmatpush1.bf16.msra.mxu0 0
        %1942 = vmatprep.subr.bf16.mxu0 0
        %1943 = vmatpush1.bf16.msra.mxu0 0
        %1944 = vmatprep.subr.bf16.mxu0 0
        %1945 = vmatpush1.bf16.msra.mxu0 0
        %1946 = vmatprep.mubr.bf16.mxu0 0
        %1947 = vmatmul.mubr.bf16.gmra.mrb[0].mxu0 %v1514
        %v1948 = vpop.f32.mrb[0].mxu0
        %v1949 = vadd.f32 %v1788, %v1948
        %v1950 = vpop.f32.mrb[0].mxu0
        %v1951 = vpop.f32.mrb[0].mxu0
        %v1952 = vadd.f32 %v1791, %v1951
        %v1953 = vpop.f32.mrb[0].mxu0
        %1954 = vmatprep.mubr.bf16.mxu0 0
        %1955 = vmatmul.mubr.bf16.gmra.mrb[0].mxu0 %v1517
        %v1956 = vpop.f32.mrb[0].mxu0
        %v1957 = vadd.f32 %v1796, %v1956
        %v1958 = vpop.f32.mrb[0].mxu0
        %v1959 = vpop.f32.mrb[0].mxu0
        %v1960 = vadd.f32 %v1799, %v1959
        %v1961 = vpop.f32.mrb[0].mxu0
        %1962 = vmatprep.mubr.bf16.mxu0 0
        %1963 = vmatmul.mubr.bf16.gmra.mrb[0].mxu0 %v1520
        %v1964 = vpop.f32.mrb[0].mxu0
        %v1965 = vadd.f32 %v1804, %v1964
        %v1966 = vpop.f32.mrb[0].mxu0
        %v1967 = vpop.f32.mrb[0].mxu0
        %v1968 = vadd.f32 %v1807, %v1967
        %v1969 = vpop.f32.mrb[0].mxu0
        %1970 = vmatprep.mubr.bf16.mxu0 0
        %1971 = vmatmul.mubr.bf16.gmra.mrb[0].mxu0 %v1523
        %v1972 = vpop.f32.mrb[0].mxu0
        %v1973 = vadd.f32 %v1812, %v1972
        %v1974 = vpop.f32.mrb[0].mxu0
        %v1975 = vpop.f32.mrb[0].mxu0
        %v1976 = vadd.f32 %v1815, %v1975
        %v1977 = vpop.f32.mrb[0].mxu0
        %1978 = vmatprep.mubr.bf16.mxu0 0
        %1979 = vmatmul.mubr.bf16.gmra.mrb[0].mxu0 %v1526
        %v1980 = vpop.f32.mrb[0].mxu0
        %v1981 = vadd.f32 %v1820, %v1980
        %v1982 = vpop.f32.mrb[0].mxu0
        %v1983 = vpop.f32.mrb[0].mxu0
        %v1984 = vadd.f32 %v1823, %v1983
        %v1985 = vpop.f32.mrb[0].mxu0
        %1986 = vmatprep.mubr.bf16.mxu0 0
        %1987 = vmatmul.mubr.bf16.gmra.mrb[0].mxu0 %v1529
        %v1988 = vpop.f32.mrb[0].mxu0
        %v1989 = vadd.f32 %v1828, %v1988
        %v1990 = vpop.f32.mrb[0].mxu0
        %v1991 = vpop.f32.mrb[0].mxu0
        %v1992 = vadd.f32 %v1831, %v1991
        %v1993 = vpop.f32.mrb[0].mxu0
        %1994 = vmatprep.mubr.bf16.mxu0 0
        %1995 = vmatmul.mubr.bf16.gmra.mrb[0].mxu0 %v1532
        %v1996 = vpop.f32.mrb[0].mxu0
        %v1997 = vadd.f32 %v1836, %v1996
        %v1998 = vpop.f32.mrb[0].mxu0
        %v1999 = vpop.f32.mrb[0].mxu0
        %v2000 = vadd.f32 %v1839, %v1999
        %v2001 = vpop.f32.mrb[0].mxu0
        %2002 = vmatprep.mubr.bf16.mxu0 0
        %2003 = vmatmul.mubr.bf16.gmra.mrb[0].mxu0 %v1535
        %v2004 = vpop.f32.mrb[0].mxu0
        %v2005 = vadd.f32 %v1844, %v2004
        %v2006 = vpop.f32.mrb[0].mxu0
        %v2007 = vpop.f32.mrb[0].mxu0
        %v2008 = vadd.f32 %v1847, %v2007
        %v2009 = vpop.f32.mrb[0].mxu0
        %2010 = vmatprep.mubr.bf16.mxu0 0
        %2011 = vmatmul.mubr.bf16.gmra.mrb[0].mxu0 %v1538
        %v2012 = vpop.f32.mrb[0].mxu0
        %v2013 = vadd.f32 %v1852, %v2012
        %v2014 = vpop.f32.mrb[0].mxu0
        %v2015 = vpop.f32.mrb[0].mxu0
        %v2016 = vadd.f32 %v1855, %v2015
        %v2017 = vpop.f32.mrb[0].mxu0
        %2018 = vmatprep.mubr.bf16.mxu0 0
        %2019 = vmatmul.mubr.bf16.gmra.mrb[0].mxu0 %v1541
        %v2020 = vpop.f32.mrb[0].mxu0
        %v2021 = vadd.f32 %v1860, %v2020
        %v2022 = vpop.f32.mrb[0].mxu0
        %v2023 = vpop.f32.mrb[0].mxu0
        %v2024 = vadd.f32 %v1863, %v2023
        %v2025 = vpop.f32.mrb[0].mxu0
        %2026 = vmatprep.mubr.bf16.mxu0 0
        %2027 = vmatmul.mubr.bf16.gmra.mrb[0].mxu0 %v1544
        %v2028 = vpop.f32.mrb[0].mxu0
        %v2029 = vadd.f32 %v1868, %v2028
        %v2030 = vpop.f32.mrb[0].mxu0
        %v2031 = vpop.f32.mrb[0].mxu0
        %v2032 = vadd.f32 %v1871, %v2031
        %v2033 = vpop.f32.mrb[0].mxu0
        %2034 = vmatprep.mubr.bf16.mxu0 0
        %2035 = vmatmul.mubr.bf16.gmra.mrb[0].mxu0 %v1547
        %v2036 = vpop.f32.mrb[0].mxu0
        %v2037 = vadd.f32 %v1876, %v2036
        %v2038 = vpop.f32.mrb[0].mxu0
        %v2039 = vpop.f32.mrb[0].mxu0
        %v2040 = vadd.f32 %v1879, %v2039
        %v2041 = vpop.f32.mrb[0].mxu0
        %2042 = vmatprep.mubr.bf16.mxu0 0
        %2043 = vmatmul.mubr.bf16.gmra.mrb[0].mxu0 %v1550
        %v2044 = vpop.f32.mrb[0].mxu0
        %v2045 = vadd.f32 %v1884, %v2044
        %v2046 = vpop.f32.mrb[0].mxu0
        %v2047 = vpop.f32.mrb[0].mxu0
        %v2048 = vadd.f32 %v1887, %v2047
        %v2049 = vpop.f32.mrb[0].mxu0
        %2050 = vmatprep.mubr.bf16.mxu0 0
        %2051 = vmatmul.mubr.bf16.gmra.mrb[0].mxu0 %v1553
        %v2052 = vpop.f32.mrb[0].mxu0
        %v2053 = vadd.f32 %v1892, %v2052
        %v2054 = vpop.f32.mrb[0].mxu0
        %v2055 = vpop.f32.mrb[0].mxu0
        %v2056 = vadd.f32 %v1895, %v2055
        %v2057 = vpop.f32.mrb[0].mxu0
        %2058 = vmatprep.mubr.bf16.mxu0 0
        %2059 = vmatmul.mubr.bf16.gmra.mrb[0].mxu0 %v1556
        %v2060 = vpop.f32.mrb[0].mxu0
        %v2061 = vadd.f32 %v1900, %v2060
        %v2062 = vpop.f32.mrb[0].mxu0
        %v2063 = vpop.f32.mrb[0].mxu0
        %v2064 = vadd.f32 %v1903, %v2063
        %v2065 = vpop.f32.mrb[0].mxu0
        %2066 = vmatprep.mubr.bf16.mxu0 0
        %2067 = vmatmul.mubr.bf16.gmra.mrb[0].mxu0 %v1559
        %v2068 = vpop.f32.mrb[0].mxu0
        %v2069 = vadd.f32 %v1908, %v2068
        %v2070 = vpop.f32.mrb[0].mxu0
        %v2071 = vpop.f32.mrb[0].mxu0
        %v2072 = vadd.f32 %v1911, %v2071
        %v2073 = vpop.f32.mrb[0].mxu0
        %2074 = vdwg.mxu0
        %v2123 = vunpack.c.l.b16 %v1464
        %v2124 = vunpack.c.l.b16 %v1465
        %v2125 = vunpack.c.l.b16 %v1466
        %v2126 = vunpack.c.l.b16 %v1467
        %v2127 = vunpack.c.l.b16 %v1468
        %v2128 = vunpack.c.l.b16 %v1469
        %v2129 = vunpack.c.l.b16 %v1470
        %v2130 = vunpack.c.l.b16 %v1471
        %v2131 = vunpack.c.l.b16 %v1472
        %v2132 = vunpack.c.l.b16 %v1473
        %v2133 = vunpack.c.l.b16 %v1474
        %v2134 = vunpack.c.l.b16 %v1475
        %v2135 = vunpack.c.l.b16 %v1476
        %v2136 = vunpack.c.l.b16 %v1477
        %v2137 = vunpack.c.l.b16 %v1478
        %v2138 = vunpack.c.l.b16 %v1479
        %v2139 = vunpack.c.l.b16 %v1480
        %v2140 = vunpack.c.l.b16 %v1481
        %v2141 = vunpack.c.l.b16 %v1482
        %v2142 = vunpack.c.l.b16 %v1483
        %v2143 = vunpack.c.l.b16 %v1484
        %v2144 = vunpack.c.l.b16 %v1485
        %v2145 = vunpack.c.l.b16 %v1486
        %v2146 = vunpack.c.l.b16 %v1487
        %v2147 = vunpack.c.l.b16 %v1488
        %v2148 = vunpack.c.l.b16 %v1489
        %v2149 = vunpack.c.l.b16 %v1490
        %v2150 = vunpack.c.l.b16 %v1491
        %v2151 = vunpack.c.l.b16 %v1492
        %v2152 = vunpack.c.l.b16 %v1493
        %v2153 = vunpack.c.l.b16 %v1494
        %v2154 = vunpack.c.l.b16 %v1495
        %v2155 = vunpack.c.l.b16 %v1496
        %v2156 = vunpack.c.l.b16 %v1497
        %v2157 = vunpack.c.l.b16 %v1498
        %v2158 = vunpack.c.l.b16 %v1499
        %v2159 = vunpack.c.l.b16 %v1500
        %v2160 = vunpack.c.l.b16 %v1501
        %v2161 = vunpack.c.l.b16 %v1502
        %v2162 = vunpack.c.l.b16 %v1503
        %v2163 = vunpack.c.l.b16 %v1504
        %v2164 = vunpack.c.l.b16 %v1505
        %v2165 = vunpack.c.l.b16 %v1506
        %v2166 = vunpack.c.l.b16 %v1507
        %v2167 = vunpack.c.l.b16 %v1508
        %v2168 = vunpack.c.l.b16 %v1509
        %v2169 = vunpack.c.l.b16 %v1510
        %v2170 = vunpack.c.l.b16 %v1511
        %v2171 = vpack.c.b16 %v2124, %v2123
        %v2172 = vpack.c.b16 %v2126, %v2125
        %v2173 = vpack.c.b16 %v2128, %v2127
        %v2174 = vpack.c.b16 %v2130, %v2129
        %v2175 = vpack.c.b16 %v2132, %v2131
        %v2176 = vpack.c.b16 %v2134, %v2133
        %v2177 = vpack.c.b16 %v2136, %v2135
        %v2178 = vpack.c.b16 %v2138, %v2137
        %v2179 = vpack.c.b16 %v2140, %v2139
        %v2180 = vpack.c.b16 %v2142, %v2141
        %v2181 = vpack.c.b16 %v2144, %v2143
        %v2182 = vpack.c.b16 %v2146, %v2145
        %v2183 = vpack.c.b16 %v2148, %v2147
        %v2184 = vpack.c.b16 %v2150, %v2149
        %v2185 = vpack.c.b16 %v2152, %v2151
        %v2186 = vpack.c.b16 %v2154, %v2153
        %v2187 = vpack.c.b16 %v2156, %v2155
        %v2188 = vpack.c.b16 %v2158, %v2157
        %v2189 = vpack.c.b16 %v2160, %v2159
        %v2190 = vpack.c.b16 %v2162, %v2161
        %v2191 = vpack.c.b16 %v2164, %v2163
        %v2192 = vpack.c.b16 %v2166, %v2165
        %v2193 = vpack.c.b16 %v2168, %v2167
        %v2194 = vpack.c.b16 %v2170, %v2169
        %2219 = vmatprep.subr.bf16.mxu0 0
        %2220 = vmatpush1.bf16.msra.mxu0 %v2171
        %2221 = vmatprep.subr.bf16.mxu0 0
        %2222 = vmatpush1.bf16.msra.mxu0 %v2172
        %2223 = vmatprep.subr.bf16.mxu0 0
        %2224 = vmatpush1.bf16.msra.mxu0 %v2173
        %2225 = vmatprep.subr.bf16.mxu0 0
        %2226 = vmatpush1.bf16.msra.mxu0 %v2174
        %2227 = vmatprep.subr.bf16.mxu0 0
        %2228 = vmatpush1.bf16.msra.mxu0 %v2175
        %2229 = vmatprep.subr.bf16.mxu0 0
        %2230 = vmatpush1.bf16.msra.mxu0 %v2176
        %2231 = vmatprep.subr.bf16.mxu0 0
        %2232 = vmatpush1.bf16.msra.mxu0 %v2177
        %2233 = vmatprep.subr.bf16.mxu0 0
        %2234 = vmatpush1.bf16.msra.mxu0 %v2178
        %2235 = vmatprep.subr.bf16.mxu0 0
        %2236 = vmatpush1.bf16.msra.mxu0 %v2179
        %2237 = vmatprep.subr.bf16.mxu0 0
        %2238 = vmatpush1.bf16.msra.mxu0 %v2180
        %2239 = vmatprep.subr.bf16.mxu0 0
        %2240 = vmatpush1.bf16.msra.mxu0 %v2181
        %2241 = vmatprep.subr.bf16.mxu0 0
        %2242 = vmatpush1.bf16.msra.mxu0 %v2182
        %2243 = vmatprep.subr.bf16.mxu0 0
        %2244 = vmatpush1.bf16.msra.mxu0 %v2183
        %2245 = vmatprep.subr.bf16.mxu0 0
        %2246 = vmatpush1.bf16.msra.mxu0 %v2184
        %2247 = vmatprep.subr.bf16.mxu0 0
        %2248 = vmatpush1.bf16.msra.mxu0 %v2185
        %2249 = vmatprep.subr.bf16.mxu0 0
        %2250 = vmatpush1.bf16.msra.mxu0 %v2186
        %2251 = vmatprep.mubr.bf16.mxu0 %v1417
        %2252 = vmatmul.mubr.bf16.gmra.mrb[0].mxu0 %v1416
        %v2253 = vpop.f32.mrb[0].mxu0
        %v2254 = vadd.f32 %v1949, %v2253
        %v2255 = vpop.f32.mrb[0].mxu0
        %v2256 = vpop.f32.mrb[0].mxu0
        %v2257 = vadd.f32 %v1952, %v2256
        %v2258 = vpop.f32.mrb[0].mxu0
        %2259 = vmatprep.mubr.bf16.mxu0 %v1420
        %2260 = vmatmul.mubr.bf16.gmra.mrb[0].mxu0 %v1419
        %v2261 = vpop.f32.mrb[0].mxu0
        %v2262 = vadd.f32 %v1957, %v2261
        %v2263 = vpop.f32.mrb[0].mxu0
        %v2264 = vpop.f32.mrb[0].mxu0
        %v2265 = vadd.f32 %v1960, %v2264
        %v2266 = vpop.f32.mrb[0].mxu0
        %2267 = vmatprep.mubr.bf16.mxu0 %v1423
        %2268 = vmatmul.mubr.bf16.gmra.mrb[0].mxu0 %v1422
        %v2269 = vpop.f32.mrb[0].mxu0
        %v2270 = vadd.f32 %v1965, %v2269
        %v2271 = vpop.f32.mrb[0].mxu0
        %v2272 = vpop.f32.mrb[0].mxu0
        %v2273 = vadd.f32 %v1968, %v2272
        %v2274 = vpop.f32.mrb[0].mxu0
        %2275 = vmatprep.mubr.bf16.mxu0 %v1426
        %2276 = vmatmul.mubr.bf16.gmra.mrb[0].mxu0 %v1425
        %v2277 = vpop.f32.mrb[0].mxu0
        %v2278 = vadd.f32 %v1973, %v2277
        %v2279 = vpop.f32.mrb[0].mxu0
        %v2280 = vpop.f32.mrb[0].mxu0
        %v2281 = vadd.f32 %v1976, %v2280
        %v2282 = vpop.f32.mrb[0].mxu0
        %2283 = vmatprep.mubr.bf16.mxu0 %v1429
        %2284 = vmatmul.mubr.bf16.gmra.mrb[0].mxu0 %v1428
        %v2285 = vpop.f32.mrb[0].mxu0
        %v2286 = vadd.f32 %v1981, %v2285
        %v2287 = vpop.f32.mrb[0].mxu0
        %v2288 = vpop.f32.mrb[0].mxu0
        %v2289 = vadd.f32 %v1984, %v2288
        %v2290 = vpop.f32.mrb[0].mxu0
        %2291 = vmatprep.mubr.bf16.mxu0 %v1432
        %2292 = vmatmul.mubr.bf16.gmra.mrb[0].mxu0 %v1431
        %v2293 = vpop.f32.mrb[0].mxu0
        %v2294 = vadd.f32 %v1989, %v2293
        %v2295 = vpop.f32.mrb[0].mxu0
        %v2296 = vpop.f32.mrb[0].mxu0
        %v2297 = vadd.f32 %v1992, %v2296
        %v2298 = vpop.f32.mrb[0].mxu0
        %2299 = vmatprep.mubr.bf16.mxu0 %v1435
        %2300 = vmatmul.mubr.bf16.gmra.mrb[0].mxu0 %v1434
        %v2301 = vpop.f32.mrb[0].mxu0
        %v2302 = vadd.f32 %v1997, %v2301
        %v2303 = vpop.f32.mrb[0].mxu0
        %v2304 = vpop.f32.mrb[0].mxu0
        %v2305 = vadd.f32 %v2000, %v2304
        %v2306 = vpop.f32.mrb[0].mxu0
        %2307 = vmatprep.mubr.bf16.mxu0 %v1438
        %2308 = vmatmul.mubr.bf16.gmra.mrb[0].mxu0 %v1437
        %v2309 = vpop.f32.mrb[0].mxu0
        %v2310 = vadd.f32 %v2005, %v2309
        %v2311 = vpop.f32.mrb[0].mxu0
        %v2312 = vpop.f32.mrb[0].mxu0
        %v2313 = vadd.f32 %v2008, %v2312
        %v2314 = vpop.f32.mrb[0].mxu0
        %2315 = vmatprep.mubr.bf16.mxu0 %v1441
        %2316 = vmatmul.mubr.bf16.gmra.mrb[0].mxu0 %v1440
        %v2317 = vpop.f32.mrb[0].mxu0
        %v2318 = vadd.f32 %v2013, %v2317
        %v2319 = vpop.f32.mrb[0].mxu0
        %v2320 = vpop.f32.mrb[0].mxu0
        %v2321 = vadd.f32 %v2016, %v2320
        %v2322 = vpop.f32.mrb[0].mxu0
        %2323 = vmatprep.mubr.bf16.mxu0 %v1444
        %2324 = vmatmul.mubr.bf16.gmra.mrb[0].mxu0 %v1443
        %v2325 = vpop.f32.mrb[0].mxu0
        %v2326 = vadd.f32 %v2021, %v2325
        %v2327 = vpop.f32.mrb[0].mxu0
        %v2328 = vpop.f32.mrb[0].mxu0
        %v2329 = vadd.f32 %v2024, %v2328
        %v2330 = vpop.f32.mrb[0].mxu0
        %2331 = vmatprep.mubr.bf16.mxu0 %v1447
        %2332 = vmatmul.mubr.bf16.gmra.mrb[0].mxu0 %v1446
        %v2333 = vpop.f32.mrb[0].mxu0
        %v2334 = vadd.f32 %v2029, %v2333
        %v2335 = vpop.f32.mrb[0].mxu0
        %v2336 = vpop.f32.mrb[0].mxu0
        %v2337 = vadd.f32 %v2032, %v2336
        %v2338 = vpop.f32.mrb[0].mxu0
        %2339 = vmatprep.mubr.bf16.mxu0 %v1450
        %2340 = vmatmul.mubr.bf16.gmra.mrb[0].mxu0 %v1449
        %v2341 = vpop.f32.mrb[0].mxu0
        %v2342 = vadd.f32 %v2037, %v2341
        %v2343 = vpop.f32.mrb[0].mxu0
        %v2344 = vpop.f32.mrb[0].mxu0
        %v2345 = vadd.f32 %v2040, %v2344
        %v2346 = vpop.f32.mrb[0].mxu0
        %2347 = vmatprep.mubr.bf16.mxu0 %v1453
        %2348 = vmatmul.mubr.bf16.gmra.mrb[0].mxu0 %v1452
        %v2349 = vpop.f32.mrb[0].mxu0
        %v2350 = vadd.f32 %v2045, %v2349
        %v2351 = vpop.f32.mrb[0].mxu0
        %v2352 = vpop.f32.mrb[0].mxu0
        %v2353 = vadd.f32 %v2048, %v2352
        %v2354 = vpop.f32.mrb[0].mxu0
        %2355 = vmatprep.mubr.bf16.mxu0 %v1456
        %2356 = vmatmul.mubr.bf16.gmra.mrb[0].mxu0 %v1455
        %v2357 = vpop.f32.mrb[0].mxu0
        %v2358 = vadd.f32 %v2053, %v2357
        %v2359 = vpop.f32.mrb[0].mxu0
        %v2360 = vpop.f32.mrb[0].mxu0
        %v2361 = vadd.f32 %v2056, %v2360
        %v2362 = vpop.f32.mrb[0].mxu0
        %2363 = vmatprep.mubr.bf16.mxu0 %v1459
        %2364 = vmatmul.mubr.bf16.gmra.mrb[0].mxu0 %v1458
        %v2365 = vpop.f32.mrb[0].mxu0
        %v2366 = vadd.f32 %v2061, %v2365
        %v2367 = vpop.f32.mrb[0].mxu0
        %v2368 = vpop.f32.mrb[0].mxu0
        %v2369 = vadd.f32 %v2064, %v2368
        %v2370 = vpop.f32.mrb[0].mxu0
        %2371 = vmatprep.mubr.bf16.mxu0 %v1462
        %2372 = vmatmul.mubr.bf16.gmra.mrb[0].mxu0 %v1461
        %v2373 = vpop.f32.mrb[0].mxu0
        %v2374 = vadd.f32 %v2069, %v2373
        %v2375 = vpop.f32.mrb[0].mxu0
        %v2376 = vpop.f32.mrb[0].mxu0
        %v2377 = vadd.f32 %v2072, %v2376
        %v2378 = vpop.f32.mrb[0].mxu0
        %2379 = vdwg.mxu0
        %2380 = vmatprep.subr.bf16.mxu0 0
        %2381 = vmatpush1.bf16.msra.mxu0 %v2187
        %2382 = vmatprep.subr.bf16.mxu0 0
        %2383 = vmatpush1.bf16.msra.mxu0 %v2188
        %2384 = vmatprep.subr.bf16.mxu0 0
        %2385 = vmatpush1.bf16.msra.mxu0 %v2189
        %2386 = vmatprep.subr.bf16.mxu0 0
        %2387 = vmatpush1.bf16.msra.mxu0 %v2190
        %2388 = vmatprep.subr.bf16.mxu0 0
        %2389 = vmatpush1.bf16.msra.mxu0 %v2191
        %2390 = vmatprep.subr.bf16.mxu0 0
        %2391 = vmatpush1.bf16.msra.mxu0 %v2192
        %2392 = vmatprep.subr.bf16.mxu0 0
        %2393 = vmatpush1.bf16.msra.mxu0 %v2193
        %2394 = vmatprep.subr.bf16.mxu0 0
        %2395 = vmatpush1.bf16.msra.mxu0 %v2194
        %2396 = vmatprep.subr.bf16.mxu0 0
        %2397 = vmatpush1.bf16.msra.mxu0 0
        %2398 = vmatprep.subr.bf16.mxu0 0
        %2399 = vmatpush1.bf16.msra.mxu0 0
        %2400 = vmatprep.subr.bf16.mxu0 0
        %2401 = vmatpush1.bf16.msra.mxu0 0
        %2402 = vmatprep.subr.bf16.mxu0 0
        %2403 = vmatpush1.bf16.msra.mxu0 0
        %2404 = vmatprep.subr.bf16.mxu0 0
        %2405 = vmatpush1.bf16.msra.mxu0 0
        %2406 = vmatprep.subr.bf16.mxu0 0
        %2407 = vmatpush1.bf16.msra.mxu0 0
        %2408 = vmatprep.subr.bf16.mxu0 0
        %2409 = vmatpush1.bf16.msra.mxu0 0
        %2410 = vmatprep.subr.bf16.mxu0 0
        %2411 = vmatpush1.bf16.msra.mxu0 0
        %2412 = vmatprep.mubr.bf16.mxu0 0
        %2413 = vmatmul.mubr.bf16.gmra.mrb[0].mxu0 %v1418
        %v2414 = vpop.f32.mrb[0].mxu0
        %v2415 = vadd.f32 %v2254, %v2414
        %v2416 = vpop.f32.mrb[0].mxu0
        %v2417 = vpop.f32.mrb[0].mxu0
        %v2418 = vadd.f32 %v2257, %v2417
        %v2419 = vpop.f32.mrb[0].mxu0
        %2420 = vmatprep.mubr.bf16.mxu0 0
        %2421 = vmatmul.mubr.bf16.gmra.mrb[0].mxu0 %v1421
        %v2422 = vpop.f32.mrb[0].mxu0
        %v2423 = vadd.f32 %v2262, %v2422
        %v2424 = vpop.f32.mrb[0].mxu0
        %v2425 = vpop.f32.mrb[0].mxu0
        %v2426 = vadd.f32 %v2265, %v2425
        %v2427 = vpop.f32.mrb[0].mxu0
        %2428 = vmatprep.mubr.bf16.mxu0 0
        %2429 = vmatmul.mubr.bf16.gmra.mrb[0].mxu0 %v1424
        %v2430 = vpop.f32.mrb[0].mxu0
        %v2431 = vadd.f32 %v2270, %v2430
        %v2432 = vpop.f32.mrb[0].mxu0
        %v2433 = vpop.f32.mrb[0].mxu0
        %v2434 = vadd.f32 %v2273, %v2433
        %v2435 = vpop.f32.mrb[0].mxu0
        %2436 = vmatprep.mubr.bf16.mxu0 0
        %2437 = vmatmul.mubr.bf16.gmra.mrb[0].mxu0 %v1427
        %v2438 = vpop.f32.mrb[0].mxu0
        %v2439 = vadd.f32 %v2278, %v2438
        %v2440 = vpop.f32.mrb[0].mxu0
        %v2441 = vpop.f32.mrb[0].mxu0
        %v2442 = vadd.f32 %v2281, %v2441
        %v2443 = vpop.f32.mrb[0].mxu0
        %2444 = vmatprep.mubr.bf16.mxu0 0
        %2445 = vmatmul.mubr.bf16.gmra.mrb[0].mxu0 %v1430
        %v2446 = vpop.f32.mrb[0].mxu0
        %v2447 = vadd.f32 %v2286, %v2446
        %v2448 = vpop.f32.mrb[0].mxu0
        %v2449 = vpop.f32.mrb[0].mxu0
        %v2450 = vadd.f32 %v2289, %v2449
        %v2451 = vpop.f32.mrb[0].mxu0
        %2452 = vmatprep.mubr.bf16.mxu0 0
        %2453 = vmatmul.mubr.bf16.gmra.mrb[0].mxu0 %v1433
        %v2454 = vpop.f32.mrb[0].mxu0
        %v2455 = vadd.f32 %v2294, %v2454
        %v2456 = vpop.f32.mrb[0].mxu0
        %v2457 = vpop.f32.mrb[0].mxu0
        %v2458 = vadd.f32 %v2297, %v2457
        %v2459 = vpop.f32.mrb[0].mxu0
        %2460 = vmatprep.mubr.bf16.mxu0 0
        %2461 = vmatmul.mubr.bf16.gmra.mrb[0].mxu0 %v1436
        %v2462 = vpop.f32.mrb[0].mxu0
        %v2463 = vadd.f32 %v2302, %v2462
        %v2464 = vpop.f32.mrb[0].mxu0
        %v2465 = vpop.f32.mrb[0].mxu0
        %v2466 = vadd.f32 %v2305, %v2465
        %v2467 = vpop.f32.mrb[0].mxu0
        %2468 = vmatprep.mubr.bf16.mxu0 0
        %2469 = vmatmul.mubr.bf16.gmra.mrb[0].mxu0 %v1439
        %v2470 = vpop.f32.mrb[0].mxu0
        %v2471 = vadd.f32 %v2310, %v2470
        %v2472 = vpop.f32.mrb[0].mxu0
        %v2473 = vpop.f32.mrb[0].mxu0
        %v2474 = vadd.f32 %v2313, %v2473
        %v2475 = vpop.f32.mrb[0].mxu0
        %2476 = vmatprep.mubr.bf16.mxu0 0
        %2477 = vmatmul.mubr.bf16.gmra.mrb[0].mxu0 %v1442
        %v2478 = vpop.f32.mrb[0].mxu0
        %v2479 = vadd.f32 %v2318, %v2478
        %v2480 = vpop.f32.mrb[0].mxu0
        %v2481 = vpop.f32.mrb[0].mxu0
        %v2482 = vadd.f32 %v2321, %v2481
        %v2483 = vpop.f32.mrb[0].mxu0
        %2484 = vmatprep.mubr.bf16.mxu0 0
        %2485 = vmatmul.mubr.bf16.gmra.mrb[0].mxu0 %v1445
        %v2486 = vpop.f32.mrb[0].mxu0
        %v2487 = vadd.f32 %v2326, %v2486
        %v2488 = vpop.f32.mrb[0].mxu0
        %v2489 = vpop.f32.mrb[0].mxu0
        %v2490 = vadd.f32 %v2329, %v2489
        %v2491 = vpop.f32.mrb[0].mxu0
        %2492 = vmatprep.mubr.bf16.mxu0 0
        %2493 = vmatmul.mubr.bf16.gmra.mrb[0].mxu0 %v1448
        %v2494 = vpop.f32.mrb[0].mxu0
        %v2495 = vadd.f32 %v2334, %v2494
        %v2496 = vpop.f32.mrb[0].mxu0
        %v2497 = vpop.f32.mrb[0].mxu0
        %v2498 = vadd.f32 %v2337, %v2497
        %v2499 = vpop.f32.mrb[0].mxu0
        %2500 = vmatprep.mubr.bf16.mxu0 0
        %2501 = vmatmul.mubr.bf16.gmra.mrb[0].mxu0 %v1451
        %v2502 = vpop.f32.mrb[0].mxu0
        %v2503 = vadd.f32 %v2342, %v2502
        %v2504 = vpop.f32.mrb[0].mxu0
        %v2505 = vpop.f32.mrb[0].mxu0
        %v2506 = vadd.f32 %v2345, %v2505
        %v2507 = vpop.f32.mrb[0].mxu0
        %2508 = vmatprep.mubr.bf16.mxu0 0
        %2509 = vmatmul.mubr.bf16.gmra.mrb[0].mxu0 %v1454
        %v2510 = vpop.f32.mrb[0].mxu0
        %v2511 = vadd.f32 %v2350, %v2510
        %v2512 = vpop.f32.mrb[0].mxu0
        %v2513 = vpop.f32.mrb[0].mxu0
        %v2514 = vadd.f32 %v2353, %v2513
        %v2515 = vpop.f32.mrb[0].mxu0
        %2516 = vmatprep.mubr.bf16.mxu0 0
        %2517 = vmatmul.mubr.bf16.gmra.mrb[0].mxu0 %v1457
        %v2518 = vpop.f32.mrb[0].mxu0
        %v2519 = vadd.f32 %v2358, %v2518
        %v2520 = vpop.f32.mrb[0].mxu0
        %v2521 = vpop.f32.mrb[0].mxu0
        %v2522 = vadd.f32 %v2361, %v2521
        %v2523 = vpop.f32.mrb[0].mxu0
        %2524 = vmatprep.mubr.bf16.mxu0 0
        %2525 = vmatmul.mubr.bf16.gmra.mrb[0].mxu0 %v1460
        %v2526 = vpop.f32.mrb[0].mxu0
        %v2527 = vadd.f32 %v2366, %v2526
        %v2528 = vpop.f32.mrb[0].mxu0
        %v2529 = vpop.f32.mrb[0].mxu0
        %v2530 = vadd.f32 %v2369, %v2529
        %v2531 = vpop.f32.mrb[0].mxu0
        %2532 = vmatprep.mubr.bf16.mxu0 0
        %2533 = vmatmul.mubr.bf16.gmra.mrb[0].mxu0 %v1463
        %v2534 = vpop.f32.mrb[0].mxu0
        %v2535 = vadd.f32 %v2374, %v2534
        %v2536 = vpop.f32.mrb[0].mxu0
        %v2537 = vpop.f32.mrb[0].mxu0
        %v2538 = vadd.f32 %v2377, %v2537
        %v2539 = vpop.f32.mrb[0].mxu0
        %2540 = vdwg.mxu0
        %s2541 = scalar_lea.vmem [#allocation2], 48
        %v2542 = vld [vmem:[%s2541] sm:$0xff]
        %v2543 = vld [vmem:[%s2541 + $0x8] sm:$0xff]
        %v2544 = vld [vmem:[%s2541 + $0x10] sm:$0xff]
        %v2545 = vld [vmem:[%s2541 + $0x18] sm:$0xff]
        %v2546 = vld [vmem:[%s2541 + $0x20] sm:$0xff]
        %v2547 = vld [vmem:[%s2541 + $0x28] sm:$0xff]
        %v2548 = vld [vmem:[%s2541 + $0x30] sm:$0xff]
        %v2549 = vld [vmem:[%s2541 + $0x38] sm:$0xff]
        %v2550 = vld [vmem:[%s2541 + $0x40] sm:$0xff]
        %v2551 = vld [vmem:[%s2541 + $0x48] sm:$0xff]
        %v2552 = vld [vmem:[%s2541 + $0x50] sm:$0xff]
        %v2553 = vld [vmem:[%s2541 + $0x58] sm:$0xff]
        %v2554 = vld [vmem:[%s2541 + $0x60] sm:$0xff]
        %v2555 = vld [vmem:[%s2541 + $0x68] sm:$0xff]
        %v2556 = vld [vmem:[%s2541 + $0x70] sm:$0xff]
        %v2557 = vld [vmem:[%s2541 + $0x78] sm:$0xff]
        %v2558 = vld [vmem:[%s2541 + $0x80] sm:$0xff]
        %v2559 = vld [vmem:[%s2541 + $0x88] sm:$0xff]
        %v2560 = vld [vmem:[%s2541 + $0x90] sm:$0xff]
        %v2561 = vld [vmem:[%s2541 + $0x98] sm:$0xff]
        %v2562 = vld [vmem:[%s2541 + $0xa0] sm:$0xff]
        %v2563 = vld [vmem:[%s2541 + $0xa8] sm:$0xff]
        %v2564 = vld [vmem:[%s2541 + $0xb0] sm:$0xff]
        %v2565 = vld [vmem:[%s2541 + $0xb8] sm:$0xff]
        %v2566 = vld [vmem:[%s2541 + $0xc0] sm:$0xff]
        %v2567 = vld [vmem:[%s2541 + $0xc8] sm:$0xff]
        %v2568 = vld [vmem:[%s2541 + $0xd0] sm:$0xff]
        %v2569 = vld [vmem:[%s2541 + $0xd8] sm:$0xff]
        %v2570 = vld [vmem:[%s2541 + $0xe0] sm:$0xff]
        %v2571 = vld [vmem:[%s2541 + $0xe8] sm:$0xff]
        %v2572 = vld [vmem:[%s2541 + $0xf0] sm:$0xff]
        %v2573 = vld [vmem:[%s2541 + $0xf8] sm:$0xff]
        %v2574 = vld [vmem:[%s2541 + $0x100] sm:$0xff]
        %v2575 = vld [vmem:[%s2541 + $0x108] sm:$0xff]
        %v2576 = vld [vmem:[%s2541 + $0x110] sm:$0xff]
        %v2577 = vld [vmem:[%s2541 + $0x118] sm:$0xff]
        %v2578 = vld [vmem:[%s2541 + $0x120] sm:$0xff]
        %v2579 = vld [vmem:[%s2541 + $0x128] sm:$0xff]
        %v2580 = vld [vmem:[%s2541 + $0x130] sm:$0xff]
        %v2581 = vld [vmem:[%s2541 + $0x138] sm:$0xff]
        %v2582 = vld [vmem:[%s2541 + $0x140] sm:$0xff]
        %v2583 = vld [vmem:[%s2541 + $0x148] sm:$0xff]
        %v2584 = vld [vmem:[%s2541 + $0x150] sm:$0xff]
        %v2585 = vld [vmem:[%s2541 + $0x158] sm:$0xff]
        %v2586 = vld [vmem:[%s2541 + $0x160] sm:$0xff]
        %v2587 = vld [vmem:[%s2541 + $0x168] sm:$0xff]
        %v2588 = vld [vmem:[%s2541 + $0x170] sm:$0xff]
        %v2589 = vld [vmem:[%s2541 + $0x178] sm:$0xff]
        %s2590 = scalar_lea.vmem [#allocation9], 384
        %v2591 = vld [vmem:[%s2590] sm:$0xf]
        %v2592 = vld [vmem:[%s2590 + $0x4] sm:$0xf]
        %v2593 = vld [vmem:[%s2590 + $0x8] sm:$0xf]
        %v2594 = vld [vmem:[%s2590 + $0xc] sm:$0xf]
        %v2595 = vld [vmem:[%s2590 + $0x10] sm:$0xf]
        %v2596 = vld [vmem:[%s2590 + $0x14] sm:$0xf]
        %v2597 = vld [vmem:[%s2590 + $0x18] sm:$0xf]
        %v2598 = vld [vmem:[%s2590 + $0x1c] sm:$0xf]
        %v2599 = vld [vmem:[%s2590 + $0x20] sm:$0xf]
        %v2600 = vld [vmem:[%s2590 + $0x24] sm:$0xf]
        %v2601 = vld [vmem:[%s2590 + $0x28] sm:$0xf]
        %v2602 = vld [vmem:[%s2590 + $0x2c] sm:$0xf]
        %v2603 = vld [vmem:[%s2590 + $0x30] sm:$0xf]
        %v2604 = vld [vmem:[%s2590 + $0x34] sm:$0xf]
        %v2605 = vld [vmem:[%s2590 + $0x38] sm:$0xf]
        %v2606 = vld [vmem:[%s2590 + $0x3c] sm:$0xf]
        %v2607 = vld [vmem:[%s2590 + $0x40] sm:$0xf]
        %v2608 = vld [vmem:[%s2590 + $0x44] sm:$0xf]
        %v2609 = vld [vmem:[%s2590 + $0x48] sm:$0xf]
        %v2610 = vld [vmem:[%s2590 + $0x4c] sm:$0xf]
        %v2611 = vld [vmem:[%s2590 + $0x50] sm:$0xf]
        %v2612 = vld [vmem:[%s2590 + $0x54] sm:$0xf]
        %v2613 = vld [vmem:[%s2590 + $0x58] sm:$0xf]
        %v2614 = vld [vmem:[%s2590 + $0x5c] sm:$0xf]
        %v2615 = vld [vmem:[%s2590 + $0x60] sm:$0xf]
        %v2616 = vld [vmem:[%s2590 + $0x64] sm:$0xf]
        %v2617 = vld [vmem:[%s2590 + $0x68] sm:$0xf]
        %v2618 = vld [vmem:[%s2590 + $0x6c] sm:$0xf]
        %v2619 = vld [vmem:[%s2590 + $0x70] sm:$0xf]
        %v2620 = vld [vmem:[%s2590 + $0x74] sm:$0xf]
        %v2621 = vld [vmem:[%s2590 + $0x78] sm:$0xf]
        %v2622 = vld [vmem:[%s2590 + $0x7c] sm:$0xf]
        %v2623 = vld [vmem:[%s2590 + $0x80] sm:$0xf]
        %v2624 = vld [vmem:[%s2590 + $0x84] sm:$0xf]
        %v2625 = vld [vmem:[%s2590 + $0x88] sm:$0xf]
        %v2626 = vld [vmem:[%s2590 + $0x8c] sm:$0xf]
        %v2627 = vld [vmem:[%s2590 + $0x90] sm:$0xf]
        %v2628 = vld [vmem:[%s2590 + $0x94] sm:$0xf]
        %v2629 = vld [vmem:[%s2590 + $0x98] sm:$0xf]
        %v2630 = vld [vmem:[%s2590 + $0x9c] sm:$0xf]
        %v2631 = vld [vmem:[%s2590 + $0xa0] sm:$0xf]
        %v2632 = vld [vmem:[%s2590 + $0xa4] sm:$0xf]
        %v2633 = vld [vmem:[%s2590 + $0xa8] sm:$0xf]
        %v2634 = vld [vmem:[%s2590 + $0xac] sm:$0xf]
        %v2635 = vld [vmem:[%s2590 + $0xb0] sm:$0xf]
        %v2636 = vld [vmem:[%s2590 + $0xb4] sm:$0xf]
        %v2637 = vld [vmem:[%s2590 + $0xb8] sm:$0xf]
        %v2638 = vld [vmem:[%s2590 + $0xbc] sm:$0xf]
        %v2687 = vunpack.c.l.b16 %v2591
        %v2688 = vunpack.c.l.b16 %v2592
        %v2689 = vunpack.c.l.b16 %v2593
        %v2690 = vunpack.c.l.b16 %v2594
        %v2691 = vunpack.c.l.b16 %v2595
        %v2692 = vunpack.c.l.b16 %v2596
        %v2693 = vunpack.c.l.b16 %v2597
        %v2694 = vunpack.c.l.b16 %v2598
        %v2695 = vunpack.c.l.b16 %v2599
        %v2696 = vunpack.c.l.b16 %v2600
        %v2697 = vunpack.c.l.b16 %v2601
        %v2698 = vunpack.c.l.b16 %v2602
        %v2699 = vunpack.c.l.b16 %v2603
        %v2700 = vunpack.c.l.b16 %v2604
        %v2701 = vunpack.c.l.b16 %v2605
        %v2702 = vunpack.c.l.b16 %v2606
        %v2703 = vunpack.c.l.b16 %v2607
        %v2704 = vunpack.c.l.b16 %v2608
        %v2705 = vunpack.c.l.b16 %v2609
        %v2706 = vunpack.c.l.b16 %v2610
        %v2707 = vunpack.c.l.b16 %v2611
        %v2708 = vunpack.c.l.b16 %v2612
        %v2709 = vunpack.c.l.b16 %v2613
        %v2710 = vunpack.c.l.b16 %v2614
        %v2711 = vunpack.c.l.b16 %v2615
        %v2712 = vunpack.c.l.b16 %v2616
        %v2713 = vunpack.c.l.b16 %v2617
        %v2714 = vunpack.c.l.b16 %v2618
        %v2715 = vunpack.c.l.b16 %v2619
        %v2716 = vunpack.c.l.b16 %v2620
        %v2717 = vunpack.c.l.b16 %v2621
        %v2718 = vunpack.c.l.b16 %v2622
        %v2719 = vunpack.c.l.b16 %v2623
        %v2720 = vunpack.c.l.b16 %v2624
        %v2721 = vunpack.c.l.b16 %v2625
        %v2722 = vunpack.c.l.b16 %v2626
        %v2723 = vunpack.c.l.b16 %v2627
        %v2724 = vunpack.c.l.b16 %v2628
        %v2725 = vunpack.c.l.b16 %v2629
        %v2726 = vunpack.c.l.b16 %v2630
        %v2727 = vunpack.c.l.b16 %v2631
        %v2728 = vunpack.c.l.b16 %v2632
        %v2729 = vunpack.c.l.b16 %v2633
        %v2730 = vunpack.c.l.b16 %v2634
        %v2731 = vunpack.c.l.b16 %v2635
        %v2732 = vunpack.c.l.b16 %v2636
        %v2733 = vunpack.c.l.b16 %v2637
        %v2734 = vunpack.c.l.b16 %v2638
        %v2735 = vpack.c.b16 %v2688, %v2687
        %v2736 = vpack.c.b16 %v2690, %v2689
        %v2737 = vpack.c.b16 %v2692, %v2691
        %v2738 = vpack.c.b16 %v2694, %v2693
        %v2739 = vpack.c.b16 %v2696, %v2695
        %v2740 = vpack.c.b16 %v2698, %v2697
        %v2741 = vpack.c.b16 %v2700, %v2699
        %v2742 = vpack.c.b16 %v2702, %v2701
        %v2743 = vpack.c.b16 %v2704, %v2703
        %v2744 = vpack.c.b16 %v2706, %v2705
        %v2745 = vpack.c.b16 %v2708, %v2707
        %v2746 = vpack.c.b16 %v2710, %v2709
        %v2747 = vpack.c.b16 %v2712, %v2711
        %v2748 = vpack.c.b16 %v2714, %v2713
        %v2749 = vpack.c.b16 %v2716, %v2715
        %v2750 = vpack.c.b16 %v2718, %v2717
        %v2751 = vpack.c.b16 %v2720, %v2719
        %v2752 = vpack.c.b16 %v2722, %v2721
        %v2753 = vpack.c.b16 %v2724, %v2723
        %v2754 = vpack.c.b16 %v2726, %v2725
        %v2755 = vpack.c.b16 %v2728, %v2727
        %v2756 = vpack.c.b16 %v2730, %v2729
        %v2757 = vpack.c.b16 %v2732, %v2731
        %v2758 = vpack.c.b16 %v2734, %v2733
        %2783 = vmatprep.subr.bf16.mxu0 0
        %2784 = vmatpush1.bf16.msra.mxu0 %v2735
        %2785 = vmatprep.subr.bf16.mxu0 0
        %2786 = vmatpush1.bf16.msra.mxu0 %v2736
        %2787 = vmatprep.subr.bf16.mxu0 0
        %2788 = vmatpush1.bf16.msra.mxu0 %v2737
        %2789 = vmatprep.subr.bf16.mxu0 0
        %2790 = vmatpush1.bf16.msra.mxu0 %v2738
        %2791 = vmatprep.subr.bf16.mxu0 0
        %2792 = vmatpush1.bf16.msra.mxu0 %v2739
        %2793 = vmatprep.subr.bf16.mxu0 0
        %2794 = vmatpush1.bf16.msra.mxu0 %v2740
        %2795 = vmatprep.subr.bf16.mxu0 0
        %2796 = vmatpush1.bf16.msra.mxu0 %v2741
        %2797 = vmatprep.subr.bf16.mxu0 0
        %2798 = vmatpush1.bf16.msra.mxu0 %v2742
        %2799 = vmatprep.subr.bf16.mxu0 0
        %2800 = vmatpush1.bf16.msra.mxu0 %v2743
        %2801 = vmatprep.subr.bf16.mxu0 0
        %2802 = vmatpush1.bf16.msra.mxu0 %v2744
        %2803 = vmatprep.subr.bf16.mxu0 0
        %2804 = vmatpush1.bf16.msra.mxu0 %v2745
        %2805 = vmatprep.subr.bf16.mxu0 0
        %2806 = vmatpush1.bf16.msra.mxu0 %v2746
        %2807 = vmatprep.subr.bf16.mxu0 0
        %2808 = vmatpush1.bf16.msra.mxu0 %v2747
        %2809 = vmatprep.subr.bf16.mxu0 0
        %2810 = vmatpush1.bf16.msra.mxu0 %v2748
        %2811 = vmatprep.subr.bf16.mxu0 0
        %2812 = vmatpush1.bf16.msra.mxu0 %v2749
        %2813 = vmatprep.subr.bf16.mxu0 0
        %2814 = vmatpush1.bf16.msra.mxu0 %v2750
        %2815 = vmatprep.mubr.bf16.mxu0 %v2543
        %2816 = vmatmul.mubr.bf16.gmra.mrb[0].mxu0 %v2542
        %v2817 = vpop.f32.mrb[0].mxu0
        %v2818 = vadd.f32 0.0, %v2817
        %v2819 = vpop.f32.mrb[0].mxu0
        %v2820 = vpop.f32.mrb[0].mxu0
        %v2821 = vadd.f32 0.0, %v2820
        %v2822 = vpop.f32.mrb[0].mxu0
        %2823 = vmatprep.mubr.bf16.mxu0 %v2546
        %2824 = vmatmul.mubr.bf16.gmra.mrb[0].mxu0 %v2545
        %v2825 = vpop.f32.mrb[0].mxu0
        %v2826 = vadd.f32 0.0, %v2825
        %v2827 = vpop.f32.mrb[0].mxu0
        %v2828 = vpop.f32.mrb[0].mxu0
        %v2829 = vadd.f32 0.0, %v2828
        %v2830 = vpop.f32.mrb[0].mxu0
        %2831 = vmatprep.mubr.bf16.mxu0 %v2549
        %2832 = vmatmul.mubr.bf16.gmra.mrb[0].mxu0 %v2548
        %v2833 = vpop.f32.mrb[0].mxu0
        %v2834 = vadd.f32 0.0, %v2833
        %v2835 = vpop.f32.mrb[0].mxu0
        %v2836 = vpop.f32.mrb[0].mxu0
        %v2837 = vadd.f32 0.0, %v2836
        %v2838 = vpop.f32.mrb[0].mxu0
        %2839 = vmatprep.mubr.bf16.mxu0 %v2552
        %2840 = vmatmul.mubr.bf16.gmra.mrb[0].mxu0 %v2551
        %v2841 = vpop.f32.mrb[0].mxu0
        %v2842 = vadd.f32 0.0, %v2841
        %v2843 = vpop.f32.mrb[0].mxu0
        %v2844 = vpop.f32.mrb[0].mxu0
        %v2845 = vadd.f32 0.0, %v2844
        %v2846 = vpop.f32.mrb[0].mxu0
        %2847 = vmatprep.mubr.bf16.mxu0 %v2555
        %2848 = vmatmul.mubr.bf16.gmra.mrb[0].mxu0 %v2554
        %v2849 = vpop.f32.mrb[0].mxu0
        %v2850 = vadd.f32 0.0, %v2849
        %v2851 = vpop.f32.mrb[0].mxu0
        %v2852 = vpop.f32.mrb[0].mxu0
        %v2853 = vadd.f32 0.0, %v2852
        %v2854 = vpop.f32.mrb[0].mxu0
        %2855 = vmatprep.mubr.bf16.mxu0 %v2558
        %2856 = vmatmul.mubr.bf16.gmra.mrb[0].mxu0 %v2557
        %v2857 = vpop.f32.mrb[0].mxu0
        %v2858 = vadd.f32 0.0, %v2857
        %v2859 = vpop.f32.mrb[0].mxu0
        %v2860 = vpop.f32.mrb[0].mxu0
        %v2861 = vadd.f32 0.0, %v2860
        %v2862 = vpop.f32.mrb[0].mxu0
        %2863 = vmatprep.mubr.bf16.mxu0 %v2561
        %2864 = vmatmul.mubr.bf16.gmra.mrb[0].mxu0 %v2560
        %v2865 = vpop.f32.mrb[0].mxu0
        %v2866 = vadd.f32 0.0, %v2865
        %v2867 = vpop.f32.mrb[0].mxu0
        %v2868 = vpop.f32.mrb[0].mxu0
        %v2869 = vadd.f32 0.0, %v2868
        %v2870 = vpop.f32.mrb[0].mxu0
        %2871 = vmatprep.mubr.bf16.mxu0 %v2564
        %2872 = vmatmul.mubr.bf16.gmra.mrb[0].mxu0 %v2563
        %v2873 = vpop.f32.mrb[0].mxu0
        %v2874 = vadd.f32 0.0, %v2873
        %v2875 = vpop.f32.mrb[0].mxu0
        %v2876 = vpop.f32.mrb[0].mxu0
        %v2877 = vadd.f32 0.0, %v2876
        %v2878 = vpop.f32.mrb[0].mxu0
        %2879 = vmatprep.mubr.bf16.mxu0 %v2567
        %2880 = vmatmul.mubr.bf16.gmra.mrb[0].mxu0 %v2566
        %v2881 = vpop.f32.mrb[0].mxu0
        %v2882 = vadd.f32 0.0, %v2881
        %v2883 = vpop.f32.mrb[0].mxu0
        %v2884 = vpop.f32.mrb[0].mxu0
        %v2885 = vadd.f32 0.0, %v2884
        %v2886 = vpop.f32.mrb[0].mxu0
        %2887 = vmatprep.mubr.bf16.mxu0 %v2570
        %2888 = vmatmul.mubr.bf16.gmra.mrb[0].mxu0 %v2569
        %v2889 = vpop.f32.mrb[0].mxu0
        %v2890 = vadd.f32 0.0, %v2889
        %v2891 = vpop.f32.mrb[0].mxu0
        %v2892 = vpop.f32.mrb[0].mxu0
        %v2893 = vadd.f32 0.0, %v2892
        %v2894 = vpop.f32.mrb[0].mxu0
        %2895 = vmatprep.mubr.bf16.mxu0 %v2573
        %2896 = vmatmul.mubr.bf16.gmra.mrb[0].mxu0 %v2572
        %v2897 = vpop.f32.mrb[0].mxu0
        %v2898 = vadd.f32 0.0, %v2897
        %v2899 = vpop.f32.mrb[0].mxu0
        %v2900 = vpop.f32.mrb[0].mxu0
        %v2901 = vadd.f32 0.0, %v2900
        %v2902 = vpop.f32.mrb[0].mxu0
        %2903 = vmatprep.mubr.bf16.mxu0 %v2576
        %2904 = vmatmul.mubr.bf16.gmra.mrb[0].mxu0 %v2575
        %v2905 = vpop.f32.mrb[0].mxu0
        %v2906 = vadd.f32 0.0, %v2905
        %v2907 = vpop.f32.mrb[0].mxu0
        %v2908 = vpop.f32.mrb[0].mxu0
        %v2909 = vadd.f32 0.0, %v2908
        %v2910 = vpop.f32.mrb[0].mxu0
        %2911 = vmatprep.mubr.bf16.mxu0 %v2579
        %2912 = vmatmul.mubr.bf16.gmra.mrb[0].mxu0 %v2578
        %v2913 = vpop.f32.mrb[0].mxu0
        %v2914 = vadd.f32 0.0, %v2913
        %v2915 = vpop.f32.mrb[0].mxu0
        %v2916 = vpop.f32.mrb[0].mxu0
        %v2917 = vadd.f32 0.0, %v2916
        %v2918 = vpop.f32.mrb[0].mxu0
        %2919 = vmatprep.mubr.bf16.mxu0 %v2582
        %2920 = vmatmul.mubr.bf16.gmra.mrb[0].mxu0 %v2581
        %v2921 = vpop.f32.mrb[0].mxu0
        %v2922 = vadd.f32 0.0, %v2921
        %v2923 = vpop.f32.mrb[0].mxu0
        %v2924 = vpop.f32.mrb[0].mxu0
        %v2925 = vadd.f32 0.0, %v2924
        %v2926 = vpop.f32.mrb[0].mxu0
        %2927 = vmatprep.mubr.bf16.mxu0 %v2585
        %2928 = vmatmul.mubr.bf16.gmra.mrb[0].mxu0 %v2584
        %v2929 = vpop.f32.mrb[0].mxu0
        %v2930 = vadd.f32 0.0, %v2929
        %v2931 = vpop.f32.mrb[0].mxu0
        %v2932 = vpop.f32.mrb[0].mxu0
        %v2933 = vadd.f32 0.0, %v2932
        %v2934 = vpop.f32.mrb[0].mxu0
        %2935 = vmatprep.mubr.bf16.mxu0 %v2588
        %2936 = vmatmul.mubr.bf16.gmra.mrb[0].mxu0 %v2587
        %v2937 = vpop.f32.mrb[0].mxu0
        %v2938 = vadd.f32 0.0, %v2937
        %v2939 = vpop.f32.mrb[0].mxu0
        %v2940 = vpop.f32.mrb[0].mxu0
        %v2941 = vadd.f32 0.0, %v2940
        %v2942 = vpop.f32.mrb[0].mxu0
        %2943 = vdwg.mxu0
        %2944 = vmatprep.subr.bf16.mxu0 0
        %2945 = vmatpush1.bf16.msra.mxu0 %v2751
        %2946 = vmatprep.subr.bf16.mxu0 0
        %2947 = vmatpush1.bf16.msra.mxu0 %v2752
        %2948 = vmatprep.subr.bf16.mxu0 0
        %2949 = vmatpush1.bf16.msra.mxu0 %v2753
        %2950 = vmatprep.subr.bf16.mxu0 0
        %2951 = vmatpush1.bf16.msra.mxu0 %v2754
        %2952 = vmatprep.subr.bf16.mxu0 0
        %2953 = vmatpush1.bf16.msra.mxu0 %v2755
        %2954 = vmatprep.subr.bf16.mxu0 0
        %2955 = vmatpush1.bf16.msra.mxu0 %v2756
        %2956 = vmatprep.subr.bf16.mxu0 0
        %2957 = vmatpush1.bf16.msra.mxu0 %v2757
        %2958 = vmatprep.subr.bf16.mxu0 0
        %2959 = vmatpush1.bf16.msra.mxu0 %v2758
        %2960 = vmatprep.subr.bf16.mxu0 0
        %2961 = vmatpush1.bf16.msra.mxu0 0
        %2962 = vmatprep.subr.bf16.mxu0 0
        %2963 = vmatpush1.bf16.msra.mxu0 0
        %2964 = vmatprep.subr.bf16.mxu0 0
        %2965 = vmatpush1.bf16.msra.mxu0 0
        %2966 = vmatprep.subr.bf16.mxu0 0
        %2967 = vmatpush1.bf16.msra.mxu0 0
        %2968 = vmatprep.subr.bf16.mxu0 0
        %2969 = vmatpush1.bf16.msra.mxu0 0
        %2970 = vmatprep.subr.bf16.mxu0 0
        %2971 = vmatpush1.bf16.msra.mxu0 0
        %2972 = vmatprep.subr.bf16.mxu0 0
        %2973 = vmatpush1.bf16.msra.mxu0 0
        %2974 = vmatprep.subr.bf16.mxu0 0
        %2975 = vmatpush1.bf16.msra.mxu0 0
        %2976 = vmatprep.mubr.bf16.mxu0 0
        %2977 = vmatmul.mubr.bf16.gmra.mrb[0].mxu0 %v2544
        %v2978 = vpop.f32.mrb[0].mxu0
        %v2979 = vadd.f32 %v2818, %v2978
        %v2980 = vpop.f32.mrb[0].mxu0
        %v2981 = vpop.f32.mrb[0].mxu0
        %v2982 = vadd.f32 %v2821, %v2981
        %v2983 = vpop.f32.mrb[0].mxu0
        %2984 = vmatprep.mubr.bf16.mxu0 0
        %2985 = vmatmul.mubr.bf16.gmra.mrb[0].mxu0 %v2547
        %v2986 = vpop.f32.mrb[0].mxu0
        %v2987 = vadd.f32 %v2826, %v2986
        %v2988 = vpop.f32.mrb[0].mxu0
        %v2989 = vpop.f32.mrb[0].mxu0
        %v2990 = vadd.f32 %v2829, %v2989
        %v2991 = vpop.f32.mrb[0].mxu0
        %2992 = vmatprep.mubr.bf16.mxu0 0
        %2993 = vmatmul.mubr.bf16.gmra.mrb[0].mxu0 %v2550
        %v2994 = vpop.f32.mrb[0].mxu0
        %v2995 = vadd.f32 %v2834, %v2994
        %v2996 = vpop.f32.mrb[0].mxu0
        %v2997 = vpop.f32.mrb[0].mxu0
        %v2998 = vadd.f32 %v2837, %v2997
        %v2999 = vpop.f32.mrb[0].mxu0
        %3000 = vmatprep.mubr.bf16.mxu0 0
        %3001 = vmatmul.mubr.bf16.gmra.mrb[0].mxu0 %v2553
        %v3002 = vpop.f32.mrb[0].mxu0
        %v3003 = vadd.f32 %v2842, %v3002
        %v3004 = vpop.f32.mrb[0].mxu0
        %v3005 = vpop.f32.mrb[0].mxu0
        %v3006 = vadd.f32 %v2845, %v3005
        %v3007 = vpop.f32.mrb[0].mxu0
        %3008 = vmatprep.mubr.bf16.mxu0 0
        %3009 = vmatmul.mubr.bf16.gmra.mrb[0].mxu0 %v2556
        %v3010 = vpop.f32.mrb[0].mxu0
        %v3011 = vadd.f32 %v2850, %v3010
        %v3012 = vpop.f32.mrb[0].mxu0
        %v3013 = vpop.f32.mrb[0].mxu0
        %v3014 = vadd.f32 %v2853, %v3013
        %v3015 = vpop.f32.mrb[0].mxu0
        %3016 = vmatprep.mubr.bf16.mxu0 0
        %3017 = vmatmul.mubr.bf16.gmra.mrb[0].mxu0 %v2559
        %v3018 = vpop.f32.mrb[0].mxu0
        %v3019 = vadd.f32 %v2858, %v3018
        %v3020 = vpop.f32.mrb[0].mxu0
        %v3021 = vpop.f32.mrb[0].mxu0
        %v3022 = vadd.f32 %v2861, %v3021
        %v3023 = vpop.f32.mrb[0].mxu0
        %3024 = vmatprep.mubr.bf16.mxu0 0
        %3025 = vmatmul.mubr.bf16.gmra.mrb[0].mxu0 %v2562
        %v3026 = vpop.f32.mrb[0].mxu0
        %v3027 = vadd.f32 %v2866, %v3026
        %v3028 = vpop.f32.mrb[0].mxu0
        %v3029 = vpop.f32.mrb[0].mxu0
        %v3030 = vadd.f32 %v2869, %v3029
        %v3031 = vpop.f32.mrb[0].mxu0
        %3032 = vmatprep.mubr.bf16.mxu0 0
        %3033 = vmatmul.mubr.bf16.gmra.mrb[0].mxu0 %v2565
        %v3034 = vpop.f32.mrb[0].mxu0
        %v3035 = vadd.f32 %v2874, %v3034
        %v3036 = vpop.f32.mrb[0].mxu0
        %v3037 = vpop.f32.mrb[0].mxu0
        %v3038 = vadd.f32 %v2877, %v3037
        %v3039 = vpop.f32.mrb[0].mxu0
        %3040 = vmatprep.mubr.bf16.mxu0 0
        %3041 = vmatmul.mubr.bf16.gmra.mrb[0].mxu0 %v2568
        %v3042 = vpop.f32.mrb[0].mxu0
        %v3043 = vadd.f32 %v2882, %v3042
        %v3044 = vpop.f32.mrb[0].mxu0
        %v3045 = vpop.f32.mrb[0].mxu0
        %v3046 = vadd.f32 %v2885, %v3045
        %v3047 = vpop.f32.mrb[0].mxu0
        %3048 = vmatprep.mubr.bf16.mxu0 0
        %3049 = vmatmul.mubr.bf16.gmra.mrb[0].mxu0 %v2571
        %v3050 = vpop.f32.mrb[0].mxu0
        %v3051 = vadd.f32 %v2890, %v3050
        %v3052 = vpop.f32.mrb[0].mxu0
        %v3053 = vpop.f32.mrb[0].mxu0
        %v3054 = vadd.f32 %v2893, %v3053
        %v3055 = vpop.f32.mrb[0].mxu0
        %3056 = vmatprep.mubr.bf16.mxu0 0
        %3057 = vmatmul.mubr.bf16.gmra.mrb[0].mxu0 %v2574
        %v3058 = vpop.f32.mrb[0].mxu0
        %v3059 = vadd.f32 %v2898, %v3058
        %v3060 = vpop.f32.mrb[0].mxu0
        %v3061 = vpop.f32.mrb[0].mxu0
        %v3062 = vadd.f32 %v2901, %v3061
        %v3063 = vpop.f32.mrb[0].mxu0
        %3064 = vmatprep.mubr.bf16.mxu0 0
        %3065 = vmatmul.mubr.bf16.gmra.mrb[0].mxu0 %v2577
        %v3066 = vpop.f32.mrb[0].mxu0
        %v3067 = vadd.f32 %v2906, %v3066
        %v3068 = vpop.f32.mrb[0].mxu0
        %v3069 = vpop.f32.mrb[0].mxu0
        %v3070 = vadd.f32 %v2909, %v3069
        %v3071 = vpop.f32.mrb[0].mxu0
        %3072 = vmatprep.mubr.bf16.mxu0 0
        %3073 = vmatmul.mubr.bf16.gmra.mrb[0].mxu0 %v2580
        %v3074 = vpop.f32.mrb[0].mxu0
        %v3075 = vadd.f32 %v2914, %v3074
        %v3076 = vpop.f32.mrb[0].mxu0
        %v3077 = vpop.f32.mrb[0].mxu0
        %v3078 = vadd.f32 %v2917, %v3077
        %v3079 = vpop.f32.mrb[0].mxu0
        %3080 = vmatprep.mubr.bf16.mxu0 0
        %3081 = vmatmul.mubr.bf16.gmra.mrb[0].mxu0 %v2583
        %v3082 = vpop.f32.mrb[0].mxu0
        %v3083 = vadd.f32 %v2922, %v3082
        %v3084 = vpop.f32.mrb[0].mxu0
        %v3085 = vpop.f32.mrb[0].mxu0
        %v3086 = vadd.f32 %v2925, %v3085
        %v3087 = vpop.f32.mrb[0].mxu0
        %3088 = vmatprep.mubr.bf16.mxu0 0
        %3089 = vmatmul.mubr.bf16.gmra.mrb[0].mxu0 %v2586
        %v3090 = vpop.f32.mrb[0].mxu0
        %v3091 = vadd.f32 %v2930, %v3090
        %v3092 = vpop.f32.mrb[0].mxu0
        %v3093 = vpop.f32.mrb[0].mxu0
        %v3094 = vadd.f32 %v2933, %v3093
        %v3095 = vpop.f32.mrb[0].mxu0
        %3096 = vmatprep.mubr.bf16.mxu0 0
        %3097 = vmatmul.mubr.bf16.gmra.mrb[0].mxu0 %v2589
        %v3098 = vpop.f32.mrb[0].mxu0
        %v3099 = vadd.f32 %v2938, %v3098
        %v3100 = vpop.f32.mrb[0].mxu0
        %v3101 = vpop.f32.mrb[0].mxu0
        %v3102 = vadd.f32 %v2941, %v3101
        %v3103 = vpop.f32.mrb[0].mxu0
        %3104 = vdwg.mxu0
        %v3105 = vadd.f32 %v2415, %v2979
        %v3106 = vadd.f32 %v2418, %v2982
        %v3107 = vadd.f32 %v2423, %v2987
        %v3108 = vadd.f32 %v2426, %v2990
        %v3109 = vadd.f32 %v2431, %v2995
        %v3110 = vadd.f32 %v2434, %v2998
        %v3111 = vadd.f32 %v2439, %v3003
        %v3112 = vadd.f32 %v2442, %v3006
        %v3113 = vadd.f32 %v2447, %v3011
        %v3114 = vadd.f32 %v2450, %v3014
        %v3115 = vadd.f32 %v2455, %v3019
        %v3116 = vadd.f32 %v2458, %v3022
        %v3117 = vadd.f32 %v2463, %v3027
        %v3118 = vadd.f32 %v2466, %v3030
        %v3119 = vadd.f32 %v2471, %v3035
        %v3120 = vadd.f32 %v2474, %v3038
        %v3121 = vadd.f32 %v2479, %v3043
        %v3122 = vadd.f32 %v2482, %v3046
        %v3123 = vadd.f32 %v2487, %v3051
        %v3124 = vadd.f32 %v2490, %v3054
        %v3125 = vadd.f32 %v2495, %v3059
        %v3126 = vadd.f32 %v2498, %v3062
        %v3127 = vadd.f32 %v2503, %v3067
        %v3128 = vadd.f32 %v2506, %v3070
        %v3129 = vadd.f32 %v2511, %v3075
        %v3130 = vadd.f32 %v2514, %v3078
        %v3131 = vadd.f32 %v2519, %v3083
        %v3132 = vadd.f32 %v2522, %v3086
        %v3133 = vadd.f32 %v2527, %v3091
        %v3134 = vadd.f32 %v2530, %v3094
        %v3135 = vadd.f32 %v2535, %v3099
        %v3136 = vadd.f32 %v2538, %v3102
        %v3137 = vld [vmem:[#allocation11] sm:$0x1]
        %v3139 = vlaneseq
        %v3140 = vshrl.u32 %v3139, 7
        %v3141 = vsub.s32 0, %v3140
        %v3142 = vrot.slane %v3137, %v3141
        %v3144 = vadd.f32 %v3105, %v3142
        %v3145 = vadd.f32 %v3106, %v3142
        %v3146 = vadd.f32 %v3107, %v3142
        %v3147 = vadd.f32 %v3108, %v3142
        %v3148 = vadd.f32 %v3109, %v3142
        %v3149 = vadd.f32 %v3110, %v3142
        %v3150 = vadd.f32 %v3111, %v3142
        %v3151 = vadd.f32 %v3112, %v3142
        %v3152 = vadd.f32 %v3113, %v3142
        %v3153 = vadd.f32 %v3114, %v3142
        %v3154 = vadd.f32 %v3115, %v3142
        %v3155 = vadd.f32 %v3116, %v3142
        %v3156 = vadd.f32 %v3117, %v3142
        %v3157 = vadd.f32 %v3118, %v3142
        %v3158 = vadd.f32 %v3119, %v3142
        %v3159 = vadd.f32 %v3120, %v3142
        %v3160 = vadd.f32 %v3121, %v3142
        %v3161 = vadd.f32 %v3122, %v3142
        %v3162 = vadd.f32 %v3123, %v3142
        %v3163 = vadd.f32 %v3124, %v3142
        %v3164 = vadd.f32 %v3125, %v3142
        %v3165 = vadd.f32 %v3126, %v3142
        %v3166 = vadd.f32 %v3127, %v3142
        %v3167 = vadd.f32 %v3128, %v3142
        %v3168 = vadd.f32 %v3129, %v3142
        %v3169 = vadd.f32 %v3130, %v3142
        %v3170 = vadd.f32 %v3131, %v3142
        %v3171 = vadd.f32 %v3132, %v3142
        %v3172 = vadd.f32 %v3133, %v3142
        %v3173 = vadd.f32 %v3134, %v3142
        %v3174 = vadd.f32 %v3135, %v3142
        %v3175 = vadd.f32 %v3136, %v3142
        %vm3176 = vcmp.gt.f32.partialorder %v3144, 0.0
        %vm3177 = vcmp.gt.f32.partialorder %v3145, 0.0
        %vm3178 = vcmp.gt.f32.partialorder %v3146, 0.0
        %vm3179 = vcmp.gt.f32.partialorder %v3147, 0.0
        %vm3180 = vcmp.gt.f32.partialorder %v3148, 0.0
        %vm3181 = vcmp.gt.f32.partialorder %v3149, 0.0
        %vm3182 = vcmp.gt.f32.partialorder %v3150, 0.0
        %vm3183 = vcmp.gt.f32.partialorder %v3151, 0.0
        %vm3184 = vcmp.gt.f32.partialorder %v3152, 0.0
        %vm3185 = vcmp.gt.f32.partialorder %v3153, 0.0
        %vm3186 = vcmp.gt.f32.partialorder %v3154, 0.0
        %vm3187 = vcmp.gt.f32.partialorder %v3155, 0.0
        %vm3188 = vcmp.gt.f32.partialorder %v3156, 0.0
        %vm3189 = vcmp.gt.f32.partialorder %v3157, 0.0
        %vm3190 = vcmp.gt.f32.partialorder %v3158, 0.0
        %vm3191 = vcmp.gt.f32.partialorder %v3159, 0.0
        %vm3192 = vcmp.gt.f32.partialorder %v3160, 0.0
        %vm3193 = vcmp.gt.f32.partialorder %v3161, 0.0
        %vm3194 = vcmp.gt.f32.partialorder %v3162, 0.0
        %vm3195 = vcmp.gt.f32.partialorder %v3163, 0.0
        %vm3196 = vcmp.gt.f32.partialorder %v3164, 0.0
        %vm3197 = vcmp.gt.f32.partialorder %v3165, 0.0
        %vm3198 = vcmp.gt.f32.partialorder %v3166, 0.0
        %vm3199 = vcmp.gt.f32.partialorder %v3167, 0.0
        %vm3200 = vcmp.gt.f32.partialorder %v3168, 0.0
        %vm3201 = vcmp.gt.f32.partialorder %v3169, 0.0
        %vm3202 = vcmp.gt.f32.partialorder %v3170, 0.0
        %vm3203 = vcmp.gt.f32.partialorder %v3171, 0.0
        %vm3204 = vcmp.gt.f32.partialorder %v3172, 0.0
        %vm3205 = vcmp.gt.f32.partialorder %v3173, 0.0
        %vm3206 = vcmp.gt.f32.partialorder %v3174, 0.0
        %vm3207 = vcmp.gt.f32.partialorder %v3175, 0.0
        %v3208 = vmul.f32 %v3144, 0.1
        %v3209 = vmul.f32 %v3145, 0.1
        %v3210 = vmul.f32 %v3146, 0.1
        %v3211 = vmul.f32 %v3147, 0.1
        %v3212 = vmul.f32 %v3148, 0.1
        %v3213 = vmul.f32 %v3149, 0.1
        %v3214 = vmul.f32 %v3150, 0.1
        %v3215 = vmul.f32 %v3151, 0.1
        %v3216 = vmul.f32 %v3152, 0.1
        %v3217 = vmul.f32 %v3153, 0.1
        %v3218 = vmul.f32 %v3154, 0.1
        %v3219 = vmul.f32 %v3155, 0.1
        %v3220 = vmul.f32 %v3156, 0.1
        %v3221 = vmul.f32 %v3157, 0.1
        %v3222 = vmul.f32 %v3158, 0.1
        %v3223 = vmul.f32 %v3159, 0.1
        %v3224 = vmul.f32 %v3160, 0.1
        %v3225 = vmul.f32 %v3161, 0.1
        %v3226 = vmul.f32 %v3162, 0.1
        %v3227 = vmul.f32 %v3163, 0.1
        %v3228 = vmul.f32 %v3164, 0.1
        %v3229 = vmul.f32 %v3165, 0.1
        %v3230 = vmul.f32 %v3166, 0.1
        %v3231 = vmul.f32 %v3167, 0.1
        %v3232 = vmul.f32 %v3168, 0.1
        %v3233 = vmul.f32 %v3169, 0.1
        %v3234 = vmul.f32 %v3170, 0.1
        %v3235 = vmul.f32 %v3171, 0.1
        %v3236 = vmul.f32 %v3172, 0.1
        %v3237 = vmul.f32 %v3173, 0.1
        %v3238 = vmul.f32 %v3174, 0.1
        %v3239 = vmul.f32 %v3175, 0.1
        %v3240 = vsel %vm3176, %v3144, %v3208
        %v3241 = vsel %vm3177, %v3145, %v3209
        %v3242 = vsel %vm3178, %v3146, %v3210
        %v3243 = vsel %vm3179, %v3147, %v3211
        %v3244 = vsel %vm3180, %v3148, %v3212
        %v3245 = vsel %vm3181, %v3149, %v3213
        %v3246 = vsel %vm3182, %v3150, %v3214
        %v3247 = vsel %vm3183, %v3151, %v3215
        %v3248 = vsel %vm3184, %v3152, %v3216
        %v3249 = vsel %vm3185, %v3153, %v3217
        %v3250 = vsel %vm3186, %v3154, %v3218
        %v3251 = vsel %vm3187, %v3155, %v3219
        %v3252 = vsel %vm3188, %v3156, %v3220
        %v3253 = vsel %vm3189, %v3157, %v3221
        %v3254 = vsel %vm3190, %v3158, %v3222
        %v3255 = vsel %vm3191, %v3159, %v3223
        %v3256 = vsel %vm3192, %v3160, %v3224
        %v3257 = vsel %vm3193, %v3161, %v3225
        %v3258 = vsel %vm3194, %v3162, %v3226
        %v3259 = vsel %vm3195, %v3163, %v3227
        %v3260 = vsel %vm3196, %v3164, %v3228
        %v3261 = vsel %vm3197, %v3165, %v3229
        %v3262 = vsel %vm3198, %v3166, %v3230
        %v3263 = vsel %vm3199, %v3167, %v3231
        %v3264 = vsel %vm3200, %v3168, %v3232
        %v3265 = vsel %vm3201, %v3169, %v3233
        %v3266 = vsel %vm3202, %v3170, %v3234
        %v3267 = vsel %vm3203, %v3171, %v3235
        %v3268 = vsel %vm3204, %v3172, %v3236
        %v3269 = vsel %vm3205, %v3173, %v3237
        %v3270 = vsel %vm3206, %v3174, %v3238
        %v3271 = vsel %vm3207, %v3175, %v3239
        %v3272 = vpack.c.bf16 %v3241, %v3240
        %v3273 = vpack.c.bf16 %v3243, %v3242
        %v3274 = vpack.c.bf16 %v3245, %v3244
        %v3275 = vpack.c.bf16 %v3247, %v3246
        %v3276 = vpack.c.bf16 %v3249, %v3248
        %v3277 = vpack.c.bf16 %v3251, %v3250
        %v3278 = vpack.c.bf16 %v3253, %v3252
        %v3279 = vpack.c.bf16 %v3255, %v3254
        %v3280 = vpack.c.bf16 %v3257, %v3256
        %v3281 = vpack.c.bf16 %v3259, %v3258
        %v3282 = vpack.c.bf16 %v3261, %v3260
        %v3283 = vpack.c.bf16 %v3263, %v3262
        %v3284 = vpack.c.bf16 %v3265, %v3264
        %v3285 = vpack.c.bf16 %v3267, %v3266
        %v3286 = vpack.c.bf16 %v3269, %v3268
        %v3287 = vpack.c.bf16 %v3271, %v3270
        %v3288 = vld [vmem:[#allocation12] sm:$0xf]
        %v3289 = vld [vmem:[#allocation12 + $0x4] sm:$0xf]
        %v3290 = vld [vmem:[#allocation12 + $0x8] sm:$0xf]
        %v3291 = vld [vmem:[#allocation12 + $0xc] sm:$0xf]
        %v3292 = vld [vmem:[#allocation12 + $0x10] sm:$0xf]
        %v3293 = vld [vmem:[#allocation12 + $0x14] sm:$0xf]
        %v3294 = vld [vmem:[#allocation12 + $0x18] sm:$0xf]
        %v3295 = vld [vmem:[#allocation12 + $0x1c] sm:$0xf]
        %v3296 = vld [vmem:[#allocation12 + $0x20] sm:$0xf]
        %v3297 = vld [vmem:[#allocation12 + $0x24] sm:$0xf]
        %v3298 = vld [vmem:[#allocation12 + $0x28] sm:$0xf]
        %v3299 = vld [vmem:[#allocation12 + $0x2c] sm:$0xf]
        %v3300 = vld [vmem:[#allocation12 + $0x30] sm:$0xf]
        %v3301 = vld [vmem:[#allocation12 + $0x34] sm:$0xf]
        %v3302 = vld [vmem:[#allocation12 + $0x38] sm:$0xf]
        %v3303 = vld [vmem:[#allocation12 + $0x3c] sm:$0xf]
        %v3304 = vld [vmem:[#allocation14] sm:$0x1]
        %v3306 = vlaneseq
        %v3307 = vshrl.u32 %v3306, 7
        %v3308 = vsub.s32 0, %v3307
        %v3309 = vrot.slane %v3304, %v3308
        %v3327 = vunpack.c.l.b16 %v3288
        %v3328 = vunpack.c.l.b16 %v3289
        %v3329 = vunpack.c.l.b16 %v3290
        %v3330 = vunpack.c.l.b16 %v3291
        %v3331 = vunpack.c.l.b16 %v3292
        %v3332 = vunpack.c.l.b16 %v3293
        %v3333 = vunpack.c.l.b16 %v3294
        %v3334 = vunpack.c.l.b16 %v3295
        %v3335 = vunpack.c.l.b16 %v3296
        %v3336 = vunpack.c.l.b16 %v3297
        %v3337 = vunpack.c.l.b16 %v3298
        %v3338 = vunpack.c.l.b16 %v3299
        %v3339 = vunpack.c.l.b16 %v3300
        %v3340 = vunpack.c.l.b16 %v3301
        %v3341 = vunpack.c.l.b16 %v3302
        %v3342 = vunpack.c.l.b16 %v3303
        %v3343 = vpack.c.b16 %v3328, %v3327
        %v3344 = vpack.c.b16 %v3330, %v3329
        %v3345 = vpack.c.b16 %v3332, %v3331
        %v3346 = vpack.c.b16 %v3334, %v3333
        %v3347 = vpack.c.b16 %v3336, %v3335
        %v3348 = vpack.c.b16 %v3338, %v3337
        %v3349 = vpack.c.b16 %v3340, %v3339
        %v3350 = vpack.c.b16 %v3342, %v3341
        %3359 = vmatprep.subr.bf16.mxu0 0
        %3360 = vmatpush1.bf16.msra.mxu0 %v3343
        %3361 = vmatprep.subr.bf16.mxu0 0
        %3362 = vmatpush1.bf16.msra.mxu0 %v3344
        %3363 = vmatprep.subr.bf16.mxu0 0
        %3364 = vmatpush1.bf16.msra.mxu0 %v3345
        %3365 = vmatprep.subr.bf16.mxu0 0
        %3366 = vmatpush1.bf16.msra.mxu0 %v3346
        %3367 = vmatprep.subr.bf16.mxu0 0
        %3368 = vmatpush1.bf16.msra.mxu0 %v3347
        %3369 = vmatprep.subr.bf16.mxu0 0
        %3370 = vmatpush1.bf16.msra.mxu0 %v3348
        %3371 = vmatprep.subr.bf16.mxu0 0
        %3372 = vmatpush1.bf16.msra.mxu0 %v3349
        %3373 = vmatprep.subr.bf16.mxu0 0
        %3374 = vmatpush1.bf16.msra.mxu0 %v3350
        %3375 = vmatprep.subr.bf16.mxu0 0
        %3376 = vmatpush1.bf16.msra.mxu0 0
        %3377 = vmatprep.subr.bf16.mxu0 0
        %3378 = vmatpush1.bf16.msra.mxu0 0
        %3379 = vmatprep.subr.bf16.mxu0 0
        %3380 = vmatpush1.bf16.msra.mxu0 0
        %3381 = vmatprep.subr.bf16.mxu0 0
        %3382 = vmatpush1.bf16.msra.mxu0 0
        %3383 = vmatprep.subr.bf16.mxu0 0
        %3384 = vmatpush1.bf16.msra.mxu0 0
        %3385 = vmatprep.subr.bf16.mxu0 0
        %3386 = vmatpush1.bf16.msra.mxu0 0
        %3387 = vmatprep.subr.bf16.mxu0 0
        %3388 = vmatpush1.bf16.msra.mxu0 0
        %3389 = vmatprep.subr.bf16.mxu0 0
        %3390 = vmatpush1.bf16.msra.mxu0 0
        %3391 = vmatprep.mubr.bf16.mxu0 0
        %3392 = vmatmul.mubr.bf16.gmra.mrb[0].mxu0 %v3272
        %v3393 = vpop.f32.mrb[0].mxu0
        %v3394 = vadd.f32 %v3309, %v3393
        %v3395 = vpop.f32.mrb[0].mxu0
        %v3396 = vpop.f32.mrb[0].mxu0
        %v3397 = vadd.f32 %v3309, %v3396
        %v3398 = vpop.f32.mrb[0].mxu0
        %3399 = vmatprep.mubr.bf16.mxu0 0
        %3400 = vmatmul.mubr.bf16.gmra.mrb[0].mxu0 %v3273
        %v3401 = vpop.f32.mrb[0].mxu0
        %v3402 = vadd.f32 %v3309, %v3401
        %v3403 = vpop.f32.mrb[0].mxu0
        %v3404 = vpop.f32.mrb[0].mxu0
        %v3405 = vadd.f32 %v3309, %v3404
        %v3406 = vpop.f32.mrb[0].mxu0
        %3407 = vmatprep.mubr.bf16.mxu0 0
        %3408 = vmatmul.mubr.bf16.gmra.mrb[0].mxu0 %v3274
        %v3409 = vpop.f32.mrb[0].mxu0
        %v3410 = vadd.f32 %v3309, %v3409
        %v3411 = vpop.f32.mrb[0].mxu0
        %v3412 = vpop.f32.mrb[0].mxu0
        %v3413 = vadd.f32 %v3309, %v3412
        %v3414 = vpop.f32.mrb[0].mxu0
        %3415 = vmatprep.mubr.bf16.mxu0 0
        %3416 = vmatmul.mubr.bf16.gmra.mrb[0].mxu0 %v3275
        %v3417 = vpop.f32.mrb[0].mxu0
        %v3418 = vadd.f32 %v3309, %v3417
        %v3419 = vpop.f32.mrb[0].mxu0
        %v3420 = vpop.f32.mrb[0].mxu0
        %v3421 = vadd.f32 %v3309, %v3420
        %v3422 = vpop.f32.mrb[0].mxu0
        %3423 = vmatprep.mubr.bf16.mxu0 0
        %3424 = vmatmul.mubr.bf16.gmra.mrb[0].mxu0 %v3276
        %v3425 = vpop.f32.mrb[0].mxu0
        %v3426 = vadd.f32 %v3309, %v3425
        %v3427 = vpop.f32.mrb[0].mxu0
        %v3428 = vpop.f32.mrb[0].mxu0
        %v3429 = vadd.f32 %v3309, %v3428
        %v3430 = vpop.f32.mrb[0].mxu0
        %3431 = vmatprep.mubr.bf16.mxu0 0
        %3432 = vmatmul.mubr.bf16.gmra.mrb[0].mxu0 %v3277
        %v3433 = vpop.f32.mrb[0].mxu0
        %v3434 = vadd.f32 %v3309, %v3433
        %v3435 = vpop.f32.mrb[0].mxu0
        %v3436 = vpop.f32.mrb[0].mxu0
        %v3437 = vadd.f32 %v3309, %v3436
        %v3438 = vpop.f32.mrb[0].mxu0
        %3439 = vmatprep.mubr.bf16.mxu0 0
        %3440 = vmatmul.mubr.bf16.gmra.mrb[0].mxu0 %v3278
        %v3441 = vpop.f32.mrb[0].mxu0
        %v3442 = vadd.f32 %v3309, %v3441
        %v3443 = vpop.f32.mrb[0].mxu0
        %v3444 = vpop.f32.mrb[0].mxu0
        %v3445 = vadd.f32 %v3309, %v3444
        %v3446 = vpop.f32.mrb[0].mxu0
        %3447 = vmatprep.mubr.bf16.mxu0 0
        %3448 = vmatmul.mubr.bf16.gmra.mrb[0].mxu0 %v3279
        %v3449 = vpop.f32.mrb[0].mxu0
        %v3450 = vadd.f32 %v3309, %v3449
        %v3451 = vpop.f32.mrb[0].mxu0
        %v3452 = vpop.f32.mrb[0].mxu0
        %v3453 = vadd.f32 %v3309, %v3452
        %v3454 = vpop.f32.mrb[0].mxu0
        %3455 = vmatprep.mubr.bf16.mxu0 0
        %3456 = vmatmul.mubr.bf16.gmra.mrb[0].mxu0 %v3280
        %v3457 = vpop.f32.mrb[0].mxu0
        %v3458 = vadd.f32 %v3309, %v3457
        %v3459 = vpop.f32.mrb[0].mxu0
        %v3460 = vpop.f32.mrb[0].mxu0
        %v3461 = vadd.f32 %v3309, %v3460
        %v3462 = vpop.f32.mrb[0].mxu0
        %3463 = vmatprep.mubr.bf16.mxu0 0
        %3464 = vmatmul.mubr.bf16.gmra.mrb[0].mxu0 %v3281
        %v3465 = vpop.f32.mrb[0].mxu0
        %v3466 = vadd.f32 %v3309, %v3465
        %v3467 = vpop.f32.mrb[0].mxu0
        %v3468 = vpop.f32.mrb[0].mxu0
        %v3469 = vadd.f32 %v3309, %v3468
        %v3470 = vpop.f32.mrb[0].mxu0
        %3471 = vmatprep.mubr.bf16.mxu0 0
        %3472 = vmatmul.mubr.bf16.gmra.mrb[0].mxu0 %v3282
        %v3473 = vpop.f32.mrb[0].mxu0
        %v3474 = vadd.f32 %v3309, %v3473
        %v3475 = vpop.f32.mrb[0].mxu0
        %v3476 = vpop.f32.mrb[0].mxu0
        %v3477 = vadd.f32 %v3309, %v3476
        %v3478 = vpop.f32.mrb[0].mxu0
        %3479 = vmatprep.mubr.bf16.mxu0 0
        %3480 = vmatmul.mubr.bf16.gmra.mrb[0].mxu0 %v3283
        %v3481 = vpop.f32.mrb[0].mxu0
        %v3482 = vadd.f32 %v3309, %v3481
        %v3483 = vpop.f32.mrb[0].mxu0
        %v3484 = vpop.f32.mrb[0].mxu0
        %v3485 = vadd.f32 %v3309, %v3484
        %v3486 = vpop.f32.mrb[0].mxu0
        %3487 = vmatprep.mubr.bf16.mxu0 0
        %3488 = vmatmul.mubr.bf16.gmra.mrb[0].mxu0 %v3284
        %v3489 = vpop.f32.mrb[0].mxu0
        %v3490 = vadd.f32 %v3309, %v3489
        %v3491 = vpop.f32.mrb[0].mxu0
        %v3492 = vpop.f32.mrb[0].mxu0
        %v3493 = vadd.f32 %v3309, %v3492
        %v3494 = vpop.f32.mrb[0].mxu0
        %3495 = vmatprep.mubr.bf16.mxu0 0
        %3496 = vmatmul.mubr.bf16.gmra.mrb[0].mxu0 %v3285
        %v3497 = vpop.f32.mrb[0].mxu0
        %v3498 = vadd.f32 %v3309, %v3497
        %v3499 = vpop.f32.mrb[0].mxu0
        %v3500 = vpop.f32.mrb[0].mxu0
        %v3501 = vadd.f32 %v3309, %v3500
        %v3502 = vpop.f32.mrb[0].mxu0
        %3503 = vmatprep.mubr.bf16.mxu0 0
        %3504 = vmatmul.mubr.bf16.gmra.mrb[0].mxu0 %v3286
        %v3505 = vpop.f32.mrb[0].mxu0
        %v3506 = vadd.f32 %v3309, %v3505
        %v3507 = vpop.f32.mrb[0].mxu0
        %v3508 = vpop.f32.mrb[0].mxu0
        %v3509 = vadd.f32 %v3309, %v3508
        %v3510 = vpop.f32.mrb[0].mxu0
        %3511 = vmatprep.mubr.bf16.mxu0 0
        %3512 = vmatmul.mubr.bf16.gmra.mrb[0].mxu0 %v3287
        %v3513 = vpop.f32.mrb[0].mxu0
        %v3514 = vadd.f32 %v3309, %v3513
        %v3515 = vpop.f32.mrb[0].mxu0
        %v3516 = vpop.f32.mrb[0].mxu0
        %v3517 = vadd.f32 %v3309, %v3516
        %v3518 = vpop.f32.mrb[0].mxu0
        %3519 = vdwg.mxu0
        %vm3520 = vcmp.gt.f32.partialorder %v3394, 0.0
        %vm3521 = vcmp.gt.f32.partialorder %v3397, 0.0
        %vm3522 = vcmp.gt.f32.partialorder %v3402, 0.0
        %vm3523 = vcmp.gt.f32.partialorder %v3405, 0.0
        %vm3524 = vcmp.gt.f32.partialorder %v3410, 0.0
        %vm3525 = vcmp.gt.f32.partialorder %v3413, 0.0
        %vm3526 = vcmp.gt.f32.partialorder %v3418, 0.0
        %vm3527 = vcmp.gt.f32.partialorder %v3421, 0.0
        %vm3528 = vcmp.gt.f32.partialorder %v3426, 0.0
        %vm3529 = vcmp.gt.f32.partialorder %v3429, 0.0
        %vm3530 = vcmp.gt.f32.partialorder %v3434, 0.0
        %vm3531 = vcmp.gt.f32.partialorder %v3437, 0.0
        %vm3532 = vcmp.gt.f32.partialorder %v3442, 0.0
        %vm3533 = vcmp.gt.f32.partialorder %v3445, 0.0
        %vm3534 = vcmp.gt.f32.partialorder %v3450, 0.0
        %vm3535 = vcmp.gt.f32.partialorder %v3453, 0.0
        %vm3536 = vcmp.gt.f32.partialorder %v3458, 0.0
        %vm3537 = vcmp.gt.f32.partialorder %v3461, 0.0
        %vm3538 = vcmp.gt.f32.partialorder %v3466, 0.0
        %vm3539 = vcmp.gt.f32.partialorder %v3469, 0.0
        %vm3540 = vcmp.gt.f32.partialorder %v3474, 0.0
        %vm3541 = vcmp.gt.f32.partialorder %v3477, 0.0
        %vm3542 = vcmp.gt.f32.partialorder %v3482, 0.0
        %vm3543 = vcmp.gt.f32.partialorder %v3485, 0.0
        %vm3544 = vcmp.gt.f32.partialorder %v3490, 0.0
        %vm3545 = vcmp.gt.f32.partialorder %v3493, 0.0
        %vm3546 = vcmp.gt.f32.partialorder %v3498, 0.0
        %vm3547 = vcmp.gt.f32.partialorder %v3501, 0.0
        %vm3548 = vcmp.gt.f32.partialorder %v3506, 0.0
        %vm3549 = vcmp.gt.f32.partialorder %v3509, 0.0
        %vm3550 = vcmp.gt.f32.partialorder %v3514, 0.0
        %vm3551 = vcmp.gt.f32.partialorder %v3517, 0.0
        %v3552 = vmul.f32 %v3394, 0.1
        %v3553 = vmul.f32 %v3397, 0.1
        %v3554 = vmul.f32 %v3402, 0.1
        %v3555 = vmul.f32 %v3405, 0.1
        %v3556 = vmul.f32 %v3410, 0.1
        %v3557 = vmul.f32 %v3413, 0.1
        %v3558 = vmul.f32 %v3418, 0.1
        %v3559 = vmul.f32 %v3421, 0.1
        %v3560 = vmul.f32 %v3426, 0.1
        %v3561 = vmul.f32 %v3429, 0.1
        %v3562 = vmul.f32 %v3434, 0.1
        %v3563 = vmul.f32 %v3437, 0.1
        %v3564 = vmul.f32 %v3442, 0.1
        %v3565 = vmul.f32 %v3445, 0.1
        %v3566 = vmul.f32 %v3450, 0.1
        %v3567 = vmul.f32 %v3453, 0.1
        %v3568 = vmul.f32 %v3458, 0.1
        %v3569 = vmul.f32 %v3461, 0.1
        %v3570 = vmul.f32 %v3466, 0.1
        %v3571 = vmul.f32 %v3469, 0.1
        %v3572 = vmul.f32 %v3474, 0.1
        %v3573 = vmul.f32 %v3477, 0.1
        %v3574 = vmul.f32 %v3482, 0.1
        %v3575 = vmul.f32 %v3485, 0.1
        %v3576 = vmul.f32 %v3490, 0.1
        %v3577 = vmul.f32 %v3493, 0.1
        %v3578 = vmul.f32 %v3498, 0.1
        %v3579 = vmul.f32 %v3501, 0.1
        %v3580 = vmul.f32 %v3506, 0.1
        %v3581 = vmul.f32 %v3509, 0.1
        %v3582 = vmul.f32 %v3514, 0.1
        %v3583 = vmul.f32 %v3517, 0.1
        %v3584 = vsel %vm3520, %v3394, %v3552
        %v3585 = vsel %vm3521, %v3397, %v3553
        %v3586 = vsel %vm3522, %v3402, %v3554
        %v3587 = vsel %vm3523, %v3405, %v3555
        %v3588 = vsel %vm3524, %v3410, %v3556
        %v3589 = vsel %vm3525, %v3413, %v3557
        %v3590 = vsel %vm3526, %v3418, %v3558
        %v3591 = vsel %vm3527, %v3421, %v3559
        %v3592 = vsel %vm3528, %v3426, %v3560
        %v3593 = vsel %vm3529, %v3429, %v3561
        %v3594 = vsel %vm3530, %v3434, %v3562
        %v3595 = vsel %vm3531, %v3437, %v3563
        %v3596 = vsel %vm3532, %v3442, %v3564
        %v3597 = vsel %vm3533, %v3445, %v3565
        %v3598 = vsel %vm3534, %v3450, %v3566
        %v3599 = vsel %vm3535, %v3453, %v3567
        %v3600 = vsel %vm3536, %v3458, %v3568
        %v3601 = vsel %vm3537, %v3461, %v3569
        %v3602 = vsel %vm3538, %v3466, %v3570
        %v3603 = vsel %vm3539, %v3469, %v3571
        %v3604 = vsel %vm3540, %v3474, %v3572
        %v3605 = vsel %vm3541, %v3477, %v3573
        %v3606 = vsel %vm3542, %v3482, %v3574
        %v3607 = vsel %vm3543, %v3485, %v3575
        %v3608 = vsel %vm3544, %v3490, %v3576
        %v3609 = vsel %vm3545, %v3493, %v3577
        %v3610 = vsel %vm3546, %v3498, %v3578
        %v3611 = vsel %vm3547, %v3501, %v3579
        %v3612 = vsel %vm3548, %v3506, %v3580
        %v3613 = vsel %vm3549, %v3509, %v3581
        %v3614 = vsel %vm3550, %v3514, %v3582
        %v3615 = vsel %vm3551, %v3517, %v3583
        %v3616 = vpack.c.bf16 %v3585, %v3584
        %v3617 = vpack.c.bf16 %v3587, %v3586
        %v3618 = vpack.c.bf16 %v3589, %v3588
        %v3619 = vpack.c.bf16 %v3591, %v3590
        %v3620 = vpack.c.bf16 %v3593, %v3592
        %v3621 = vpack.c.bf16 %v3595, %v3594
        %v3622 = vpack.c.bf16 %v3597, %v3596
        %v3623 = vpack.c.bf16 %v3599, %v3598
        %v3624 = vpack.c.bf16 %v3601, %v3600
        %v3625 = vpack.c.bf16 %v3603, %v3602
        %v3626 = vpack.c.bf16 %v3605, %v3604
        %v3627 = vpack.c.bf16 %v3607, %v3606
        %v3628 = vpack.c.bf16 %v3609, %v3608
        %v3629 = vpack.c.bf16 %v3611, %v3610
        %v3630 = vpack.c.bf16 %v3613, %v3612
        %v3631 = vpack.c.bf16 %v3615, %v3614
        %3632 = vst [vmem:[%s548 + $0x8] sm:$0xff] %v3616
        %3633 = vst [vmem:[%s548 + $0x20] sm:$0xff] %v3617
        %3634 = vst [vmem:[%s548 + $0x38] sm:$0xff] %v3618
        %3635 = vst [vmem:[%s548 + $0x50] sm:$0xff] %v3619
        %3636 = vst [vmem:[%s548 + $0x68] sm:$0xff] %v3620
        %3637 = vst [vmem:[%s548 + $0x80] sm:$0xff] %v3621
        %3638 = vst [vmem:[%s548 + $0x98] sm:$0xff] %v3622
        %3639 = vst [vmem:[%s548 + $0xb0] sm:$0xff] %v3623
        %3640 = vst [vmem:[%s548 + $0xc8] sm:$0xff] %v3624
        %3641 = vst [vmem:[%s548 + $0xe0] sm:$0xff] %v3625
        %3642 = vst [vmem:[%s548 + $0xf8] sm:$0xff] %v3626
        %3643 = vst [vmem:[%s548 + $0x110] sm:$0xff] %v3627
        %3644 = vst [vmem:[%s548 + $0x128] sm:$0xff] %v3628
        %3645 = vst [vmem:[%s548 + $0x140] sm:$0xff] %v3629
        %3646 = vst [vmem:[%s548 + $0x158] sm:$0xff] %v3630
        %3647 = vst [vmem:[%s548 + $0x170] sm:$0xff] %v3631
        %v3649 = vshrl.u32 %v3616, 16
        %v3651 = vrot.slane %v3649, 7
        %v3652 = vshll.u32 %v3616, 16
        %v3654 = vor.u32 %v3651, %v3652
        %v3656 = vshrl.u32 %v3617, 16
        %v3658 = vrot.slane %v3656, 7
        %v3659 = vshll.u32 %v3617, 16
        %v3661 = vor.u32 %v3658, %v3659
        %v3663 = vshrl.u32 %v3618, 16
        %v3665 = vrot.slane %v3663, 7
        %v3666 = vshll.u32 %v3618, 16
        %v3668 = vor.u32 %v3665, %v3666
        %v3670 = vshrl.u32 %v3619, 16
        %v3672 = vrot.slane %v3670, 7
        %v3673 = vshll.u32 %v3619, 16
        %v3675 = vor.u32 %v3672, %v3673
        %v3677 = vshrl.u32 %v3620, 16
        %v3679 = vrot.slane %v3677, 7
        %v3680 = vshll.u32 %v3620, 16
        %v3682 = vor.u32 %v3679, %v3680
        %v3684 = vshrl.u32 %v3621, 16
        %v3686 = vrot.slane %v3684, 7
        %v3687 = vshll.u32 %v3621, 16
        %v3689 = vor.u32 %v3686, %v3687
        %v3691 = vshrl.u32 %v3622, 16
        %v3693 = vrot.slane %v3691, 7
        %v3694 = vshll.u32 %v3622, 16
        %v3696 = vor.u32 %v3693, %v3694
        %v3698 = vshrl.u32 %v3623, 16
        %v3700 = vrot.slane %v3698, 7
        %v3701 = vshll.u32 %v3623, 16
        %v3703 = vor.u32 %v3700, %v3701
        %v3705 = vshrl.u32 %v3624, 16
        %v3707 = vrot.slane %v3705, 7
        %v3708 = vshll.u32 %v3624, 16
        %v3710 = vor.u32 %v3707, %v3708
        %v3712 = vshrl.u32 %v3625, 16
        %v3714 = vrot.slane %v3712, 7
        %v3715 = vshll.u32 %v3625, 16
        %v3717 = vor.u32 %v3714, %v3715
        %v3719 = vshrl.u32 %v3626, 16
        %v3721 = vrot.slane %v3719, 7
        %v3722 = vshll.u32 %v3626, 16
        %v3724 = vor.u32 %v3721, %v3722
        %v3726 = vshrl.u32 %v3627, 16
        %v3728 = vrot.slane %v3726, 7
        %v3729 = vshll.u32 %v3627, 16
        %v3731 = vor.u32 %v3728, %v3729
        %v3733 = vshrl.u32 %v3628, 16
        %v3735 = vrot.slane %v3733, 7
        %v3736 = vshll.u32 %v3628, 16
        %v3738 = vor.u32 %v3735, %v3736
        %v3740 = vshrl.u32 %v3629, 16
        %v3742 = vrot.slane %v3740, 7
        %v3743 = vshll.u32 %v3629, 16
        %v3745 = vor.u32 %v3742, %v3743
        %v3747 = vshrl.u32 %v3630, 16
        %v3749 = vrot.slane %v3747, 7
        %v3750 = vshll.u32 %v3630, 16
        %v3752 = vor.u32 %v3749, %v3750
        %v3754 = vshrl.u32 %v3631, 16
        %v3756 = vrot.slane %v3754, 7
        %v3757 = vshll.u32 %v3631, 16
        %v3759 = vor.u32 %v3756, %v3757
        %v3776 = vld [vmem:[%s548] sm:$0xff]
        %v3777 = vsel %vm1269, %v3654, %v3776
        %3778 = vst [vmem:[%s548] sm:$0xff] %v3777
        %v3779 = vld [vmem:[%s548 + $0x18] sm:$0xff]
        %v3780 = vsel %vm1269, %v3661, %v3779
        %3781 = vst [vmem:[%s548 + $0x18] sm:$0xff] %v3780
        %v3782 = vld [vmem:[%s548 + $0x30] sm:$0xff]
        %v3783 = vsel %vm1269, %v3668, %v3782
        %3784 = vst [vmem:[%s548 + $0x30] sm:$0xff] %v3783
        %v3785 = vld [vmem:[%s548 + $0x48] sm:$0xff]
        %v3786 = vsel %vm1269, %v3675, %v3785
        %3787 = vst [vmem:[%s548 + $0x48] sm:$0xff] %v3786
        %v3788 = vld [vmem:[%s548 + $0x60] sm:$0xff]
        %v3789 = vsel %vm1269, %v3682, %v3788
        %3790 = vst [vmem:[%s548 + $0x60] sm:$0xff] %v3789
        %v3791 = vld [vmem:[%s548 + $0x78] sm:$0xff]
        %v3792 = vsel %vm1269, %v3689, %v3791
        %3793 = vst [vmem:[%s548 + $0x78] sm:$0xff] %v3792
        %v3794 = vld [vmem:[%s548 + $0x90] sm:$0xff]
        %v3795 = vsel %vm1269, %v3696, %v3794
        %3796 = vst [vmem:[%s548 + $0x90] sm:$0xff] %v3795
        %v3797 = vld [vmem:[%s548 + $0xa8] sm:$0xff]
        %v3798 = vsel %vm1269, %v3703, %v3797
        %3799 = vst [vmem:[%s548 + $0xa8] sm:$0xff] %v3798
        %v3800 = vld [vmem:[%s548 + $0xc0] sm:$0xff]
        %v3801 = vsel %vm1269, %v3710, %v3800
        %3802 = vst [vmem:[%s548 + $0xc0] sm:$0xff] %v3801
        %v3803 = vld [vmem:[%s548 + $0xd8] sm:$0xff]
        %v3804 = vsel %vm1269, %v3717, %v3803
        %3805 = vst [vmem:[%s548 + $0xd8] sm:$0xff] %v3804
        %v3806 = vld [vmem:[%s548 + $0xf0] sm:$0xff]
        %v3807 = vsel %vm1269, %v3724, %v3806
        %3808 = vst [vmem:[%s548 + $0xf0] sm:$0xff] %v3807
        %v3809 = vld [vmem:[%s548 + $0x108] sm:$0xff]
        %v3810 = vsel %vm1269, %v3731, %v3809
        %3811 = vst [vmem:[%s548 + $0x108] sm:$0xff] %v3810
        %v3812 = vld [vmem:[%s548 + $0x120] sm:$0xff]
        %v3813 = vsel %vm1269, %v3738, %v3812
        %3814 = vst [vmem:[%s548 + $0x120] sm:$0xff] %v3813
        %v3815 = vld [vmem:[%s548 + $0x138] sm:$0xff]
        %v3816 = vsel %vm1269, %v3745, %v3815
        %3817 = vst [vmem:[%s548 + $0x138] sm:$0xff] %v3816
        %v3818 = vld [vmem:[%s548 + $0x150] sm:$0xff]
        %v3819 = vsel %vm1269, %v3752, %v3818
        %3820 = vst [vmem:[%s548 + $0x150] sm:$0xff] %v3819
        %v3821 = vld [vmem:[%s548 + $0x168] sm:$0xff]
        %v3822 = vsel %vm1269, %v3759, %v3821
        %3823 = vst [vmem:[%s548 + $0x168] sm:$0xff] %v3822
        %v3824 = vrot.slane %v3652, 1
        %v3825 = vor.u32 %v3649, %v3824
        %v3826 = vrot.slane %v3659, 1
        %v3827 = vor.u32 %v3656, %v3826
        %v3828 = vrot.slane %v3666, 1
        %v3829 = vor.u32 %v3663, %v3828
        %v3830 = vrot.slane %v3673, 1
        %v3831 = vor.u32 %v3670, %v3830
        %v3832 = vrot.slane %v3680, 1
        %v3833 = vor.u32 %v3677, %v3832
        %v3834 = vrot.slane %v3687, 1
        %v3835 = vor.u32 %v3684, %v3834
        %v3836 = vrot.slane %v3694, 1
        %v3837 = vor.u32 %v3691, %v3836
        %v3838 = vrot.slane %v3701, 1
        %v3839 = vor.u32 %v3698, %v3838
        %v3840 = vrot.slane %v3708, 1
        %v3841 = vor.u32 %v3705, %v3840
        %v3842 = vrot.slane %v3715, 1
        %v3843 = vor.u32 %v3712, %v3842
        %v3844 = vrot.slane %v3722, 1
        %v3845 = vor.u32 %v3719, %v3844
        %v3846 = vrot.slane %v3729, 1
        %v3847 = vor.u32 %v3726, %v3846
        %v3848 = vrot.slane %v3736, 1
        %v3849 = vor.u32 %v3733, %v3848
        %v3850 = vrot.slane %v3743, 1
        %v3851 = vor.u32 %v3740, %v3850
        %v3852 = vrot.slane %v3750, 1
        %v3853 = vor.u32 %v3747, %v3852
        %v3854 = vrot.slane %v3757, 1
        %v3855 = vor.u32 %v3754, %v3854
        %v3872 = vld [vmem:[%s548 + $0x10] sm:$0xff]
        %v3873 = vsel %vm1367, %v3825, %v3872
        %3874 = vst [vmem:[%s548 + $0x10] sm:$0xff] %v3873
        %v3875 = vld [vmem:[%s548 + $0x28] sm:$0xff]
        %v3876 = vsel %vm1367, %v3827, %v3875
        %3877 = vst [vmem:[%s548 + $0x28] sm:$0xff] %v3876
        %v3878 = vld [vmem:[%s548 + $0x40] sm:$0xff]
        %v3879 = vsel %vm1367, %v3829, %v3878
        %3880 = vst [vmem:[%s548 + $0x40] sm:$0xff] %v3879
        %v3881 = vld [vmem:[%s548 + $0x58] sm:$0xff]
        %v3882 = vsel %vm1367, %v3831, %v3881
        %3883 = vst [vmem:[%s548 + $0x58] sm:$0xff] %v3882
        %v3884 = vld [vmem:[%s548 + $0x70] sm:$0xff]
        %v3885 = vsel %vm1367, %v3833, %v3884
        %3886 = vst [vmem:[%s548 + $0x70] sm:$0xff] %v3885
        %v3887 = vld [vmem:[%s548 + $0x88] sm:$0xff]
        %v3888 = vsel %vm1367, %v3835, %v3887
        %3889 = vst [vmem:[%s548 + $0x88] sm:$0xff] %v3888
        %v3890 = vld [vmem:[%s548 + $0xa0] sm:$0xff]
        %v3891 = vsel %vm1367, %v3837, %v3890
        %3892 = vst [vmem:[%s548 + $0xa0] sm:$0xff] %v3891
        %v3893 = vld [vmem:[%s548 + $0xb8] sm:$0xff]
        %v3894 = vsel %vm1367, %v3839, %v3893
        %3895 = vst [vmem:[%s548 + $0xb8] sm:$0xff] %v3894
        %v3896 = vld [vmem:[%s548 + $0xd0] sm:$0xff]
        %v3897 = vsel %vm1367, %v3841, %v3896
        %3898 = vst [vmem:[%s548 + $0xd0] sm:$0xff] %v3897
        %v3899 = vld [vmem:[%s548 + $0xe8] sm:$0xff]
        %v3900 = vsel %vm1367, %v3843, %v3899
        %3901 = vst [vmem:[%s548 + $0xe8] sm:$0xff] %v3900
        %v3902 = vld [vmem:[%s548 + $0x100] sm:$0xff]
        %v3903 = vsel %vm1367, %v3845, %v3902
        %3904 = vst [vmem:[%s548 + $0x100] sm:$0xff] %v3903
        %v3905 = vld [vmem:[%s548 + $0x118] sm:$0xff]
        %v3906 = vsel %vm1367, %v3847, %v3905
        %3907 = vst [vmem:[%s548 + $0x118] sm:$0xff] %v3906
        %v3908 = vld [vmem:[%s548 + $0x130] sm:$0xff]
        %v3909 = vsel %vm1367, %v3849, %v3908
        %3910 = vst [vmem:[%s548 + $0x130] sm:$0xff] %v3909
        %v3911 = vld [vmem:[%s548 + $0x148] sm:$0xff]
        %v3912 = vsel %vm1367, %v3851, %v3911
        %3913 = vst [vmem:[%s548 + $0x148] sm:$0xff] %v3912
        %v3914 = vld [vmem:[%s548 + $0x160] sm:$0xff]
        %v3915 = vsel %vm1367, %v3853, %v3914
        %3916 = vst [vmem:[%s548 + $0x160] sm:$0xff] %v3915
        %v3917 = vld [vmem:[%s548 + $0x178] sm:$0xff]
        %v3918 = vsel %vm1367, %v3855, %v3917
        %3919 = vst [vmem:[%s548 + $0x178] sm:$0xff] %v3918
        %v3920 = vld [vmem:[#allocation2] sm:$0xff]
        %v3921 = vld [vmem:[#allocation2 + $0x8] sm:$0xff]
        %v3922 = vld [vmem:[#allocation2 + $0x10] sm:$0xff]
        %v3923 = vld [vmem:[#allocation2 + $0x18] sm:$0xff]
        %v3924 = vld [vmem:[#allocation2 + $0x20] sm:$0xff]
        %v3925 = vld [vmem:[#allocation2 + $0x28] sm:$0xff]
        %v3926 = vld [vmem:[#allocation2 + $0x30] sm:$0xff]
        %v3927 = vld [vmem:[#allocation2 + $0x38] sm:$0xff]
        %v3928 = vld [vmem:[#allocation2 + $0x40] sm:$0xff]
        %v3929 = vld [vmem:[#allocation2 + $0x48] sm:$0xff]
        %v3930 = vld [vmem:[#allocation2 + $0x50] sm:$0xff]
        %v3931 = vld [vmem:[#allocation2 + $0x58] sm:$0xff]
        %v3932 = vld [vmem:[#allocation2 + $0x60] sm:$0xff]
        %v3933 = vld [vmem:[#allocation2 + $0x68] sm:$0xff]
        %v3934 = vld [vmem:[#allocation2 + $0x70] sm:$0xff]
        %v3935 = vld [vmem:[#allocation2 + $0x78] sm:$0xff]
        %v3936 = vld [vmem:[#allocation2 + $0x80] sm:$0xff]
        %v3937 = vld [vmem:[#allocation2 + $0x88] sm:$0xff]
        %v3938 = vld [vmem:[#allocation2 + $0x90] sm:$0xff]
        %v3939 = vld [vmem:[#allocation2 + $0x98] sm:$0xff]
        %v3940 = vld [vmem:[#allocation2 + $0xa0] sm:$0xff]
        %v3941 = vld [vmem:[#allocation2 + $0xa8] sm:$0xff]
        %v3942 = vld [vmem:[#allocation2 + $0xb0] sm:$0xff]
        %v3943 = vld [vmem:[#allocation2 + $0xb8] sm:$0xff]
        %v3944 = vld [vmem:[#allocation2 + $0xc0] sm:$0xff]
        %v3945 = vld [vmem:[#allocation2 + $0xc8] sm:$0xff]
        %v3946 = vld [vmem:[#allocation2 + $0xd0] sm:$0xff]
        %v3947 = vld [vmem:[#allocation2 + $0xd8] sm:$0xff]
        %v3948 = vld [vmem:[#allocation2 + $0xe0] sm:$0xff]
        %v3949 = vld [vmem:[#allocation2 + $0xe8] sm:$0xff]
        %v3950 = vld [vmem:[#allocation2 + $0xf0] sm:$0xff]
        %v3951 = vld [vmem:[#allocation2 + $0xf8] sm:$0xff]
        %v3952 = vld [vmem:[#allocation2 + $0x100] sm:$0xff]
        %v3953 = vld [vmem:[#allocation2 + $0x108] sm:$0xff]
        %v3954 = vld [vmem:[#allocation2 + $0x110] sm:$0xff]
        %v3955 = vld [vmem:[#allocation2 + $0x118] sm:$0xff]
        %v3956 = vld [vmem:[#allocation2 + $0x120] sm:$0xff]
        %v3957 = vld [vmem:[#allocation2 + $0x128] sm:$0xff]
        %v3958 = vld [vmem:[#allocation2 + $0x130] sm:$0xff]
        %v3959 = vld [vmem:[#allocation2 + $0x138] sm:$0xff]
        %v3960 = vld [vmem:[#allocation2 + $0x140] sm:$0xff]
        %v3961 = vld [vmem:[#allocation2 + $0x148] sm:$0xff]
        %v3962 = vld [vmem:[#allocation2 + $0x150] sm:$0xff]
        %v3963 = vld [vmem:[#allocation2 + $0x158] sm:$0xff]
        %v3964 = vld [vmem:[#allocation2 + $0x160] sm:$0xff]
        %v3965 = vld [vmem:[#allocation2 + $0x168] sm:$0xff]
        %v3966 = vld [vmem:[#allocation2 + $0x170] sm:$0xff]
        %v3967 = vld [vmem:[#allocation2 + $0x178] sm:$0xff]
        %v3968 = vld [vmem:[#allocation15] sm:$0xf]
        %v3969 = vld [vmem:[#allocation15 + $0x4] sm:$0xf]
        %v3970 = vld [vmem:[#allocation15 + $0x8] sm:$0xf]
        %v3971 = vld [vmem:[#allocation15 + $0xc] sm:$0xf]
        %v3972 = vld [vmem:[#allocation15 + $0x10] sm:$0xf]
        %v3973 = vld [vmem:[#allocation15 + $0x14] sm:$0xf]
        %v3974 = vld [vmem:[#allocation15 + $0x18] sm:$0xf]
        %v3975 = vld [vmem:[#allocation15 + $0x1c] sm:$0xf]
        %v3976 = vld [vmem:[#allocation15 + $0x20] sm:$0xf]
        %v3977 = vld [vmem:[#allocation15 + $0x24] sm:$0xf]
        %v3978 = vld [vmem:[#allocation15 + $0x28] sm:$0xf]
        %v3979 = vld [vmem:[#allocation15 + $0x2c] sm:$0xf]
        %v3980 = vld [vmem:[#allocation15 + $0x30] sm:$0xf]
        %v3981 = vld [vmem:[#allocation15 + $0x34] sm:$0xf]
        %v3982 = vld [vmem:[#allocation15 + $0x38] sm:$0xf]
        %v3983 = vld [vmem:[#allocation15 + $0x3c] sm:$0xf]
        %v3984 = vld [vmem:[#allocation15 + $0x40] sm:$0xf]
        %v3985 = vld [vmem:[#allocation15 + $0x44] sm:$0xf]
        %v3986 = vld [vmem:[#allocation15 + $0x48] sm:$0xf]
        %v3987 = vld [vmem:[#allocation15 + $0x4c] sm:$0xf]
        %v3988 = vld [vmem:[#allocation15 + $0x50] sm:$0xf]
        %v3989 = vld [vmem:[#allocation15 + $0x54] sm:$0xf]
        %v3990 = vld [vmem:[#allocation15 + $0x58] sm:$0xf]
        %v3991 = vld [vmem:[#allocation15 + $0x5c] sm:$0xf]
        %v3992 = vld [vmem:[#allocation15 + $0x60] sm:$0xf]
        %v3993 = vld [vmem:[#allocation15 + $0x64] sm:$0xf]
        %v3994 = vld [vmem:[#allocation15 + $0x68] sm:$0xf]
        %v3995 = vld [vmem:[#allocation15 + $0x6c] sm:$0xf]
        %v3996 = vld [vmem:[#allocation15 + $0x70] sm:$0xf]
        %v3997 = vld [vmem:[#allocation15 + $0x74] sm:$0xf]
        %v3998 = vld [vmem:[#allocation15 + $0x78] sm:$0xf]
        %v3999 = vld [vmem:[#allocation15 + $0x7c] sm:$0xf]
        %v4000 = vld [vmem:[#allocation15 + $0x80] sm:$0xf]
        %v4001 = vld [vmem:[#allocation15 + $0x84] sm:$0xf]
        %v4002 = vld [vmem:[#allocation15 + $0x88] sm:$0xf]
        %v4003 = vld [vmem:[#allocation15 + $0x8c] sm:$0xf]
        %v4004 = vld [vmem:[#allocation15 + $0x90] sm:$0xf]
        %v4005 = vld [vmem:[#allocation15 + $0x94] sm:$0xf]
        %v4006 = vld [vmem:[#allocation15 + $0x98] sm:$0xf]
        %v4007 = vld [vmem:[#allocation15 + $0x9c] sm:$0xf]
        %v4008 = vld [vmem:[#allocation15 + $0xa0] sm:$0xf]
        %v4009 = vld [vmem:[#allocation15 + $0xa4] sm:$0xf]
        %v4010 = vld [vmem:[#allocation15 + $0xa8] sm:$0xf]
        %v4011 = vld [vmem:[#allocation15 + $0xac] sm:$0xf]
        %v4012 = vld [vmem:[#allocation15 + $0xb0] sm:$0xf]
        %v4013 = vld [vmem:[#allocation15 + $0xb4] sm:$0xf]
        %v4014 = vld [vmem:[#allocation15 + $0xb8] sm:$0xf]
        %v4015 = vld [vmem:[#allocation15 + $0xbc] sm:$0xf]
        %v4016 = vld [vmem:[%s548] sm:$0xff]
        %v4017 = vld [vmem:[%s548 + $0x8] sm:$0xff]
        %v4018 = vld [vmem:[%s548 + $0x10] sm:$0xff]
        %v4019 = vld [vmem:[%s548 + $0x18] sm:$0xff]
        %v4020 = vld [vmem:[%s548 + $0x20] sm:$0xff]
        %v4021 = vld [vmem:[%s548 + $0x28] sm:$0xff]
        %v4022 = vld [vmem:[%s548 + $0x30] sm:$0xff]
        %v4023 = vld [vmem:[%s548 + $0x38] sm:$0xff]
        %v4024 = vld [vmem:[%s548 + $0x40] sm:$0xff]
        %v4025 = vld [vmem:[%s548 + $0x48] sm:$0xff]
        %v4026 = vld [vmem:[%s548 + $0x50] sm:$0xff]
        %v4027 = vld [vmem:[%s548 + $0x58] sm:$0xff]
        %v4028 = vld [vmem:[%s548 + $0x60] sm:$0xff]
        %v4029 = vld [vmem:[%s548 + $0x68] sm:$0xff]
        %v4030 = vld [vmem:[%s548 + $0x70] sm:$0xff]
        %v4031 = vld [vmem:[%s548 + $0x78] sm:$0xff]
        %v4032 = vld [vmem:[%s548 + $0x80] sm:$0xff]
        %v4033 = vld [vmem:[%s548 + $0x88] sm:$0xff]
        %v4034 = vld [vmem:[%s548 + $0x90] sm:$0xff]
        %v4035 = vld [vmem:[%s548 + $0x98] sm:$0xff]
        %v4036 = vld [vmem:[%s548 + $0xa0] sm:$0xff]
        %v4037 = vld [vmem:[%s548 + $0xa8] sm:$0xff]
        %v4038 = vld [vmem:[%s548 + $0xb0] sm:$0xff]
        %v4039 = vld [vmem:[%s548 + $0xb8] sm:$0xff]
        %v4040 = vld [vmem:[%s548 + $0xc0] sm:$0xff]
        %v4041 = vld [vmem:[%s548 + $0xc8] sm:$0xff]
        %v4042 = vld [vmem:[%s548 + $0xd0] sm:$0xff]
        %v4043 = vld [vmem:[%s548 + $0xd8] sm:$0xff]
        %v4044 = vld [vmem:[%s548 + $0xe0] sm:$0xff]
        %v4045 = vld [vmem:[%s548 + $0xe8] sm:$0xff]
        %v4046 = vld [vmem:[%s548 + $0xf0] sm:$0xff]
        %v4047 = vld [vmem:[%s548 + $0xf8] sm:$0xff]
        %v4048 = vld [vmem:[%s548 + $0x100] sm:$0xff]
        %v4049 = vld [vmem:[%s548 + $0x108] sm:$0xff]
        %v4050 = vld [vmem:[%s548 + $0x110] sm:$0xff]
        %v4051 = vld [vmem:[%s548 + $0x118] sm:$0xff]
        %v4052 = vld [vmem:[%s548 + $0x120] sm:$0xff]
        %v4053 = vld [vmem:[%s548 + $0x128] sm:$0xff]
        %v4054 = vld [vmem:[%s548 + $0x130] sm:$0xff]
        %v4055 = vld [vmem:[%s548 + $0x138] sm:$0xff]
        %v4056 = vld [vmem:[%s548 + $0x140] sm:$0xff]
        %v4057 = vld [vmem:[%s548 + $0x148] sm:$0xff]
        %v4058 = vld [vmem:[%s548 + $0x150] sm:$0xff]
        %v4059 = vld [vmem:[%s548 + $0x158] sm:$0xff]
        %v4060 = vld [vmem:[%s548 + $0x160] sm:$0xff]
        %v4061 = vld [vmem:[%s548 + $0x168] sm:$0xff]
        %v4062 = vld [vmem:[%s548 + $0x170] sm:$0xff]
        %v4063 = vld [vmem:[%s548 + $0x178] sm:$0xff]
        %s4064 = scalar_lea.vmem [#allocation15], 192
        %v4065 = vld [vmem:[%s4064] sm:$0xf]
        %v4066 = vld [vmem:[%s4064 + $0x4] sm:$0xf]
        %v4067 = vld [vmem:[%s4064 + $0x8] sm:$0xf]
        %v4068 = vld [vmem:[%s4064 + $0xc] sm:$0xf]
        %v4069 = vld [vmem:[%s4064 + $0x10] sm:$0xf]
        %v4070 = vld [vmem:[%s4064 + $0x14] sm:$0xf]
        %v4071 = vld [vmem:[%s4064 + $0x18] sm:$0xf]
        %v4072 = vld [vmem:[%s4064 + $0x1c] sm:$0xf]
        %v4073 = vld [vmem:[%s4064 + $0x20] sm:$0xf]
        %v4074 = vld [vmem:[%s4064 + $0x24] sm:$0xf]
        %v4075 = vld [vmem:[%s4064 + $0x28] sm:$0xf]
        %v4076 = vld [vmem:[%s4064 + $0x2c] sm:$0xf]
        %v4077 = vld [vmem:[%s4064 + $0x30] sm:$0xf]
        %v4078 = vld [vmem:[%s4064 + $0x34] sm:$0xf]
        %v4079 = vld [vmem:[%s4064 + $0x38] sm:$0xf]
        %v4080 = vld [vmem:[%s4064 + $0x3c] sm:$0xf]
        %v4081 = vld [vmem:[%s4064 + $0x40] sm:$0xf]
        %v4082 = vld [vmem:[%s4064 + $0x44] sm:$0xf]
        %v4083 = vld [vmem:[%s4064 + $0x48] sm:$0xf]
        %v4084 = vld [vmem:[%s4064 + $0x4c] sm:$0xf]
        %v4085 = vld [vmem:[%s4064 + $0x50] sm:$0xf]
        %v4086 = vld [vmem:[%s4064 + $0x54] sm:$0xf]
        %v4087 = vld [vmem:[%s4064 + $0x58] sm:$0xf]
        %v4088 = vld [vmem:[%s4064 + $0x5c] sm:$0xf]
        %v4089 = vld [vmem:[%s4064 + $0x60] sm:$0xf]
        %v4090 = vld [vmem:[%s4064 + $0x64] sm:$0xf]
        %v4091 = vld [vmem:[%s4064 + $0x68] sm:$0xf]
        %v4092 = vld [vmem:[%s4064 + $0x6c] sm:$0xf]
        %v4093 = vld [vmem:[%s4064 + $0x70] sm:$0xf]
        %v4094 = vld [vmem:[%s4064 + $0x74] sm:$0xf]
        %v4095 = vld [vmem:[%s4064 + $0x78] sm:$0xf]
        %v4096 = vld [vmem:[%s4064 + $0x7c] sm:$0xf]
        %v4097 = vld [vmem:[%s4064 + $0x80] sm:$0xf]
        %v4098 = vld [vmem:[%s4064 + $0x84] sm:$0xf]
        %v4099 = vld [vmem:[%s4064 + $0x88] sm:$0xf]
        %v4100 = vld [vmem:[%s4064 + $0x8c] sm:$0xf]
        %v4101 = vld [vmem:[%s4064 + $0x90] sm:$0xf]
        %v4102 = vld [vmem:[%s4064 + $0x94] sm:$0xf]
        %v4103 = vld [vmem:[%s4064 + $0x98] sm:$0xf]
        %v4104 = vld [vmem:[%s4064 + $0x9c] sm:$0xf]
        %v4105 = vld [vmem:[%s4064 + $0xa0] sm:$0xf]
        %v4106 = vld [vmem:[%s4064 + $0xa4] sm:$0xf]
        %v4107 = vld [vmem:[%s4064 + $0xa8] sm:$0xf]
        %v4108 = vld [vmem:[%s4064 + $0xac] sm:$0xf]
        %v4109 = vld [vmem:[%s4064 + $0xb0] sm:$0xf]
        %v4110 = vld [vmem:[%s4064 + $0xb4] sm:$0xf]
        %v4111 = vld [vmem:[%s4064 + $0xb8] sm:$0xf]
        %v4112 = vld [vmem:[%s4064 + $0xbc] sm:$0xf]
        %v4161 = vunpack.c.l.b16 %v4065
        %v4162 = vunpack.c.l.b16 %v4066
        %v4163 = vunpack.c.l.b16 %v4067
        %v4164 = vunpack.c.l.b16 %v4068
        %v4165 = vunpack.c.l.b16 %v4069
        %v4166 = vunpack.c.l.b16 %v4070
        %v4167 = vunpack.c.l.b16 %v4071
        %v4168 = vunpack.c.l.b16 %v4072
        %v4169 = vunpack.c.l.b16 %v4073
        %v4170 = vunpack.c.l.b16 %v4074
        %v4171 = vunpack.c.l.b16 %v4075
        %v4172 = vunpack.c.l.b16 %v4076
        %v4173 = vunpack.c.l.b16 %v4077
        %v4174 = vunpack.c.l.b16 %v4078
        %v4175 = vunpack.c.l.b16 %v4079
        %v4176 = vunpack.c.l.b16 %v4080
        %v4177 = vunpack.c.l.b16 %v4081
        %v4178 = vunpack.c.l.b16 %v4082
        %v4179 = vunpack.c.l.b16 %v4083
        %v4180 = vunpack.c.l.b16 %v4084
        %v4181 = vunpack.c.l.b16 %v4085
        %v4182 = vunpack.c.l.b16 %v4086
        %v4183 = vunpack.c.l.b16 %v4087
        %v4184 = vunpack.c.l.b16 %v4088
        %v4185 = vunpack.c.l.b16 %v4089
        %v4186 = vunpack.c.l.b16 %v4090
        %v4187 = vunpack.c.l.b16 %v4091
        %v4188 = vunpack.c.l.b16 %v4092
        %v4189 = vunpack.c.l.b16 %v4093
        %v4190 = vunpack.c.l.b16 %v4094
        %v4191 = vunpack.c.l.b16 %v4095
        %v4192 = vunpack.c.l.b16 %v4096
        %v4193 = vunpack.c.l.b16 %v4097
        %v4194 = vunpack.c.l.b16 %v4098
        %v4195 = vunpack.c.l.b16 %v4099
        %v4196 = vunpack.c.l.b16 %v4100
        %v4197 = vunpack.c.l.b16 %v4101
        %v4198 = vunpack.c.l.b16 %v4102
        %v4199 = vunpack.c.l.b16 %v4103
        %v4200 = vunpack.c.l.b16 %v4104
        %v4201 = vunpack.c.l.b16 %v4105
        %v4202 = vunpack.c.l.b16 %v4106
        %v4203 = vunpack.c.l.b16 %v4107
        %v4204 = vunpack.c.l.b16 %v4108
        %v4205 = vunpack.c.l.b16 %v4109
        %v4206 = vunpack.c.l.b16 %v4110
        %v4207 = vunpack.c.l.b16 %v4111
        %v4208 = vunpack.c.l.b16 %v4112
        %v4209 = vpack.c.b16 %v4162, %v4161
        %v4210 = vpack.c.b16 %v4164, %v4163
        %v4211 = vpack.c.b16 %v4166, %v4165
        %v4212 = vpack.c.b16 %v4168, %v4167
        %v4213 = vpack.c.b16 %v4170, %v4169
        %v4214 = vpack.c.b16 %v4172, %v4171
        %v4215 = vpack.c.b16 %v4174, %v4173
        %v4216 = vpack.c.b16 %v4176, %v4175
        %v4217 = vpack.c.b16 %v4178, %v4177
        %v4218 = vpack.c.b16 %v4180, %v4179
        %v4219 = vpack.c.b16 %v4182, %v4181
        %v4220 = vpack.c.b16 %v4184, %v4183
        %v4221 = vpack.c.b16 %v4186, %v4185
        %v4222 = vpack.c.b16 %v4188, %v4187
        %v4223 = vpack.c.b16 %v4190, %v4189
        %v4224 = vpack.c.b16 %v4192, %v4191
        %v4225 = vpack.c.b16 %v4194, %v4193
        %v4226 = vpack.c.b16 %v4196, %v4195
        %v4227 = vpack.c.b16 %v4198, %v4197
        %v4228 = vpack.c.b16 %v4200, %v4199
        %v4229 = vpack.c.b16 %v4202, %v4201
        %v4230 = vpack.c.b16 %v4204, %v4203
        %v4231 = vpack.c.b16 %v4206, %v4205
        %v4232 = vpack.c.b16 %v4208, %v4207
        %4257 = vmatprep.subr.bf16.mxu0 0
        %4258 = vmatpush1.bf16.msra.mxu0 %v4209
        %4259 = vmatprep.subr.bf16.mxu0 0
        %4260 = vmatpush1.bf16.msra.mxu0 %v4210
        %4261 = vmatprep.subr.bf16.mxu0 0
        %4262 = vmatpush1.bf16.msra.mxu0 %v4211
        %4263 = vmatprep.subr.bf16.mxu0 0
        %4264 = vmatpush1.bf16.msra.mxu0 %v4212
        %4265 = vmatprep.subr.bf16.mxu0 0
        %4266 = vmatpush1.bf16.msra.mxu0 %v4213
        %4267 = vmatprep.subr.bf16.mxu0 0
        %4268 = vmatpush1.bf16.msra.mxu0 %v4214
        %4269 = vmatprep.subr.bf16.mxu0 0
        %4270 = vmatpush1.bf16.msra.mxu0 %v4215
        %4271 = vmatprep.subr.bf16.mxu0 0
        %4272 = vmatpush1.bf16.msra.mxu0 %v4216
        %4273 = vmatprep.subr.bf16.mxu0 0
        %4274 = vmatpush1.bf16.msra.mxu0 %v4217
        %4275 = vmatprep.subr.bf16.mxu0 0
        %4276 = vmatpush1.bf16.msra.mxu0 %v4218
        %4277 = vmatprep.subr.bf16.mxu0 0
        %4278 = vmatpush1.bf16.msra.mxu0 %v4219
        %4279 = vmatprep.subr.bf16.mxu0 0
        %4280 = vmatpush1.bf16.msra.mxu0 %v4220
        %4281 = vmatprep.subr.bf16.mxu0 0
        %4282 = vmatpush1.bf16.msra.mxu0 %v4221
        %4283 = vmatprep.subr.bf16.mxu0 0
        %4284 = vmatpush1.bf16.msra.mxu0 %v4222
        %4285 = vmatprep.subr.bf16.mxu0 0
        %4286 = vmatpush1.bf16.msra.mxu0 %v4223
        %4287 = vmatprep.subr.bf16.mxu0 0
        %4288 = vmatpush1.bf16.msra.mxu0 %v4224
        %4289 = vmatprep.mubr.bf16.mxu0 %v4017
        %4290 = vmatmul.mubr.bf16.gmra.mrb[0].mxu0 %v4016
        %v4291 = vpop.f32.mrb[0].mxu0
        %v4292 = vadd.f32 0.0, %v4291
        %v4293 = vpop.f32.mrb[0].mxu0
        %v4294 = vpop.f32.mrb[0].mxu0
        %v4295 = vadd.f32 0.0, %v4294
        %v4296 = vpop.f32.mrb[0].mxu0
        %4297 = vmatprep.mubr.bf16.mxu0 %v4020
        %4298 = vmatmul.mubr.bf16.gmra.mrb[0].mxu0 %v4019
        %v4299 = vpop.f32.mrb[0].mxu0
        %v4300 = vadd.f32 0.0, %v4299
        %v4301 = vpop.f32.mrb[0].mxu0
        %v4302 = vpop.f32.mrb[0].mxu0
        %v4303 = vadd.f32 0.0, %v4302
        %v4304 = vpop.f32.mrb[0].mxu0
        %4305 = vmatprep.mubr.bf16.mxu0 %v4023
        %4306 = vmatmul.mubr.bf16.gmra.mrb[0].mxu0 %v4022
        %v4307 = vpop.f32.mrb[0].mxu0
        %v4308 = vadd.f32 0.0, %v4307
        %v4309 = vpop.f32.mrb[0].mxu0
        %v4310 = vpop.f32.mrb[0].mxu0
        %v4311 = vadd.f32 0.0, %v4310
        %v4312 = vpop.f32.mrb[0].mxu0
        %4313 = vmatprep.mubr.bf16.mxu0 %v4026
        %4314 = vmatmul.mubr.bf16.gmra.mrb[0].mxu0 %v4025
        %v4315 = vpop.f32.mrb[0].mxu0
        %v4316 = vadd.f32 0.0, %v4315
        %v4317 = vpop.f32.mrb[0].mxu0
        %v4318 = vpop.f32.mrb[0].mxu0
        %v4319 = vadd.f32 0.0, %v4318
        %v4320 = vpop.f32.mrb[0].mxu0
        %4321 = vmatprep.mubr.bf16.mxu0 %v4029
        %4322 = vmatmul.mubr.bf16.gmra.mrb[0].mxu0 %v4028
        %v4323 = vpop.f32.mrb[0].mxu0
        %v4324 = vadd.f32 0.0, %v4323
        %v4325 = vpop.f32.mrb[0].mxu0
        %v4326 = vpop.f32.mrb[0].mxu0
        %v4327 = vadd.f32 0.0, %v4326
        %v4328 = vpop.f32.mrb[0].mxu0
        %4329 = vmatprep.mubr.bf16.mxu0 %v4032
        %4330 = vmatmul.mubr.bf16.gmra.mrb[0].mxu0 %v4031
        %v4331 = vpop.f32.mrb[0].mxu0
        %v4332 = vadd.f32 0.0, %v4331
        %v4333 = vpop.f32.mrb[0].mxu0
        %v4334 = vpop.f32.mrb[0].mxu0
        %v4335 = vadd.f32 0.0, %v4334
        %v4336 = vpop.f32.mrb[0].mxu0
        %4337 = vmatprep.mubr.bf16.mxu0 %v4035
        %4338 = vmatmul.mubr.bf16.gmra.mrb[0].mxu0 %v4034
        %v4339 = vpop.f32.mrb[0].mxu0
        %v4340 = vadd.f32 0.0, %v4339
        %v4341 = vpop.f32.mrb[0].mxu0
        %v4342 = vpop.f32.mrb[0].mxu0
        %v4343 = vadd.f32 0.0, %v4342
        %v4344 = vpop.f32.mrb[0].mxu0
        %4345 = vmatprep.mubr.bf16.mxu0 %v4038
        %4346 = vmatmul.mubr.bf16.gmra.mrb[0].mxu0 %v4037
        %v4347 = vpop.f32.mrb[0].mxu0
        %v4348 = vadd.f32 0.0, %v4347
        %v4349 = vpop.f32.mrb[0].mxu0
        %v4350 = vpop.f32.mrb[0].mxu0
        %v4351 = vadd.f32 0.0, %v4350
        %v4352 = vpop.f32.mrb[0].mxu0
        %4353 = vmatprep.mubr.bf16.mxu0 %v4041
        %4354 = vmatmul.mubr.bf16.gmra.mrb[0].mxu0 %v4040
        %v4355 = vpop.f32.mrb[0].mxu0
        %v4356 = vadd.f32 0.0, %v4355
        %v4357 = vpop.f32.mrb[0].mxu0
        %v4358 = vpop.f32.mrb[0].mxu0
        %v4359 = vadd.f32 0.0, %v4358
        %v4360 = vpop.f32.mrb[0].mxu0
        %4361 = vmatprep.mubr.bf16.mxu0 %v4044
        %4362 = vmatmul.mubr.bf16.gmra.mrb[0].mxu0 %v4043
        %v4363 = vpop.f32.mrb[0].mxu0
        %v4364 = vadd.f32 0.0, %v4363
        %v4365 = vpop.f32.mrb[0].mxu0
        %v4366 = vpop.f32.mrb[0].mxu0
        %v4367 = vadd.f32 0.0, %v4366
        %v4368 = vpop.f32.mrb[0].mxu0
        %4369 = vmatprep.mubr.bf16.mxu0 %v4047
        %4370 = vmatmul.mubr.bf16.gmra.mrb[0].mxu0 %v4046
        %v4371 = vpop.f32.mrb[0].mxu0
        %v4372 = vadd.f32 0.0, %v4371
        %v4373 = vpop.f32.mrb[0].mxu0
        %v4374 = vpop.f32.mrb[0].mxu0
        %v4375 = vadd.f32 0.0, %v4374
        %v4376 = vpop.f32.mrb[0].mxu0
        %4377 = vmatprep.mubr.bf16.mxu0 %v4050
        %4378 = vmatmul.mubr.bf16.gmra.mrb[0].mxu0 %v4049
        %v4379 = vpop.f32.mrb[0].mxu0
        %v4380 = vadd.f32 0.0, %v4379
        %v4381 = vpop.f32.mrb[0].mxu0
        %v4382 = vpop.f32.mrb[0].mxu0
        %v4383 = vadd.f32 0.0, %v4382
        %v4384 = vpop.f32.mrb[0].mxu0
        %4385 = vmatprep.mubr.bf16.mxu0 %v4053
        %4386 = vmatmul.mubr.bf16.gmra.mrb[0].mxu0 %v4052
        %v4387 = vpop.f32.mrb[0].mxu0
        %v4388 = vadd.f32 0.0, %v4387
        %v4389 = vpop.f32.mrb[0].mxu0
        %v4390 = vpop.f32.mrb[0].mxu0
        %v4391 = vadd.f32 0.0, %v4390
        %v4392 = vpop.f32.mrb[0].mxu0
        %4393 = vmatprep.mubr.bf16.mxu0 %v4056
        %4394 = vmatmul.mubr.bf16.gmra.mrb[0].mxu0 %v4055
        %v4395 = vpop.f32.mrb[0].mxu0
        %v4396 = vadd.f32 0.0, %v4395
        %v4397 = vpop.f32.mrb[0].mxu0
        %v4398 = vpop.f32.mrb[0].mxu0
        %v4399 = vadd.f32 0.0, %v4398
        %v4400 = vpop.f32.mrb[0].mxu0
        %4401 = vmatprep.mubr.bf16.mxu0 %v4059
        %4402 = vmatmul.mubr.bf16.gmra.mrb[0].mxu0 %v4058
        %v4403 = vpop.f32.mrb[0].mxu0
        %v4404 = vadd.f32 0.0, %v4403
        %v4405 = vpop.f32.mrb[0].mxu0
        %v4406 = vpop.f32.mrb[0].mxu0
        %v4407 = vadd.f32 0.0, %v4406
        %v4408 = vpop.f32.mrb[0].mxu0
        %4409 = vmatprep.mubr.bf16.mxu0 %v4062
        %4410 = vmatmul.mubr.bf16.gmra.mrb[0].mxu0 %v4061
        %v4411 = vpop.f32.mrb[0].mxu0
        %v4412 = vadd.f32 0.0, %v4411
        %v4413 = vpop.f32.mrb[0].mxu0
        %v4414 = vpop.f32.mrb[0].mxu0
        %v4415 = vadd.f32 0.0, %v4414
        %v4416 = vpop.f32.mrb[0].mxu0
        %4417 = vdwg.mxu0
        %4418 = vmatprep.subr.bf16.mxu0 0
        %4419 = vmatpush1.bf16.msra.mxu0 %v4225
        %4420 = vmatprep.subr.bf16.mxu0 0
        %4421 = vmatpush1.bf16.msra.mxu0 %v4226
        %4422 = vmatprep.subr.bf16.mxu0 0
        %4423 = vmatpush1.bf16.msra.mxu0 %v4227
        %4424 = vmatprep.subr.bf16.mxu0 0
        %4425 = vmatpush1.bf16.msra.mxu0 %v4228
        %4426 = vmatprep.subr.bf16.mxu0 0
        %4427 = vmatpush1.bf16.msra.mxu0 %v4229
        %4428 = vmatprep.subr.bf16.mxu0 0
        %4429 = vmatpush1.bf16.msra.mxu0 %v4230
        %4430 = vmatprep.subr.bf16.mxu0 0
        %4431 = vmatpush1.bf16.msra.mxu0 %v4231
        %4432 = vmatprep.subr.bf16.mxu0 0
        %4433 = vmatpush1.bf16.msra.mxu0 %v4232
        %4434 = vmatprep.subr.bf16.mxu0 0
        %4435 = vmatpush1.bf16.msra.mxu0 0
        %4436 = vmatprep.subr.bf16.mxu0 0
        %4437 = vmatpush1.bf16.msra.mxu0 0
        %4438 = vmatprep.subr.bf16.mxu0 0
        %4439 = vmatpush1.bf16.msra.mxu0 0
        %4440 = vmatprep.subr.bf16.mxu0 0
        %4441 = vmatpush1.bf16.msra.mxu0 0
        %4442 = vmatprep.subr.bf16.mxu0 0
        %4443 = vmatpush1.bf16.msra.mxu0 0
        %4444 = vmatprep.subr.bf16.mxu0 0
        %4445 = vmatpush1.bf16.msra.mxu0 0
        %4446 = vmatprep.subr.bf16.mxu0 0
        %4447 = vmatpush1.bf16.msra.mxu0 0
        %4448 = vmatprep.subr.bf16.mxu0 0
        %4449 = vmatpush1.bf16.msra.mxu0 0
        %4450 = vmatprep.mubr.bf16.mxu0 0
        %4451 = vmatmul.mubr.bf16.gmra.mrb[0].mxu0 %v4018
        %v4452 = vpop.f32.mrb[0].mxu0
        %v4453 = vadd.f32 %v4292, %v4452
        %v4454 = vpop.f32.mrb[0].mxu0
        %v4455 = vpop.f32.mrb[0].mxu0
        %v4456 = vadd.f32 %v4295, %v4455
        %v4457 = vpop.f32.mrb[0].mxu0
        %4458 = vmatprep.mubr.bf16.mxu0 0
        %4459 = vmatmul.mubr.bf16.gmra.mrb[0].mxu0 %v4021
        %v4460 = vpop.f32.mrb[0].mxu0
        %v4461 = vadd.f32 %v4300, %v4460
        %v4462 = vpop.f32.mrb[0].mxu0
        %v4463 = vpop.f32.mrb[0].mxu0
        %v4464 = vadd.f32 %v4303, %v4463
        %v4465 = vpop.f32.mrb[0].mxu0
        %4466 = vmatprep.mubr.bf16.mxu0 0
        %4467 = vmatmul.mubr.bf16.gmra.mrb[0].mxu0 %v4024
        %v4468 = vpop.f32.mrb[0].mxu0
        %v4469 = vadd.f32 %v4308, %v4468
        %v4470 = vpop.f32.mrb[0].mxu0
        %v4471 = vpop.f32.mrb[0].mxu0
        %v4472 = vadd.f32 %v4311, %v4471
        %v4473 = vpop.f32.mrb[0].mxu0
        %4474 = vmatprep.mubr.bf16.mxu0 0
        %4475 = vmatmul.mubr.bf16.gmra.mrb[0].mxu0 %v4027
        %v4476 = vpop.f32.mrb[0].mxu0
        %v4477 = vadd.f32 %v4316, %v4476
        %v4478 = vpop.f32.mrb[0].mxu0
        %v4479 = vpop.f32.mrb[0].mxu0
        %v4480 = vadd.f32 %v4319, %v4479
        %v4481 = vpop.f32.mrb[0].mxu0
        %4482 = vmatprep.mubr.bf16.mxu0 0
        %4483 = vmatmul.mubr.bf16.gmra.mrb[0].mxu0 %v4030
        %v4484 = vpop.f32.mrb[0].mxu0
        %v4485 = vadd.f32 %v4324, %v4484
        %v4486 = vpop.f32.mrb[0].mxu0
        %v4487 = vpop.f32.mrb[0].mxu0
        %v4488 = vadd.f32 %v4327, %v4487
        %v4489 = vpop.f32.mrb[0].mxu0
        %4490 = vmatprep.mubr.bf16.mxu0 0
        %4491 = vmatmul.mubr.bf16.gmra.mrb[0].mxu0 %v4033
        %v4492 = vpop.f32.mrb[0].mxu0
        %v4493 = vadd.f32 %v4332, %v4492
        %v4494 = vpop.f32.mrb[0].mxu0
        %v4495 = vpop.f32.mrb[0].mxu0
        %v4496 = vadd.f32 %v4335, %v4495
        %v4497 = vpop.f32.mrb[0].mxu0
        %4498 = vmatprep.mubr.bf16.mxu0 0
        %4499 = vmatmul.mubr.bf16.gmra.mrb[0].mxu0 %v4036
        %v4500 = vpop.f32.mrb[0].mxu0
        %v4501 = vadd.f32 %v4340, %v4500
        %v4502 = vpop.f32.mrb[0].mxu0
        %v4503 = vpop.f32.mrb[0].mxu0
        %v4504 = vadd.f32 %v4343, %v4503
        %v4505 = vpop.f32.mrb[0].mxu0
        %4506 = vmatprep.mubr.bf16.mxu0 0
        %4507 = vmatmul.mubr.bf16.gmra.mrb[0].mxu0 %v4039
        %v4508 = vpop.f32.mrb[0].mxu0
        %v4509 = vadd.f32 %v4348, %v4508
        %v4510 = vpop.f32.mrb[0].mxu0
        %v4511 = vpop.f32.mrb[0].mxu0
        %v4512 = vadd.f32 %v4351, %v4511
        %v4513 = vpop.f32.mrb[0].mxu0
        %4514 = vmatprep.mubr.bf16.mxu0 0
        %4515 = vmatmul.mubr.bf16.gmra.mrb[0].mxu0 %v4042
        %v4516 = vpop.f32.mrb[0].mxu0
        %v4517 = vadd.f32 %v4356, %v4516
        %v4518 = vpop.f32.mrb[0].mxu0
        %v4519 = vpop.f32.mrb[0].mxu0
        %v4520 = vadd.f32 %v4359, %v4519
        %v4521 = vpop.f32.mrb[0].mxu0
        %4522 = vmatprep.mubr.bf16.mxu0 0
        %4523 = vmatmul.mubr.bf16.gmra.mrb[0].mxu0 %v4045
        %v4524 = vpop.f32.mrb[0].mxu0
        %v4525 = vadd.f32 %v4364, %v4524
        %v4526 = vpop.f32.mrb[0].mxu0
        %v4527 = vpop.f32.mrb[0].mxu0
        %v4528 = vadd.f32 %v4367, %v4527
        %v4529 = vpop.f32.mrb[0].mxu0
        %4530 = vmatprep.mubr.bf16.mxu0 0
        %4531 = vmatmul.mubr.bf16.gmra.mrb[0].mxu0 %v4048
        %v4532 = vpop.f32.mrb[0].mxu0
        %v4533 = vadd.f32 %v4372, %v4532
        %v4534 = vpop.f32.mrb[0].mxu0
        %v4535 = vpop.f32.mrb[0].mxu0
        %v4536 = vadd.f32 %v4375, %v4535
        %v4537 = vpop.f32.mrb[0].mxu0
        %4538 = vmatprep.mubr.bf16.mxu0 0
        %4539 = vmatmul.mubr.bf16.gmra.mrb[0].mxu0 %v4051
        %v4540 = vpop.f32.mrb[0].mxu0
        %v4541 = vadd.f32 %v4380, %v4540
        %v4542 = vpop.f32.mrb[0].mxu0
        %v4543 = vpop.f32.mrb[0].mxu0
        %v4544 = vadd.f32 %v4383, %v4543
        %v4545 = vpop.f32.mrb[0].mxu0
        %4546 = vmatprep.mubr.bf16.mxu0 0
        %4547 = vmatmul.mubr.bf16.gmra.mrb[0].mxu0 %v4054
        %v4548 = vpop.f32.mrb[0].mxu0
        %v4549 = vadd.f32 %v4388, %v4548
        %v4550 = vpop.f32.mrb[0].mxu0
        %v4551 = vpop.f32.mrb[0].mxu0
        %v4552 = vadd.f32 %v4391, %v4551
        %v4553 = vpop.f32.mrb[0].mxu0
        %4554 = vmatprep.mubr.bf16.mxu0 0
        %4555 = vmatmul.mubr.bf16.gmra.mrb[0].mxu0 %v4057
        %v4556 = vpop.f32.mrb[0].mxu0
        %v4557 = vadd.f32 %v4396, %v4556
        %v4558 = vpop.f32.mrb[0].mxu0
        %v4559 = vpop.f32.mrb[0].mxu0
        %v4560 = vadd.f32 %v4399, %v4559
        %v4561 = vpop.f32.mrb[0].mxu0
        %4562 = vmatprep.mubr.bf16.mxu0 0
        %4563 = vmatmul.mubr.bf16.gmra.mrb[0].mxu0 %v4060
        %v4564 = vpop.f32.mrb[0].mxu0
        %v4565 = vadd.f32 %v4404, %v4564
        %v4566 = vpop.f32.mrb[0].mxu0
        %v4567 = vpop.f32.mrb[0].mxu0
        %v4568 = vadd.f32 %v4407, %v4567
        %v4569 = vpop.f32.mrb[0].mxu0
        %4570 = vmatprep.mubr.bf16.mxu0 0
        %4571 = vmatmul.mubr.bf16.gmra.mrb[0].mxu0 %v4063
        %v4572 = vpop.f32.mrb[0].mxu0
        %v4573 = vadd.f32 %v4412, %v4572
        %v4574 = vpop.f32.mrb[0].mxu0
        %v4575 = vpop.f32.mrb[0].mxu0
        %v4576 = vadd.f32 %v4415, %v4575
        %v4577 = vpop.f32.mrb[0].mxu0
        %4578 = vdwg.mxu0
        %v4627 = vunpack.c.l.b16 %v3968
        %v4628 = vunpack.c.l.b16 %v3969
        %v4629 = vunpack.c.l.b16 %v3970
        %v4630 = vunpack.c.l.b16 %v3971
        %v4631 = vunpack.c.l.b16 %v3972
        %v4632 = vunpack.c.l.b16 %v3973
        %v4633 = vunpack.c.l.b16 %v3974
        %v4634 = vunpack.c.l.b16 %v3975
        %v4635 = vunpack.c.l.b16 %v3976
        %v4636 = vunpack.c.l.b16 %v3977
        %v4637 = vunpack.c.l.b16 %v3978
        %v4638 = vunpack.c.l.b16 %v3979
        %v4639 = vunpack.c.l.b16 %v3980
        %v4640 = vunpack.c.l.b16 %v3981
        %v4641 = vunpack.c.l.b16 %v3982
        %v4642 = vunpack.c.l.b16 %v3983
        %v4643 = vunpack.c.l.b16 %v3984
        %v4644 = vunpack.c.l.b16 %v3985
        %v4645 = vunpack.c.l.b16 %v3986
        %v4646 = vunpack.c.l.b16 %v3987
        %v4647 = vunpack.c.l.b16 %v3988
        %v4648 = vunpack.c.l.b16 %v3989
        %v4649 = vunpack.c.l.b16 %v3990
        %v4650 = vunpack.c.l.b16 %v3991
        %v4651 = vunpack.c.l.b16 %v3992
        %v4652 = vunpack.c.l.b16 %v3993
        %v4653 = vunpack.c.l.b16 %v3994
        %v4654 = vunpack.c.l.b16 %v3995
        %v4655 = vunpack.c.l.b16 %v3996
        %v4656 = vunpack.c.l.b16 %v3997
        %v4657 = vunpack.c.l.b16 %v3998
        %v4658 = vunpack.c.l.b16 %v3999
        %v4659 = vunpack.c.l.b16 %v4000
        %v4660 = vunpack.c.l.b16 %v4001
        %v4661 = vunpack.c.l.b16 %v4002
        %v4662 = vunpack.c.l.b16 %v4003
        %v4663 = vunpack.c.l.b16 %v4004
        %v4664 = vunpack.c.l.b16 %v4005
        %v4665 = vunpack.c.l.b16 %v4006
        %v4666 = vunpack.c.l.b16 %v4007
        %v4667 = vunpack.c.l.b16 %v4008
        %v4668 = vunpack.c.l.b16 %v4009
        %v4669 = vunpack.c.l.b16 %v4010
        %v4670 = vunpack.c.l.b16 %v4011
        %v4671 = vunpack.c.l.b16 %v4012
        %v4672 = vunpack.c.l.b16 %v4013
        %v4673 = vunpack.c.l.b16 %v4014
        %v4674 = vunpack.c.l.b16 %v4015
        %v4675 = vpack.c.b16 %v4628, %v4627
        %v4676 = vpack.c.b16 %v4630, %v4629
        %v4677 = vpack.c.b16 %v4632, %v4631
        %v4678 = vpack.c.b16 %v4634, %v4633
        %v4679 = vpack.c.b16 %v4636, %v4635
        %v4680 = vpack.c.b16 %v4638, %v4637
        %v4681 = vpack.c.b16 %v4640, %v4639
        %v4682 = vpack.c.b16 %v4642, %v4641
        %v4683 = vpack.c.b16 %v4644, %v4643
        %v4684 = vpack.c.b16 %v4646, %v4645
        %v4685 = vpack.c.b16 %v4648, %v4647
        %v4686 = vpack.c.b16 %v4650, %v4649
        %v4687 = vpack.c.b16 %v4652, %v4651
        %v4688 = vpack.c.b16 %v4654, %v4653
        %v4689 = vpack.c.b16 %v4656, %v4655
        %v4690 = vpack.c.b16 %v4658, %v4657
        %v4691 = vpack.c.b16 %v4660, %v4659
        %v4692 = vpack.c.b16 %v4662, %v4661
        %v4693 = vpack.c.b16 %v4664, %v4663
        %v4694 = vpack.c.b16 %v4666, %v4665
        %v4695 = vpack.c.b16 %v4668, %v4667
        %v4696 = vpack.c.b16 %v4670, %v4669
        %v4697 = vpack.c.b16 %v4672, %v4671
        %v4698 = vpack.c.b16 %v4674, %v4673
        %4723 = vmatprep.subr.bf16.mxu0 0
        %4724 = vmatpush1.bf16.msra.mxu0 %v4675
        %4725 = vmatprep.subr.bf16.mxu0 0
        %4726 = vmatpush1.bf16.msra.mxu0 %v4676
        %4727 = vmatprep.subr.bf16.mxu0 0
        %4728 = vmatpush1.bf16.msra.mxu0 %v4677
        %4729 = vmatprep.subr.bf16.mxu0 0
        %4730 = vmatpush1.bf16.msra.mxu0 %v4678
        %4731 = vmatprep.subr.bf16.mxu0 0
        %4732 = vmatpush1.bf16.msra.mxu0 %v4679
        %4733 = vmatprep.subr.bf16.mxu0 0
        %4734 = vmatpush1.bf16.msra.mxu0 %v4680
        %4735 = vmatprep.subr.bf16.mxu0 0
        %4736 = vmatpush1.bf16.msra.mxu0 %v4681
        %4737 = vmatprep.subr.bf16.mxu0 0
        %4738 = vmatpush1.bf16.msra.mxu0 %v4682
        %4739 = vmatprep.subr.bf16.mxu0 0
        %4740 = vmatpush1.bf16.msra.mxu0 %v4683
        %4741 = vmatprep.subr.bf16.mxu0 0
        %4742 = vmatpush1.bf16.msra.mxu0 %v4684
        %4743 = vmatprep.subr.bf16.mxu0 0
        %4744 = vmatpush1.bf16.msra.mxu0 %v4685
        %4745 = vmatprep.subr.bf16.mxu0 0
        %4746 = vmatpush1.bf16.msra.mxu0 %v4686
        %4747 = vmatprep.subr.bf16.mxu0 0
        %4748 = vmatpush1.bf16.msra.mxu0 %v4687
        %4749 = vmatprep.subr.bf16.mxu0 0
        %4750 = vmatpush1.bf16.msra.mxu0 %v4688
        %4751 = vmatprep.subr.bf16.mxu0 0
        %4752 = vmatpush1.bf16.msra.mxu0 %v4689
        %4753 = vmatprep.subr.bf16.mxu0 0
        %4754 = vmatpush1.bf16.msra.mxu0 %v4690
        %4755 = vmatprep.mubr.bf16.mxu0 %v3921
        %4756 = vmatmul.mubr.bf16.gmra.mrb[0].mxu0 %v3920
        %v4757 = vpop.f32.mrb[0].mxu0
        %v4758 = vadd.f32 %v4453, %v4757
        %v4759 = vpop.f32.mrb[0].mxu0
        %v4760 = vpop.f32.mrb[0].mxu0
        %v4761 = vadd.f32 %v4456, %v4760
        %v4762 = vpop.f32.mrb[0].mxu0
        %4763 = vmatprep.mubr.bf16.mxu0 %v3924
        %4764 = vmatmul.mubr.bf16.gmra.mrb[0].mxu0 %v3923
        %v4765 = vpop.f32.mrb[0].mxu0
        %v4766 = vadd.f32 %v4461, %v4765
        %v4767 = vpop.f32.mrb[0].mxu0
        %v4768 = vpop.f32.mrb[0].mxu0
        %v4769 = vadd.f32 %v4464, %v4768
        %v4770 = vpop.f32.mrb[0].mxu0
        %4771 = vmatprep.mubr.bf16.mxu0 %v3927
        %4772 = vmatmul.mubr.bf16.gmra.mrb[0].mxu0 %v3926
        %v4773 = vpop.f32.mrb[0].mxu0
        %v4774 = vadd.f32 %v4469, %v4773
        %v4775 = vpop.f32.mrb[0].mxu0
        %v4776 = vpop.f32.mrb[0].mxu0
        %v4777 = vadd.f32 %v4472, %v4776
        %v4778 = vpop.f32.mrb[0].mxu0
        %4779 = vmatprep.mubr.bf16.mxu0 %v3930
        %4780 = vmatmul.mubr.bf16.gmra.mrb[0].mxu0 %v3929
        %v4781 = vpop.f32.mrb[0].mxu0
        %v4782 = vadd.f32 %v4477, %v4781
        %v4783 = vpop.f32.mrb[0].mxu0
        %v4784 = vpop.f32.mrb[0].mxu0
        %v4785 = vadd.f32 %v4480, %v4784
        %v4786 = vpop.f32.mrb[0].mxu0
        %4787 = vmatprep.mubr.bf16.mxu0 %v3933
        %4788 = vmatmul.mubr.bf16.gmra.mrb[0].mxu0 %v3932
        %v4789 = vpop.f32.mrb[0].mxu0
        %v4790 = vadd.f32 %v4485, %v4789
        %v4791 = vpop.f32.mrb[0].mxu0
        %v4792 = vpop.f32.mrb[0].mxu0
        %v4793 = vadd.f32 %v4488, %v4792
        %v4794 = vpop.f32.mrb[0].mxu0
        %4795 = vmatprep.mubr.bf16.mxu0 %v3936
        %4796 = vmatmul.mubr.bf16.gmra.mrb[0].mxu0 %v3935
        %v4797 = vpop.f32.mrb[0].mxu0
        %v4798 = vadd.f32 %v4493, %v4797
        %v4799 = vpop.f32.mrb[0].mxu0
        %v4800 = vpop.f32.mrb[0].mxu0
        %v4801 = vadd.f32 %v4496, %v4800
        %v4802 = vpop.f32.mrb[0].mxu0
        %4803 = vmatprep.mubr.bf16.mxu0 %v3939
        %4804 = vmatmul.mubr.bf16.gmra.mrb[0].mxu0 %v3938
        %v4805 = vpop.f32.mrb[0].mxu0
        %v4806 = vadd.f32 %v4501, %v4805
        %v4807 = vpop.f32.mrb[0].mxu0
        %v4808 = vpop.f32.mrb[0].mxu0
        %v4809 = vadd.f32 %v4504, %v4808
        %v4810 = vpop.f32.mrb[0].mxu0
        %4811 = vmatprep.mubr.bf16.mxu0 %v3942
        %4812 = vmatmul.mubr.bf16.gmra.mrb[0].mxu0 %v3941
        %v4813 = vpop.f32.mrb[0].mxu0
        %v4814 = vadd.f32 %v4509, %v4813
        %v4815 = vpop.f32.mrb[0].mxu0
        %v4816 = vpop.f32.mrb[0].mxu0
        %v4817 = vadd.f32 %v4512, %v4816
        %v4818 = vpop.f32.mrb[0].mxu0
        %4819 = vmatprep.mubr.bf16.mxu0 %v3945
        %4820 = vmatmul.mubr.bf16.gmra.mrb[0].mxu0 %v3944
        %v4821 = vpop.f32.mrb[0].mxu0
        %v4822 = vadd.f32 %v4517, %v4821
        %v4823 = vpop.f32.mrb[0].mxu0
        %v4824 = vpop.f32.mrb[0].mxu0
        %v4825 = vadd.f32 %v4520, %v4824
        %v4826 = vpop.f32.mrb[0].mxu0
        %4827 = vmatprep.mubr.bf16.mxu0 %v3948
        %4828 = vmatmul.mubr.bf16.gmra.mrb[0].mxu0 %v3947
        %v4829 = vpop.f32.mrb[0].mxu0
        %v4830 = vadd.f32 %v4525, %v4829
        %v4831 = vpop.f32.mrb[0].mxu0
        %v4832 = vpop.f32.mrb[0].mxu0
        %v4833 = vadd.f32 %v4528, %v4832
        %v4834 = vpop.f32.mrb[0].mxu0
        %4835 = vmatprep.mubr.bf16.mxu0 %v3951
        %4836 = vmatmul.mubr.bf16.gmra.mrb[0].mxu0 %v3950
        %v4837 = vpop.f32.mrb[0].mxu0
        %v4838 = vadd.f32 %v4533, %v4837
        %v4839 = vpop.f32.mrb[0].mxu0
        %v4840 = vpop.f32.mrb[0].mxu0
        %v4841 = vadd.f32 %v4536, %v4840
        %v4842 = vpop.f32.mrb[0].mxu0
        %4843 = vmatprep.mubr.bf16.mxu0 %v3954
        %4844 = vmatmul.mubr.bf16.gmra.mrb[0].mxu0 %v3953
        %v4845 = vpop.f32.mrb[0].mxu0
        %v4846 = vadd.f32 %v4541, %v4845
        %v4847 = vpop.f32.mrb[0].mxu0
        %v4848 = vpop.f32.mrb[0].mxu0
        %v4849 = vadd.f32 %v4544, %v4848
        %v4850 = vpop.f32.mrb[0].mxu0
        %4851 = vmatprep.mubr.bf16.mxu0 %v3957
        %4852 = vmatmul.mubr.bf16.gmra.mrb[0].mxu0 %v3956
        %v4853 = vpop.f32.mrb[0].mxu0
        %v4854 = vadd.f32 %v4549, %v4853
        %v4855 = vpop.f32.mrb[0].mxu0
        %v4856 = vpop.f32.mrb[0].mxu0
        %v4857 = vadd.f32 %v4552, %v4856
        %v4858 = vpop.f32.mrb[0].mxu0
        %4859 = vmatprep.mubr.bf16.mxu0 %v3960
        %4860 = vmatmul.mubr.bf16.gmra.mrb[0].mxu0 %v3959
        %v4861 = vpop.f32.mrb[0].mxu0
        %v4862 = vadd.f32 %v4557, %v4861
        %v4863 = vpop.f32.mrb[0].mxu0
        %v4864 = vpop.f32.mrb[0].mxu0
        %v4865 = vadd.f32 %v4560, %v4864
        %v4866 = vpop.f32.mrb[0].mxu0
        %4867 = vmatprep.mubr.bf16.mxu0 %v3963
        %4868 = vmatmul.mubr.bf16.gmra.mrb[0].mxu0 %v3962
        %v4869 = vpop.f32.mrb[0].mxu0
        %v4870 = vadd.f32 %v4565, %v4869
        %v4871 = vpop.f32.mrb[0].mxu0
        %v4872 = vpop.f32.mrb[0].mxu0
        %v4873 = vadd.f32 %v4568, %v4872
        %v4874 = vpop.f32.mrb[0].mxu0
        %4875 = vmatprep.mubr.bf16.mxu0 %v3966
        %4876 = vmatmul.mubr.bf16.gmra.mrb[0].mxu0 %v3965
        %v4877 = vpop.f32.mrb[0].mxu0
        %v4878 = vadd.f32 %v4573, %v4877
        %v4879 = vpop.f32.mrb[0].mxu0
        %v4880 = vpop.f32.mrb[0].mxu0
        %v4881 = vadd.f32 %v4576, %v4880
        %v4882 = vpop.f32.mrb[0].mxu0
        %4883 = vdwg.mxu0
        %4884 = vmatprep.subr.bf16.mxu0 0
        %4885 = vmatpush1.bf16.msra.mxu0 %v4691
        %4886 = vmatprep.subr.bf16.mxu0 0
        %4887 = vmatpush1.bf16.msra.mxu0 %v4692
        %4888 = vmatprep.subr.bf16.mxu0 0
        %4889 = vmatpush1.bf16.msra.mxu0 %v4693
        %4890 = vmatprep.subr.bf16.mxu0 0
        %4891 = vmatpush1.bf16.msra.mxu0 %v4694
        %4892 = vmatprep.subr.bf16.mxu0 0
        %4893 = vmatpush1.bf16.msra.mxu0 %v4695
        %4894 = vmatprep.subr.bf16.mxu0 0
        %4895 = vmatpush1.bf16.msra.mxu0 %v4696
        %4896 = vmatprep.subr.bf16.mxu0 0
        %4897 = vmatpush1.bf16.msra.mxu0 %v4697
        %4898 = vmatprep.subr.bf16.mxu0 0
        %4899 = vmatpush1.bf16.msra.mxu0 %v4698
        %4900 = vmatprep.subr.bf16.mxu0 0
        %4901 = vmatpush1.bf16.msra.mxu0 0
        %4902 = vmatprep.subr.bf16.mxu0 0
        %4903 = vmatpush1.bf16.msra.mxu0 0
        %4904 = vmatprep.subr.bf16.mxu0 0
        %4905 = vmatpush1.bf16.msra.mxu0 0
        %4906 = vmatprep.subr.bf16.mxu0 0
        %4907 = vmatpush1.bf16.msra.mxu0 0
        %4908 = vmatprep.subr.bf16.mxu0 0
        %4909 = vmatpush1.bf16.msra.mxu0 0
        %4910 = vmatprep.subr.bf16.mxu0 0
        %4911 = vmatpush1.bf16.msra.mxu0 0
        %4912 = vmatprep.subr.bf16.mxu0 0
        %4913 = vmatpush1.bf16.msra.mxu0 0
        %4914 = vmatprep.subr.bf16.mxu0 0
        %4915 = vmatpush1.bf16.msra.mxu0 0
        %4916 = vmatprep.mubr.bf16.mxu0 0
        %4917 = vmatmul.mubr.bf16.gmra.mrb[0].mxu0 %v3922
        %v4918 = vpop.f32.mrb[0].mxu0
        %v4919 = vadd.f32 %v4758, %v4918
        %v4920 = vpop.f32.mrb[0].mxu0
        %v4921 = vpop.f32.mrb[0].mxu0
        %v4922 = vadd.f32 %v4761, %v4921
        %v4923 = vpop.f32.mrb[0].mxu0
        %4924 = vmatprep.mubr.bf16.mxu0 0
        %4925 = vmatmul.mubr.bf16.gmra.mrb[0].mxu0 %v3925
        %v4926 = vpop.f32.mrb[0].mxu0
        %v4927 = vadd.f32 %v4766, %v4926
        %v4928 = vpop.f32.mrb[0].mxu0
        %v4929 = vpop.f32.mrb[0].mxu0
        %v4930 = vadd.f32 %v4769, %v4929
        %v4931 = vpop.f32.mrb[0].mxu0
        %4932 = vmatprep.mubr.bf16.mxu0 0
        %4933 = vmatmul.mubr.bf16.gmra.mrb[0].mxu0 %v3928
        %v4934 = vpop.f32.mrb[0].mxu0
        %v4935 = vadd.f32 %v4774, %v4934
        %v4936 = vpop.f32.mrb[0].mxu0
        %v4937 = vpop.f32.mrb[0].mxu0
        %v4938 = vadd.f32 %v4777, %v4937
        %v4939 = vpop.f32.mrb[0].mxu0
        %4940 = vmatprep.mubr.bf16.mxu0 0
        %4941 = vmatmul.mubr.bf16.gmra.mrb[0].mxu0 %v3931
        %v4942 = vpop.f32.mrb[0].mxu0
        %v4943 = vadd.f32 %v4782, %v4942
        %v4944 = vpop.f32.mrb[0].mxu0
        %v4945 = vpop.f32.mrb[0].mxu0
        %v4946 = vadd.f32 %v4785, %v4945
        %v4947 = vpop.f32.mrb[0].mxu0
        %4948 = vmatprep.mubr.bf16.mxu0 0
        %4949 = vmatmul.mubr.bf16.gmra.mrb[0].mxu0 %v3934
        %v4950 = vpop.f32.mrb[0].mxu0
        %v4951 = vadd.f32 %v4790, %v4950
        %v4952 = vpop.f32.mrb[0].mxu0
        %v4953 = vpop.f32.mrb[0].mxu0
        %v4954 = vadd.f32 %v4793, %v4953
        %v4955 = vpop.f32.mrb[0].mxu0
        %4956 = vmatprep.mubr.bf16.mxu0 0
        %4957 = vmatmul.mubr.bf16.gmra.mrb[0].mxu0 %v3937
        %v4958 = vpop.f32.mrb[0].mxu0
        %v4959 = vadd.f32 %v4798, %v4958
        %v4960 = vpop.f32.mrb[0].mxu0
        %v4961 = vpop.f32.mrb[0].mxu0
        %v4962 = vadd.f32 %v4801, %v4961
        %v4963 = vpop.f32.mrb[0].mxu0
        %4964 = vmatprep.mubr.bf16.mxu0 0
        %4965 = vmatmul.mubr.bf16.gmra.mrb[0].mxu0 %v3940
        %v4966 = vpop.f32.mrb[0].mxu0
        %v4967 = vadd.f32 %v4806, %v4966
        %v4968 = vpop.f32.mrb[0].mxu0
        %v4969 = vpop.f32.mrb[0].mxu0
        %v4970 = vadd.f32 %v4809, %v4969
        %v4971 = vpop.f32.mrb[0].mxu0
        %4972 = vmatprep.mubr.bf16.mxu0 0
        %4973 = vmatmul.mubr.bf16.gmra.mrb[0].mxu0 %v3943
        %v4974 = vpop.f32.mrb[0].mxu0
        %v4975 = vadd.f32 %v4814, %v4974
        %v4976 = vpop.f32.mrb[0].mxu0
        %v4977 = vpop.f32.mrb[0].mxu0
        %v4978 = vadd.f32 %v4817, %v4977
        %v4979 = vpop.f32.mrb[0].mxu0
        %4980 = vmatprep.mubr.bf16.mxu0 0
        %4981 = vmatmul.mubr.bf16.gmra.mrb[0].mxu0 %v3946
        %v4982 = vpop.f32.mrb[0].mxu0
        %v4983 = vadd.f32 %v4822, %v4982
        %v4984 = vpop.f32.mrb[0].mxu0
        %v4985 = vpop.f32.mrb[0].mxu0
        %v4986 = vadd.f32 %v4825, %v4985
        %v4987 = vpop.f32.mrb[0].mxu0
        %4988 = vmatprep.mubr.bf16.mxu0 0
        %4989 = vmatmul.mubr.bf16.gmra.mrb[0].mxu0 %v3949
        %v4990 = vpop.f32.mrb[0].mxu0
        %v4991 = vadd.f32 %v4830, %v4990
        %v4992 = vpop.f32.mrb[0].mxu0
        %v4993 = vpop.f32.mrb[0].mxu0
        %v4994 = vadd.f32 %v4833, %v4993
        %v4995 = vpop.f32.mrb[0].mxu0
        %4996 = vmatprep.mubr.bf16.mxu0 0
        %4997 = vmatmul.mubr.bf16.gmra.mrb[0].mxu0 %v3952
        %v4998 = vpop.f32.mrb[0].mxu0
        %v4999 = vadd.f32 %v4838, %v4998
        %v5000 = vpop.f32.mrb[0].mxu0
        %v5001 = vpop.f32.mrb[0].mxu0
        %v5002 = vadd.f32 %v4841, %v5001
        %v5003 = vpop.f32.mrb[0].mxu0
        %5004 = vmatprep.mubr.bf16.mxu0 0
        %5005 = vmatmul.mubr.bf16.gmra.mrb[0].mxu0 %v3955
        %v5006 = vpop.f32.mrb[0].mxu0
        %v5007 = vadd.f32 %v4846, %v5006
        %v5008 = vpop.f32.mrb[0].mxu0
        %v5009 = vpop.f32.mrb[0].mxu0
        %v5010 = vadd.f32 %v4849, %v5009
        %v5011 = vpop.f32.mrb[0].mxu0
        %5012 = vmatprep.mubr.bf16.mxu0 0
        %5013 = vmatmul.mubr.bf16.gmra.mrb[0].mxu0 %v3958
        %v5014 = vpop.f32.mrb[0].mxu0
        %v5015 = vadd.f32 %v4854, %v5014
        %v5016 = vpop.f32.mrb[0].mxu0
        %v5017 = vpop.f32.mrb[0].mxu0
        %v5018 = vadd.f32 %v4857, %v5017
        %v5019 = vpop.f32.mrb[0].mxu0
        %5020 = vmatprep.mubr.bf16.mxu0 0
        %5021 = vmatmul.mubr.bf16.gmra.mrb[0].mxu0 %v3961
        %v5022 = vpop.f32.mrb[0].mxu0
        %v5023 = vadd.f32 %v4862, %v5022
        %v5024 = vpop.f32.mrb[0].mxu0
        %v5025 = vpop.f32.mrb[0].mxu0
        %v5026 = vadd.f32 %v4865, %v5025
        %v5027 = vpop.f32.mrb[0].mxu0
        %5028 = vmatprep.mubr.bf16.mxu0 0
        %5029 = vmatmul.mubr.bf16.gmra.mrb[0].mxu0 %v3964
        %v5030 = vpop.f32.mrb[0].mxu0
        %v5031 = vadd.f32 %v4870, %v5030
        %v5032 = vpop.f32.mrb[0].mxu0
        %v5033 = vpop.f32.mrb[0].mxu0
        %v5034 = vadd.f32 %v4873, %v5033
        %v5035 = vpop.f32.mrb[0].mxu0
        %5036 = vmatprep.mubr.bf16.mxu0 0
        %5037 = vmatmul.mubr.bf16.gmra.mrb[0].mxu0 %v3967
        %v5038 = vpop.f32.mrb[0].mxu0
        %v5039 = vadd.f32 %v4878, %v5038
        %v5040 = vpop.f32.mrb[0].mxu0
        %v5041 = vpop.f32.mrb[0].mxu0
        %v5042 = vadd.f32 %v4881, %v5041
        %v5043 = vpop.f32.mrb[0].mxu0
        %5044 = vdwg.mxu0
        %v5045 = vld [vmem:[%s2541] sm:$0xff]
        %v5046 = vld [vmem:[%s2541 + $0x8] sm:$0xff]
        %v5047 = vld [vmem:[%s2541 + $0x10] sm:$0xff]
        %v5048 = vld [vmem:[%s2541 + $0x18] sm:$0xff]
        %v5049 = vld [vmem:[%s2541 + $0x20] sm:$0xff]
        %v5050 = vld [vmem:[%s2541 + $0x28] sm:$0xff]
        %v5051 = vld [vmem:[%s2541 + $0x30] sm:$0xff]
        %v5052 = vld [vmem:[%s2541 + $0x38] sm:$0xff]
        %v5053 = vld [vmem:[%s2541 + $0x40] sm:$0xff]
        %v5054 = vld [vmem:[%s2541 + $0x48] sm:$0xff]
        %v5055 = vld [vmem:[%s2541 + $0x50] sm:$0xff]
        %v5056 = vld [vmem:[%s2541 + $0x58] sm:$0xff]
        %v5057 = vld [vmem:[%s2541 + $0x60] sm:$0xff]
        %v5058 = vld [vmem:[%s2541 + $0x68] sm:$0xff]
        %v5059 = vld [vmem:[%s2541 + $0x70] sm:$0xff]
        %v5060 = vld [vmem:[%s2541 + $0x78] sm:$0xff]
        %v5061 = vld [vmem:[%s2541 + $0x80] sm:$0xff]
        %v5062 = vld [vmem:[%s2541 + $0x88] sm:$0xff]
        %v5063 = vld [vmem:[%s2541 + $0x90] sm:$0xff]
        %v5064 = vld [vmem:[%s2541 + $0x98] sm:$0xff]
        %v5065 = vld [vmem:[%s2541 + $0xa0] sm:$0xff]
        %v5066 = vld [vmem:[%s2541 + $0xa8] sm:$0xff]
        %v5067 = vld [vmem:[%s2541 + $0xb0] sm:$0xff]
        %v5068 = vld [vmem:[%s2541 + $0xb8] sm:$0xff]
        %v5069 = vld [vmem:[%s2541 + $0xc0] sm:$0xff]
        %v5070 = vld [vmem:[%s2541 + $0xc8] sm:$0xff]
        %v5071 = vld [vmem:[%s2541 + $0xd0] sm:$0xff]
        %v5072 = vld [vmem:[%s2541 + $0xd8] sm:$0xff]
        %v5073 = vld [vmem:[%s2541 + $0xe0] sm:$0xff]
        %v5074 = vld [vmem:[%s2541 + $0xe8] sm:$0xff]
        %v5075 = vld [vmem:[%s2541 + $0xf0] sm:$0xff]
        %v5076 = vld [vmem:[%s2541 + $0xf8] sm:$0xff]
        %v5077 = vld [vmem:[%s2541 + $0x100] sm:$0xff]
        %v5078 = vld [vmem:[%s2541 + $0x108] sm:$0xff]
        %v5079 = vld [vmem:[%s2541 + $0x110] sm:$0xff]
        %v5080 = vld [vmem:[%s2541 + $0x118] sm:$0xff]
        %v5081 = vld [vmem:[%s2541 + $0x120] sm:$0xff]
        %v5082 = vld [vmem:[%s2541 + $0x128] sm:$0xff]
        %v5083 = vld [vmem:[%s2541 + $0x130] sm:$0xff]
        %v5084 = vld [vmem:[%s2541 + $0x138] sm:$0xff]
        %v5085 = vld [vmem:[%s2541 + $0x140] sm:$0xff]
        %v5086 = vld [vmem:[%s2541 + $0x148] sm:$0xff]
        %v5087 = vld [vmem:[%s2541 + $0x150] sm:$0xff]
        %v5088 = vld [vmem:[%s2541 + $0x158] sm:$0xff]
        %v5089 = vld [vmem:[%s2541 + $0x160] sm:$0xff]
        %v5090 = vld [vmem:[%s2541 + $0x168] sm:$0xff]
        %v5091 = vld [vmem:[%s2541 + $0x170] sm:$0xff]
        %v5092 = vld [vmem:[%s2541 + $0x178] sm:$0xff]
        %s5093 = scalar_lea.vmem [#allocation15], 384
        %v5094 = vld [vmem:[%s5093] sm:$0xf]
        %v5095 = vld [vmem:[%s5093 + $0x4] sm:$0xf]
        %v5096 = vld [vmem:[%s5093 + $0x8] sm:$0xf]
        %v5097 = vld [vmem:[%s5093 + $0xc] sm:$0xf]
        %v5098 = vld [vmem:[%s5093 + $0x10] sm:$0xf]
        %v5099 = vld [vmem:[%s5093 + $0x14] sm:$0xf]
        %v5100 = vld [vmem:[%s5093 + $0x18] sm:$0xf]
        %v5101 = vld [vmem:[%s5093 + $0x1c] sm:$0xf]
        %v5102 = vld [vmem:[%s5093 + $0x20] sm:$0xf]
        %v5103 = vld [vmem:[%s5093 + $0x24] sm:$0xf]
        %v5104 = vld [vmem:[%s5093 + $0x28] sm:$0xf]
        %v5105 = vld [vmem:[%s5093 + $0x2c] sm:$0xf]
        %v5106 = vld [vmem:[%s5093 + $0x30] sm:$0xf]
        %v5107 = vld [vmem:[%s5093 + $0x34] sm:$0xf]
        %v5108 = vld [vmem:[%s5093 + $0x38] sm:$0xf]
        %v5109 = vld [vmem:[%s5093 + $0x3c] sm:$0xf]
        %v5110 = vld [vmem:[%s5093 + $0x40] sm:$0xf]
        %v5111 = vld [vmem:[%s5093 + $0x44] sm:$0xf]
        %v5112 = vld [vmem:[%s5093 + $0x48] sm:$0xf]
        %v5113 = vld [vmem:[%s5093 + $0x4c] sm:$0xf]
        %v5114 = vld [vmem:[%s5093 + $0x50] sm:$0xf]
        %v5115 = vld [vmem:[%s5093 + $0x54] sm:$0xf]
        %v5116 = vld [vmem:[%s5093 + $0x58] sm:$0xf]
        %v5117 = vld [vmem:[%s5093 + $0x5c] sm:$0xf]
        %v5118 = vld [vmem:[%s5093 + $0x60] sm:$0xf]
        %v5119 = vld [vmem:[%s5093 + $0x64] sm:$0xf]
        %v5120 = vld [vmem:[%s5093 + $0x68] sm:$0xf]
        %v5121 = vld [vmem:[%s5093 + $0x6c] sm:$0xf]
        %v5122 = vld [vmem:[%s5093 + $0x70] sm:$0xf]
        %v5123 = vld [vmem:[%s5093 + $0x74] sm:$0xf]
        %v5124 = vld [vmem:[%s5093 + $0x78] sm:$0xf]
        %v5125 = vld [vmem:[%s5093 + $0x7c] sm:$0xf]
        %v5126 = vld [vmem:[%s5093 + $0x80] sm:$0xf]
        %v5127 = vld [vmem:[%s5093 + $0x84] sm:$0xf]
        %v5128 = vld [vmem:[%s5093 + $0x88] sm:$0xf]
        %v5129 = vld [vmem:[%s5093 + $0x8c] sm:$0xf]
        %v5130 = vld [vmem:[%s5093 + $0x90] sm:$0xf]
        %v5131 = vld [vmem:[%s5093 + $0x94] sm:$0xf]
        %v5132 = vld [vmem:[%s5093 + $0x98] sm:$0xf]
        %v5133 = vld [vmem:[%s5093 + $0x9c] sm:$0xf]
        %v5134 = vld [vmem:[%s5093 + $0xa0] sm:$0xf]
        %v5135 = vld [vmem:[%s5093 + $0xa4] sm:$0xf]
        %v5136 = vld [vmem:[%s5093 + $0xa8] sm:$0xf]
        %v5137 = vld [vmem:[%s5093 + $0xac] sm:$0xf]
        %v5138 = vld [vmem:[%s5093 + $0xb0] sm:$0xf]
        %v5139 = vld [vmem:[%s5093 + $0xb4] sm:$0xf]
        %v5140 = vld [vmem:[%s5093 + $0xb8] sm:$0xf]
        %v5141 = vld [vmem:[%s5093 + $0xbc] sm:$0xf]
        %v5190 = vunpack.c.l.b16 %v5094
        %v5191 = vunpack.c.l.b16 %v5095
        %v5192 = vunpack.c.l.b16 %v5096
        %v5193 = vunpack.c.l.b16 %v5097
        %v5194 = vunpack.c.l.b16 %v5098
        %v5195 = vunpack.c.l.b16 %v5099
        %v5196 = vunpack.c.l.b16 %v5100
        %v5197 = vunpack.c.l.b16 %v5101
        %v5198 = vunpack.c.l.b16 %v5102
        %v5199 = vunpack.c.l.b16 %v5103
        %v5200 = vunpack.c.l.b16 %v5104
        %v5201 = vunpack.c.l.b16 %v5105
        %v5202 = vunpack.c.l.b16 %v5106
        %v5203 = vunpack.c.l.b16 %v5107
        %v5204 = vunpack.c.l.b16 %v5108
        %v5205 = vunpack.c.l.b16 %v5109
        %v5206 = vunpack.c.l.b16 %v5110
        %v5207 = vunpack.c.l.b16 %v5111
        %v5208 = vunpack.c.l.b16 %v5112
        %v5209 = vunpack.c.l.b16 %v5113
        %v5210 = vunpack.c.l.b16 %v5114
        %v5211 = vunpack.c.l.b16 %v5115
        %v5212 = vunpack.c.l.b16 %v5116
        %v5213 = vunpack.c.l.b16 %v5117
        %v5214 = vunpack.c.l.b16 %v5118
        %v5215 = vunpack.c.l.b16 %v5119
        %v5216 = vunpack.c.l.b16 %v5120
        %v5217 = vunpack.c.l.b16 %v5121
        %v5218 = vunpack.c.l.b16 %v5122
        %v5219 = vunpack.c.l.b16 %v5123
        %v5220 = vunpack.c.l.b16 %v5124
        %v5221 = vunpack.c.l.b16 %v5125
        %v5222 = vunpack.c.l.b16 %v5126
        %v5223 = vunpack.c.l.b16 %v5127
        %v5224 = vunpack.c.l.b16 %v5128
        %v5225 = vunpack.c.l.b16 %v5129
        %v5226 = vunpack.c.l.b16 %v5130
        %v5227 = vunpack.c.l.b16 %v5131
        %v5228 = vunpack.c.l.b16 %v5132
        %v5229 = vunpack.c.l.b16 %v5133
        %v5230 = vunpack.c.l.b16 %v5134
        %v5231 = vunpack.c.l.b16 %v5135
        %v5232 = vunpack.c.l.b16 %v5136
        %v5233 = vunpack.c.l.b16 %v5137
        %v5234 = vunpack.c.l.b16 %v5138
        %v5235 = vunpack.c.l.b16 %v5139
        %v5236 = vunpack.c.l.b16 %v5140
        %v5237 = vunpack.c.l.b16 %v5141
        %v5238 = vpack.c.b16 %v5191, %v5190
        %v5239 = vpack.c.b16 %v5193, %v5192
        %v5240 = vpack.c.b16 %v5195, %v5194
        %v5241 = vpack.c.b16 %v5197, %v5196
        %v5242 = vpack.c.b16 %v5199, %v5198
        %v5243 = vpack.c.b16 %v5201, %v5200
        %v5244 = vpack.c.b16 %v5203, %v5202
        %v5245 = vpack.c.b16 %v5205, %v5204
        %v5246 = vpack.c.b16 %v5207, %v5206
        %v5247 = vpack.c.b16 %v5209, %v5208
        %v5248 = vpack.c.b16 %v5211, %v5210
        %v5249 = vpack.c.b16 %v5213, %v5212
        %v5250 = vpack.c.b16 %v5215, %v5214
        %v5251 = vpack.c.b16 %v5217, %v5216
        %v5252 = vpack.c.b16 %v5219, %v5218
        %v5253 = vpack.c.b16 %v5221, %v5220
        %v5254 = vpack.c.b16 %v5223, %v5222
        %v5255 = vpack.c.b16 %v5225, %v5224
        %v5256 = vpack.c.b16 %v5227, %v5226
        %v5257 = vpack.c.b16 %v5229, %v5228
        %v5258 = vpack.c.b16 %v5231, %v5230
        %v5259 = vpack.c.b16 %v5233, %v5232
        %v5260 = vpack.c.b16 %v5235, %v5234
        %v5261 = vpack.c.b16 %v5237, %v5236
        %5286 = vmatprep.subr.bf16.mxu0 0
        %5287 = vmatpush1.bf16.msra.mxu0 %v5238
        %5288 = vmatprep.subr.bf16.mxu0 0
        %5289 = vmatpush1.bf16.msra.mxu0 %v5239
        %5290 = vmatprep.subr.bf16.mxu0 0
        %5291 = vmatpush1.bf16.msra.mxu0 %v5240
        %5292 = vmatprep.subr.bf16.mxu0 0
        %5293 = vmatpush1.bf16.msra.mxu0 %v5241
        %5294 = vmatprep.subr.bf16.mxu0 0
        %5295 = vmatpush1.bf16.msra.mxu0 %v5242
        %5296 = vmatprep.subr.bf16.mxu0 0
        %5297 = vmatpush1.bf16.msra.mxu0 %v5243
        %5298 = vmatprep.subr.bf16.mxu0 0
        %5299 = vmatpush1.bf16.msra.mxu0 %v5244
        %5300 = vmatprep.subr.bf16.mxu0 0
        %5301 = vmatpush1.bf16.msra.mxu0 %v5245
        %5302 = vmatprep.subr.bf16.mxu0 0
        %5303 = vmatpush1.bf16.msra.mxu0 %v5246
        %5304 = vmatprep.subr.bf16.mxu0 0
        %5305 = vmatpush1.bf16.msra.mxu0 %v5247
        %5306 = vmatprep.subr.bf16.mxu0 0
        %5307 = vmatpush1.bf16.msra.mxu0 %v5248
        %5308 = vmatprep.subr.bf16.mxu0 0
        %5309 = vmatpush1.bf16.msra.mxu0 %v5249
        %5310 = vmatprep.subr.bf16.mxu0 0
        %5311 = vmatpush1.bf16.msra.mxu0 %v5250
        %5312 = vmatprep.subr.bf16.mxu0 0
        %5313 = vmatpush1.bf16.msra.mxu0 %v5251
        %5314 = vmatprep.subr.bf16.mxu0 0
        %5315 = vmatpush1.bf16.msra.mxu0 %v5252
        %5316 = vmatprep.subr.bf16.mxu0 0
        %5317 = vmatpush1.bf16.msra.mxu0 %v5253
        %5318 = vmatprep.mubr.bf16.mxu0 %v5046
        %5319 = vmatmul.mubr.bf16.gmra.mrb[0].mxu0 %v5045
        %v5320 = vpop.f32.mrb[0].mxu0
        %v5321 = vadd.f32 0.0, %v5320
        %v5322 = vpop.f32.mrb[0].mxu0
        %v5323 = vpop.f32.mrb[0].mxu0
        %v5324 = vadd.f32 0.0, %v5323
        %v5325 = vpop.f32.mrb[0].mxu0
        %5326 = vmatprep.mubr.bf16.mxu0 %v5049
        %5327 = vmatmul.mubr.bf16.gmra.mrb[0].mxu0 %v5048
        %v5328 = vpop.f32.mrb[0].mxu0
        %v5329 = vadd.f32 0.0, %v5328
        %v5330 = vpop.f32.mrb[0].mxu0
        %v5331 = vpop.f32.mrb[0].mxu0
        %v5332 = vadd.f32 0.0, %v5331
        %v5333 = vpop.f32.mrb[0].mxu0
        %5334 = vmatprep.mubr.bf16.mxu0 %v5052
        %5335 = vmatmul.mubr.bf16.gmra.mrb[0].mxu0 %v5051
        %v5336 = vpop.f32.mrb[0].mxu0
        %v5337 = vadd.f32 0.0, %v5336
        %v5338 = vpop.f32.mrb[0].mxu0
        %v5339 = vpop.f32.mrb[0].mxu0
        %v5340 = vadd.f32 0.0, %v5339
        %v5341 = vpop.f32.mrb[0].mxu0
        %5342 = vmatprep.mubr.bf16.mxu0 %v5055
        %5343 = vmatmul.mubr.bf16.gmra.mrb[0].mxu0 %v5054
        %v5344 = vpop.f32.mrb[0].mxu0
        %v5345 = vadd.f32 0.0, %v5344
        %v5346 = vpop.f32.mrb[0].mxu0
        %v5347 = vpop.f32.mrb[0].mxu0
        %v5348 = vadd.f32 0.0, %v5347
        %v5349 = vpop.f32.mrb[0].mxu0
        %5350 = vmatprep.mubr.bf16.mxu0 %v5058
        %5351 = vmatmul.mubr.bf16.gmra.mrb[0].mxu0 %v5057
        %v5352 = vpop.f32.mrb[0].mxu0
        %v5353 = vadd.f32 0.0, %v5352
        %v5354 = vpop.f32.mrb[0].mxu0
        %v5355 = vpop.f32.mrb[0].mxu0
        %v5356 = vadd.f32 0.0, %v5355
        %v5357 = vpop.f32.mrb[0].mxu0
        %5358 = vmatprep.mubr.bf16.mxu0 %v5061
        %5359 = vmatmul.mubr.bf16.gmra.mrb[0].mxu0 %v5060
        %v5360 = vpop.f32.mrb[0].mxu0
        %v5361 = vadd.f32 0.0, %v5360
        %v5362 = vpop.f32.mrb[0].mxu0
        %v5363 = vpop.f32.mrb[0].mxu0
        %v5364 = vadd.f32 0.0, %v5363
        %v5365 = vpop.f32.mrb[0].mxu0
        %5366 = vmatprep.mubr.bf16.mxu0 %v5064
        %5367 = vmatmul.mubr.bf16.gmra.mrb[0].mxu0 %v5063
        %v5368 = vpop.f32.mrb[0].mxu0
        %v5369 = vadd.f32 0.0, %v5368
        %v5370 = vpop.f32.mrb[0].mxu0
        %v5371 = vpop.f32.mrb[0].mxu0
        %v5372 = vadd.f32 0.0, %v5371
        %v5373 = vpop.f32.mrb[0].mxu0
        %5374 = vmatprep.mubr.bf16.mxu0 %v5067
        %5375 = vmatmul.mubr.bf16.gmra.mrb[0].mxu0 %v5066
        %v5376 = vpop.f32.mrb[0].mxu0
        %v5377 = vadd.f32 0.0, %v5376
        %v5378 = vpop.f32.mrb[0].mxu0
        %v5379 = vpop.f32.mrb[0].mxu0
        %v5380 = vadd.f32 0.0, %v5379
        %v5381 = vpop.f32.mrb[0].mxu0
        %5382 = vmatprep.mubr.bf16.mxu0 %v5070
        %5383 = vmatmul.mubr.bf16.gmra.mrb[0].mxu0 %v5069
        %v5384 = vpop.f32.mrb[0].mxu0
        %v5385 = vadd.f32 0.0, %v5384
        %v5386 = vpop.f32.mrb[0].mxu0
        %v5387 = vpop.f32.mrb[0].mxu0
        %v5388 = vadd.f32 0.0, %v5387
        %v5389 = vpop.f32.mrb[0].mxu0
        %5390 = vmatprep.mubr.bf16.mxu0 %v5073
        %5391 = vmatmul.mubr.bf16.gmra.mrb[0].mxu0 %v5072
        %v5392 = vpop.f32.mrb[0].mxu0
        %v5393 = vadd.f32 0.0, %v5392
        %v5394 = vpop.f32.mrb[0].mxu0
        %v5395 = vpop.f32.mrb[0].mxu0
        %v5396 = vadd.f32 0.0, %v5395
        %v5397 = vpop.f32.mrb[0].mxu0
        %5398 = vmatprep.mubr.bf16.mxu0 %v5076
        %5399 = vmatmul.mubr.bf16.gmra.mrb[0].mxu0 %v5075
        %v5400 = vpop.f32.mrb[0].mxu0
        %v5401 = vadd.f32 0.0, %v5400
        %v5402 = vpop.f32.mrb[0].mxu0
        %v5403 = vpop.f32.mrb[0].mxu0
        %v5404 = vadd.f32 0.0, %v5403
        %v5405 = vpop.f32.mrb[0].mxu0
        %5406 = vmatprep.mubr.bf16.mxu0 %v5079
        %5407 = vmatmul.mubr.bf16.gmra.mrb[0].mxu0 %v5078
        %v5408 = vpop.f32.mrb[0].mxu0
        %v5409 = vadd.f32 0.0, %v5408
        %v5410 = vpop.f32.mrb[0].mxu0
        %v5411 = vpop.f32.mrb[0].mxu0
        %v5412 = vadd.f32 0.0, %v5411
        %v5413 = vpop.f32.mrb[0].mxu0
        %5414 = vmatprep.mubr.bf16.mxu0 %v5082
        %5415 = vmatmul.mubr.bf16.gmra.mrb[0].mxu0 %v5081
        %v5416 = vpop.f32.mrb[0].mxu0
        %v5417 = vadd.f32 0.0, %v5416
        %v5418 = vpop.f32.mrb[0].mxu0
        %v5419 = vpop.f32.mrb[0].mxu0
        %v5420 = vadd.f32 0.0, %v5419
        %v5421 = vpop.f32.mrb[0].mxu0
        %5422 = vmatprep.mubr.bf16.mxu0 %v5085
        %5423 = vmatmul.mubr.bf16.gmra.mrb[0].mxu0 %v5084
        %v5424 = vpop.f32.mrb[0].mxu0
        %v5425 = vadd.f32 0.0, %v5424
        %v5426 = vpop.f32.mrb[0].mxu0
        %v5427 = vpop.f32.mrb[0].mxu0
        %v5428 = vadd.f32 0.0, %v5427
        %v5429 = vpop.f32.mrb[0].mxu0
        %5430 = vmatprep.mubr.bf16.mxu0 %v5088
        %5431 = vmatmul.mubr.bf16.gmra.mrb[0].mxu0 %v5087
        %v5432 = vpop.f32.mrb[0].mxu0
        %v5433 = vadd.f32 0.0, %v5432
        %v5434 = vpop.f32.mrb[0].mxu0
        %v5435 = vpop.f32.mrb[0].mxu0
        %v5436 = vadd.f32 0.0, %v5435
        %v5437 = vpop.f32.mrb[0].mxu0
        %5438 = vmatprep.mubr.bf16.mxu0 %v5091
        %5439 = vmatmul.mubr.bf16.gmra.mrb[0].mxu0 %v5090
        %v5440 = vpop.f32.mrb[0].mxu0
        %v5441 = vadd.f32 0.0, %v5440
        %v5442 = vpop.f32.mrb[0].mxu0
        %v5443 = vpop.f32.mrb[0].mxu0
        %v5444 = vadd.f32 0.0, %v5443
        %v5445 = vpop.f32.mrb[0].mxu0
        %5446 = vdwg.mxu0
        %5447 = vmatprep.subr.bf16.mxu0 0
        %5448 = vmatpush1.bf16.msra.mxu0 %v5254
        %5449 = vmatprep.subr.bf16.mxu0 0
        %5450 = vmatpush1.bf16.msra.mxu0 %v5255
        %5451 = vmatprep.subr.bf16.mxu0 0
        %5452 = vmatpush1.bf16.msra.mxu0 %v5256
        %5453 = vmatprep.subr.bf16.mxu0 0
        %5454 = vmatpush1.bf16.msra.mxu0 %v5257
        %5455 = vmatprep.subr.bf16.mxu0 0
        %5456 = vmatpush1.bf16.msra.mxu0 %v5258
        %5457 = vmatprep.subr.bf16.mxu0 0
        %5458 = vmatpush1.bf16.msra.mxu0 %v5259
        %5459 = vmatprep.subr.bf16.mxu0 0
        %5460 = vmatpush1.bf16.msra.mxu0 %v5260
        %5461 = vmatprep.subr.bf16.mxu0 0
        %5462 = vmatpush1.bf16.msra.mxu0 %v5261
        %5463 = vmatprep.subr.bf16.mxu0 0
        %5464 = vmatpush1.bf16.msra.mxu0 0
        %5465 = vmatprep.subr.bf16.mxu0 0
        %5466 = vmatpush1.bf16.msra.mxu0 0
        %5467 = vmatprep.subr.bf16.mxu0 0
        %5468 = vmatpush1.bf16.msra.mxu0 0
        %5469 = vmatprep.subr.bf16.mxu0 0
        %5470 = vmatpush1.bf16.msra.mxu0 0
        %5471 = vmatprep.subr.bf16.mxu0 0
        %5472 = vmatpush1.bf16.msra.mxu0 0
        %5473 = vmatprep.subr.bf16.mxu0 0
        %5474 = vmatpush1.bf16.msra.mxu0 0
        %5475 = vmatprep.subr.bf16.mxu0 0
        %5476 = vmatpush1.bf16.msra.mxu0 0
        %5477 = vmatprep.subr.bf16.mxu0 0
        %5478 = vmatpush1.bf16.msra.mxu0 0
        %5479 = vmatprep.mubr.bf16.mxu0 0
        %5480 = vmatmul.mubr.bf16.gmra.mrb[0].mxu0 %v5047
        %v5481 = vpop.f32.mrb[0].mxu0
        %v5482 = vadd.f32 %v5321, %v5481
        %v5483 = vpop.f32.mrb[0].mxu0
        %v5484 = vpop.f32.mrb[0].mxu0
        %v5485 = vadd.f32 %v5324, %v5484
        %v5486 = vpop.f32.mrb[0].mxu0
        %5487 = vmatprep.mubr.bf16.mxu0 0
        %5488 = vmatmul.mubr.bf16.gmra.mrb[0].mxu0 %v5050
        %v5489 = vpop.f32.mrb[0].mxu0
        %v5490 = vadd.f32 %v5329, %v5489
        %v5491 = vpop.f32.mrb[0].mxu0
        %v5492 = vpop.f32.mrb[0].mxu0
        %v5493 = vadd.f32 %v5332, %v5492
        %v5494 = vpop.f32.mrb[0].mxu0
        %5495 = vmatprep.mubr.bf16.mxu0 0
        %5496 = vmatmul.mubr.bf16.gmra.mrb[0].mxu0 %v5053
        %v5497 = vpop.f32.mrb[0].mxu0
        %v5498 = vadd.f32 %v5337, %v5497
        %v5499 = vpop.f32.mrb[0].mxu0
        %v5500 = vpop.f32.mrb[0].mxu0
        %v5501 = vadd.f32 %v5340, %v5500
        %v5502 = vpop.f32.mrb[0].mxu0
        %5503 = vmatprep.mubr.bf16.mxu0 0
        %5504 = vmatmul.mubr.bf16.gmra.mrb[0].mxu0 %v5056
        %v5505 = vpop.f32.mrb[0].mxu0
        %v5506 = vadd.f32 %v5345, %v5505
        %v5507 = vpop.f32.mrb[0].mxu0
        %v5508 = vpop.f32.mrb[0].mxu0
        %v5509 = vadd.f32 %v5348, %v5508
        %v5510 = vpop.f32.mrb[0].mxu0
        %5511 = vmatprep.mubr.bf16.mxu0 0
        %5512 = vmatmul.mubr.bf16.gmra.mrb[0].mxu0 %v5059
        %v5513 = vpop.f32.mrb[0].mxu0
        %v5514 = vadd.f32 %v5353, %v5513
        %v5515 = vpop.f32.mrb[0].mxu0
        %v5516 = vpop.f32.mrb[0].mxu0
        %v5517 = vadd.f32 %v5356, %v5516
        %v5518 = vpop.f32.mrb[0].mxu0
        %5519 = vmatprep.mubr.bf16.mxu0 0
        %5520 = vmatmul.mubr.bf16.gmra.mrb[0].mxu0 %v5062
        %v5521 = vpop.f32.mrb[0].mxu0
        %v5522 = vadd.f32 %v5361, %v5521
        %v5523 = vpop.f32.mrb[0].mxu0
        %v5524 = vpop.f32.mrb[0].mxu0
        %v5525 = vadd.f32 %v5364, %v5524
        %v5526 = vpop.f32.mrb[0].mxu0
        %5527 = vmatprep.mubr.bf16.mxu0 0
        %5528 = vmatmul.mubr.bf16.gmra.mrb[0].mxu0 %v5065
        %v5529 = vpop.f32.mrb[0].mxu0
        %v5530 = vadd.f32 %v5369, %v5529
        %v5531 = vpop.f32.mrb[0].mxu0
        %v5532 = vpop.f32.mrb[0].mxu0
        %v5533 = vadd.f32 %v5372, %v5532
        %v5534 = vpop.f32.mrb[0].mxu0
        %5535 = vmatprep.mubr.bf16.mxu0 0
        %5536 = vmatmul.mubr.bf16.gmra.mrb[0].mxu0 %v5068
        %v5537 = vpop.f32.mrb[0].mxu0
        %v5538 = vadd.f32 %v5377, %v5537
        %v5539 = vpop.f32.mrb[0].mxu0
        %v5540 = vpop.f32.mrb[0].mxu0
        %v5541 = vadd.f32 %v5380, %v5540
        %v5542 = vpop.f32.mrb[0].mxu0
        %5543 = vmatprep.mubr.bf16.mxu0 0
        %5544 = vmatmul.mubr.bf16.gmra.mrb[0].mxu0 %v5071
        %v5545 = vpop.f32.mrb[0].mxu0
        %v5546 = vadd.f32 %v5385, %v5545
        %v5547 = vpop.f32.mrb[0].mxu0
        %v5548 = vpop.f32.mrb[0].mxu0
        %v5549 = vadd.f32 %v5388, %v5548
        %v5550 = vpop.f32.mrb[0].mxu0
        %5551 = vmatprep.mubr.bf16.mxu0 0
        %5552 = vmatmul.mubr.bf16.gmra.mrb[0].mxu0 %v5074
        %v5553 = vpop.f32.mrb[0].mxu0
        %v5554 = vadd.f32 %v5393, %v5553
        %v5555 = vpop.f32.mrb[0].mxu0
        %v5556 = vpop.f32.mrb[0].mxu0
        %v5557 = vadd.f32 %v5396, %v5556
        %v5558 = vpop.f32.mrb[0].mxu0
        %5559 = vmatprep.mubr.bf16.mxu0 0
        %5560 = vmatmul.mubr.bf16.gmra.mrb[0].mxu0 %v5077
        %v5561 = vpop.f32.mrb[0].mxu0
        %v5562 = vadd.f32 %v5401, %v5561
        %v5563 = vpop.f32.mrb[0].mxu0
        %v5564 = vpop.f32.mrb[0].mxu0
        %v5565 = vadd.f32 %v5404, %v5564
        %v5566 = vpop.f32.mrb[0].mxu0
        %5567 = vmatprep.mubr.bf16.mxu0 0
        %5568 = vmatmul.mubr.bf16.gmra.mrb[0].mxu0 %v5080
        %v5569 = vpop.f32.mrb[0].mxu0
        %v5570 = vadd.f32 %v5409, %v5569
        %v5571 = vpop.f32.mrb[0].mxu0
        %v5572 = vpop.f32.mrb[0].mxu0
        %v5573 = vadd.f32 %v5412, %v5572
        %v5574 = vpop.f32.mrb[0].mxu0
        %5575 = vmatprep.mubr.bf16.mxu0 0
        %5576 = vmatmul.mubr.bf16.gmra.mrb[0].mxu0 %v5083
        %v5577 = vpop.f32.mrb[0].mxu0
        %v5578 = vadd.f32 %v5417, %v5577
        %v5579 = vpop.f32.mrb[0].mxu0
        %v5580 = vpop.f32.mrb[0].mxu0
        %v5581 = vadd.f32 %v5420, %v5580
        %v5582 = vpop.f32.mrb[0].mxu0
        %5583 = vmatprep.mubr.bf16.mxu0 0
        %5584 = vmatmul.mubr.bf16.gmra.mrb[0].mxu0 %v5086
        %v5585 = vpop.f32.mrb[0].mxu0
        %v5586 = vadd.f32 %v5425, %v5585
        %v5587 = vpop.f32.mrb[0].mxu0
        %v5588 = vpop.f32.mrb[0].mxu0
        %v5589 = vadd.f32 %v5428, %v5588
        %v5590 = vpop.f32.mrb[0].mxu0
        %5591 = vmatprep.mubr.bf16.mxu0 0
        %5592 = vmatmul.mubr.bf16.gmra.mrb[0].mxu0 %v5089
        %v5593 = vpop.f32.mrb[0].mxu0
        %v5594 = vadd.f32 %v5433, %v5593
        %v5595 = vpop.f32.mrb[0].mxu0
        %v5596 = vpop.f32.mrb[0].mxu0
        %v5597 = vadd.f32 %v5436, %v5596
        %v5598 = vpop.f32.mrb[0].mxu0
        %5599 = vmatprep.mubr.bf16.mxu0 0
        %5600 = vmatmul.mubr.bf16.gmra.mrb[0].mxu0 %v5092
        %v5601 = vpop.f32.mrb[0].mxu0
        %v5602 = vadd.f32 %v5441, %v5601
        %v5603 = vpop.f32.mrb[0].mxu0
        %v5604 = vpop.f32.mrb[0].mxu0
        %v5605 = vadd.f32 %v5444, %v5604
        %v5606 = vpop.f32.mrb[0].mxu0
        %5607 = vdwg.mxu0
        %v5608 = vadd.f32 %v4919, %v5482
        %v5609 = vadd.f32 %v4922, %v5485
        %v5610 = vadd.f32 %v4927, %v5490
        %v5611 = vadd.f32 %v4930, %v5493
        %v5612 = vadd.f32 %v4935, %v5498
        %v5613 = vadd.f32 %v4938, %v5501
        %v5614 = vadd.f32 %v4943, %v5506
        %v5615 = vadd.f32 %v4946, %v5509
        %v5616 = vadd.f32 %v4951, %v5514
        %v5617 = vadd.f32 %v4954, %v5517
        %v5618 = vadd.f32 %v4959, %v5522
        %v5619 = vadd.f32 %v4962, %v5525
        %v5620 = vadd.f32 %v4967, %v5530
        %v5621 = vadd.f32 %v4970, %v5533
        %v5622 = vadd.f32 %v4975, %v5538
        %v5623 = vadd.f32 %v4978, %v5541
        %v5624 = vadd.f32 %v4983, %v5546
        %v5625 = vadd.f32 %v4986, %v5549
        %v5626 = vadd.f32 %v4991, %v5554
        %v5627 = vadd.f32 %v4994, %v5557
        %v5628 = vadd.f32 %v4999, %v5562
        %v5629 = vadd.f32 %v5002, %v5565
        %v5630 = vadd.f32 %v5007, %v5570
        %v5631 = vadd.f32 %v5010, %v5573
        %v5632 = vadd.f32 %v5015, %v5578
        %v5633 = vadd.f32 %v5018, %v5581
        %v5634 = vadd.f32 %v5023, %v5586
        %v5635 = vadd.f32 %v5026, %v5589
        %v5636 = vadd.f32 %v5031, %v5594
        %v5637 = vadd.f32 %v5034, %v5597
        %v5638 = vadd.f32 %v5039, %v5602
        %v5639 = vadd.f32 %v5042, %v5605
        %v5640 = vld [vmem:[#allocation17] sm:$0x1]
        %v5642 = vlaneseq
        %v5643 = vshrl.u32 %v5642, 7
        %v5644 = vsub.s32 0, %v5643
        %v5645 = vrot.slane %v5640, %v5644
        %v5647 = vadd.f32 %v5608, %v5645
        %v5648 = vadd.f32 %v5609, %v5645
        %v5649 = vadd.f32 %v5610, %v5645
        %v5650 = vadd.f32 %v5611, %v5645
        %v5651 = vadd.f32 %v5612, %v5645
        %v5652 = vadd.f32 %v5613, %v5645
        %v5653 = vadd.f32 %v5614, %v5645
        %v5654 = vadd.f32 %v5615, %v5645
        %v5655 = vadd.f32 %v5616, %v5645
        %v5656 = vadd.f32 %v5617, %v5645
        %v5657 = vadd.f32 %v5618, %v5645
        %v5658 = vadd.f32 %v5619, %v5645
        %v5659 = vadd.f32 %v5620, %v5645
        %v5660 = vadd.f32 %v5621, %v5645
        %v5661 = vadd.f32 %v5622, %v5645
        %v5662 = vadd.f32 %v5623, %v5645
        %v5663 = vadd.f32 %v5624, %v5645
        %v5664 = vadd.f32 %v5625, %v5645
        %v5665 = vadd.f32 %v5626, %v5645
        %v5666 = vadd.f32 %v5627, %v5645
        %v5667 = vadd.f32 %v5628, %v5645
        %v5668 = vadd.f32 %v5629, %v5645
        %v5669 = vadd.f32 %v5630, %v5645
        %v5670 = vadd.f32 %v5631, %v5645
        %v5671 = vadd.f32 %v5632, %v5645
        %v5672 = vadd.f32 %v5633, %v5645
        %v5673 = vadd.f32 %v5634, %v5645
        %v5674 = vadd.f32 %v5635, %v5645
        %v5675 = vadd.f32 %v5636, %v5645
        %v5676 = vadd.f32 %v5637, %v5645
        %v5677 = vadd.f32 %v5638, %v5645
        %v5678 = vadd.f32 %v5639, %v5645
        %vm5679 = vcmp.gt.f32.partialorder %v5647, 0.0
        %vm5680 = vcmp.gt.f32.partialorder %v5648, 0.0
        %vm5681 = vcmp.gt.f32.partialorder %v5649, 0.0
        %vm5682 = vcmp.gt.f32.partialorder %v5650, 0.0
        %vm5683 = vcmp.gt.f32.partialorder %v5651, 0.0
        %vm5684 = vcmp.gt.f32.partialorder %v5652, 0.0
        %vm5685 = vcmp.gt.f32.partialorder %v5653, 0.0
        %vm5686 = vcmp.gt.f32.partialorder %v5654, 0.0
        %vm5687 = vcmp.gt.f32.partialorder %v5655, 0.0
        %vm5688 = vcmp.gt.f32.partialorder %v5656, 0.0
        %vm5689 = vcmp.gt.f32.partialorder %v5657, 0.0
        %vm5690 = vcmp.gt.f32.partialorder %v5658, 0.0
        %vm5691 = vcmp.gt.f32.partialorder %v5659, 0.0
        %vm5692 = vcmp.gt.f32.partialorder %v5660, 0.0
        %vm5693 = vcmp.gt.f32.partialorder %v5661, 0.0
        %vm5694 = vcmp.gt.f32.partialorder %v5662, 0.0
        %vm5695 = vcmp.gt.f32.partialorder %v5663, 0.0
        %vm5696 = vcmp.gt.f32.partialorder %v5664, 0.0
        %vm5697 = vcmp.gt.f32.partialorder %v5665, 0.0
        %vm5698 = vcmp.gt.f32.partialorder %v5666, 0.0
        %vm5699 = vcmp.gt.f32.partialorder %v5667, 0.0
        %vm5700 = vcmp.gt.f32.partialorder %v5668, 0.0
        %vm5701 = vcmp.gt.f32.partialorder %v5669, 0.0
        %vm5702 = vcmp.gt.f32.partialorder %v5670, 0.0
        %vm5703 = vcmp.gt.f32.partialorder %v5671, 0.0
        %vm5704 = vcmp.gt.f32.partialorder %v5672, 0.0
        %vm5705 = vcmp.gt.f32.partialorder %v5673, 0.0
        %vm5706 = vcmp.gt.f32.partialorder %v5674, 0.0
        %vm5707 = vcmp.gt.f32.partialorder %v5675, 0.0
        %vm5708 = vcmp.gt.f32.partialorder %v5676, 0.0
        %vm5709 = vcmp.gt.f32.partialorder %v5677, 0.0
        %vm5710 = vcmp.gt.f32.partialorder %v5678, 0.0
        %v5711 = vmul.f32 %v5647, 0.1
        %v5712 = vmul.f32 %v5648, 0.1
        %v5713 = vmul.f32 %v5649, 0.1
        %v5714 = vmul.f32 %v5650, 0.1
        %v5715 = vmul.f32 %v5651, 0.1
        %v5716 = vmul.f32 %v5652, 0.1
        %v5717 = vmul.f32 %v5653, 0.1
        %v5718 = vmul.f32 %v5654, 0.1
        %v5719 = vmul.f32 %v5655, 0.1
        %v5720 = vmul.f32 %v5656, 0.1
        %v5721 = vmul.f32 %v5657, 0.1
        %v5722 = vmul.f32 %v5658, 0.1
        %v5723 = vmul.f32 %v5659, 0.1
        %v5724 = vmul.f32 %v5660, 0.1
        %v5725 = vmul.f32 %v5661, 0.1
        %v5726 = vmul.f32 %v5662, 0.1
        %v5727 = vmul.f32 %v5663, 0.1
        %v5728 = vmul.f32 %v5664, 0.1
        %v5729 = vmul.f32 %v5665, 0.1
        %v5730 = vmul.f32 %v5666, 0.1
        %v5731 = vmul.f32 %v5667, 0.1
        %v5732 = vmul.f32 %v5668, 0.1
        %v5733 = vmul.f32 %v5669, 0.1
        %v5734 = vmul.f32 %v5670, 0.1
        %v5735 = vmul.f32 %v5671, 0.1
        %v5736 = vmul.f32 %v5672, 0.1
        %v5737 = vmul.f32 %v5673, 0.1
        %v5738 = vmul.f32 %v5674, 0.1
        %v5739 = vmul.f32 %v5675, 0.1
        %v5740 = vmul.f32 %v5676, 0.1
        %v5741 = vmul.f32 %v5677, 0.1
        %v5742 = vmul.f32 %v5678, 0.1
        %v5743 = vsel %vm5679, %v5647, %v5711
        %v5744 = vsel %vm5680, %v5648, %v5712
        %v5745 = vsel %vm5681, %v5649, %v5713
        %v5746 = vsel %vm5682, %v5650, %v5714
        %v5747 = vsel %vm5683, %v5651, %v5715
        %v5748 = vsel %vm5684, %v5652, %v5716
        %v5749 = vsel %vm5685, %v5653, %v5717
        %v5750 = vsel %vm5686, %v5654, %v5718
        %v5751 = vsel %vm5687, %v5655, %v5719
        %v5752 = vsel %vm5688, %v5656, %v5720
        %v5753 = vsel %vm5689, %v5657, %v5721
        %v5754 = vsel %vm5690, %v5658, %v5722
        %v5755 = vsel %vm5691, %v5659, %v5723
        %v5756 = vsel %vm5692, %v5660, %v5724
        %v5757 = vsel %vm5693, %v5661, %v5725
        %v5758 = vsel %vm5694, %v5662, %v5726
        %v5759 = vsel %vm5695, %v5663, %v5727
        %v5760 = vsel %vm5696, %v5664, %v5728
        %v5761 = vsel %vm5697, %v5665, %v5729
        %v5762 = vsel %vm5698, %v5666, %v5730
        %v5763 = vsel %vm5699, %v5667, %v5731
        %v5764 = vsel %vm5700, %v5668, %v5732
        %v5765 = vsel %vm5701, %v5669, %v5733
        %v5766 = vsel %vm5702, %v5670, %v5734
        %v5767 = vsel %vm5703, %v5671, %v5735
        %v5768 = vsel %vm5704, %v5672, %v5736
        %v5769 = vsel %vm5705, %v5673, %v5737
        %v5770 = vsel %vm5706, %v5674, %v5738
        %v5771 = vsel %vm5707, %v5675, %v5739
        %v5772 = vsel %vm5708, %v5676, %v5740
        %v5773 = vsel %vm5709, %v5677, %v5741
        %v5774 = vsel %vm5710, %v5678, %v5742
        %v5775 = vpack.c.bf16 %v5744, %v5743
        %v5776 = vpack.c.bf16 %v5746, %v5745
        %v5777 = vpack.c.bf16 %v5748, %v5747
        %v5778 = vpack.c.bf16 %v5750, %v5749
        %v5779 = vpack.c.bf16 %v5752, %v5751
        %v5780 = vpack.c.bf16 %v5754, %v5753
        %v5781 = vpack.c.bf16 %v5756, %v5755
        %v5782 = vpack.c.bf16 %v5758, %v5757
        %v5783 = vpack.c.bf16 %v5760, %v5759
        %v5784 = vpack.c.bf16 %v5762, %v5761
        %v5785 = vpack.c.bf16 %v5764, %v5763
        %v5786 = vpack.c.bf16 %v5766, %v5765
        %v5787 = vpack.c.bf16 %v5768, %v5767
        %v5788 = vpack.c.bf16 %v5770, %v5769
        %v5789 = vpack.c.bf16 %v5772, %v5771
        %v5790 = vpack.c.bf16 %v5774, %v5773
        %v5791 = vld [vmem:[#allocation18] sm:$0xf]
        %v5792 = vld [vmem:[#allocation18 + $0x4] sm:$0xf]
        %v5793 = vld [vmem:[#allocation18 + $0x8] sm:$0xf]
        %v5794 = vld [vmem:[#allocation18 + $0xc] sm:$0xf]
        %v5795 = vld [vmem:[#allocation18 + $0x10] sm:$0xf]
        %v5796 = vld [vmem:[#allocation18 + $0x14] sm:$0xf]
        %v5797 = vld [vmem:[#allocation18 + $0x18] sm:$0xf]
        %v5798 = vld [vmem:[#allocation18 + $0x1c] sm:$0xf]
        %v5799 = vld [vmem:[#allocation18 + $0x20] sm:$0xf]
        %v5800 = vld [vmem:[#allocation18 + $0x24] sm:$0xf]
        %v5801 = vld [vmem:[#allocation18 + $0x28] sm:$0xf]
        %v5802 = vld [vmem:[#allocation18 + $0x2c] sm:$0xf]
        %v5803 = vld [vmem:[#allocation18 + $0x30] sm:$0xf]
        %v5804 = vld [vmem:[#allocation18 + $0x34] sm:$0xf]
        %v5805 = vld [vmem:[#allocation18 + $0x38] sm:$0xf]
        %v5806 = vld [vmem:[#allocation18 + $0x3c] sm:$0xf]
        %v5807 = vld [vmem:[#allocation20] sm:$0x1]
        %v5809 = vlaneseq
        %v5810 = vshrl.u32 %v5809, 7
        %v5811 = vsub.s32 0, %v5810
        %v5812 = vrot.slane %v5807, %v5811
        %v5830 = vunpack.c.l.b16 %v5791
        %v5831 = vunpack.c.l.b16 %v5792
        %v5832 = vunpack.c.l.b16 %v5793
        %v5833 = vunpack.c.l.b16 %v5794
        %v5834 = vunpack.c.l.b16 %v5795
        %v5835 = vunpack.c.l.b16 %v5796
        %v5836 = vunpack.c.l.b16 %v5797
        %v5837 = vunpack.c.l.b16 %v5798
        %v5838 = vunpack.c.l.b16 %v5799
        %v5839 = vunpack.c.l.b16 %v5800
        %v5840 = vunpack.c.l.b16 %v5801
        %v5841 = vunpack.c.l.b16 %v5802
        %v5842 = vunpack.c.l.b16 %v5803
        %v5843 = vunpack.c.l.b16 %v5804
        %v5844 = vunpack.c.l.b16 %v5805
        %v5845 = vunpack.c.l.b16 %v5806
        %v5846 = vpack.c.b16 %v5831, %v5830
        %v5847 = vpack.c.b16 %v5833, %v5832
        %v5848 = vpack.c.b16 %v5835, %v5834
        %v5849 = vpack.c.b16 %v5837, %v5836
        %v5850 = vpack.c.b16 %v5839, %v5838
        %v5851 = vpack.c.b16 %v5841, %v5840
        %v5852 = vpack.c.b16 %v5843, %v5842
        %v5853 = vpack.c.b16 %v5845, %v5844
        %5862 = vmatprep.subr.bf16.mxu0 0
        %5863 = vmatpush1.bf16.msra.mxu0 %v5846
        %5864 = vmatprep.subr.bf16.mxu0 0
        %5865 = vmatpush1.bf16.msra.mxu0 %v5847
        %5866 = vmatprep.subr.bf16.mxu0 0
        %5867 = vmatpush1.bf16.msra.mxu0 %v5848
        %5868 = vmatprep.subr.bf16.mxu0 0
        %5869 = vmatpush1.bf16.msra.mxu0 %v5849
        %5870 = vmatprep.subr.bf16.mxu0 0
        %5871 = vmatpush1.bf16.msra.mxu0 %v5850
        %5872 = vmatprep.subr.bf16.mxu0 0
        %5873 = vmatpush1.bf16.msra.mxu0 %v5851
        %5874 = vmatprep.subr.bf16.mxu0 0
        %5875 = vmatpush1.bf16.msra.mxu0 %v5852
        %5876 = vmatprep.subr.bf16.mxu0 0
        %5877 = vmatpush1.bf16.msra.mxu0 %v5853
        %5878 = vmatprep.subr.bf16.mxu0 0
        %5879 = vmatpush1.bf16.msra.mxu0 0
        %5880 = vmatprep.subr.bf16.mxu0 0
        %5881 = vmatpush1.bf16.msra.mxu0 0
        %5882 = vmatprep.subr.bf16.mxu0 0
        %5883 = vmatpush1.bf16.msra.mxu0 0
        %5884 = vmatprep.subr.bf16.mxu0 0
        %5885 = vmatpush1.bf16.msra.mxu0 0
        %5886 = vmatprep.subr.bf16.mxu0 0
        %5887 = vmatpush1.bf16.msra.mxu0 0
        %5888 = vmatprep.subr.bf16.mxu0 0
        %5889 = vmatpush1.bf16.msra.mxu0 0
        %5890 = vmatprep.subr.bf16.mxu0 0
        %5891 = vmatpush1.bf16.msra.mxu0 0
        %5892 = vmatprep.subr.bf16.mxu0 0
        %5893 = vmatpush1.bf16.msra.mxu0 0
        %5894 = vmatprep.mubr.bf16.mxu0 0
        %5895 = vmatmul.mubr.bf16.gmra.mrb[0].mxu0 %v5775
        %v5896 = vpop.f32.mrb[0].mxu0
        %v5897 = vadd.f32 %v5812, %v5896
        %v5898 = vpop.f32.mrb[0].mxu0
        %v5899 = vpop.f32.mrb[0].mxu0
        %v5900 = vadd.f32 %v5812, %v5899
        %v5901 = vpop.f32.mrb[0].mxu0
        %5902 = vmatprep.mubr.bf16.mxu0 0
        %5903 = vmatmul.mubr.bf16.gmra.mrb[0].mxu0 %v5776
        %v5904 = vpop.f32.mrb[0].mxu0
        %v5905 = vadd.f32 %v5812, %v5904
        %v5906 = vpop.f32.mrb[0].mxu0
        %v5907 = vpop.f32.mrb[0].mxu0
        %v5908 = vadd.f32 %v5812, %v5907
        %v5909 = vpop.f32.mrb[0].mxu0
        %5910 = vmatprep.mubr.bf16.mxu0 0
        %5911 = vmatmul.mubr.bf16.gmra.mrb[0].mxu0 %v5777
        %v5912 = vpop.f32.mrb[0].mxu0
        %v5913 = vadd.f32 %v5812, %v5912
        %v5914 = vpop.f32.mrb[0].mxu0
        %v5915 = vpop.f32.mrb[0].mxu0
        %v5916 = vadd.f32 %v5812, %v5915
        %v5917 = vpop.f32.mrb[0].mxu0
        %5918 = vmatprep.mubr.bf16.mxu0 0
        %5919 = vmatmul.mubr.bf16.gmra.mrb[0].mxu0 %v5778
        %v5920 = vpop.f32.mrb[0].mxu0
        %v5921 = vadd.f32 %v5812, %v5920
        %v5922 = vpop.f32.mrb[0].mxu0
        %v5923 = vpop.f32.mrb[0].mxu0
        %v5924 = vadd.f32 %v5812, %v5923
        %v5925 = vpop.f32.mrb[0].mxu0
        %5926 = vmatprep.mubr.bf16.mxu0 0
        %5927 = vmatmul.mubr.bf16.gmra.mrb[0].mxu0 %v5779
        %v5928 = vpop.f32.mrb[0].mxu0
        %v5929 = vadd.f32 %v5812, %v5928
        %v5930 = vpop.f32.mrb[0].mxu0
        %v5931 = vpop.f32.mrb[0].mxu0
        %v5932 = vadd.f32 %v5812, %v5931
        %v5933 = vpop.f32.mrb[0].mxu0
        %5934 = vmatprep.mubr.bf16.mxu0 0
        %5935 = vmatmul.mubr.bf16.gmra.mrb[0].mxu0 %v5780
        %v5936 = vpop.f32.mrb[0].mxu0
        %v5937 = vadd.f32 %v5812, %v5936
        %v5938 = vpop.f32.mrb[0].mxu0
        %v5939 = vpop.f32.mrb[0].mxu0
        %v5940 = vadd.f32 %v5812, %v5939
        %v5941 = vpop.f32.mrb[0].mxu0
        %5942 = vmatprep.mubr.bf16.mxu0 0
        %5943 = vmatmul.mubr.bf16.gmra.mrb[0].mxu0 %v5781
        %v5944 = vpop.f32.mrb[0].mxu0
        %v5945 = vadd.f32 %v5812, %v5944
        %v5946 = vpop.f32.mrb[0].mxu0
        %v5947 = vpop.f32.mrb[0].mxu0
        %v5948 = vadd.f32 %v5812, %v5947
        %v5949 = vpop.f32.mrb[0].mxu0
        %5950 = vmatprep.mubr.bf16.mxu0 0
        %5951 = vmatmul.mubr.bf16.gmra.mrb[0].mxu0 %v5782
        %v5952 = vpop.f32.mrb[0].mxu0
        %v5953 = vadd.f32 %v5812, %v5952
        %v5954 = vpop.f32.mrb[0].mxu0
        %v5955 = vpop.f32.mrb[0].mxu0
        %v5956 = vadd.f32 %v5812, %v5955
        %v5957 = vpop.f32.mrb[0].mxu0
        %5958 = vmatprep.mubr.bf16.mxu0 0
        %5959 = vmatmul.mubr.bf16.gmra.mrb[0].mxu0 %v5783
        %v5960 = vpop.f32.mrb[0].mxu0
        %v5961 = vadd.f32 %v5812, %v5960
        %v5962 = vpop.f32.mrb[0].mxu0
        %v5963 = vpop.f32.mrb[0].mxu0
        %v5964 = vadd.f32 %v5812, %v5963
        %v5965 = vpop.f32.mrb[0].mxu0
        %5966 = vmatprep.mubr.bf16.mxu0 0
        %5967 = vmatmul.mubr.bf16.gmra.mrb[0].mxu0 %v5784
        %v5968 = vpop.f32.mrb[0].mxu0
        %v5969 = vadd.f32 %v5812, %v5968
        %v5970 = vpop.f32.mrb[0].mxu0
        %v5971 = vpop.f32.mrb[0].mxu0
        %v5972 = vadd.f32 %v5812, %v5971
        %v5973 = vpop.f32.mrb[0].mxu0
        %5974 = vmatprep.mubr.bf16.mxu0 0
        %5975 = vmatmul.mubr.bf16.gmra.mrb[0].mxu0 %v5785
        %v5976 = vpop.f32.mrb[0].mxu0
        %v5977 = vadd.f32 %v5812, %v5976
        %v5978 = vpop.f32.mrb[0].mxu0
        %v5979 = vpop.f32.mrb[0].mxu0
        %v5980 = vadd.f32 %v5812, %v5979
        %v5981 = vpop.f32.mrb[0].mxu0
        %5982 = vmatprep.mubr.bf16.mxu0 0
        %5983 = vmatmul.mubr.bf16.gmra.mrb[0].mxu0 %v5786
        %v5984 = vpop.f32.mrb[0].mxu0
        %v5985 = vadd.f32 %v5812, %v5984
        %v5986 = vpop.f32.mrb[0].mxu0
        %v5987 = vpop.f32.mrb[0].mxu0
        %v5988 = vadd.f32 %v5812, %v5987
        %v5989 = vpop.f32.mrb[0].mxu0
        %5990 = vmatprep.mubr.bf16.mxu0 0
        %5991 = vmatmul.mubr.bf16.gmra.mrb[0].mxu0 %v5787
        %v5992 = vpop.f32.mrb[0].mxu0
        %v5993 = vadd.f32 %v5812, %v5992
        %v5994 = vpop.f32.mrb[0].mxu0
        %v5995 = vpop.f32.mrb[0].mxu0
        %v5996 = vadd.f32 %v5812, %v5995
        %v5997 = vpop.f32.mrb[0].mxu0
        %5998 = vmatprep.mubr.bf16.mxu0 0
        %5999 = vmatmul.mubr.bf16.gmra.mrb[0].mxu0 %v5788
        %v6000 = vpop.f32.mrb[0].mxu0
        %v6001 = vadd.f32 %v5812, %v6000
        %v6002 = vpop.f32.mrb[0].mxu0
        %v6003 = vpop.f32.mrb[0].mxu0
        %v6004 = vadd.f32 %v5812, %v6003
        %v6005 = vpop.f32.mrb[0].mxu0
        %6006 = vmatprep.mubr.bf16.mxu0 0
        %6007 = vmatmul.mubr.bf16.gmra.mrb[0].mxu0 %v5789
        %v6008 = vpop.f32.mrb[0].mxu0
        %v6009 = vadd.f32 %v5812, %v6008
        %v6010 = vpop.f32.mrb[0].mxu0
        %v6011 = vpop.f32.mrb[0].mxu0
        %v6012 = vadd.f32 %v5812, %v6011
        %v6013 = vpop.f32.mrb[0].mxu0
        %6014 = vmatprep.mubr.bf16.mxu0 0
        %6015 = vmatmul.mubr.bf16.gmra.mrb[0].mxu0 %v5790
        %v6016 = vpop.f32.mrb[0].mxu0
        %v6017 = vadd.f32 %v5812, %v6016
        %v6018 = vpop.f32.mrb[0].mxu0
        %v6019 = vpop.f32.mrb[0].mxu0
        %v6020 = vadd.f32 %v5812, %v6019
        %v6021 = vpop.f32.mrb[0].mxu0
        %6022 = vdwg.mxu0
        %vm6023 = vcmp.gt.f32.partialorder %v5897, 0.0
        %vm6024 = vcmp.gt.f32.partialorder %v5900, 0.0
        %vm6025 = vcmp.gt.f32.partialorder %v5905, 0.0
        %vm6026 = vcmp.gt.f32.partialorder %v5908, 0.0
        %vm6027 = vcmp.gt.f32.partialorder %v5913, 0.0
        %vm6028 = vcmp.gt.f32.partialorder %v5916, 0.0
        %vm6029 = vcmp.gt.f32.partialorder %v5921, 0.0
        %vm6030 = vcmp.gt.f32.partialorder %v5924, 0.0
        %vm6031 = vcmp.gt.f32.partialorder %v5929, 0.0
        %vm6032 = vcmp.gt.f32.partialorder %v5932, 0.0
        %vm6033 = vcmp.gt.f32.partialorder %v5937, 0.0
        %vm6034 = vcmp.gt.f32.partialorder %v5940, 0.0
        %vm6035 = vcmp.gt.f32.partialorder %v5945, 0.0
        %vm6036 = vcmp.gt.f32.partialorder %v5948, 0.0
        %vm6037 = vcmp.gt.f32.partialorder %v5953, 0.0
        %vm6038 = vcmp.gt.f32.partialorder %v5956, 0.0
        %vm6039 = vcmp.gt.f32.partialorder %v5961, 0.0
        %vm6040 = vcmp.gt.f32.partialorder %v5964, 0.0
        %vm6041 = vcmp.gt.f32.partialorder %v5969, 0.0
        %vm6042 = vcmp.gt.f32.partialorder %v5972, 0.0
        %vm6043 = vcmp.gt.f32.partialorder %v5977, 0.0
        %vm6044 = vcmp.gt.f32.partialorder %v5980, 0.0
        %vm6045 = vcmp.gt.f32.partialorder %v5985, 0.0
        %vm6046 = vcmp.gt.f32.partialorder %v5988, 0.0
        %vm6047 = vcmp.gt.f32.partialorder %v5993, 0.0
        %vm6048 = vcmp.gt.f32.partialorder %v5996, 0.0
        %vm6049 = vcmp.gt.f32.partialorder %v6001, 0.0
        %vm6050 = vcmp.gt.f32.partialorder %v6004, 0.0
        %vm6051 = vcmp.gt.f32.partialorder %v6009, 0.0
        %vm6052 = vcmp.gt.f32.partialorder %v6012, 0.0
        %vm6053 = vcmp.gt.f32.partialorder %v6017, 0.0
        %vm6054 = vcmp.gt.f32.partialorder %v6020, 0.0
        %v6055 = vmul.f32 %v5897, 0.1
        %v6056 = vmul.f32 %v5900, 0.1
        %v6057 = vmul.f32 %v5905, 0.1
        %v6058 = vmul.f32 %v5908, 0.1
        %v6059 = vmul.f32 %v5913, 0.1
        %v6060 = vmul.f32 %v5916, 0.1
        %v6061 = vmul.f32 %v5921, 0.1
        %v6062 = vmul.f32 %v5924, 0.1
        %v6063 = vmul.f32 %v5929, 0.1
        %v6064 = vmul.f32 %v5932, 0.1
        %v6065 = vmul.f32 %v5937, 0.1
        %v6066 = vmul.f32 %v5940, 0.1
        %v6067 = vmul.f32 %v5945, 0.1
        %v6068 = vmul.f32 %v5948, 0.1
        %v6069 = vmul.f32 %v5953, 0.1
        %v6070 = vmul.f32 %v5956, 0.1
        %v6071 = vmul.f32 %v5961, 0.1
        %v6072 = vmul.f32 %v5964, 0.1
        %v6073 = vmul.f32 %v5969, 0.1
        %v6074 = vmul.f32 %v5972, 0.1
        %v6075 = vmul.f32 %v5977, 0.1
        %v6076 = vmul.f32 %v5980, 0.1
        %v6077 = vmul.f32 %v5985, 0.1
        %v6078 = vmul.f32 %v5988, 0.1
        %v6079 = vmul.f32 %v5993, 0.1
        %v6080 = vmul.f32 %v5996, 0.1
        %v6081 = vmul.f32 %v6001, 0.1
        %v6082 = vmul.f32 %v6004, 0.1
        %v6083 = vmul.f32 %v6009, 0.1
        %v6084 = vmul.f32 %v6012, 0.1
        %v6085 = vmul.f32 %v6017, 0.1
        %v6086 = vmul.f32 %v6020, 0.1
        %v6087 = vsel %vm6023, %v5897, %v6055
        %v6088 = vsel %vm6024, %v5900, %v6056
        %v6089 = vsel %vm6025, %v5905, %v6057
        %v6090 = vsel %vm6026, %v5908, %v6058
        %v6091 = vsel %vm6027, %v5913, %v6059
        %v6092 = vsel %vm6028, %v5916, %v6060
        %v6093 = vsel %vm6029, %v5921, %v6061
        %v6094 = vsel %vm6030, %v5924, %v6062
        %v6095 = vsel %vm6031, %v5929, %v6063
        %v6096 = vsel %vm6032, %v5932, %v6064
        %v6097 = vsel %vm6033, %v5937, %v6065
        %v6098 = vsel %vm6034, %v5940, %v6066
        %v6099 = vsel %vm6035, %v5945, %v6067
        %v6100 = vsel %vm6036, %v5948, %v6068
        %v6101 = vsel %vm6037, %v5953, %v6069
        %v6102 = vsel %vm6038, %v5956, %v6070
        %v6103 = vsel %vm6039, %v5961, %v6071
        %v6104 = vsel %vm6040, %v5964, %v6072
        %v6105 = vsel %vm6041, %v5969, %v6073
        %v6106 = vsel %vm6042, %v5972, %v6074
        %v6107 = vsel %vm6043, %v5977, %v6075
        %v6108 = vsel %vm6044, %v5980, %v6076
        %v6109 = vsel %vm6045, %v5985, %v6077
        %v6110 = vsel %vm6046, %v5988, %v6078
        %v6111 = vsel %vm6047, %v5993, %v6079
        %v6112 = vsel %vm6048, %v5996, %v6080
        %v6113 = vsel %vm6049, %v6001, %v6081
        %v6114 = vsel %vm6050, %v6004, %v6082
        %v6115 = vsel %vm6051, %v6009, %v6083
        %v6116 = vsel %vm6052, %v6012, %v6084
        %v6117 = vsel %vm6053, %v6017, %v6085
        %v6118 = vsel %vm6054, %v6020, %v6086
        %6119 = vst [vmem:[%s539] sm:$0xff] %v6087
        %6120 = vst [vmem:[%s539 + $0x8] sm:$0xff] %v6088
        %6121 = vst [vmem:[%s539 + $0x10] sm:$0xff] %v6089
        %6122 = vst [vmem:[%s539 + $0x18] sm:$0xff] %v6090
        %6123 = vst [vmem:[%s539 + $0x20] sm:$0xff] %v6091
        %6124 = vst [vmem:[%s539 + $0x28] sm:$0xff] %v6092
        %6125 = vst [vmem:[%s539 + $0x30] sm:$0xff] %v6093
        %6126 = vst [vmem:[%s539 + $0x38] sm:$0xff] %v6094
        %6127 = vst [vmem:[%s539 + $0x40] sm:$0xff] %v6095
        %6128 = vst [vmem:[%s539 + $0x48] sm:$0xff] %v6096
        %6129 = vst [vmem:[%s539 + $0x50] sm:$0xff] %v6097
        %6130 = vst [vmem:[%s539 + $0x58] sm:$0xff] %v6098
        %6131 = vst [vmem:[%s539 + $0x60] sm:$0xff] %v6099
        %6132 = vst [vmem:[%s539 + $0x68] sm:$0xff] %v6100
        %6133 = vst [vmem:[%s539 + $0x70] sm:$0xff] %v6101
        %6134 = vst [vmem:[%s539 + $0x78] sm:$0xff] %v6102
        %6135 = vst [vmem:[%s539 + $0x80] sm:$0xff] %v6103
        %6136 = vst [vmem:[%s539 + $0x88] sm:$0xff] %v6104
        %6137 = vst [vmem:[%s539 + $0x90] sm:$0xff] %v6105
        %6138 = vst [vmem:[%s539 + $0x98] sm:$0xff] %v6106
        %6139 = vst [vmem:[%s539 + $0xa0] sm:$0xff] %v6107
        %6140 = vst [vmem:[%s539 + $0xa8] sm:$0xff] %v6108
        %6141 = vst [vmem:[%s539 + $0xb0] sm:$0xff] %v6109
        %6142 = vst [vmem:[%s539 + $0xb8] sm:$0xff] %v6110
        %6143 = vst [vmem:[%s539 + $0xc0] sm:$0xff] %v6111
        %6144 = vst [vmem:[%s539 + $0xc8] sm:$0xff] %v6112
        %6145 = vst [vmem:[%s539 + $0xd0] sm:$0xff] %v6113
        %6146 = vst [vmem:[%s539 + $0xd8] sm:$0xff] %v6114
        %6147 = vst [vmem:[%s539 + $0xe0] sm:$0xff] %v6115
        %6148 = vst [vmem:[%s539 + $0xe8] sm:$0xff] %v6116
        %6149 = vst [vmem:[%s539 + $0xf0] sm:$0xff] %v6117
        %6150 = vst [vmem:[%s539 + $0xf8] sm:$0xff] %v6118
        %s6151 = sand.u32 %s277, 1
        %s6152 = scalar_lea.sflag [#allocation5], %s6151
        %s6153 = sand.u32 %s277, 1
        %s6154 = smul.addr %s6153, 256
        %s6155 = scalar_lea.vmem [#allocation21], %s6154
        // Predicated region
        $region109: #{tpu_custom_call.1} parent=63 // pred_check
          %p6156 = pneg %p287
        $region110: #{tpu_custom_call.1} parent=63 // pred_check_branch
          %6158 = sbr.rel (%p6156) target = $region112
        $region111: #{tpu_custom_call.1} parent=63 // pred_region
          %s6160 = ssub.s32 4096, 4096
          %6161 = vsyncadd %s6152, %s6160
          %s6162 = smul.addr %s33, 32
          %s6163 = smul.addr %s6162, 128
          %s6164 = scalar_lea.hbm %s11, %s6163
          %s6165 = sshll.u32 %s6155, 4
          %s6166 = int_to_ptr.vmem [resolvable:$true] %s6165
          %6171 = dma.vmem_to_hbm [thread:$0]  %s6166, 4096, %s6164, %s6152, 128, 128, 8
        $region112: #{tpu_custom_call.1} parent=63 // pred_fallthru
          _
      $region64: #{tpu_custom_call.1} parent=5 // pred_fallthru
        _
      %p6172 = scmp.le.s32.totalorder 2, %s28
      // Predicated region
      $region113: #{tpu_custom_call.1} parent=5 // pred_check
        %p6173 = pneg %p6172
      $region114: #{tpu_custom_call.1} parent=5 // pred_check_branch
        %6175 = sbr.rel (%p6173) target = $region116
      $region115: #{tpu_custom_call.1} parent=5 // pred_region
        %s6176 = ssub.s32 %s28, 2
        // Predicated region
        $region117: #{tpu_custom_call.1} parent=115 // pred_check
          %p6177 = pneg %p293
        $region118: #{tpu_custom_call.1} parent=115 // pred_check_branch
          %6179 = sbr.rel (%p6177) target = $region120
        $region119: #{tpu_custom_call.1} parent=115 // pred_region
          %s6180 = sand.u32 %s278, 1
          %s6181 = scalar_lea.sflag [#allocation5], %s6180
          %s6182 = sand.u32 %s278, 1
          %s6183 = smul.addr %s6182, 256
          %s6184 = scalar_lea.vmem [#allocation21], %s6183
          %6185 = dma.done %s6181, 4096
        $region120: #{tpu_custom_call.1} parent=115 // pred_fallthru
          _
      $region116: #{tpu_custom_call.1} parent=5 // pred_fallthru
        _
    $region6: #{tpu_custom_call.1} parent=1 // loop_footer
      %s32 = sadd.s32 1, %s28
    $region7: #{tpu_custom_call.1} parent=1 // loop_footer_branch
      %27 = sbr.rel target = $region3
    $region8: #{tpu_custom_call.1} parent=1 // loop_exit
      _
    %6186 = vsyncpa [#allocation4], 1
    %s6187 = scalar_lea.sflag [#allocation4], 1
    %6188 = vsyncpa %s6187, 1
    %6189 = vsyncpa [#allocation7], 1
    %6190 = vsyncpa [#allocation10], 1
    %6191 = vsyncpa [#allocation13], 1
    %6192 = vsyncpa [#allocation16], 1
    %6193 = vsyncpa [#allocation19], 1
    %6194 = vsyncpa [#allocation5], 1
    %s6195 = scalar_lea.sflag [#allocation5], 1
    %6196 = vsyncpa %s6195, 1

</llo_original>
